<compile_context>
chip_gen: v5e
topology: v5e:2x2
jax: 0.10.0
libtpu: 0.0.40
codegen_flags: <defaults>
</compile_context>

<pallas_src>
import jax
import jax.numpy as jnp
from jax import lax
from jax.experimental import pallas as pl
from jax.experimental.pallas import tpu as pltpu

_LANE = 128
_SUB = 8


# ---------------------------------------------------------------------------
# Small helpers
# ---------------------------------------------------------------------------
def _round_up(n, m):
    return ((n + m - 1) // m) * m


def _cdiv(a, b):
    return -(-a // b)


def _supports_pipeline_mode():
    try:
        pl.BlockSpec((8, 128), lambda i: (0, 0), pipeline_mode=pl.Buffered(1))
        return True
    except Exception:
        return False


_HAS_PIPELINE_MODE = _supports_pipeline_mode()


def _unroll_cap(Bt, Hp):
    """Cap the time-loop unroll so carried state (4 h/c carries + the one-step-ahead xg
    carry) stays well inside the 64-vreg file; spills would saturate the vld/vst slots
    (only 1 vst slot on v5e) and erase the scheduling benefit of unrolling."""
    live_vregs = (8 * Bt * Hp * 4) // 4096  # f32: h0,c0,h1,c1 (4*Bt*Hp) + xg (Bt*4Hp)
    if live_vregs <= 12:
        return 8
    if live_vregs <= 24:
        return 4
    if live_vregs <= 40:
        return 2
    return 1


def _pad_gate_cols(w, H, Hp):
    """(K, 4H) with gate blocks [i|f|g|o] -> (K, 4Hp): each gate zero-padded to Hp lanes."""
    K = w.shape[0]
    out = jnp.zeros((K, 4, Hp), w.dtype)
    out = out.at[:, :, :H].set(w.reshape(K, 4, H))
    return out.reshape(K, 4 * Hp)


def _pad_rows(w, Kp):
    return jnp.zeros((Kp,) + w.shape[1:], w.dtype).at[: w.shape[0]].set(w)


def _pad_cols(w, Np):
    return jnp.zeros(w.shape[:-1] + (Np,), w.dtype).at[..., : w.shape[-1]].set(w)


# ---------------------------------------------------------------------------
# Kernel
# ---------------------------------------------------------------------------
def _build_kernel(tail_len, unroll_cap):
    """tail_len: number of valid timesteps in the LAST sequence chunk (static int)."""

    def kernel(x_ref,      # (t_chunk, Bt, Din)  time-major input chunk (streamed over S)
               wih0_ref,   # (Din, 4Hp)
               whh0_ref,   # (Hp,  4Hp)
               b0_ref,     # (1,   4Hp)   = b_ih_l0 + b_hh_l0 (gate-padded)
               wih1_ref,   # (Hp,  4Hp)
               whh1_ref,   # (Hp,  4Hp)
               b1_ref,     # (1,   4Hp)   = b_ih_l1 + b_hh_l1
               wfc_ref,    # (Hp,  Doutp)
               bfc_ref,    # (1,   Doutp)
               out_ref,    # (Bt,  Doutp)
               h0_ref, c0_ref, h1_ref, c1_ref):   # VMEM carries (Bt, Hp)
        s = pl.program_id(1)                 # sequence-chunk index ("arbitrary" axis)
        n_s = pl.num_programs(1)
        t_chunk = x_ref.shape[0]
        Bt, Hp = h0_ref.shape
        G = 4 * Hp

        # ---- init carries at the first chunk of every batch tile
        @pl.when(s == 0)
        def _init():
            h0_ref[...] = jnp.zeros_like(h0_ref)
            c0_ref[...] = jnp.zeros_like(c0_ref)
            h1_ref[...] = jnp.zeros_like(h1_ref)
            c1_ref[...] = jnp.zeros_like(c1_ref)

        # hoist bias broadcasts out of the loop (broadcast_in_dim is not CSE'd by JAX)
        b0b = jnp.broadcast_to(b0_ref[...], (Bt, G))
        b1b = jnp.broadcast_to(b1_ref[...], (Bt, G))

        def gates_to_hc(g, c):
            # gate slices are lane-tile aligned because Hp % 128 == 0
            i = jax.nn.sigmoid(g[:, 0 * Hp:1 * Hp])
            f = jax.nn.sigmoid(g[:, 1 * Hp:2 * Hp])
            gg = jnp.tanh(g[:, 2 * Hp:3 * Hp])
            o = jax.nn.sigmoid(g[:, 3 * Hp:4 * Hp])
            c_new = f * c + i * gg
            h_new = o * jnp.tanh(c_new)
            return h_new, c_new

        def project(t):
            # single-timestep input projection (feeds the NEXT loop iteration)
            return (jnp.dot(x_ref[t], wih0_ref[...],
                            preferred_element_type=jnp.float32) + b0b)

        def time_loop(T):
            def step(t, carry):
                h0, c0, h1, c1, xg = carry
                # Independent work first: next step's input projection and the recurrent
                # half of layer 1 — both off the critical path, so their MXU pushes fill
                # the idle cycles under this step's EUP/VPU gate chain.
                xg_nxt = project(jnp.minimum(t + 1, T - 1))
                g1 = jnp.dot(h1, whh1_ref[...],
                             preferred_element_type=jnp.float32) + b1b
                # layer 0 (critical path): only the recurrent matmul remains
                g0 = xg + jnp.dot(h0, whh0_ref[...],
                                  preferred_element_type=jnp.float32)
                h0, c0 = gates_to_hc(g0, c0)
                # layer 1: add the freshly available input half
                g1 = g1 + jnp.dot(h0, wih1_ref[...],
                                  preferred_element_type=jnp.float32)
                h1, c1 = gates_to_hc(g1, c1)
                return (h0, c0, h1, c1, xg_nxt)

            carry0 = (h0_ref[...], c0_ref[...], h1_ref[...], c1_ref[...], project(0))
            u = max(1, min(unroll_cap, T))
            h0, c0, h1, c1, _ = lax.fori_loop(0, T, step, carry0, unroll=u)
            # persist carries for the next chunk
            h0_ref[...] = h0
            c0_ref[...] = c0
            h1_ref[...] = h1
            c1_ref[...] = c1

        if tail_len == t_chunk:
            # S divides evenly: a single loop version
            time_loop(t_chunk)
        else:
            # statically-sized tail loop for the last chunk (no masking, no wasted steps)
            @pl.when(s != n_s - 1)
            def _full():
                time_loop(t_chunk)

            @pl.when(s == n_s - 1)
            def _tail():
                time_loop(tail_len)

        # ---- FC on the final top-layer hidden state (once per batch tile)
        @pl.when(s == n_s - 1)
        def _fc():
            out_ref[...] = (jnp.dot(h1_ref[...], wfc_ref[...],
                                    preferred_element_type=jnp.float32)
                            + bfc_ref[...]).astype(out_ref.dtype)

    return kernel


# ---------------------------------------------------------------------------
# Wrapper
# ---------------------------------------------------------------------------
def sequence_model_forward(x_bsd, params, *, t_chunk=None, batch_tiles=None,
                           projection_dtype=jnp.float32):
    """x_bsd: (batch, seq, input_dim) -> (batch, output_dim) float32.

    Equivalent to: out,_ = nn.LSTM(input_dim, H, num_layers=2, batch_first=True)(x);
                   return nn.Linear(H, output_dim)(out[:, -1, :]).
    projection_dtype=jnp.bfloat16 casts only x / Wih0 (the non-recurrent projection) for
    ~3x MXU throughput on v6e/v7x; default f32 keeps the strict 1e-4 atol budget.
    """
    x_bsd = x_bsd.astype(jnp.float32)
    B, S, Din = x_bsd.shape
    H = params["whh0"].shape[0]
    Dout = params["wfc"].shape[1]

    Hp = _round_up(H, _LANE)         # lane-aligned hidden dim -> tile-aligned gate slices
    Doutp = _round_up(Dout, _LANE)   # lane-dense final store
    G = 4 * Hp

    # ---- batch tiling: leading "parallel" grid axis (one tile per TensorCore on v7x).
    Bp0 = _round_up(B, _SUB)
    if batch_tiles is None:
        batch_tiles = 2 if Bp0 >= 64 else 1   # splitting a tiny batch only adds overhead
    Bt = _round_up(_cdiv(Bp0, batch_tiles), _SUB)
    Bp = batch_tiles * Bt

    # ---- VMEM budget (per core) -> t_chunk and an explicit scoped-VMEM limit.
    try:
        vmem_cap = int(getattr(pltpu.get_tpu_info(), "vmem_capacity_bytes", 0)) or (64 << 20)
    except Exception:   # no device / interpret mode: assume the smallest generation (v7x)
        vmem_cap = 64 << 20
    xb = jnp.dtype(projection_dtype).itemsize
    wbuf = 1 if _HAS_PIPELINE_MODE else 2            # weights single-buffered when supported
    weight_bytes = (Din * G * xb                     # wih0 (projection dtype)
                    + 3 * Hp * G * 4                 # whh0, wih1, whh1
                    + 2 * _SUB * G * 4               # b0, b1  ((1,G) tiles pad to 8 sublanes)
                    + Hp * Doutp * 4 + _SUB * Doutp * 4)   # wfc, bfc
    fixed = (wbuf * weight_bytes
             + 2 * Bt * Doutp * 4                    # double-buffered output block
             + 4 * Bt * Hp * 4)                      # h/c carries (VMEM scratch)
    per_t = 2 * Bt * Din * xb                        # double-buffered x chunk, per timestep
    budget = int(vmem_cap * 0.75)                    # ~25% headroom for compiler scratch
    if t_chunk is None:
        t_chunk = (budget - fixed) // per_t
    t_chunk = int(max(1, min(t_chunk, S, 512)))
    n_chunks = _cdiv(S, t_chunk)
    Sp = n_chunks * t_chunk
    tail_len = S - (n_chunks - 1) * t_chunk          # valid steps in the last chunk (static)
    vmem_limit = int(min(vmem_cap * 0.9,
                         max((fixed + per_t * t_chunk) * 1.25, 32 << 20)))

    # ---- weight prep: gates zero-padded to Hp lanes, rows to Hp/Din, FC cols to Doutp.
    # (Zero padding is exact because h/c start at 0: padded lanes stay identically 0.)
    f32 = jnp.float32
    wih0 = _pad_gate_cols(params["wih0"].astype(f32), H, Hp).astype(projection_dtype)
    whh0 = _pad_rows(_pad_gate_cols(params["whh0"].astype(f32), H, Hp), Hp)
    b0 = _pad_gate_cols(params["b0"].astype(f32), H, Hp)
    wih1 = _pad_rows(_pad_gate_cols(params["wih1"].astype(f32), H, Hp), Hp)
    whh1 = _pad_rows(_pad_gate_cols(params["whh1"].astype(f32), H, Hp), Hp)
    b1 = _pad_gate_cols(params["b1"].astype(f32), H, Hp)
    wfc = _pad_cols(_pad_rows(params["wfc"].astype(f32), Hp), Doutp)
    bfc = _pad_cols(params["bfc"].astype(f32), Doutp)

    # ---- time-major, batch/seq-padded input: (Sp, Bp, Din).
    # TODO(synk): on v5e (lowest HBM bw) this transpose is an extra XLA pass over x; a
    # transpose-free variant would fetch batch-first (Bt, t_chunk, Din) blocks and
    # relayout per chunk in-kernel on the (otherwise idle) XLU.
    x_tm = jnp.transpose(x_bsd, (1, 0, 2)).astype(projection_dtype)
    x_pad = jnp.zeros((Sp, Bp, Din), projection_dtype).at[:S, :B, :].set(x_tm)

    kernel = _build_kernel(tail_len, _unroll_cap(Bt, Hp))

    def _call(single_buffer_weights):
        def const_spec(shape):
            idx = lambda b, s: (0,) * len(shape)
            if single_buffer_weights:
                # constant index_map -> never re-fetched; 1 buffer halves weight VMEM
                return pl.BlockSpec(shape, idx, pipeline_mode=pl.Buffered(1))
            return pl.BlockSpec(shape, idx)

        grid_spec = pltpu.PrefetchScalarGridSpec(
            num_scalar_prefetch=0,
            grid=(batch_tiles, n_chunks),
            in_specs=[
                pl.BlockSpec((t_chunk, Bt, Din), lambda b, s: (s, b, 0)),  # x (streamed)
                const_spec((Din, G)),       # wih0
                const_spec((Hp, G)),        # whh0
                const_spec((1, G)),         # b0
                const_spec((Hp, G)),        # wih1
                const_spec((Hp, G)),        # whh1
                const_spec((1, G)),         # b1
                const_spec((Hp, Doutp)),    # wfc
                const_spec((1, Doutp)),     # bfc
            ],
            out_specs=pl.BlockSpec((Bt, Doutp), lambda b, s: (b, 0)),
            scratch_shapes=[pltpu.VMEM((Bt, Hp), jnp.float32)] * 4,   # h0, c0, h1, c1
        )
        return pl.pallas_call(
            kernel,
            out_shape=jax.ShapeDtypeStruct((Bp, Doutp), jnp.float32),
            grid_spec=grid_spec,
            compiler_params=pltpu.CompilerParams(
                dimension_semantics=("parallel", "arbitrary"),  # batch tiles || ; S carried
                vmem_limit_bytes=vmem_limit),
        )(x_pad, wih0, whh0, b0, wih1, whh1, b1, wfc, bfc)

    if _HAS_PIPELINE_MODE:
        try:
            out_padded = _call(True)
        except Exception:   # pipeline_mode accepted at construction but not honored here
            out_padded = _call(False)
    else:
        out_padded = _call(False)

    return out_padded[:B, :Dout]


# ---------------------------------------------------------------------------
# Parameters / reference
# ---------------------------------------------------------------------------
def make_params(key, input_dim, hidden_dim, output_dim):
    """Deterministic synthetic parameters matching nn.LSTM(num_layers=2) + nn.Linear,
    stored pre-transposed relative to PyTorch ((out, in) -> (in, out))."""
    ks = jax.random.split(key, 10)
    H = hidden_dim
    scale = 0.1

    def rnd(k, shape):
        return scale * jax.random.normal(k, shape, dtype=jnp.float32)

    wih0 = rnd(ks[0], (input_dim, 4 * H))
    whh0 = rnd(ks[1], (H, 4 * H))
    b0 = rnd(ks[2], (1, 4 * H)) + rnd(ks[3], (1, 4 * H))    # b_ih_l0 + b_hh_l0
    wih1 = rnd(ks[4], (H, 4 * H))
    whh1 = rnd(ks[5], (H, 4 * H))
    b1 = rnd(ks[6], (1, 4 * H)) + rnd(ks[7], (1, 4 * H))    # b_ih_l1 + b_hh_l1
    wfc = rnd(ks[8], (H, output_dim))
    bfc = rnd(ks[9], (1, output_dim))
    return dict(wih0=wih0, whh0=whh0, b0=b0,
                wih1=wih1, whh1=whh1, b1=b1,
                wfc=wfc, bfc=bfc)


def reference_forward(x_bsd, params):
    """Pure-JAX reference (same math as torch's 2-layer LSTM forward + Linear)."""
    B, S, _ = x_bsd.shape
    H = params["whh0"].shape[0]

    def cell(x_t, h, c, wih, whh, b):
        gates = x_t @ wih + h @ whh + b
        i = jax.nn.sigmoid(gates[:, 0 * H:1 * H])
        f = jax.nn.sigmoid(gates[:, 1 * H:2 * H])
        g = jnp.tanh(gates[:, 2 * H:3 * H])
        o = jax.nn.sigmoid(gates[:, 3 * H:4 * H])
        c = f * c + i * g
        h = o * jnp.tanh(c)
        return h, c

    h0 = c0 = h1 = c1 = jnp.zeros((B, H), jnp.float32)
    for t in range(S):
        x_t = x_bsd[:, t, :]
        h0, c0 = cell(x_t, h0, c0, params["wih0"], params["whh0"], params["b0"])
        h1, c1 = cell(h0, h1, c1, params["wih1"], params["whh1"], params["b1"])
    return h1 @ params["wfc"] + params["bfc"]


if __name__ == "__main__":
    batch, seq, input_dim, hidden_dim, output_dim = 2, 8, 16, 32, 8

    key = jax.random.PRNGKey(0)
    k_x, k_p = jax.random.split(key)
    x = jax.random.normal(k_x, (batch, seq, input_dim), dtype=jnp.float32)
    params = make_params(k_p, input_dim, hidden_dim, output_dim)
    ref = reference_forward(x, params)

    # t_chunk=3 -> grid (1, 3) with a 2-step tail chunk: exercises S-streaming, the
    # VMEM-resident carries across chunks, and the static tail-loop path.
    out = sequence_model_forward(x, params, t_chunk=3)
    out = jax.block_until_ready(out)
    assert out.shape == (batch, output_dim)
    assert jnp.allclose(out, ref, rtol=1e-3, atol=1e-4), "mismatch vs reference (t_chunk=3)"

    # default: VMEM-model-driven t_chunk (whole sequence in one chunk at this size)
    out2 = jax.block_until_ready(sequence_model_forward(x, params))
    assert jnp.allclose(out2, ref, rtol=1e-3, atol=1e-4), "mismatch vs reference (auto t_chunk)"

    print("KERNEL_OK")
</pallas_src>

<mosaic_0001>
module attributes {stable_mosaic.version = 11 : i64} {
  func.func @kernel(%arg0: i32, %arg1: i32, %arg2: memref<3x8x16xf32, #tpu.memory_space<vmem>>, %arg3: memref<16x512xf32, #tpu.memory_space<vmem>>, %arg4: memref<128x512xf32, #tpu.memory_space<vmem>>, %arg5: memref<1x512xf32, #tpu.memory_space<vmem>>, %arg6: memref<128x512xf32, #tpu.memory_space<vmem>>, %arg7: memref<128x512xf32, #tpu.memory_space<vmem>>, %arg8: memref<1x512xf32, #tpu.memory_space<vmem>>, %arg9: memref<128x128xf32, #tpu.memory_space<vmem>>, %arg10: memref<1x128xf32, #tpu.memory_space<vmem>>, %arg11: memref<8x128xf32, #tpu.memory_space<vmem>>, %arg12: memref<8x128xf32, #tpu.memory_space<vmem>>, %arg13: memref<8x128xf32, #tpu.memory_space<vmem>>, %arg14: memref<8x128xf32, #tpu.memory_space<vmem>>, %arg15: memref<8x128xf32, #tpu.memory_space<vmem>>) attributes {dimension_semantics = [#tpu.dimension_semantics<parallel>, #tpu.dimension_semantics<arbitrary>], iteration_bounds = array<i64: 1, 3>, scalar_prefetch = 0 : i64, scratch_operands = 4 : i64, tpu.core_type = #tpu.core_type<tc>, window_params = [{transform_indices = @transform_0, window_bounds = array<i64: 3, 8, 16>}, {pipeline_mode = #tpu.pipeline_mode<synchronous>, transform_indices = @transform_1, window_bounds = array<i64: 16, 512>}, {pipeline_mode = #tpu.pipeline_mode<synchronous>, transform_indices = @transform_2, window_bounds = array<i64: 128, 512>}, {pipeline_mode = #tpu.pipeline_mode<synchronous>, transform_indices = @transform_3, window_bounds = array<i64: 1, 512>}, {pipeline_mode = #tpu.pipeline_mode<synchronous>, transform_indices = @transform_4, window_bounds = array<i64: 128, 512>}, {pipeline_mode = #tpu.pipeline_mode<synchronous>, transform_indices = @transform_5, window_bounds = array<i64: 128, 512>}, {pipeline_mode = #tpu.pipeline_mode<synchronous>, transform_indices = @transform_6, window_bounds = array<i64: 1, 512>}, {pipeline_mode = #tpu.pipeline_mode<synchronous>, transform_indices = @transform_7, window_bounds = array<i64: 128, 128>}, {pipeline_mode = #tpu.pipeline_mode<synchronous>, transform_indices = @transform_8, window_bounds = array<i64: 1, 128>}, {transform_indices = @transform_9, window_bounds = array<i64: 8, 128>}]} {
    %c0_i32 = arith.constant 0 : i32
    %0 = arith.cmpi eq, %arg1, %c0_i32 : i32
    %1 = arith.extui %0 : i1 to i32
    %c0_i32_0 = arith.constant 0 : i32
    %2 = arith.cmpi ne, %1, %c0_i32_0 : i32
    scf.if %2 {
      %cst = arith.constant 0.000000e+00 : f32
      %18 = vector.broadcast %cst : f32 to vector<8x128xf32>
      %c0_9 = arith.constant 0 : index
      %c0_10 = arith.constant 0 : index
      %19 = vector.load %arg12[%c0_9, %c0_10] : memref<8x128xf32, #tpu.memory_space<vmem>>, vector<8x128xf32>
      tpu.vector_store %arg12[%c0_9, %c0_10], %18 {strides = array<i32>} : memref<8x128xf32, #tpu.memory_space<vmem>>, vector<8x128xf32>,
      %cst_11 = arith.constant 0.000000e+00 : f32
      %20 = vector.broadcast %cst_11 : f32 to vector<8x128xf32>
      %c0_12 = arith.constant 0 : index
      %c0_13 = arith.constant 0 : index
      %21 = vector.load %arg13[%c0_12, %c0_13] : memref<8x128xf32, #tpu.memory_space<vmem>>, vector<8x128xf32>
      tpu.vector_store %arg13[%c0_12, %c0_13], %20 {strides = array<i32>} : memref<8x128xf32, #tpu.memory_space<vmem>>, vector<8x128xf32>,
      %cst_14 = arith.constant 0.000000e+00 : f32
      %22 = vector.broadcast %cst_14 : f32 to vector<8x128xf32>
      %c0_15 = arith.constant 0 : index
      %c0_16 = arith.constant 0 : index
      %23 = vector.load %arg14[%c0_15, %c0_16] : memref<8x128xf32, #tpu.memory_space<vmem>>, vector<8x128xf32>
      tpu.vector_store %arg14[%c0_15, %c0_16], %22 {strides = array<i32>} : memref<8x128xf32, #tpu.memory_space<vmem>>, vector<8x128xf32>,
      %cst_17 = arith.constant 0.000000e+00 : f32
      %24 = vector.broadcast %cst_17 : f32 to vector<8x128xf32>
      %c0_18 = arith.constant 0 : index
      %c0_19 = arith.constant 0 : index
      %25 = vector.load %arg15[%c0_18, %c0_19] : memref<8x128xf32, #tpu.memory_space<vmem>>, vector<8x128xf32>
      tpu.vector_store %arg15[%c0_18, %c0_19], %24 {strides = array<i32>} : memref<8x128xf32, #tpu.memory_space<vmem>>, vector<8x128xf32>,
    } else {
    }
    %c0 = arith.constant 0 : index
    %c0_1 = arith.constant 0 : index
    %3 = vector.load %arg5[%c0, %c0_1] : memref<1x512xf32, #tpu.memory_space<vmem>>, vector<1x512xf32>
    %4 = vector.shape_cast %3 : vector<1x512xf32> to vector<1x512xf32>
    %5 = vector.broadcast %4 : vector<1x512xf32> to vector<8x512xf32>
    %c0_2 = arith.constant 0 : index
    %c0_3 = arith.constant 0 : index
    %6 = vector.load %arg8[%c0_2, %c0_3] : memref<1x512xf32, #tpu.memory_space<vmem>>, vector<1x512xf32>
    %7 = vector.shape_cast %6 : vector<1x512xf32> to vector<1x512xf32>
    %8 = vector.broadcast %7 : vector<1x512xf32> to vector<8x512xf32>
    %c2_i32 = arith.constant 2 : i32
    %9 = arith.cmpi ne, %arg1, %c2_i32 : i32
    %10 = arith.extui %9 : i1 to i32
    %c0_i32_4 = arith.constant 0 : i32
    %11 = arith.cmpi ne, %10, %c0_i32_4 : i32
    scf.if %11 {
      %c0_9 = arith.constant 0 : index
      %c0_10 = arith.constant 0 : index
      %18 = vector.load %arg12[%c0_9, %c0_10] : memref<8x128xf32, #tpu.memory_space<vmem>>, vector<8x128xf32>
      %c0_11 = arith.constant 0 : index
      %c0_12 = arith.constant 0 : index
      %19 = vector.load %arg13[%c0_11, %c0_12] : memref<8x128xf32, #tpu.memory_space<vmem>>, vector<8x128xf32>
      %c0_13 = arith.constant 0 : index
      %c0_14 = arith.constant 0 : index
      %20 = vector.load %arg14[%c0_13, %c0_14] : memref<8x128xf32, #tpu.memory_space<vmem>>, vector<8x128xf32>
      %c0_15 = arith.constant 0 : index
      %c0_16 = arith.constant 0 : index
      %21 = vector.load %arg15[%c0_15, %c0_16] : memref<8x128xf32, #tpu.memory_space<vmem>>, vector<8x128xf32>
      %c0_17 = arith.constant 0 : index
      %c0_18 = arith.constant 0 : index
      %c0_19 = arith.constant 0 : index
      %22 = vector.load %arg2[%c0_17, %c0_18, %c0_19] : memref<3x8x16xf32, #tpu.memory_space<vmem>>, vector<1x8x16xf32>
      %23 = vector.shape_cast %22 : vector<1x8x16xf32> to vector<8x16xf32>
      %c0_20 = arith.constant 0 : index
      %c0_21 = arith.constant 0 : index
      %24 = vector.load %arg3[%c0_20, %c0_21] : memref<16x512xf32, #tpu.memory_space<vmem>>, vector<16x512xf32>
      %cst = arith.constant dense<0.000000e+00> : vector<8x512xf32>
      %25 = tpu.matmul %23, %24, %cst {dimension_numbers = #tpu.dot_dimension_numbers<[1], [0], [0], [1], [0, 0, 1, 1], [], []>} : vector<8x16xf32>, vector<16x512xf32>, vector<8x512xf32> -> vector<8x512xf32>
      %26 = arith.addf %25, %5 : vector<8x512xf32>
      %c0_i32_22 = arith.constant 0 : i32
      %c1_i32 = arith.constant 1 : i32
      %27 = arith.addi %c0_i32_22, %c1_i32 : i32
      %c2_i32_23 = arith.constant 2 : i32
      %28 = arith.minsi %27, %c2_i32_23 : i32
      %29 = arith.index_cast %28 : i32 to index
      %c0_24 = arith.constant 0 : index
      %c0_25 = arith.constant 0 : index
      %30 = vector.load %arg2[%29, %c0_24, %c0_25] : memref<3x8x16xf32, #tpu.memory_space<vmem>>, vector<1x8x16xf32>
      %31 = vector.shape_cast %30 : vector<1x8x16xf32> to vector<8x16xf32>
      %c0_26 = arith.constant 0 : index
      %c0_27 = arith.constant 0 : index
      %32 = vector.load %arg3[%c0_26, %c0_27] : memref<16x512xf32, #tpu.memory_space<vmem>>, vector<16x512xf32>
      %cst_28 = arith.constant dense<0.000000e+00> : vector<8x512xf32>
      %33 = tpu.matmul %31, %32, %cst_28 {dimension_numbers = #tpu.dot_dimension_numbers<[1], [0], [0], [1], [0, 0, 1, 1], [], []>} : vector<8x16xf32>, vector<16x512xf32>, vector<8x512xf32> -> vector<8x512xf32>
      %34 = arith.addf %33, %5 : vector<8x512xf32>
      %c0_29 = arith.constant 0 : index
      %c0_30 = arith.constant 0 : index
      %35 = vector.load %arg7[%c0_29, %c0_30] : memref<128x512xf32, #tpu.memory_space<vmem>>, vector<128x512xf32>
      %cst_31 = arith.constant dense<0.000000e+00> : vector<8x512xf32>
      %36 = tpu.matmul %20, %35, %cst_31 {dimension_numbers = #tpu.dot_dimension_numbers<[1], [0], [0], [1], [0, 0, 1, 1], [], []>} : vector<8x128xf32>, vector<128x512xf32>, vector<8x512xf32> -> vector<8x512xf32>
      %37 = arith.addf %36, %8 : vector<8x512xf32>
      %c0_32 = arith.constant 0 : index
      %c0_33 = arith.constant 0 : index
      %38 = vector.load %arg4[%c0_32, %c0_33] : memref<128x512xf32, #tpu.memory_space<vmem>>, vector<128x512xf32>
      %cst_34 = arith.constant dense<0.000000e+00> : vector<8x512xf32>
      %39 = tpu.matmul %18, %38, %cst_34 {dimension_numbers = #tpu.dot_dimension_numbers<[1], [0], [0], [1], [0, 0, 1, 1], [], []>} : vector<8x128xf32>, vector<128x512xf32>, vector<8x512xf32> -> vector<8x512xf32>
      %40 = arith.addf %26, %39 : vector<8x512xf32>
      %41 = vector.extract_strided_slice %40 {offsets = [0, 0], sizes = [8, 128], strides = [1, 1]} : vector<8x512xf32> to vector<8x128xf32>
      %42 = arith.negf %41 : vector<8x128xf32>
      %43 = math.exp %42 : vector<8x128xf32>
      %cst_35 = arith.constant 1.000000e+00 : f32
      %44 = vector.broadcast %cst_35 : f32 to vector<8x128xf32>
      %45 = arith.addf %44, %43 : vector<8x128xf32>
      %46 = arith.divf %44, %45 : vector<8x128xf32>
      %47 = vector.extract_strided_slice %40 {offsets = [0, 128], sizes = [8, 128], strides = [1, 1]} : vector<8x512xf32> to vector<8x128xf32>
      %48 = arith.negf %47 : vector<8x128xf32>
      %49 = math.exp %48 : vector<8x128xf32>
      %cst_36 = arith.constant 1.000000e+00 : f32
      %50 = vector.broadcast %cst_36 : f32 to vector<8x128xf32>
      %51 = arith.addf %50, %49 : vector<8x128xf32>
      %52 = arith.divf %50, %51 : vector<8x128xf32>
      %53 = vector.extract_strided_slice %40 {offsets = [0, 256], sizes = [8, 128], strides = [1, 1]} : vector<8x512xf32> to vector<8x128xf32>
      %54 = math.tanh %53 : vector<8x128xf32>
      %55 = vector.extract_strided_slice %40 {offsets = [0, 384], sizes = [8, 128], strides = [1, 1]} : vector<8x512xf32> to vector<8x128xf32>
      %56 = arith.negf %55 : vector<8x128xf32>
      %57 = math.exp %56 : vector<8x128xf32>
      %cst_37 = arith.constant 1.000000e+00 : f32
      %58 = vector.broadcast %cst_37 : f32 to vector<8x128xf32>
      %59 = arith.addf %58, %57 : vector<8x128xf32>
      %60 = arith.divf %58, %59 : vector<8x128xf32>
      %61 = arith.mulf %52, %19 : vector<8x128xf32>
      %62 = arith.mulf %46, %54 : vector<8x128xf32>
      %63 = arith.addf %61, %62 : vector<8x128xf32>
      %64 = math.tanh %63 : vector<8x128xf32>
      %65 = arith.mulf %60, %64 : vector<8x128xf32>
      %c0_38 = arith.constant 0 : index
      %c0_39 = arith.constant 0 : index
      %66 = vector.load %arg6[%c0_38, %c0_39] : memref<128x512xf32, #tpu.memory_space<vmem>>, vector<128x512xf32>
      %cst_40 = arith.constant dense<0.000000e+00> : vector<8x512xf32>
      %67 = tpu.matmul %65, %66, %cst_40 {dimension_numbers = #tpu.dot_dimension_numbers<[1], [0], [0], [1], [0, 0, 1, 1], [], []>} : vector<8x128xf32>, vector<128x512xf32>, vector<8x512xf32> -> vector<8x512xf32>
      %68 = arith.addf %37, %67 : vector<8x512xf32>
      %69 = vector.extract_strided_slice %68 {offsets = [0, 0], sizes = [8, 128], strides = [1, 1]} : vector<8x512xf32> to vector<8x128xf32>
      %70 = arith.negf %69 : vector<8x128xf32>
      %71 = math.exp %70 : vector<8x128xf32>
      %cst_41 = arith.constant 1.000000e+00 : f32
      %72 = vector.broadcast %cst_41 : f32 to vector<8x128xf32>
      %73 = arith.addf %72, %71 : vector<8x128xf32>
      %74 = arith.divf %72, %73 : vector<8x128xf32>
      %75 = vector.extract_strided_slice %68 {offsets = [0, 128], sizes = [8, 128], strides = [1, 1]} : vector<8x512xf32> to vector<8x128xf32>
      %76 = arith.negf %75 : vector<8x128xf32>
      %77 = math.exp %76 : vector<8x128xf32>
      %cst_42 = arith.constant 1.000000e+00 : f32
      %78 = vector.broadcast %cst_42 : f32 to vector<8x128xf32>
      %79 = arith.addf %78, %77 : vector<8x128xf32>
      %80 = arith.divf %78, %79 : vector<8x128xf32>
      %81 = vector.extract_strided_slice %68 {offsets = [0, 256], sizes = [8, 128], strides = [1, 1]} : vector<8x512xf32> to vector<8x128xf32>
      %82 = math.tanh %81 : vector<8x128xf32>
      %83 = vector.extract_strided_slice %68 {offsets = [0, 384], sizes = [8, 128], strides = [1, 1]} : vector<8x512xf32> to vector<8x128xf32>
      %84 = arith.negf %83 : vector<8x128xf32>
      %85 = math.exp %84 : vector<8x128xf32>
      %cst_43 = arith.constant 1.000000e+00 : f32
      %86 = vector.broadcast %cst_43 : f32 to vector<8x128xf32>
      %87 = arith.addf %86, %85 : vector<8x128xf32>
      %88 = arith.divf %86, %87 : vector<8x128xf32>
      %89 = arith.mulf %80, %21 : vector<8x128xf32>
      %90 = arith.mulf %74, %82 : vector<8x128xf32>
      %91 = arith.addf %89, %90 : vector<8x128xf32>
      %92 = math.tanh %91 : vector<8x128xf32>
      %93 = arith.mulf %88, %92 : vector<8x128xf32>
      %c1_i32_44 = arith.constant 1 : i32
      %c1_i32_45 = arith.constant 1 : i32
      %94 = arith.addi %c1_i32_44, %c1_i32_45 : i32
      %c2_i32_46 = arith.constant 2 : i32
      %95 = arith.minsi %94, %c2_i32_46 : i32
      %96 = arith.index_cast %95 : i32 to index
      %c0_47 = arith.constant 0 : index
      %c0_48 = arith.constant 0 : index
      %97 = vector.load %arg2[%96, %c0_47, %c0_48] : memref<3x8x16xf32, #tpu.memory_space<vmem>>, vector<1x8x16xf32>
      %98 = vector.shape_cast %97 : vector<1x8x16xf32> to vector<8x16xf32>
      %c0_49 = arith.constant 0 : index
      %c0_50 = arith.constant 0 : index
      %99 = vector.load %arg3[%c0_49, %c0_50] : memref<16x512xf32, #tpu.memory_space<vmem>>, vector<16x512xf32>
      %cst_51 = arith.constant dense<0.000000e+00> : vector<8x512xf32>
      %100 = tpu.matmul %98, %99, %cst_51 {dimension_numbers = #tpu.dot_dimension_numbers<[1], [0], [0], [1], [0, 0, 1, 1], [], []>} : vector<8x16xf32>, vector<16x512xf32>, vector<8x512xf32> -> vector<8x512xf32>
      %101 = arith.addf %100, %5 : vector<8x512xf32>
      %c0_52 = arith.constant 0 : index
      %c0_53 = arith.constant 0 : index
      %102 = vector.load %arg7[%c0_52, %c0_53] : memref<128x512xf32, #tpu.memory_space<vmem>>, vector<128x512xf32>
      %cst_54 = arith.constant dense<0.000000e+00> : vector<8x512xf32>
      %103 = tpu.matmul %93, %102, %cst_54 {dimension_numbers = #tpu.dot_dimension_numbers<[1], [0], [0], [1], [0, 0, 1, 1], [], []>} : vector<8x128xf32>, vector<128x512xf32>, vector<8x512xf32> -> vector<8x512xf32>
      %104 = arith.addf %103, %8 : vector<8x512xf32>
      %c0_55 = arith.constant 0 : index
      %c0_56 = arith.constant 0 : index
      %105 = vector.load %arg4[%c0_55, %c0_56] : memref<128x512xf32, #tpu.memory_space<vmem>>, vector<128x512xf32>
      %cst_57 = arith.constant dense<0.000000e+00> : vector<8x512xf32>
      %106 = tpu.matmul %65, %105, %cst_57 {dimension_numbers = #tpu.dot_dimension_numbers<[1], [0], [0], [1], [0, 0, 1, 1], [], []>} : vector<8x128xf32>, vector<128x512xf32>, vector<8x512xf32> -> vector<8x512xf32>
      %107 = arith.addf %34, %106 : vector<8x512xf32>
      %108 = vector.extract_strided_slice %107 {offsets = [0, 0], sizes = [8, 128], strides = [1, 1]} : vector<8x512xf32> to vector<8x128xf32>
      %109 = arith.negf %108 : vector<8x128xf32>
      %110 = math.exp %109 : vector<8x128xf32>
      %cst_58 = arith.constant 1.000000e+00 : f32
      %111 = vector.broadcast %cst_58 : f32 to vector<8x128xf32>
      %112 = arith.addf %111, %110 : vector<8x128xf32>
      %113 = arith.divf %111, %112 : vector<8x128xf32>
      %114 = vector.extract_strided_slice %107 {offsets = [0, 128], sizes = [8, 128], strides = [1, 1]} : vector<8x512xf32> to vector<8x128xf32>
      %115 = arith.negf %114 : vector<8x128xf32>
      %116 = math.exp %115 : vector<8x128xf32>
      %cst_59 = arith.constant 1.000000e+00 : f32
      %117 = vector.broadcast %cst_59 : f32 to vector<8x128xf32>
      %118 = arith.addf %117, %116 : vector<8x128xf32>
      %119 = arith.divf %117, %118 : vector<8x128xf32>
      %120 = vector.extract_strided_slice %107 {offsets = [0, 256], sizes = [8, 128], strides = [1, 1]} : vector<8x512xf32> to vector<8x128xf32>
      %121 = math.tanh %120 : vector<8x128xf32>
      %122 = vector.extract_strided_slice %107 {offsets = [0, 384], sizes = [8, 128], strides = [1, 1]} : vector<8x512xf32> to vector<8x128xf32>
      %123 = arith.negf %122 : vector<8x128xf32>
      %124 = math.exp %123 : vector<8x128xf32>
      %cst_60 = arith.constant 1.000000e+00 : f32
      %125 = vector.broadcast %cst_60 : f32 to vector<8x128xf32>
      %126 = arith.addf %125, %124 : vector<8x128xf32>
      %127 = arith.divf %125, %126 : vector<8x128xf32>
      %128 = arith.mulf %119, %63 : vector<8x128xf32>
      %129 = arith.mulf %113, %121 : vector<8x128xf32>
      %130 = arith.addf %128, %129 : vector<8x128xf32>
      %131 = math.tanh %130 : vector<8x128xf32>
      %132 = arith.mulf %127, %131 : vector<8x128xf32>
      %c0_61 = arith.constant 0 : index
      %c0_62 = arith.constant 0 : index
      %133 = vector.load %arg6[%c0_61, %c0_62] : memref<128x512xf32, #tpu.memory_space<vmem>>, vector<128x512xf32>
      %cst_63 = arith.constant dense<0.000000e+00> : vector<8x512xf32>
      %134 = tpu.matmul %132, %133, %cst_63 {dimension_numbers = #tpu.dot_dimension_numbers<[1], [0], [0], [1], [0, 0, 1, 1], [], []>} : vector<8x128xf32>, vector<128x512xf32>, vector<8x512xf32> -> vector<8x512xf32>
      %135 = arith.addf %104, %134 : vector<8x512xf32>
      %136 = vector.extract_strided_slice %135 {offsets = [0, 0], sizes = [8, 128], strides = [1, 1]} : vector<8x512xf32> to vector<8x128xf32>
      %137 = arith.negf %136 : vector<8x128xf32>
      %138 = math.exp %137 : vector<8x128xf32>
      %cst_64 = arith.constant 1.000000e+00 : f32
      %139 = vector.broadcast %cst_64 : f32 to vector<8x128xf32>
      %140 = arith.addf %139, %138 : vector<8x128xf32>
      %141 = arith.divf %139, %140 : vector<8x128xf32>
      %142 = vector.extract_strided_slice %135 {offsets = [0, 128], sizes = [8, 128], strides = [1, 1]} : vector<8x512xf32> to vector<8x128xf32>
      %143 = arith.negf %142 : vector<8x128xf32>
      %144 = math.exp %143 : vector<8x128xf32>
      %cst_65 = arith.constant 1.000000e+00 : f32
      %145 = vector.broadcast %cst_65 : f32 to vector<8x128xf32>
      %146 = arith.addf %145, %144 : vector<8x128xf32>
      %147 = arith.divf %145, %146 : vector<8x128xf32>
      %148 = vector.extract_strided_slice %135 {offsets = [0, 256], sizes = [8, 128], strides = [1, 1]} : vector<8x512xf32> to vector<8x128xf32>
      %149 = math.tanh %148 : vector<8x128xf32>
      %150 = vector.extract_strided_slice %135 {offsets = [0, 384], sizes = [8, 128], strides = [1, 1]} : vector<8x512xf32> to vector<8x128xf32>
      %151 = arith.negf %150 : vector<8x128xf32>
      %152 = math.exp %151 : vector<8x128xf32>
      %cst_66 = arith.constant 1.000000e+00 : f32
      %153 = vector.broadcast %cst_66 : f32 to vector<8x128xf32>
      %154 = arith.addf %153, %152 : vector<8x128xf32>
      %155 = arith.divf %153, %154 : vector<8x128xf32>
      %156 = arith.mulf %147, %91 : vector<8x128xf32>
      %157 = arith.mulf %141, %149 : vector<8x128xf32>
      %158 = arith.addf %156, %157 : vector<8x128xf32>
      %159 = math.tanh %158 : vector<8x128xf32>
      %160 = arith.mulf %155, %159 : vector<8x128xf32>
      %c2_i32_67 = arith.constant 2 : i32
      %c1_i32_68 = arith.constant 1 : i32
      %161 = arith.addi %c2_i32_67, %c1_i32_68 : i32
      %c2_i32_69 = arith.constant 2 : i32
      %162 = arith.minsi %161, %c2_i32_69 : i32
      %163 = arith.index_cast %162 : i32 to index
      %c0_70 = arith.constant 0 : index
      %c0_71 = arith.constant 0 : index
      %164 = vector.load %arg2[%163, %c0_70, %c0_71] : memref<3x8x16xf32, #tpu.memory_space<vmem>>, vector<1x8x16xf32>
      %165 = vector.shape_cast %164 : vector<1x8x16xf32> to vector<8x16xf32>
      %c0_72 = arith.constant 0 : index
      %c0_73 = arith.constant 0 : index
      %166 = vector.load %arg3[%c0_72, %c0_73] : memref<16x512xf32, #tpu.memory_space<vmem>>, vector<16x512xf32>
      %cst_74 = arith.constant dense<0.000000e+00> : vector<8x512xf32>
      %167 = tpu.matmul %165, %166, %cst_74 {dimension_numbers = #tpu.dot_dimension_numbers<[1], [0], [0], [1], [0, 0, 1, 1], [], []>} : vector<8x16xf32>, vector<16x512xf32>, vector<8x512xf32> -> vector<8x512xf32>
      %168 = arith.addf %167, %5 : vector<8x512xf32>
      %c0_75 = arith.constant 0 : index
      %c0_76 = arith.constant 0 : index
      %169 = vector.load %arg7[%c0_75, %c0_76] : memref<128x512xf32, #tpu.memory_space<vmem>>, vector<128x512xf32>
      %cst_77 = arith.constant dense<0.000000e+00> : vector<8x512xf32>
      %170 = tpu.matmul %160, %169, %cst_77 {dimension_numbers = #tpu.dot_dimension_numbers<[1], [0], [0], [1], [0, 0, 1, 1], [], []>} : vector<8x128xf32>, vector<128x512xf32>, vector<8x512xf32> -> vector<8x512xf32>
      %171 = arith.addf %170, %8 : vector<8x512xf32>
      %c0_78 = arith.constant 0 : index
      %c0_79 = arith.constant 0 : index
      %172 = vector.load %arg4[%c0_78, %c0_79] : memref<128x512xf32, #tpu.memory_space<vmem>>, vector<128x512xf32>
      %cst_80 = arith.constant dense<0.000000e+00> : vector<8x512xf32>
      %173 = tpu.matmul %132, %172, %cst_80 {dimension_numbers = #tpu.dot_dimension_numbers<[1], [0], [0], [1], [0, 0, 1, 1], [], []>} : vector<8x128xf32>, vector<128x512xf32>, vector<8x512xf32> -> vector<8x512xf32>
      %174 = arith.addf %101, %173 : vector<8x512xf32>
      %175 = vector.extract_strided_slice %174 {offsets = [0, 0], sizes = [8, 128], strides = [1, 1]} : vector<8x512xf32> to vector<8x128xf32>
      %176 = arith.negf %175 : vector<8x128xf32>
      %177 = math.exp %176 : vector<8x128xf32>
      %cst_81 = arith.constant 1.000000e+00 : f32
      %178 = vector.broadcast %cst_81 : f32 to vector<8x128xf32>
      %179 = arith.addf %178, %177 : vector<8x128xf32>
      %180 = arith.divf %178, %179 : vector<8x128xf32>
      %181 = vector.extract_strided_slice %174 {offsets = [0, 128], sizes = [8, 128], strides = [1, 1]} : vector<8x512xf32> to vector<8x128xf32>
      %182 = arith.negf %181 : vector<8x128xf32>
      %183 = math.exp %182 : vector<8x128xf32>
      %cst_82 = arith.constant 1.000000e+00 : f32
      %184 = vector.broadcast %cst_82 : f32 to vector<8x128xf32>
      %185 = arith.addf %184, %183 : vector<8x128xf32>
      %186 = arith.divf %184, %185 : vector<8x128xf32>
      %187 = vector.extract_strided_slice %174 {offsets = [0, 256], sizes = [8, 128], strides = [1, 1]} : vector<8x512xf32> to vector<8x128xf32>
      %188 = math.tanh %187 : vector<8x128xf32>
      %189 = vector.extract_strided_slice %174 {offsets = [0, 384], sizes = [8, 128], strides = [1, 1]} : vector<8x512xf32> to vector<8x128xf32>
      %190 = arith.negf %189 : vector<8x128xf32>
      %191 = math.exp %190 : vector<8x128xf32>
      %cst_83 = arith.constant 1.000000e+00 : f32
      %192 = vector.broadcast %cst_83 : f32 to vector<8x128xf32>
      %193 = arith.addf %192, %191 : vector<8x128xf32>
      %194 = arith.divf %192, %193 : vector<8x128xf32>
      %195 = arith.mulf %186, %130 : vector<8x128xf32>
      %196 = arith.mulf %180, %188 : vector<8x128xf32>
      %197 = arith.addf %195, %196 : vector<8x128xf32>
      %198 = math.tanh %197 : vector<8x128xf32>
      %199 = arith.mulf %194, %198 : vector<8x128xf32>
      %c0_84 = arith.constant 0 : index
      %c0_85 = arith.constant 0 : index
      %200 = vector.load %arg6[%c0_84, %c0_85] : memref<128x512xf32, #tpu.memory_space<vmem>>, vector<128x512xf32>
      %cst_86 = arith.constant dense<0.000000e+00> : vector<8x512xf32>
      %201 = tpu.matmul %199, %200, %cst_86 {dimension_numbers = #tpu.dot_dimension_numbers<[1], [0], [0], [1], [0, 0, 1, 1], [], []>} : vector<8x128xf32>, vector<128x512xf32>, vector<8x512xf32> -> vector<8x512xf32>
      %202 = arith.addf %171, %201 : vector<8x512xf32>
      %203 = vector.extract_strided_slice %202 {offsets = [0, 0], sizes = [8, 128], strides = [1, 1]} : vector<8x512xf32> to vector<8x128xf32>
      %204 = arith.negf %203 : vector<8x128xf32>
      %205 = math.exp %204 : vector<8x128xf32>
      %cst_87 = arith.constant 1.000000e+00 : f32
      %206 = vector.broadcast %cst_87 : f32 to vector<8x128xf32>
      %207 = arith.addf %206, %205 : vector<8x128xf32>
      %208 = arith.divf %206, %207 : vector<8x128xf32>
      %209 = vector.extract_strided_slice %202 {offsets = [0, 128], sizes = [8, 128], strides = [1, 1]} : vector<8x512xf32> to vector<8x128xf32>
      %210 = arith.negf %209 : vector<8x128xf32>
      %211 = math.exp %210 : vector<8x128xf32>
      %cst_88 = arith.constant 1.000000e+00 : f32
      %212 = vector.broadcast %cst_88 : f32 to vector<8x128xf32>
      %213 = arith.addf %212, %211 : vector<8x128xf32>
      %214 = arith.divf %212, %213 : vector<8x128xf32>
      %215 = vector.extract_strided_slice %202 {offsets = [0, 256], sizes = [8, 128], strides = [1, 1]} : vector<8x512xf32> to vector<8x128xf32>
      %216 = math.tanh %215 : vector<8x128xf32>
      %217 = vector.extract_strided_slice %202 {offsets = [0, 384], sizes = [8, 128], strides = [1, 1]} : vector<8x512xf32> to vector<8x128xf32>
      %218 = arith.negf %217 : vector<8x128xf32>
      %219 = math.exp %218 : vector<8x128xf32>
      %cst_89 = arith.constant 1.000000e+00 : f32
      %220 = vector.broadcast %cst_89 : f32 to vector<8x128xf32>
      %221 = arith.addf %220, %219 : vector<8x128xf32>
      %222 = arith.divf %220, %221 : vector<8x128xf32>
      %223 = arith.mulf %214, %158 : vector<8x128xf32>
      %224 = arith.mulf %208, %216 : vector<8x128xf32>
      %225 = arith.addf %223, %224 : vector<8x128xf32>
      %226 = math.tanh %225 : vector<8x128xf32>
      %227 = arith.mulf %222, %226 : vector<8x128xf32>
      %c3_i32 = arith.constant 3 : i32
      %c0_90 = arith.constant 0 : index
      %c0_91 = arith.constant 0 : index
      %228 = vector.load %arg12[%c0_90, %c0_91] : memref<8x128xf32, #tpu.memory_space<vmem>>, vector<8x128xf32>
      tpu.vector_store %arg12[%c0_90, %c0_91], %199 {strides = array<i32>} : memref<8x128xf32, #tpu.memory_space<vmem>>, vector<8x128xf32>,
      %c0_92 = arith.constant 0 : index
      %c0_93 = arith.constant 0 : index
      %229 = vector.load %arg13[%c0_92, %c0_93] : memref<8x128xf32, #tpu.memory_space<vmem>>, vector<8x128xf32>
      tpu.vector_store %arg13[%c0_92, %c0_93], %197 {strides = array<i32>} : memref<8x128xf32, #tpu.memory_space<vmem>>, vector<8x128xf32>,
      %c0_94 = arith.constant 0 : index
      %c0_95 = arith.constant 0 : index
      %230 = vector.load %arg14[%c0_94, %c0_95] : memref<8x128xf32, #tpu.memory_space<vmem>>, vector<8x128xf32>
      tpu.vector_store %arg14[%c0_94, %c0_95], %227 {strides = array<i32>} : memref<8x128xf32, #tpu.memory_space<vmem>>, vector<8x128xf32>,
      %c0_96 = arith.constant 0 : index
      %c0_97 = arith.constant 0 : index
      %231 = vector.load %arg15[%c0_96, %c0_97] : memref<8x128xf32, #tpu.memory_space<vmem>>, vector<8x128xf32>
      tpu.vector_store %arg15[%c0_96, %c0_97], %225 {strides = array<i32>} : memref<8x128xf32, #tpu.memory_space<vmem>>, vector<8x128xf32>,
    } else {
    }
    %c2_i32_5 = arith.constant 2 : i32
    %12 = arith.cmpi eq, %arg1, %c2_i32_5 : i32
    %13 = arith.extui %12 : i1 to i32
    %c0_i32_6 = arith.constant 0 : i32
    %14 = arith.cmpi ne, %13, %c0_i32_6 : i32
    scf.if %14 {
      %c0_9 = arith.constant 0 : index
      %c0_10 = arith.constant 0 : index
      %18 = vector.load %arg12[%c0_9, %c0_10] : memref<8x128xf32, #tpu.memory_space<vmem>>, vector<8x128xf32>
      %c0_11 = arith.constant 0 : index
      %c0_12 = arith.constant 0 : index
      %19 = vector.load %arg13[%c0_11, %c0_12] : memref<8x128xf32, #tpu.memory_space<vmem>>, vector<8x128xf32>
      %c0_13 = arith.constant 0 : index
      %c0_14 = arith.constant 0 : index
      %20 = vector.load %arg14[%c0_13, %c0_14] : memref<8x128xf32, #tpu.memory_space<vmem>>, vector<8x128xf32>
      %c0_15 = arith.constant 0 : index
      %c0_16 = arith.constant 0 : index
      %21 = vector.load %arg15[%c0_15, %c0_16] : memref<8x128xf32, #tpu.memory_space<vmem>>, vector<8x128xf32>
      %c0_17 = arith.constant 0 : index
      %c0_18 = arith.constant 0 : index
      %c0_19 = arith.constant 0 : index
      %22 = vector.load %arg2[%c0_17, %c0_18, %c0_19] : memref<3x8x16xf32, #tpu.memory_space<vmem>>, vector<1x8x16xf32>
      %23 = vector.shape_cast %22 : vector<1x8x16xf32> to vector<8x16xf32>
      %c0_20 = arith.constant 0 : index
      %c0_21 = arith.constant 0 : index
      %24 = vector.load %arg3[%c0_20, %c0_21] : memref<16x512xf32, #tpu.memory_space<vmem>>, vector<16x512xf32>
      %cst = arith.constant dense<0.000000e+00> : vector<8x512xf32>
      %25 = tpu.matmul %23, %24, %cst {dimension_numbers = #tpu.dot_dimension_numbers<[1], [0], [0], [1], [0, 0, 1, 1], [], []>} : vector<8x16xf32>, vector<16x512xf32>, vector<8x512xf32> -> vector<8x512xf32>
      %26 = arith.addf %25, %5 : vector<8x512xf32>
      %c0_i32_22 = arith.constant 0 : i32
      %c1_i32 = arith.constant 1 : i32
      %27 = arith.addi %c0_i32_22, %c1_i32 : i32
      %c1_i32_23 = arith.constant 1 : i32
      %28 = arith.minsi %27, %c1_i32_23 : i32
      %29 = arith.index_cast %28 : i32 to index
      %c0_24 = arith.constant 0 : index
      %c0_25 = arith.constant 0 : index
      %30 = vector.load %arg2[%29, %c0_24, %c0_25] : memref<3x8x16xf32, #tpu.memory_space<vmem>>, vector<1x8x16xf32>
      %31 = vector.shape_cast %30 : vector<1x8x16xf32> to vector<8x16xf32>
      %c0_26 = arith.constant 0 : index
      %c0_27 = arith.constant 0 : index
      %32 = vector.load %arg3[%c0_26, %c0_27] : memref<16x512xf32, #tpu.memory_space<vmem>>, vector<16x512xf32>
      %cst_28 = arith.constant dense<0.000000e+00> : vector<8x512xf32>
      %33 = tpu.matmul %31, %32, %cst_28 {dimension_numbers = #tpu.dot_dimension_numbers<[1], [0], [0], [1], [0, 0, 1, 1], [], []>} : vector<8x16xf32>, vector<16x512xf32>, vector<8x512xf32> -> vector<8x512xf32>
      %34 = arith.addf %33, %5 : vector<8x512xf32>
      %c0_29 = arith.constant 0 : index
      %c0_30 = arith.constant 0 : index
      %35 = vector.load %arg7[%c0_29, %c0_30] : memref<128x512xf32, #tpu.memory_space<vmem>>, vector<128x512xf32>
      %cst_31 = arith.constant dense<0.000000e+00> : vector<8x512xf32>
      %36 = tpu.matmul %20, %35, %cst_31 {dimension_numbers = #tpu.dot_dimension_numbers<[1], [0], [0], [1], [0, 0, 1, 1], [], []>} : vector<8x128xf32>, vector<128x512xf32>, vector<8x512xf32> -> vector<8x512xf32>
      %37 = arith.addf %36, %8 : vector<8x512xf32>
      %c0_32 = arith.constant 0 : index
      %c0_33 = arith.constant 0 : index
      %38 = vector.load %arg4[%c0_32, %c0_33] : memref<128x512xf32, #tpu.memory_space<vmem>>, vector<128x512xf32>
      %cst_34 = arith.constant dense<0.000000e+00> : vector<8x512xf32>
      %39 = tpu.matmul %18, %38, %cst_34 {dimension_numbers = #tpu.dot_dimension_numbers<[1], [0], [0], [1], [0, 0, 1, 1], [], []>} : vector<8x128xf32>, vector<128x512xf32>, vector<8x512xf32> -> vector<8x512xf32>
      %40 = arith.addf %26, %39 : vector<8x512xf32>
      %41 = vector.extract_strided_slice %40 {offsets = [0, 0], sizes = [8, 128], strides = [1, 1]} : vector<8x512xf32> to vector<8x128xf32>
      %42 = arith.negf %41 : vector<8x128xf32>
      %43 = math.exp %42 : vector<8x128xf32>
      %cst_35 = arith.constant 1.000000e+00 : f32
      %44 = vector.broadcast %cst_35 : f32 to vector<8x128xf32>
      %45 = arith.addf %44, %43 : vector<8x128xf32>
      %46 = arith.divf %44, %45 : vector<8x128xf32>
      %47 = vector.extract_strided_slice %40 {offsets = [0, 128], sizes = [8, 128], strides = [1, 1]} : vector<8x512xf32> to vector<8x128xf32>
      %48 = arith.negf %47 : vector<8x128xf32>
      %49 = math.exp %48 : vector<8x128xf32>
      %cst_36 = arith.constant 1.000000e+00 : f32
      %50 = vector.broadcast %cst_36 : f32 to vector<8x128xf32>
      %51 = arith.addf %50, %49 : vector<8x128xf32>
      %52 = arith.divf %50, %51 : vector<8x128xf32>
      %53 = vector.extract_strided_slice %40 {offsets = [0, 256], sizes = [8, 128], strides = [1, 1]} : vector<8x512xf32> to vector<8x128xf32>
      %54 = math.tanh %53 : vector<8x128xf32>
      %55 = vector.extract_strided_slice %40 {offsets = [0, 384], sizes = [8, 128], strides = [1, 1]} : vector<8x512xf32> to vector<8x128xf32>
      %56 = arith.negf %55 : vector<8x128xf32>
      %57 = math.exp %56 : vector<8x128xf32>
      %cst_37 = arith.constant 1.000000e+00 : f32
      %58 = vector.broadcast %cst_37 : f32 to vector<8x128xf32>
      %59 = arith.addf %58, %57 : vector<8x128xf32>
      %60 = arith.divf %58, %59 : vector<8x128xf32>
      %61 = arith.mulf %52, %19 : vector<8x128xf32>
      %62 = arith.mulf %46, %54 : vector<8x128xf32>
      %63 = arith.addf %61, %62 : vector<8x128xf32>
      %64 = math.tanh %63 : vector<8x128xf32>
      %65 = arith.mulf %60, %64 : vector<8x128xf32>
      %c0_38 = arith.constant 0 : index
      %c0_39 = arith.constant 0 : index
      %66 = vector.load %arg6[%c0_38, %c0_39] : memref<128x512xf32, #tpu.memory_space<vmem>>, vector<128x512xf32>
      %cst_40 = arith.constant dense<0.000000e+00> : vector<8x512xf32>
      %67 = tpu.matmul %65, %66, %cst_40 {dimension_numbers = #tpu.dot_dimension_numbers<[1], [0], [0], [1], [0, 0, 1, 1], [], []>} : vector<8x128xf32>, vector<128x512xf32>, vector<8x512xf32> -> vector<8x512xf32>
      %68 = arith.addf %37, %67 : vector<8x512xf32>
      %69 = vector.extract_strided_slice %68 {offsets = [0, 0], sizes = [8, 128], strides = [1, 1]} : vector<8x512xf32> to vector<8x128xf32>
      %70 = arith.negf %69 : vector<8x128xf32>
      %71 = math.exp %70 : vector<8x128xf32>
      %cst_41 = arith.constant 1.000000e+00 : f32
      %72 = vector.broadcast %cst_41 : f32 to vector<8x128xf32>
      %73 = arith.addf %72, %71 : vector<8x128xf32>
      %74 = arith.divf %72, %73 : vector<8x128xf32>
      %75 = vector.extract_strided_slice %68 {offsets = [0, 128], sizes = [8, 128], strides = [1, 1]} : vector<8x512xf32> to vector<8x128xf32>
      %76 = arith.negf %75 : vector<8x128xf32>
      %77 = math.exp %76 : vector<8x128xf32>
      %cst_42 = arith.constant 1.000000e+00 : f32
      %78 = vector.broadcast %cst_42 : f32 to vector<8x128xf32>
      %79 = arith.addf %78, %77 : vector<8x128xf32>
      %80 = arith.divf %78, %79 : vector<8x128xf32>
      %81 = vector.extract_strided_slice %68 {offsets = [0, 256], sizes = [8, 128], strides = [1, 1]} : vector<8x512xf32> to vector<8x128xf32>
      %82 = math.tanh %81 : vector<8x128xf32>
      %83 = vector.extract_strided_slice %68 {offsets = [0, 384], sizes = [8, 128], strides = [1, 1]} : vector<8x512xf32> to vector<8x128xf32>
      %84 = arith.negf %83 : vector<8x128xf32>
      %85 = math.exp %84 : vector<8x128xf32>
      %cst_43 = arith.constant 1.000000e+00 : f32
      %86 = vector.broadcast %cst_43 : f32 to vector<8x128xf32>
      %87 = arith.addf %86, %85 : vector<8x128xf32>
      %88 = arith.divf %86, %87 : vector<8x128xf32>
      %89 = arith.mulf %80, %21 : vector<8x128xf32>
      %90 = arith.mulf %74, %82 : vector<8x128xf32>
      %91 = arith.addf %89, %90 : vector<8x128xf32>
      %92 = math.tanh %91 : vector<8x128xf32>
      %93 = arith.mulf %88, %92 : vector<8x128xf32>
      %c1_i32_44 = arith.constant 1 : i32
      %c1_i32_45 = arith.constant 1 : i32
      %94 = arith.addi %c1_i32_44, %c1_i32_45 : i32
      %c1_i32_46 = arith.constant 1 : i32
      %95 = arith.minsi %94, %c1_i32_46 : i32
      %96 = arith.index_cast %95 : i32 to index
      %c0_47 = arith.constant 0 : index
      %c0_48 = arith.constant 0 : index
      %97 = vector.load %arg2[%96, %c0_47, %c0_48] : memref<3x8x16xf32, #tpu.memory_space<vmem>>, vector<1x8x16xf32>
      %98 = vector.shape_cast %97 : vector<1x8x16xf32> to vector<8x16xf32>
      %c0_49 = arith.constant 0 : index
      %c0_50 = arith.constant 0 : index
      %99 = vector.load %arg3[%c0_49, %c0_50] : memref<16x512xf32, #tpu.memory_space<vmem>>, vector<16x512xf32>
      %cst_51 = arith.constant dense<0.000000e+00> : vector<8x512xf32>
      %100 = tpu.matmul %98, %99, %cst_51 {dimension_numbers = #tpu.dot_dimension_numbers<[1], [0], [0], [1], [0, 0, 1, 1], [], []>} : vector<8x16xf32>, vector<16x512xf32>, vector<8x512xf32> -> vector<8x512xf32>
      %101 = arith.addf %100, %5 : vector<8x512xf32>
      %c0_52 = arith.constant 0 : index
      %c0_53 = arith.constant 0 : index
      %102 = vector.load %arg7[%c0_52, %c0_53] : memref<128x512xf32, #tpu.memory_space<vmem>>, vector<128x512xf32>
      %cst_54 = arith.constant dense<0.000000e+00> : vector<8x512xf32>
      %103 = tpu.matmul %93, %102, %cst_54 {dimension_numbers = #tpu.dot_dimension_numbers<[1], [0], [0], [1], [0, 0, 1, 1], [], []>} : vector<8x128xf32>, vector<128x512xf32>, vector<8x512xf32> -> vector<8x512xf32>
      %104 = arith.addf %103, %8 : vector<8x512xf32>
      %c0_55 = arith.constant 0 : index
      %c0_56 = arith.constant 0 : index
      %105 = vector.load %arg4[%c0_55, %c0_56] : memref<128x512xf32, #tpu.memory_space<vmem>>, vector<128x512xf32>
      %cst_57 = arith.constant dense<0.000000e+00> : vector<8x512xf32>
      %106 = tpu.matmul %65, %105, %cst_57 {dimension_numbers = #tpu.dot_dimension_numbers<[1], [0], [0], [1], [0, 0, 1, 1], [], []>} : vector<8x128xf32>, vector<128x512xf32>, vector<8x512xf32> -> vector<8x512xf32>
      %107 = arith.addf %34, %106 : vector<8x512xf32>
      %108 = vector.extract_strided_slice %107 {offsets = [0, 0], sizes = [8, 128], strides = [1, 1]} : vector<8x512xf32> to vector<8x128xf32>
      %109 = arith.negf %108 : vector<8x128xf32>
      %110 = math.exp %109 : vector<8x128xf32>
      %cst_58 = arith.constant 1.000000e+00 : f32
      %111 = vector.broadcast %cst_58 : f32 to vector<8x128xf32>
      %112 = arith.addf %111, %110 : vector<8x128xf32>
      %113 = arith.divf %111, %112 : vector<8x128xf32>
      %114 = vector.extract_strided_slice %107 {offsets = [0, 128], sizes = [8, 128], strides = [1, 1]} : vector<8x512xf32> to vector<8x128xf32>
      %115 = arith.negf %114 : vector<8x128xf32>
      %116 = math.exp %115 : vector<8x128xf32>
      %cst_59 = arith.constant 1.000000e+00 : f32
      %117 = vector.broadcast %cst_59 : f32 to vector<8x128xf32>
      %118 = arith.addf %117, %116 : vector<8x128xf32>
      %119 = arith.divf %117, %118 : vector<8x128xf32>
      %120 = vector.extract_strided_slice %107 {offsets = [0, 256], sizes = [8, 128], strides = [1, 1]} : vector<8x512xf32> to vector<8x128xf32>
      %121 = math.tanh %120 : vector<8x128xf32>
      %122 = vector.extract_strided_slice %107 {offsets = [0, 384], sizes = [8, 128], strides = [1, 1]} : vector<8x512xf32> to vector<8x128xf32>
      %123 = arith.negf %122 : vector<8x128xf32>
      %124 = math.exp %123 : vector<8x128xf32>
      %cst_60 = arith.constant 1.000000e+00 : f32
      %125 = vector.broadcast %cst_60 : f32 to vector<8x128xf32>
      %126 = arith.addf %125, %124 : vector<8x128xf32>
      %127 = arith.divf %125, %126 : vector<8x128xf32>
      %128 = arith.mulf %119, %63 : vector<8x128xf32>
      %129 = arith.mulf %113, %121 : vector<8x128xf32>
      %130 = arith.addf %128, %129 : vector<8x128xf32>
      %131 = math.tanh %130 : vector<8x128xf32>
      %132 = arith.mulf %127, %131 : vector<8x128xf32>
      %c0_61 = arith.constant 0 : index
      %c0_62 = arith.constant 0 : index
      %133 = vector.load %arg6[%c0_61, %c0_62] : memref<128x512xf32, #tpu.memory_space<vmem>>, vector<128x512xf32>
      %cst_63 = arith.constant dense<0.000000e+00> : vector<8x512xf32>
      %134 = tpu.matmul %132, %133, %cst_63 {dimension_numbers = #tpu.dot_dimension_numbers<[1], [0], [0], [1], [0, 0, 1, 1], [], []>} : vector<8x128xf32>, vector<128x512xf32>, vector<8x512xf32> -> vector<8x512xf32>
      %135 = arith.addf %104, %134 : vector<8x512xf32>
      %136 = vector.extract_strided_slice %135 {offsets = [0, 0], sizes = [8, 128], strides = [1, 1]} : vector<8x512xf32> to vector<8x128xf32>
      %137 = arith.negf %136 : vector<8x128xf32>
      %138 = math.exp %137 : vector<8x128xf32>
      %cst_64 = arith.constant 1.000000e+00 : f32
      %139 = vector.broadcast %cst_64 : f32 to vector<8x128xf32>
      %140 = arith.addf %139, %138 : vector<8x128xf32>
      %141 = arith.divf %139, %140 : vector<8x128xf32>
      %142 = vector.extract_strided_slice %135 {offsets = [0, 128], sizes = [8, 128], strides = [1, 1]} : vector<8x512xf32> to vector<8x128xf32>
      %143 = arith.negf %142 : vector<8x128xf32>
      %144 = math.exp %143 : vector<8x128xf32>
      %cst_65 = arith.constant 1.000000e+00 : f32
      %145 = vector.broadcast %cst_65 : f32 to vector<8x128xf32>
      %146 = arith.addf %145, %144 : vector<8x128xf32>
      %147 = arith.divf %145, %146 : vector<8x128xf32>
      %148 = vector.extract_strided_slice %135 {offsets = [0, 256], sizes = [8, 128], strides = [1, 1]} : vector<8x512xf32> to vector<8x128xf32>
      %149 = math.tanh %148 : vector<8x128xf32>
      %150 = vector.extract_strided_slice %135 {offsets = [0, 384], sizes = [8, 128], strides = [1, 1]} : vector<8x512xf32> to vector<8x128xf32>
      %151 = arith.negf %150 : vector<8x128xf32>
      %152 = math.exp %151 : vector<8x128xf32>
      %cst_66 = arith.constant 1.000000e+00 : f32
      %153 = vector.broadcast %cst_66 : f32 to vector<8x128xf32>
      %154 = arith.addf %153, %152 : vector<8x128xf32>
      %155 = arith.divf %153, %154 : vector<8x128xf32>
      %156 = arith.mulf %147, %91 : vector<8x128xf32>
      %157 = arith.mulf %141, %149 : vector<8x128xf32>
      %158 = arith.addf %156, %157 : vector<8x128xf32>
      %159 = math.tanh %158 : vector<8x128xf32>
      %160 = arith.mulf %155, %159 : vector<8x128xf32>
      %c2_i32_67 = arith.constant 2 : i32
      %c0_68 = arith.constant 0 : index
      %c0_69 = arith.constant 0 : index
      %161 = vector.load %arg12[%c0_68, %c0_69] : memref<8x128xf32, #tpu.memory_space<vmem>>, vector<8x128xf32>
      tpu.vector_store %arg12[%c0_68, %c0_69], %132 {strides = array<i32>} : memref<8x128xf32, #tpu.memory_space<vmem>>, vector<8x128xf32>,
      %c0_70 = arith.constant 0 : index
      %c0_71 = arith.constant 0 : index
      %162 = vector.load %arg13[%c0_70, %c0_71] : memref<8x128xf32, #tpu.memory_space<vmem>>, vector<8x128xf32>
      tpu.vector_store %arg13[%c0_70, %c0_71], %130 {strides = array<i32>} : memref<8x128xf32, #tpu.memory_space<vmem>>, vector<8x128xf32>,
      %c0_72 = arith.constant 0 : index
      %c0_73 = arith.constant 0 : index
      %163 = vector.load %arg14[%c0_72, %c0_73] : memref<8x128xf32, #tpu.memory_space<vmem>>, vector<8x128xf32>
      tpu.vector_store %arg14[%c0_72, %c0_73], %160 {strides = array<i32>} : memref<8x128xf32, #tpu.memory_space<vmem>>, vector<8x128xf32>,
      %c0_74 = arith.constant 0 : index
      %c0_75 = arith.constant 0 : index
      %164 = vector.load %arg15[%c0_74, %c0_75] : memref<8x128xf32, #tpu.memory_space<vmem>>, vector<8x128xf32>
      tpu.vector_store %arg15[%c0_74, %c0_75], %158 {strides = array<i32>} : memref<8x128xf32, #tpu.memory_space<vmem>>, vector<8x128xf32>,
    } else {
    }
    %c2_i32_7 = arith.constant 2 : i32
    %15 = arith.cmpi eq, %arg1, %c2_i32_7 : i32
    %16 = arith.extui %15 : i1 to i32
    %c0_i32_8 = arith.constant 0 : i32
    %17 = arith.cmpi ne, %16, %c0_i32_8 : i32
    scf.if %17 {
      %c0_9 = arith.constant 0 : index
      %c0_10 = arith.constant 0 : index
      %18 = vector.load %arg14[%c0_9, %c0_10] : memref<8x128xf32, #tpu.memory_space<vmem>>, vector<8x128xf32>
      %c0_11 = arith.constant 0 : index
      %c0_12 = arith.constant 0 : index
      %19 = vector.load %arg9[%c0_11, %c0_12] : memref<128x128xf32, #tpu.memory_space<vmem>>, vector<128x128xf32>
      %cst = arith.constant dense<0.000000e+00> : vector<8x128xf32>
      %20 = tpu.matmul %18, %19, %cst {dimension_numbers = #tpu.dot_dimension_numbers<[1], [0], [0], [1], [0, 0, 1, 1], [], []>} : vector<8x128xf32>, vector<128x128xf32>, vector<8x128xf32> -> vector<8x128xf32>
      %c0_13 = arith.constant 0 : index
      %c0_14 = arith.constant 0 : index
      %21 = vector.load %arg10[%c0_13, %c0_14] : memref<1x128xf32, #tpu.memory_space<vmem>>, vector<1x128xf32>
      %22 = vector.broadcast %21 : vector<1x128xf32> to vector<8x128xf32>
      %23 = arith.addf %20, %22 : vector<8x128xf32>
      %c0_15 = arith.constant 0 : index
      %c0_16 = arith.constant 0 : index
      %24 = vector.load %arg11[%c0_15, %c0_16] : memref<8x128xf32, #tpu.memory_space<vmem>>, vector<8x128xf32>
      tpu.vector_store %arg11[%c0_15, %c0_16], %23 {strides = array<i32>} : memref<8x128xf32, #tpu.memory_space<vmem>>, vector<8x128xf32>,
    } else {
    }
    return
  }
  func.func @transform_0(%arg0: i32, %arg1: i32) -> (i32, i32, i32) {
    %c0_i32 = arith.constant 0 : i32
    %c0_i32_0 = arith.constant 0 : i32
    return %arg1, %arg0, %c0_i32 : i32, i32, i32
  }
  func.func @transform_1(%arg0: i32, %arg1: i32) -> (i32, i32) {
    %c0_i32 = arith.constant 0 : i32
    %c0_i32_0 = arith.constant 0 : i32
    %c0_i32_1 = arith.constant 0 : i32
    return %c0_i32, %c0_i32_0 : i32, i32
  }
  func.func @transform_2(%arg0: i32, %arg1: i32) -> (i32, i32) {
    %c0_i32 = arith.constant 0 : i32
    %c0_i32_0 = arith.constant 0 : i32
    %c0_i32_1 = arith.constant 0 : i32
    return %c0_i32, %c0_i32_0 : i32, i32
  }
  func.func @transform_3(%arg0: i32, %arg1: i32) -> (i32, i32) {
    %c0_i32 = arith.constant 0 : i32
    %c0_i32_0 = arith.constant 0 : i32
    %c0_i32_1 = arith.constant 0 : i32
    return %c0_i32, %c0_i32_0 : i32, i32
  }
  func.func @transform_4(%arg0: i32, %arg1: i32) -> (i32, i32) {
    %c0_i32 = arith.constant 0 : i32
    %c0_i32_0 = arith.constant 0 : i32
    %c0_i32_1 = arith.constant 0 : i32
    return %c0_i32, %c0_i32_0 : i32, i32
  }
  func.func @transform_5(%arg0: i32, %arg1: i32) -> (i32, i32) {
    %c0_i32 = arith.constant 0 : i32
    %c0_i32_0 = arith.constant 0 : i32
    %c0_i32_1 = arith.constant 0 : i32
    return %c0_i32, %c0_i32_0 : i32, i32
  }
  func.func @transform_6(%arg0: i32, %arg1: i32) -> (i32, i32) {
    %c0_i32 = arith.constant 0 : i32
    %c0_i32_0 = arith.constant 0 : i32
    %c0_i32_1 = arith.constant 0 : i32
    return %c0_i32, %c0_i32_0 : i32, i32
  }
  func.func @transform_7(%arg0: i32, %arg1: i32) -> (i32, i32) {
    %c0_i32 = arith.constant 0 : i32
    %c0_i32_0 = arith.constant 0 : i32
    %c0_i32_1 = arith.constant 0 : i32
    return %c0_i32, %c0_i32_0 : i32, i32
  }
  func.func @transform_8(%arg0: i32, %arg1: i32) -> (i32, i32) {
    %c0_i32 = arith.constant 0 : i32
    %c0_i32_0 = arith.constant 0 : i32
    %c0_i32_1 = arith.constant 0 : i32
    return %c0_i32, %c0_i32_0 : i32, i32
  }
  func.func @transform_9(%arg0: i32, %arg1: i32) -> (i32, i32) {
    %c0_i32 = arith.constant 0 : i32
    %c0_i32_0 = arith.constant 0 : i32
    return %arg0, %c0_i32 : i32, i32
  }
}

module attributes {stable_mosaic.version = 11 : i64} {
  func.func @kernel(%arg0: i32, %arg1: i32, %arg2: memref<3x8x16xf32, #tpu.memory_space<vmem>>, %arg3: memref<16x512xf32, #tpu.memory_space<vmem>>, %arg4: memref<128x512xf32, #tpu.memory_space<vmem>>, %arg5: memref<1x512xf32, #tpu.memory_space<vmem>>, %arg6: memref<128x512xf32, #tpu.memory_space<vmem>>, %arg7: memref<128x512xf32, #tpu.memory_space<vmem>>, %arg8: memref<1x512xf32, #tpu.memory_space<vmem>>, %arg9: memref<128x128xf32, #tpu.memory_space<vmem>>, %arg10: memref<1x128xf32, #tpu.memory_space<vmem>>, %arg11: memref<8x128xf32, #tpu.memory_space<vmem>>, %arg12: memref<8x128xf32, #tpu.memory_space<vmem>>, %arg13: memref<8x128xf32, #tpu.memory_space<vmem>>, %arg14: memref<8x128xf32, #tpu.memory_space<vmem>>, %arg15: memref<8x128xf32, #tpu.memory_space<vmem>>) attributes {dimension_semantics = [#tpu.dimension_semantics<parallel>, #tpu.dimension_semantics<arbitrary>], iteration_bounds = array<i64: 1, 3>, scalar_prefetch = 0 : i64, scratch_operands = 4 : i64, tpu.core_type = #tpu.core_type<tc>, window_params = [{transform_indices = @transform_0, window_bounds = array<i64: 3, 8, 16>}, {pipeline_mode = #tpu.pipeline_mode<synchronous>, transform_indices = @transform_1, window_bounds = array<i64: 16, 512>}, {pipeline_mode = #tpu.pipeline_mode<synchronous>, transform_indices = @transform_2, window_bounds = array<i64: 128, 512>}, {pipeline_mode = #tpu.pipeline_mode<synchronous>, transform_indices = @transform_3, window_bounds = array<i64: 1, 512>}, {pipeline_mode = #tpu.pipeline_mode<synchronous>, transform_indices = @transform_4, window_bounds = array<i64: 128, 512>}, {pipeline_mode = #tpu.pipeline_mode<synchronous>, transform_indices = @transform_5, window_bounds = array<i64: 128, 512>}, {pipeline_mode = #tpu.pipeline_mode<synchronous>, transform_indices = @transform_6, window_bounds = array<i64: 1, 512>}, {pipeline_mode = #tpu.pipeline_mode<synchronous>, transform_indices = @transform_7, window_bounds = array<i64: 128, 128>}, {pipeline_mode = #tpu.pipeline_mode<synchronous>, transform_indices = @transform_8, window_bounds = array<i64: 1, 128>}, {transform_indices = @transform_9, window_bounds = array<i64: 8, 128>}]} {
    %c0_i32 = arith.constant 0 : i32
    %0 = arith.cmpi eq, %arg1, %c0_i32 : i32
    %1 = arith.extui %0 : i1 to i32
    %c0_i32_0 = arith.constant 0 : i32
    %2 = arith.cmpi ne, %1, %c0_i32_0 : i32
    scf.if %2 {
      %cst = arith.constant 0.000000e+00 : f32
      %18 = vector.broadcast %cst : f32 to vector<8x128xf32>
      %c0_9 = arith.constant 0 : index
      %c0_10 = arith.constant 0 : index
      %19 = vector.load %arg12[%c0_9, %c0_10] : memref<8x128xf32, #tpu.memory_space<vmem>>, vector<8x128xf32>
      tpu.vector_store %arg12[%c0_9, %c0_10], %18 {strides = array<i32>} : memref<8x128xf32, #tpu.memory_space<vmem>>, vector<8x128xf32>,
      %cst_11 = arith.constant 0.000000e+00 : f32
      %20 = vector.broadcast %cst_11 : f32 to vector<8x128xf32>
      %c0_12 = arith.constant 0 : index
      %c0_13 = arith.constant 0 : index
      %21 = vector.load %arg13[%c0_12, %c0_13] : memref<8x128xf32, #tpu.memory_space<vmem>>, vector<8x128xf32>
      tpu.vector_store %arg13[%c0_12, %c0_13], %20 {strides = array<i32>} : memref<8x128xf32, #tpu.memory_space<vmem>>, vector<8x128xf32>,
      %cst_14 = arith.constant 0.000000e+00 : f32
      %22 = vector.broadcast %cst_14 : f32 to vector<8x128xf32>
      %c0_15 = arith.constant 0 : index
      %c0_16 = arith.constant 0 : index
      %23 = vector.load %arg14[%c0_15, %c0_16] : memref<8x128xf32, #tpu.memory_space<vmem>>, vector<8x128xf32>
      tpu.vector_store %arg14[%c0_15, %c0_16], %22 {strides = array<i32>} : memref<8x128xf32, #tpu.memory_space<vmem>>, vector<8x128xf32>,
      %cst_17 = arith.constant 0.000000e+00 : f32
      %24 = vector.broadcast %cst_17 : f32 to vector<8x128xf32>
      %c0_18 = arith.constant 0 : index
      %c0_19 = arith.constant 0 : index
      %25 = vector.load %arg15[%c0_18, %c0_19] : memref<8x128xf32, #tpu.memory_space<vmem>>, vector<8x128xf32>
      tpu.vector_store %arg15[%c0_18, %c0_19], %24 {strides = array<i32>} : memref<8x128xf32, #tpu.memory_space<vmem>>, vector<8x128xf32>,
    } else {
    }
    %c0 = arith.constant 0 : index
    %c0_1 = arith.constant 0 : index
    %3 = vector.load %arg5[%c0, %c0_1] : memref<1x512xf32, #tpu.memory_space<vmem>>, vector<1x512xf32>
    %4 = vector.shape_cast %3 : vector<1x512xf32> to vector<1x512xf32>
    %5 = vector.broadcast %4 : vector<1x512xf32> to vector<8x512xf32>
    %c0_2 = arith.constant 0 : index
    %c0_3 = arith.constant 0 : index
    %6 = vector.load %arg8[%c0_2, %c0_3] : memref<1x512xf32, #tpu.memory_space<vmem>>, vector<1x512xf32>
    %7 = vector.shape_cast %6 : vector<1x512xf32> to vector<1x512xf32>
    %8 = vector.broadcast %7 : vector<1x512xf32> to vector<8x512xf32>
    %c2_i32 = arith.constant 2 : i32
    %9 = arith.cmpi ne, %arg1, %c2_i32 : i32
    %10 = arith.extui %9 : i1 to i32
    %c0_i32_4 = arith.constant 0 : i32
    %11 = arith.cmpi ne, %10, %c0_i32_4 : i32
    scf.if %11 {
      %c0_9 = arith.constant 0 : index
      %c0_10 = arith.constant 0 : index
      %18 = vector.load %arg12[%c0_9, %c0_10] : memref<8x128xf32, #tpu.memory_space<vmem>>, vector<8x128xf32>
      %c0_11 = arith.constant 0 : index
      %c0_12 = arith.constant 0 : index
      %19 = vector.load %arg13[%c0_11, %c0_12] : memref<8x128xf32, #tpu.memory_space<vmem>>, vector<8x128xf32>
      %c0_13 = arith.constant 0 : index
      %c0_14 = arith.constant 0 : index
      %20 = vector.load %arg14[%c0_13, %c0_14] : memref<8x128xf32, #tpu.memory_space<vmem>>, vector<8x128xf32>
      %c0_15 = arith.constant 0 : index
      %c0_16 = arith.constant 0 : index
      %21 = vector.load %arg15[%c0_15, %c0_16] : memref<8x128xf32, #tpu.memory_space<vmem>>, vector<8x128xf32>
      %c0_17 = arith.constant 0 : index
      %c0_18 = arith.constant 0 : index
      %c0_19 = arith.constant 0 : index
      %22 = vector.load %arg2[%c0_17, %c0_18, %c0_19] : memref<3x8x16xf32, #tpu.memory_space<vmem>>, vector<1x8x16xf32>
      %23 = vector.shape_cast %22 : vector<1x8x16xf32> to vector<8x16xf32>
      %c0_20 = arith.constant 0 : index
      %c0_21 = arith.constant 0 : index
      %24 = vector.load %arg3[%c0_20, %c0_21] : memref<16x512xf32, #tpu.memory_space<vmem>>, vector<16x512xf32>
      %cst = arith.constant dense<0.000000e+00> : vector<8x512xf32>
      %25 = tpu.matmul %23, %24, %cst {dimension_numbers = #tpu.dot_dimension_numbers<[1], [0], [0], [1], [0, 0, 1, 1], [], []>} : vector<8x16xf32>, vector<16x512xf32>, vector<8x512xf32> -> vector<8x512xf32>
      %26 = arith.addf %25, %5 : vector<8x512xf32>
      %c0_i32_22 = arith.constant 0 : i32
      %c1_i32 = arith.constant 1 : i32
      %27 = arith.addi %c0_i32_22, %c1_i32 : i32
      %c2_i32_23 = arith.constant 2 : i32
      %28 = arith.minsi %27, %c2_i32_23 : i32
      %29 = arith.index_cast %28 : i32 to index
      %c0_24 = arith.constant 0 : index
      %c0_25 = arith.constant 0 : index
      %30 = vector.load %arg2[%29, %c0_24, %c0_25] : memref<3x8x16xf32, #tpu.memory_space<vmem>>, vector<1x8x16xf32>
      %31 = vector.shape_cast %30 : vector<1x8x16xf32> to vector<8x16xf32>
      %c0_26 = arith.constant 0 : index
      %c0_27 = arith.constant 0 : index
      %32 = vector.load %arg3[%c0_26, %c0_27] : memref<16x512xf32, #tpu.memory_space<vmem>>, vector<16x512xf32>
      %cst_28 = arith.constant dense<0.000000e+00> : vector<8x512xf32>
      %33 = tpu.matmul %31, %32, %cst_28 {dimension_numbers = #tpu.dot_dimension_numbers<[1], [0], [0], [1], [0, 0, 1, 1], [], []>} : vector<8x16xf32>, vector<16x512xf32>, vector<8x512xf32> -> vector<8x512xf32>
      %34 = arith.addf %33, %5 : vector<8x512xf32>
      %c0_29 = arith.constant 0 : index
      %c0_30 = arith.constant 0 : index
      %35 = vector.load %arg7[%c0_29, %c0_30] : memref<128x512xf32, #tpu.memory_space<vmem>>, vector<128x512xf32>
      %cst_31 = arith.constant dense<0.000000e+00> : vector<8x512xf32>
      %36 = tpu.matmul %20, %35, %cst_31 {dimension_numbers = #tpu.dot_dimension_numbers<[1], [0], [0], [1], [0, 0, 1, 1], [], []>} : vector<8x128xf32>, vector<128x512xf32>, vector<8x512xf32> -> vector<8x512xf32>
      %37 = arith.addf %36, %8 : vector<8x512xf32>
      %c0_32 = arith.constant 0 : index
      %c0_33 = arith.constant 0 : index
      %38 = vector.load %arg4[%c0_32, %c0_33] : memref<128x512xf32, #tpu.memory_space<vmem>>, vector<128x512xf32>
      %cst_34 = arith.constant dense<0.000000e+00> : vector<8x512xf32>
      %39 = tpu.matmul %18, %38, %cst_34 {dimension_numbers = #tpu.dot_dimension_numbers<[1], [0], [0], [1], [0, 0, 1, 1], [], []>} : vector<8x128xf32>, vector<128x512xf32>, vector<8x512xf32> -> vector<8x512xf32>
      %40 = arith.addf %26, %39 : vector<8x512xf32>
      %41 = vector.extract_strided_slice %40 {offsets = [0, 0], sizes = [8, 128], strides = [1, 1]} : vector<8x512xf32> to vector<8x128xf32>
      %42 = arith.negf %41 : vector<8x128xf32>
      %43 = math.exp %42 : vector<8x128xf32>
      %cst_35 = arith.constant 1.000000e+00 : f32
      %44 = vector.broadcast %cst_35 : f32 to vector<8x128xf32>
      %45 = arith.addf %44, %43 : vector<8x128xf32>
      %46 = arith.divf %44, %45 : vector<8x128xf32>
      %47 = vector.extract_strided_slice %40 {offsets = [0, 128], sizes = [8, 128], strides = [1, 1]} : vector<8x512xf32> to vector<8x128xf32>
      %48 = arith.negf %47 : vector<8x128xf32>
      %49 = math.exp %48 : vector<8x128xf32>
      %cst_36 = arith.constant 1.000000e+00 : f32
      %50 = vector.broadcast %cst_36 : f32 to vector<8x128xf32>
      %51 = arith.addf %50, %49 : vector<8x128xf32>
      %52 = arith.divf %50, %51 : vector<8x128xf32>
      %53 = vector.extract_strided_slice %40 {offsets = [0, 256], sizes = [8, 128], strides = [1, 1]} : vector<8x512xf32> to vector<8x128xf32>
      %54 = math.tanh %53 : vector<8x128xf32>
      %55 = vector.extract_strided_slice %40 {offsets = [0, 384], sizes = [8, 128], strides = [1, 1]} : vector<8x512xf32> to vector<8x128xf32>
      %56 = arith.negf %55 : vector<8x128xf32>
      %57 = math.exp %56 : vector<8x128xf32>
      %cst_37 = arith.constant 1.000000e+00 : f32
      %58 = vector.broadcast %cst_37 : f32 to vector<8x128xf32>
      %59 = arith.addf %58, %57 : vector<8x128xf32>
      %60 = arith.divf %58, %59 : vector<8x128xf32>
      %61 = arith.mulf %52, %19 : vector<8x128xf32>
      %62 = arith.mulf %46, %54 : vector<8x128xf32>
      %63 = arith.addf %61, %62 : vector<8x128xf32>
      %64 = math.tanh %63 : vector<8x128xf32>
      %65 = arith.mulf %60, %64 : vector<8x128xf32>
      %c0_38 = arith.constant 0 : index
      %c0_39 = arith.constant 0 : index
      %66 = vector.load %arg6[%c0_38, %c0_39] : memref<128x512xf32, #tpu.memory_space<vmem>>, vector<128x512xf32>
      %cst_40 = arith.constant dense<0.000000e+00> : vector<8x512xf32>
      %67 = tpu.matmul %65, %66, %cst_40 {dimension_numbers = #tpu.dot_dimension_numbers<[1], [0], [0], [1], [0, 0, 1, 1], [], []>} : vector<8x128xf32>, vector<128x512xf32>, vector<8x512xf32> -> vector<8x512xf32>
      %68 = arith.addf %37, %67 : vector<8x512xf32>
      %69 = vector.extract_strided_slice %68 {offsets = [0, 0], sizes = [8, 128], strides = [1, 1]} : vector<8x512xf32> to vector<8x128xf32>
      %70 = arith.negf %69 : vector<8x128xf32>
      %71 = math.exp %70 : vector<8x128xf32>
      %cst_41 = arith.constant 1.000000e+00 : f32
      %72 = vector.broadcast %cst_41 : f32 to vector<8x128xf32>
      %73 = arith.addf %72, %71 : vector<8x128xf32>
      %74 = arith.divf %72, %73 : vector<8x128xf32>
      %75 = vector.extract_strided_slice %68 {offsets = [0, 128], sizes = [8, 128], strides = [1, 1]} : vector<8x512xf32> to vector<8x128xf32>
      %76 = arith.negf %75 : vector<8x128xf32>
      %77 = math.exp %76 : vector<8x128xf32>
      %cst_42 = arith.constant 1.000000e+00 : f32
      %78 = vector.broadcast %cst_42 : f32 to vector<8x128xf32>
      %79 = arith.addf %78, %77 : vector<8x128xf32>
      %80 = arith.divf %78, %79 : vector<8x128xf32>
      %81 = vector.extract_strided_slice %68 {offsets = [0, 256], sizes = [8, 128], strides = [1, 1]} : vector<8x512xf32> to vector<8x128xf32>
      %82 = math.tanh %81 : vector<8x128xf32>
      %83 = vector.extract_strided_slice %68 {offsets = [0, 384], sizes = [8, 128], strides = [1, 1]} : vector<8x512xf32> to vector<8x128xf32>
      %84 = arith.negf %83 : vector<8x128xf32>
      %85 = math.exp %84 : vector<8x128xf32>
      %cst_43 = arith.constant 1.000000e+00 : f32
      %86 = vector.broadcast %cst_43 : f32 to vector<8x128xf32>
      %87 = arith.addf %86, %85 : vector<8x128xf32>
      %88 = arith.divf %86, %87 : vector<8x128xf32>
      %89 = arith.mulf %80, %21 : vector<8x128xf32>
      %90 = arith.mulf %74, %82 : vector<8x128xf32>
      %91 = arith.addf %89, %90 : vector<8x128xf32>
      %92 = math.tanh %91 : vector<8x128xf32>
      %93 = arith.mulf %88, %92 : vector<8x128xf32>
      %c1_i32_44 = arith.constant 1 : i32
      %c1_i32_45 = arith.constant 1 : i32
      %94 = arith.addi %c1_i32_44, %c1_i32_45 : i32
      %c2_i32_46 = arith.constant 2 : i32
      %95 = arith.minsi %94, %c2_i32_46 : i32
      %96 = arith.index_cast %95 : i32 to index
      %c0_47 = arith.constant 0 : index
      %c0_48 = arith.constant 0 : index
      %97 = vector.load %arg2[%96, %c0_47, %c0_48] : memref<3x8x16xf32, #tpu.memory_space<vmem>>, vector<1x8x16xf32>
      %98 = vector.shape_cast %97 : vector<1x8x16xf32> to vector<8x16xf32>
      %c0_49 = arith.constant 0 : index
      %c0_50 = arith.constant 0 : index
      %99 = vector.load %arg3[%c0_49, %c0_50] : memref<16x512xf32, #tpu.memory_space<vmem>>, vector<16x512xf32>
      %cst_51 = arith.constant dense<0.000000e+00> : vector<8x512xf32>
      %100 = tpu.matmul %98, %99, %cst_51 {dimension_numbers = #tpu.dot_dimension_numbers<[1], [0], [0], [1], [0, 0, 1, 1], [], []>} : vector<8x16xf32>, vector<16x512xf32>, vector<8x512xf32> -> vector<8x512xf32>
      %101 = arith.addf %100, %5 : vector<8x512xf32>
      %c0_52 = arith.constant 0 : index
      %c0_53 = arith.constant 0 : index
      %102 = vector.load %arg7[%c0_52, %c0_53] : memref<128x512xf32, #tpu.memory_space<vmem>>, vector<128x512xf32>
      %cst_54 = arith.constant dense<0.000000e+00> : vector<8x512xf32>
      %103 = tpu.matmul %93, %102, %cst_54 {dimension_numbers = #tpu.dot_dimension_numbers<[1], [0], [0], [1], [0, 0, 1, 1], [], []>} : vector<8x128xf32>, vector<128x512xf32>, vector<8x512xf32> -> vector<8x512xf32>
      %104 = arith.addf %103, %8 : vector<8x512xf32>
      %c0_55 = arith.constant 0 : index
      %c0_56 = arith.constant 0 : index
      %105 = vector.load %arg4[%c0_55, %c0_56] : memref<128x512xf32, #tpu.memory_space<vmem>>, vector<128x512xf32>
      %cst_57 = arith.constant dense<0.000000e+00> : vector<8x512xf32>
      %106 = tpu.matmul %65, %105, %cst_57 {dimension_numbers = #tpu.dot_dimension_numbers<[1], [0], [0], [1], [0, 0, 1, 1], [], []>} : vector<8x128xf32>, vector<128x512xf32>, vector<8x512xf32> -> vector<8x512xf32>
      %107 = arith.addf %34, %106 : vector<8x512xf32>
      %108 = vector.extract_strided_slice %107 {offsets = [0, 0], sizes = [8, 128], strides = [1, 1]} : vector<8x512xf32> to vector<8x128xf32>
      %109 = arith.negf %108 : vector<8x128xf32>
      %110 = math.exp %109 : vector<8x128xf32>
      %cst_58 = arith.constant 1.000000e+00 : f32
      %111 = vector.broadcast %cst_58 : f32 to vector<8x128xf32>
      %112 = arith.addf %111, %110 : vector<8x128xf32>
      %113 = arith.divf %111, %112 : vector<8x128xf32>
      %114 = vector.extract_strided_slice %107 {offsets = [0, 128], sizes = [8, 128], strides = [1, 1]} : vector<8x512xf32> to vector<8x128xf32>
      %115 = arith.negf %114 : vector<8x128xf32>
      %116 = math.exp %115 : vector<8x128xf32>
      %cst_59 = arith.constant 1.000000e+00 : f32
      %117 = vector.broadcast %cst_59 : f32 to vector<8x128xf32>
      %118 = arith.addf %117, %116 : vector<8x128xf32>
      %119 = arith.divf %117, %118 : vector<8x128xf32>
      %120 = vector.extract_strided_slice %107 {offsets = [0, 256], sizes = [8, 128], strides = [1, 1]} : vector<8x512xf32> to vector<8x128xf32>
      %121 = math.tanh %120 : vector<8x128xf32>
      %122 = vector.extract_strided_slice %107 {offsets = [0, 384], sizes = [8, 128], strides = [1, 1]} : vector<8x512xf32> to vector<8x128xf32>
      %123 = arith.negf %122 : vector<8x128xf32>
      %124 = math.exp %123 : vector<8x128xf32>
      %cst_60 = arith.constant 1.000000e+00 : f32
      %125 = vector.broadcast %cst_60 : f32 to vector<8x128xf32>
      %126 = arith.addf %125, %124 : vector<8x128xf32>
      %127 = arith.divf %125, %126 : vector<8x128xf32>
      %128 = arith.mulf %119, %63 : vector<8x128xf32>
      %129 = arith.mulf %113, %121 : vector<8x128xf32>
      %130 = arith.addf %128, %129 : vector<8x128xf32>
      %131 = math.tanh %130 : vector<8x128xf32>
      %132 = arith.mulf %127, %131 : vector<8x128xf32>
      %c0_61 = arith.constant 0 : index
      %c0_62 = arith.constant 0 : index
      %133 = vector.load %arg6[%c0_61, %c0_62] : memref<128x512xf32, #tpu.memory_space<vmem>>, vector<128x512xf32>
      %cst_63 = arith.constant dense<0.000000e+00> : vector<8x512xf32>
      %134 = tpu.matmul %132, %133, %cst_63 {dimension_numbers = #tpu.dot_dimension_numbers<[1], [0], [0], [1], [0, 0, 1, 1], [], []>} : vector<8x128xf32>, vector<128x512xf32>, vector<8x512xf32> -> vector<8x512xf32>
      %135 = arith.addf %104, %134 : vector<8x512xf32>
      %136 = vector.extract_strided_slice %135 {offsets = [0, 0], sizes = [8, 128], strides = [1, 1]} : vector<8x512xf32> to vector<8x128xf32>
      %137 = arith.negf %136 : vector<8x128xf32>
      %138 = math.exp %137 : vector<8x128xf32>
      %cst_64 = arith.constant 1.000000e+00 : f32
      %139 = vector.broadcast %cst_64 : f32 to vector<8x128xf32>
      %140 = arith.addf %139, %138 : vector<8x128xf32>
      %141 = arith.divf %139, %140 : vector<8x128xf32>
      %142 = vector.extract_strided_slice %135 {offsets = [0, 128], sizes = [8, 128], strides = [1, 1]} : vector<8x512xf32> to vector<8x128xf32>
      %143 = arith.negf %142 : vector<8x128xf32>
      %144 = math.exp %143 : vector<8x128xf32>
      %cst_65 = arith.constant 1.000000e+00 : f32
      %145 = vector.broadcast %cst_65 : f32 to vector<8x128xf32>
      %146 = arith.addf %145, %144 : vector<8x128xf32>
      %147 = arith.divf %145, %146 : vector<8x128xf32>
      %148 = vector.extract_strided_slice %135 {offsets = [0, 256], sizes = [8, 128], strides = [1, 1]} : vector<8x512xf32> to vector<8x128xf32>
      %149 = math.tanh %148 : vector<8x128xf32>
      %150 = vector.extract_strided_slice %135 {offsets = [0, 384], sizes = [8, 128], strides = [1, 1]} : vector<8x512xf32> to vector<8x128xf32>
      %151 = arith.negf %150 : vector<8x128xf32>
      %152 = math.exp %151 : vector<8x128xf32>
      %cst_66 = arith.constant 1.000000e+00 : f32
      %153 = vector.broadcast %cst_66 : f32 to vector<8x128xf32>
      %154 = arith.addf %153, %152 : vector<8x128xf32>
      %155 = arith.divf %153, %154 : vector<8x128xf32>
      %156 = arith.mulf %147, %91 : vector<8x128xf32>
      %157 = arith.mulf %141, %149 : vector<8x128xf32>
      %158 = arith.addf %156, %157 : vector<8x128xf32>
      %159 = math.tanh %158 : vector<8x128xf32>
      %160 = arith.mulf %155, %159 : vector<8x128xf32>
      %c2_i32_67 = arith.constant 2 : i32
      %c1_i32_68 = arith.constant 1 : i32
      %161 = arith.addi %c2_i32_67, %c1_i32_68 : i32
      %c2_i32_69 = arith.constant 2 : i32
      %162 = arith.minsi %161, %c2_i32_69 : i32
      %163 = arith.index_cast %162 : i32 to index
      %c0_70 = arith.constant 0 : index
      %c0_71 = arith.constant 0 : index
      %164 = vector.load %arg2[%163, %c0_70, %c0_71] : memref<3x8x16xf32, #tpu.memory_space<vmem>>, vector<1x8x16xf32>
      %165 = vector.shape_cast %164 : vector<1x8x16xf32> to vector<8x16xf32>
      %c0_72 = arith.constant 0 : index
      %c0_73 = arith.constant 0 : index
      %166 = vector.load %arg3[%c0_72, %c0_73] : memref<16x512xf32, #tpu.memory_space<vmem>>, vector<16x512xf32>
      %cst_74 = arith.constant dense<0.000000e+00> : vector<8x512xf32>
      %167 = tpu.matmul %165, %166, %cst_74 {dimension_numbers = #tpu.dot_dimension_numbers<[1], [0], [0], [1], [0, 0, 1, 1], [], []>} : vector<8x16xf32>, vector<16x512xf32>, vector<8x512xf32> -> vector<8x512xf32>
      %168 = arith.addf %167, %5 : vector<8x512xf32>
      %c0_75 = arith.constant 0 : index
      %c0_76 = arith.constant 0 : index
      %169 = vector.load %arg7[%c0_75, %c0_76] : memref<128x512xf32, #tpu.memory_space<vmem>>, vector<128x512xf32>
      %cst_77 = arith.constant dense<0.000000e+00> : vector<8x512xf32>
      %170 = tpu.matmul %160, %169, %cst_77 {dimension_numbers = #tpu.dot_dimension_numbers<[1], [0], [0], [1], [0, 0, 1, 1], [], []>} : vector<8x128xf32>, vector<128x512xf32>, vector<8x512xf32> -> vector<8x512xf32>
      %171 = arith.addf %170, %8 : vector<8x512xf32>
      %c0_78 = arith.constant 0 : index
      %c0_79 = arith.constant 0 : index
      %172 = vector.load %arg4[%c0_78, %c0_79] : memref<128x512xf32, #tpu.memory_space<vmem>>, vector<128x512xf32>
      %cst_80 = arith.constant dense<0.000000e+00> : vector<8x512xf32>
      %173 = tpu.matmul %132, %172, %cst_80 {dimension_numbers = #tpu.dot_dimension_numbers<[1], [0], [0], [1], [0, 0, 1, 1], [], []>} : vector<8x128xf32>, vector<128x512xf32>, vector<8x512xf32> -> vector<8x512xf32>
      %174 = arith.addf %101, %173 : vector<8x512xf32>
      %175 = vector.extract_strided_slice %174 {offsets = [0, 0], sizes = [8, 128], strides = [1, 1]} : vector<8x512xf32> to vector<8x128xf32>
      %176 = arith.negf %175 : vector<8x128xf32>
      %177 = math.exp %176 : vector<8x128xf32>
      %cst_81 = arith.constant 1.000000e+00 : f32
      %178 = vector.broadcast %cst_81 : f32 to vector<8x128xf32>
      %179 = arith.addf %178, %177 : vector<8x128xf32>
      %180 = arith.divf %178, %179 : vector<8x128xf32>
      %181 = vector.extract_strided_slice %174 {offsets = [0, 128], sizes = [8, 128], strides = [1, 1]} : vector<8x512xf32> to vector<8x128xf32>
      %182 = arith.negf %181 : vector<8x128xf32>
      %183 = math.exp %182 : vector<8x128xf32>
      %cst_82 = arith.constant 1.000000e+00 : f32
      %184 = vector.broadcast %cst_82 : f32 to vector<8x128xf32>
      %185 = arith.addf %184, %183 : vector<8x128xf32>
      %186 = arith.divf %184, %185 : vector<8x128xf32>
      %187 = vector.extract_strided_slice %174 {offsets = [0, 256], sizes = [8, 128], strides = [1, 1]} : vector<8x512xf32> to vector<8x128xf32>
      %188 = math.tanh %187 : vector<8x128xf32>
      %189 = vector.extract_strided_slice %174 {offsets = [0, 384], sizes = [8, 128], strides = [1, 1]} : vector<8x512xf32> to vector<8x128xf32>
      %190 = arith.negf %189 : vector<8x128xf32>
      %191 = math.exp %190 : vector<8x128xf32>
      %cst_83 = arith.constant 1.000000e+00 : f32
      %192 = vector.broadcast %cst_83 : f32 to vector<8x128xf32>
      %193 = arith.addf %192, %191 : vector<8x128xf32>
      %194 = arith.divf %192, %193 : vector<8x128xf32>
      %195 = arith.mulf %186, %130 : vector<8x128xf32>
      %196 = arith.mulf %180, %188 : vector<8x128xf32>
      %197 = arith.addf %195, %196 : vector<8x128xf32>
      %198 = math.tanh %197 : vector<8x128xf32>
      %199 = arith.mulf %194, %198 : vector<8x128xf32>
      %c0_84 = arith.constant 0 : index
      %c0_85 = arith.constant 0 : index
      %200 = vector.load %arg6[%c0_84, %c0_85] : memref<128x512xf32, #tpu.memory_space<vmem>>, vector<128x512xf32>
      %cst_86 = arith.constant dense<0.000000e+00> : vector<8x512xf32>
      %201 = tpu.matmul %199, %200, %cst_86 {dimension_numbers = #tpu.dot_dimension_numbers<[1], [0], [0], [1], [0, 0, 1, 1], [], []>} : vector<8x128xf32>, vector<128x512xf32>, vector<8x512xf32> -> vector<8x512xf32>
      %202 = arith.addf %171, %201 : vector<8x512xf32>
      %203 = vector.extract_strided_slice %202 {offsets = [0, 0], sizes = [8, 128], strides = [1, 1]} : vector<8x512xf32> to vector<8x128xf32>
      %204 = arith.negf %203 : vector<8x128xf32>
      %205 = math.exp %204 : vector<8x128xf32>
      %cst_87 = arith.constant 1.000000e+00 : f32
      %206 = vector.broadcast %cst_87 : f32 to vector<8x128xf32>
      %207 = arith.addf %206, %205 : vector<8x128xf32>
      %208 = arith.divf %206, %207 : vector<8x128xf32>
      %209 = vector.extract_strided_slice %202 {offsets = [0, 128], sizes = [8, 128], strides = [1, 1]} : vector<8x512xf32> to vector<8x128xf32>
      %210 = arith.negf %209 : vector<8x128xf32>
      %211 = math.exp %210 : vector<8x128xf32>
      %cst_88 = arith.constant 1.000000e+00 : f32
      %212 = vector.broadcast %cst_88 : f32 to vector<8x128xf32>
      %213 = arith.addf %212, %211 : vector<8x128xf32>
      %214 = arith.divf %212, %213 : vector<8x128xf32>
      %215 = vector.extract_strided_slice %202 {offsets = [0, 256], sizes = [8, 128], strides = [1, 1]} : vector<8x512xf32> to vector<8x128xf32>
      %216 = math.tanh %215 : vector<8x128xf32>
      %217 = vector.extract_strided_slice %202 {offsets = [0, 384], sizes = [8, 128], strides = [1, 1]} : vector<8x512xf32> to vector<8x128xf32>
      %218 = arith.negf %217 : vector<8x128xf32>
      %219 = math.exp %218 : vector<8x128xf32>
      %cst_89 = arith.constant 1.000000e+00 : f32
      %220 = vector.broadcast %cst_89 : f32 to vector<8x128xf32>
      %221 = arith.addf %220, %219 : vector<8x128xf32>
      %222 = arith.divf %220, %221 : vector<8x128xf32>
      %223 = arith.mulf %214, %158 : vector<8x128xf32>
      %224 = arith.mulf %208, %216 : vector<8x128xf32>
      %225 = arith.addf %223, %224 : vector<8x128xf32>
      %226 = math.tanh %225 : vector<8x128xf32>
      %227 = arith.mulf %222, %226 : vector<8x128xf32>
      %c3_i32 = arith.constant 3 : i32
      %c0_90 = arith.constant 0 : index
      %c0_91 = arith.constant 0 : index
      %228 = vector.load %arg12[%c0_90, %c0_91] : memref<8x128xf32, #tpu.memory_space<vmem>>, vector<8x128xf32>
      tpu.vector_store %arg12[%c0_90, %c0_91], %199 {strides = array<i32>} : memref<8x128xf32, #tpu.memory_space<vmem>>, vector<8x128xf32>,
      %c0_92 = arith.constant 0 : index
      %c0_93 = arith.constant 0 : index
      %229 = vector.load %arg13[%c0_92, %c0_93] : memref<8x128xf32, #tpu.memory_space<vmem>>, vector<8x128xf32>
      tpu.vector_store %arg13[%c0_92, %c0_93], %197 {strides = array<i32>} : memref<8x128xf32, #tpu.memory_space<vmem>>, vector<8x128xf32>,
      %c0_94 = arith.constant 0 : index
      %c0_95 = arith.constant 0 : index
      %230 = vector.load %arg14[%c0_94, %c0_95] : memref<8x128xf32, #tpu.memory_space<vmem>>, vector<8x128xf32>
      tpu.vector_store %arg14[%c0_94, %c0_95], %227 {strides = array<i32>} : memref<8x128xf32, #tpu.memory_space<vmem>>, vector<8x128xf32>,
      %c0_96 = arith.constant 0 : index
      %c0_97 = arith.constant 0 : index
      %231 = vector.load %arg15[%c0_96, %c0_97] : memref<8x128xf32, #tpu.memory_space<vmem>>, vector<8x128xf32>
      tpu.vector_store %arg15[%c0_96, %c0_97], %225 {strides = array<i32>} : memref<8x128xf32, #tpu.memory_space<vmem>>, vector<8x128xf32>,
    } else {
    }
    %c2_i32_5 = arith.constant 2 : i32
    %12 = arith.cmpi eq, %arg1, %c2_i32_5 : i32
    %13 = arith.extui %12 : i1 to i32
    %c0_i32_6 = arith.constant 0 : i32
    %14 = arith.cmpi ne, %13, %c0_i32_6 : i32
    scf.if %14 {
      %c0_9 = arith.constant 0 : index
      %c0_10 = arith.constant 0 : index
      %18 = vector.load %arg12[%c0_9, %c0_10] : memref<8x128xf32, #tpu.memory_space<vmem>>, vector<8x128xf32>
      %c0_11 = arith.constant 0 : index
      %c0_12 = arith.constant 0 : index
      %19 = vector.load %arg13[%c0_11, %c0_12] : memref<8x128xf32, #tpu.memory_space<vmem>>, vector<8x128xf32>
      %c0_13 = arith.constant 0 : index
      %c0_14 = arith.constant 0 : index
      %20 = vector.load %arg14[%c0_13, %c0_14] : memref<8x128xf32, #tpu.memory_space<vmem>>, vector<8x128xf32>
      %c0_15 = arith.constant 0 : index
      %c0_16 = arith.constant 0 : index
      %21 = vector.load %arg15[%c0_15, %c0_16] : memref<8x128xf32, #tpu.memory_space<vmem>>, vector<8x128xf32>
      %c0_17 = arith.constant 0 : index
      %c0_18 = arith.constant 0 : index
      %c0_19 = arith.constant 0 : index
      %22 = vector.load %arg2[%c0_17, %c0_18, %c0_19] : memref<3x8x16xf32, #tpu.memory_space<vmem>>, vector<1x8x16xf32>
      %23 = vector.shape_cast %22 : vector<1x8x16xf32> to vector<8x16xf32>
      %c0_20 = arith.constant 0 : index
      %c0_21 = arith.constant 0 : index
      %24 = vector.load %arg3[%c0_20, %c0_21] : memref<16x512xf32, #tpu.memory_space<vmem>>, vector<16x512xf32>
      %cst = arith.constant dense<0.000000e+00> : vector<8x512xf32>
      %25 = tpu.matmul %23, %24, %cst {dimension_numbers = #tpu.dot_dimension_numbers<[1], [0], [0], [1], [0, 0, 1, 1], [], []>} : vector<8x16xf32>, vector<16x512xf32>, vector<8x512xf32> -> vector<8x512xf32>
      %26 = arith.addf %25, %5 : vector<8x512xf32>
      %c0_i32_22 = arith.constant 0 : i32
      %c1_i32 = arith.constant 1 : i32
      %27 = arith.addi %c0_i32_22, %c1_i32 : i32
      %c1_i32_23 = arith.constant 1 : i32
      %28 = arith.minsi %27, %c1_i32_23 : i32
      %29 = arith.index_cast %28 : i32 to index
      %c0_24 = arith.constant 0 : index
      %c0_25 = arith.constant 0 : index
      %30 = vector.load %arg2[%29, %c0_24, %c0_25] : memref<3x8x16xf32, #tpu.memory_space<vmem>>, vector<1x8x16xf32>
      %31 = vector.shape_cast %30 : vector<1x8x16xf32> to vector<8x16xf32>
      %c0_26 = arith.constant 0 : index
      %c0_27 = arith.constant 0 : index
      %32 = vector.load %arg3[%c0_26, %c0_27] : memref<16x512xf32, #tpu.memory_space<vmem>>, vector<16x512xf32>
      %cst_28 = arith.constant dense<0.000000e+00> : vector<8x512xf32>
      %33 = tpu.matmul %31, %32, %cst_28 {dimension_numbers = #tpu.dot_dimension_numbers<[1], [0], [0], [1], [0, 0, 1, 1], [], []>} : vector<8x16xf32>, vector<16x512xf32>, vector<8x512xf32> -> vector<8x512xf32>
      %34 = arith.addf %33, %5 : vector<8x512xf32>
      %c0_29 = arith.constant 0 : index
      %c0_30 = arith.constant 0 : index
      %35 = vector.load %arg7[%c0_29, %c0_30] : memref<128x512xf32, #tpu.memory_space<vmem>>, vector<128x512xf32>
      %cst_31 = arith.constant dense<0.000000e+00> : vector<8x512xf32>
      %36 = tpu.matmul %20, %35, %cst_31 {dimension_numbers = #tpu.dot_dimension_numbers<[1], [0], [0], [1], [0, 0, 1, 1], [], []>} : vector<8x128xf32>, vector<128x512xf32>, vector<8x512xf32> -> vector<8x512xf32>
      %37 = arith.addf %36, %8 : vector<8x512xf32>
      %c0_32 = arith.constant 0 : index
      %c0_33 = arith.constant 0 : index
      %38 = vector.load %arg4[%c0_32, %c0_33] : memref<128x512xf32, #tpu.memory_space<vmem>>, vector<128x512xf32>
      %cst_34 = arith.constant dense<0.000000e+00> : vector<8x512xf32>
      %39 = tpu.matmul %18, %38, %cst_34 {dimension_numbers = #tpu.dot_dimension_numbers<[1], [0], [0], [1], [0, 0, 1, 1], [], []>} : vector<8x128xf32>, vector<128x512xf32>, vector<8x512xf32> -> vector<8x512xf32>
      %40 = arith.addf %26, %39 : vector<8x512xf32>
      %41 = vector.extract_strided_slice %40 {offsets = [0, 0], sizes = [8, 128], strides = [1, 1]} : vector<8x512xf32> to vector<8x128xf32>
      %42 = arith.negf %41 : vector<8x128xf32>
      %43 = math.exp %42 : vector<8x128xf32>
      %cst_35 = arith.constant 1.000000e+00 : f32
      %44 = vector.broadcast %cst_35 : f32 to vector<8x128xf32>
      %45 = arith.addf %44, %43 : vector<8x128xf32>
      %46 = arith.divf %44, %45 : vector<8x128xf32>
      %47 = vector.extract_strided_slice %40 {offsets = [0, 128], sizes = [8, 128], strides = [1, 1]} : vector<8x512xf32> to vector<8x128xf32>
      %48 = arith.negf %47 : vector<8x128xf32>
      %49 = math.exp %48 : vector<8x128xf32>
      %cst_36 = arith.constant 1.000000e+00 : f32
      %50 = vector.broadcast %cst_36 : f32 to vector<8x128xf32>
      %51 = arith.addf %50, %49 : vector<8x128xf32>
      %52 = arith.divf %50, %51 : vector<8x128xf32>
      %53 = vector.extract_strided_slice %40 {offsets = [0, 256], sizes = [8, 128], strides = [1, 1]} : vector<8x512xf32> to vector<8x128xf32>
      %54 = math.tanh %53 : vector<8x128xf32>
      %55 = vector.extract_strided_slice %40 {offsets = [0, 384], sizes = [8, 128], strides = [1, 1]} : vector<8x512xf32> to vector<8x128xf32>
      %56 = arith.negf %55 : vector<8x128xf32>
      %57 = math.exp %56 : vector<8x128xf32>
      %cst_37 = arith.constant 1.000000e+00 : f32
      %58 = vector.broadcast %cst_37 : f32 to vector<8x128xf32>
      %59 = arith.addf %58, %57 : vector<8x128xf32>
      %60 = arith.divf %58, %59 : vector<8x128xf32>
      %61 = arith.mulf %52, %19 : vector<8x128xf32>
      %62 = arith.mulf %46, %54 : vector<8x128xf32>
      %63 = arith.addf %61, %62 : vector<8x128xf32>
      %64 = math.tanh %63 : vector<8x128xf32>
      %65 = arith.mulf %60, %64 : vector<8x128xf32>
      %c0_38 = arith.constant 0 : index
      %c0_39 = arith.constant 0 : index
      %66 = vector.load %arg6[%c0_38, %c0_39] : memref<128x512xf32, #tpu.memory_space<vmem>>, vector<128x512xf32>
      %cst_40 = arith.constant dense<0.000000e+00> : vector<8x512xf32>
      %67 = tpu.matmul %65, %66, %cst_40 {dimension_numbers = #tpu.dot_dimension_numbers<[1], [0], [0], [1], [0, 0, 1, 1], [], []>} : vector<8x128xf32>, vector<128x512xf32>, vector<8x512xf32> -> vector<8x512xf32>
      %68 = arith.addf %37, %67 : vector<8x512xf32>
      %69 = vector.extract_strided_slice %68 {offsets = [0, 0], sizes = [8, 128], strides = [1, 1]} : vector<8x512xf32> to vector<8x128xf32>
      %70 = arith.negf %69 : vector<8x128xf32>
      %71 = math.exp %70 : vector<8x128xf32>
      %cst_41 = arith.constant 1.000000e+00 : f32
      %72 = vector.broadcast %cst_41 : f32 to vector<8x128xf32>
      %73 = arith.addf %72, %71 : vector<8x128xf32>
      %74 = arith.divf %72, %73 : vector<8x128xf32>
      %75 = vector.extract_strided_slice %68 {offsets = [0, 128], sizes = [8, 128], strides = [1, 1]} : vector<8x512xf32> to vector<8x128xf32>
      %76 = arith.negf %75 : vector<8x128xf32>
      %77 = math.exp %76 : vector<8x128xf32>
      %cst_42 = arith.constant 1.000000e+00 : f32
      %78 = vector.broadcast %cst_42 : f32 to vector<8x128xf32>
      %79 = arith.addf %78, %77 : vector<8x128xf32>
      %80 = arith.divf %78, %79 : vector<8x128xf32>
      %81 = vector.extract_strided_slice %68 {offsets = [0, 256], sizes = [8, 128], strides = [1, 1]} : vector<8x512xf32> to vector<8x128xf32>
      %82 = math.tanh %81 : vector<8x128xf32>
      %83 = vector.extract_strided_slice %68 {offsets = [0, 384], sizes = [8, 128], strides = [1, 1]} : vector<8x512xf32> to vector<8x128xf32>
      %84 = arith.negf %83 : vector<8x128xf32>
      %85 = math.exp %84 : vector<8x128xf32>
      %cst_43 = arith.constant 1.000000e+00 : f32
      %86 = vector.broadcast %cst_43 : f32 to vector<8x128xf32>
      %87 = arith.addf %86, %85 : vector<8x128xf32>
      %88 = arith.divf %86, %87 : vector<8x128xf32>
      %89 = arith.mulf %80, %21 : vector<8x128xf32>
      %90 = arith.mulf %74, %82 : vector<8x128xf32>
      %91 = arith.addf %89, %90 : vector<8x128xf32>
      %92 = math.tanh %91 : vector<8x128xf32>
      %93 = arith.mulf %88, %92 : vector<8x128xf32>
      %c1_i32_44 = arith.constant 1 : i32
      %c1_i32_45 = arith.constant 1 : i32
      %94 = arith.addi %c1_i32_44, %c1_i32_45 : i32
      %c1_i32_46 = arith.constant 1 : i32
      %95 = arith.minsi %94, %c1_i32_46 : i32
      %96 = arith.index_cast %95 : i32 to index
      %c0_47 = arith.constant 0 : index
      %c0_48 = arith.constant 0 : index
      %97 = vector.load %arg2[%96, %c0_47, %c0_48] : memref<3x8x16xf32, #tpu.memory_space<vmem>>, vector<1x8x16xf32>
      %98 = vector.shape_cast %97 : vector<1x8x16xf32> to vector<8x16xf32>
      %c0_49 = arith.constant 0 : index
      %c0_50 = arith.constant 0 : index
      %99 = vector.load %arg3[%c0_49, %c0_50] : memref<16x512xf32, #tpu.memory_space<vmem>>, vector<16x512xf32>
      %cst_51 = arith.constant dense<0.000000e+00> : vector<8x512xf32>
      %100 = tpu.matmul %98, %99, %cst_51 {dimension_numbers = #tpu.dot_dimension_numbers<[1], [0], [0], [1], [0, 0, 1, 1], [], []>} : vector<8x16xf32>, vector<16x512xf32>, vector<8x512xf32> -> vector<8x512xf32>
      %101 = arith.addf %100, %5 : vector<8x512xf32>
      %c0_52 = arith.constant 0 : index
      %c0_53 = arith.constant 0 : index
      %102 = vector.load %arg7[%c0_52, %c0_53] : memref<128x512xf32, #tpu.memory_space<vmem>>, vector<128x512xf32>
      %cst_54 = arith.constant dense<0.000000e+00> : vector<8x512xf32>
      %103 = tpu.matmul %93, %102, %cst_54 {dimension_numbers = #tpu.dot_dimension_numbers<[1], [0], [0], [1], [0, 0, 1, 1], [], []>} : vector<8x128xf32>, vector<128x512xf32>, vector<8x512xf32> -> vector<8x512xf32>
      %104 = arith.addf %103, %8 : vector<8x512xf32>
      %c0_55 = arith.constant 0 : index
      %c0_56 = arith.constant 0 : index
      %105 = vector.load %arg4[%c0_55, %c0_56] : memref<128x512xf32, #tpu.memory_space<vmem>>, vector<128x512xf32>
      %cst_57 = arith.constant dense<0.000000e+00> : vector<8x512xf32>
      %106 = tpu.matmul %65, %105, %cst_57 {dimension_numbers = #tpu.dot_dimension_numbers<[1], [0], [0], [1], [0, 0, 1, 1], [], []>} : vector<8x128xf32>, vector<128x512xf32>, vector<8x512xf32> -> vector<8x512xf32>
      %107 = arith.addf %34, %106 : vector<8x512xf32>
      %108 = vector.extract_strided_slice %107 {offsets = [0, 0], sizes = [8, 128], strides = [1, 1]} : vector<8x512xf32> to vector<8x128xf32>
      %109 = arith.negf %108 : vector<8x128xf32>
      %110 = math.exp %109 : vector<8x128xf32>
      %cst_58 = arith.constant 1.000000e+00 : f32
      %111 = vector.broadcast %cst_58 : f32 to vector<8x128xf32>
      %112 = arith.addf %111, %110 : vector<8x128xf32>
      %113 = arith.divf %111, %112 : vector<8x128xf32>
      %114 = vector.extract_strided_slice %107 {offsets = [0, 128], sizes = [8, 128], strides = [1, 1]} : vector<8x512xf32> to vector<8x128xf32>
      %115 = arith.negf %114 : vector<8x128xf32>
      %116 = math.exp %115 : vector<8x128xf32>
      %cst_59 = arith.constant 1.000000e+00 : f32
      %117 = vector.broadcast %cst_59 : f32 to vector<8x128xf32>
      %118 = arith.addf %117, %116 : vector<8x128xf32>
      %119 = arith.divf %117, %118 : vector<8x128xf32>
      %120 = vector.extract_strided_slice %107 {offsets = [0, 256], sizes = [8, 128], strides = [1, 1]} : vector<8x512xf32> to vector<8x128xf32>
      %121 = math.tanh %120 : vector<8x128xf32>
      %122 = vector.extract_strided_slice %107 {offsets = [0, 384], sizes = [8, 128], strides = [1, 1]} : vector<8x512xf32> to vector<8x128xf32>
      %123 = arith.negf %122 : vector<8x128xf32>
      %124 = math.exp %123 : vector<8x128xf32>
      %cst_60 = arith.constant 1.000000e+00 : f32
      %125 = vector.broadcast %cst_60 : f32 to vector<8x128xf32>
      %126 = arith.addf %125, %124 : vector<8x128xf32>
      %127 = arith.divf %125, %126 : vector<8x128xf32>
      %128 = arith.mulf %119, %63 : vector<8x128xf32>
      %129 = arith.mulf %113, %121 : vector<8x128xf32>
      %130 = arith.addf %128, %129 : vector<8x128xf32>
      %131 = math.tanh %130 : vector<8x128xf32>
      %132 = arith.mulf %127, %131 : vector<8x128xf32>
      %c0_61 = arith.constant 0 : index
      %c0_62 = arith.constant 0 : index
      %133 = vector.load %arg6[%c0_61, %c0_62] : memref<128x512xf32, #tpu.memory_space<vmem>>, vector<128x512xf32>
      %cst_63 = arith.constant dense<0.000000e+00> : vector<8x512xf32>
      %134 = tpu.matmul %132, %133, %cst_63 {dimension_numbers = #tpu.dot_dimension_numbers<[1], [0], [0], [1], [0, 0, 1, 1], [], []>} : vector<8x128xf32>, vector<128x512xf32>, vector<8x512xf32> -> vector<8x512xf32>
      %135 = arith.addf %104, %134 : vector<8x512xf32>
      %136 = vector.extract_strided_slice %135 {offsets = [0, 0], sizes = [8, 128], strides = [1, 1]} : vector<8x512xf32> to vector<8x128xf32>
      %137 = arith.negf %136 : vector<8x128xf32>
      %138 = math.exp %137 : vector<8x128xf32>
      %cst_64 = arith.constant 1.000000e+00 : f32
      %139 = vector.broadcast %cst_64 : f32 to vector<8x128xf32>
      %140 = arith.addf %139, %138 : vector<8x128xf32>
      %141 = arith.divf %139, %140 : vector<8x128xf32>
      %142 = vector.extract_strided_slice %135 {offsets = [0, 128], sizes = [8, 128], strides = [1, 1]} : vector<8x512xf32> to vector<8x128xf32>
      %143 = arith.negf %142 : vector<8x128xf32>
      %144 = math.exp %143 : vector<8x128xf32>
      %cst_65 = arith.constant 1.000000e+00 : f32
      %145 = vector.broadcast %cst_65 : f32 to vector<8x128xf32>
      %146 = arith.addf %145, %144 : vector<8x128xf32>
      %147 = arith.divf %145, %146 : vector<8x128xf32>
      %148 = vector.extract_strided_slice %135 {offsets = [0, 256], sizes = [8, 128], strides = [1, 1]} : vector<8x512xf32> to vector<8x128xf32>
      %149 = math.tanh %148 : vector<8x128xf32>
      %150 = vector.extract_strided_slice %135 {offsets = [0, 384], sizes = [8, 128], strides = [1, 1]} : vector<8x512xf32> to vector<8x128xf32>
      %151 = arith.negf %150 : vector<8x128xf32>
      %152 = math.exp %151 : vector<8x128xf32>
      %cst_66 = arith.constant 1.000000e+00 : f32
      %153 = vector.broadcast %cst_66 : f32 to vector<8x128xf32>
      %154 = arith.addf %153, %152 : vector<8x128xf32>
      %155 = arith.divf %153, %154 : vector<8x128xf32>
      %156 = arith.mulf %147, %91 : vector<8x128xf32>
      %157 = arith.mulf %141, %149 : vector<8x128xf32>
      %158 = arith.addf %156, %157 : vector<8x128xf32>
      %159 = math.tanh %158 : vector<8x128xf32>
      %160 = arith.mulf %155, %159 : vector<8x128xf32>
      %c2_i32_67 = arith.constant 2 : i32
      %c0_68 = arith.constant 0 : index
      %c0_69 = arith.constant 0 : index
      %161 = vector.load %arg12[%c0_68, %c0_69] : memref<8x128xf32, #tpu.memory_space<vmem>>, vector<8x128xf32>
      tpu.vector_store %arg12[%c0_68, %c0_69], %132 {strides = array<i32>} : memref<8x128xf32, #tpu.memory_space<vmem>>, vector<8x128xf32>,
      %c0_70 = arith.constant 0 : index
      %c0_71 = arith.constant 0 : index
      %162 = vector.load %arg13[%c0_70, %c0_71] : memref<8x128xf32, #tpu.memory_space<vmem>>, vector<8x128xf32>
      tpu.vector_store %arg13[%c0_70, %c0_71], %130 {strides = array<i32>} : memref<8x128xf32, #tpu.memory_space<vmem>>, vector<8x128xf32>,
      %c0_72 = arith.constant 0 : index
      %c0_73 = arith.constant 0 : index
      %163 = vector.load %arg14[%c0_72, %c0_73] : memref<8x128xf32, #tpu.memory_space<vmem>>, vector<8x128xf32>
      tpu.vector_store %arg14[%c0_72, %c0_73], %160 {strides = array<i32>} : memref<8x128xf32, #tpu.memory_space<vmem>>, vector<8x128xf32>,
      %c0_74 = arith.constant 0 : index
      %c0_75 = arith.constant 0 : index
      %164 = vector.load %arg15[%c0_74, %c0_75] : memref<8x128xf32, #tpu.memory_space<vmem>>, vector<8x128xf32>
      tpu.vector_store %arg15[%c0_74, %c0_75], %158 {strides = array<i32>} : memref<8x128xf32, #tpu.memory_space<vmem>>, vector<8x128xf32>,
    } else {
    }
    %c2_i32_7 = arith.constant 2 : i32
    %15 = arith.cmpi eq, %arg1, %c2_i32_7 : i32
    %16 = arith.extui %15 : i1 to i32
    %c0_i32_8 = arith.constant 0 : i32
    %17 = arith.cmpi ne, %16, %c0_i32_8 : i32
    scf.if %17 {
      %c0_9 = arith.constant 0 : index
      %c0_10 = arith.constant 0 : index
      %18 = vector.load %arg14[%c0_9, %c0_10] : memref<8x128xf32, #tpu.memory_space<vmem>>, vector<8x128xf32>
      %c0_11 = arith.constant 0 : index
      %c0_12 = arith.constant 0 : index
      %19 = vector.load %arg9[%c0_11, %c0_12] : memref<128x128xf32, #tpu.memory_space<vmem>>, vector<128x128xf32>
      %cst = arith.constant dense<0.000000e+00> : vector<8x128xf32>
      %20 = tpu.matmul %18, %19, %cst {dimension_numbers = #tpu.dot_dimension_numbers<[1], [0], [0], [1], [0, 0, 1, 1], [], []>} : vector<8x128xf32>, vector<128x128xf32>, vector<8x128xf32> -> vector<8x128xf32>
      %c0_13 = arith.constant 0 : index
      %c0_14 = arith.constant 0 : index
      %21 = vector.load %arg10[%c0_13, %c0_14] : memref<1x128xf32, #tpu.memory_space<vmem>>, vector<1x128xf32>
      %22 = vector.broadcast %21 : vector<1x128xf32> to vector<8x128xf32>
      %23 = arith.addf %20, %22 : vector<8x128xf32>
      %c0_15 = arith.constant 0 : index
      %c0_16 = arith.constant 0 : index
      %24 = vector.load %arg11[%c0_15, %c0_16] : memref<8x128xf32, #tpu.memory_space<vmem>>, vector<8x128xf32>
      tpu.vector_store %arg11[%c0_15, %c0_16], %23 {strides = array<i32>} : memref<8x128xf32, #tpu.memory_space<vmem>>, vector<8x128xf32>,
    } else {
    }
    return
  }
  func.func @transform_0(%arg0: i32, %arg1: i32) -> (i32, i32, i32) {
    %c0_i32 = arith.constant 0 : i32
    %c0_i32_0 = arith.constant 0 : i32
    return %arg1, %arg0, %c0_i32 : i32, i32, i32
  }
  func.func @transform_1(%arg0: i32, %arg1: i32) -> (i32, i32) {
    %c0_i32 = arith.constant 0 : i32
    %c0_i32_0 = arith.constant 0 : i32
    %c0_i32_1 = arith.constant 0 : i32
    return %c0_i32, %c0_i32_0 : i32, i32
  }
  func.func @transform_2(%arg0: i32, %arg1: i32) -> (i32, i32) {
    %c0_i32 = arith.constant 0 : i32
    %c0_i32_0 = arith.constant 0 : i32
    %c0_i32_1 = arith.constant 0 : i32
    return %c0_i32, %c0_i32_0 : i32, i32
  }
  func.func @transform_3(%arg0: i32, %arg1: i32) -> (i32, i32) {
    %c0_i32 = arith.constant 0 : i32
    %c0_i32_0 = arith.constant 0 : i32
    %c0_i32_1 = arith.constant 0 : i32
    return %c0_i32, %c0_i32_0 : i32, i32
  }
  func.func @transform_4(%arg0: i32, %arg1: i32) -> (i32, i32) {
    %c0_i32 = arith.constant 0 : i32
    %c0_i32_0 = arith.constant 0 : i32
    %c0_i32_1 = arith.constant 0 : i32
    return %c0_i32, %c0_i32_0 : i32, i32
  }
  func.func @transform_5(%arg0: i32, %arg1: i32) -> (i32, i32) {
    %c0_i32 = arith.constant 0 : i32
    %c0_i32_0 = arith.constant 0 : i32
    %c0_i32_1 = arith.constant 0 : i32
    return %c0_i32, %c0_i32_0 : i32, i32
  }
  func.func @transform_6(%arg0: i32, %arg1: i32) -> (i32, i32) {
    %c0_i32 = arith.constant 0 : i32
    %c0_i32_0 = arith.constant 0 : i32
    %c0_i32_1 = arith.constant 0 : i32
    return %c0_i32, %c0_i32_0 : i32, i32
  }
  func.func @transform_7(%arg0: i32, %arg1: i32) -> (i32, i32) {
    %c0_i32 = arith.constant 0 : i32
    %c0_i32_0 = arith.constant 0 : i32
    %c0_i32_1 = arith.constant 0 : i32
    return %c0_i32, %c0_i32_0 : i32, i32
  }
  func.func @transform_8(%arg0: i32, %arg1: i32) -> (i32, i32) {
    %c0_i32 = arith.constant 0 : i32
    %c0_i32_0 = arith.constant 0 : i32
    %c0_i32_1 = arith.constant 0 : i32
    return %c0_i32, %c0_i32_0 : i32, i32
  }
  func.func @transform_9(%arg0: i32, %arg1: i32) -> (i32, i32) {
    %c0_i32 = arith.constant 0 : i32
    %c0_i32_0 = arith.constant 0 : i32
    return %arg0, %c0_i32 : i32, i32
  }
}

</mosaic_0001>

<llo_original>
// kernel: tpu_custom_call.1
$region0: #{tpu_custom_call.1}
  #allocation0 [shape = 'u32[]', space=smem, size = 0x4, offset = 0x4, fixed_abs, tag = 'smem constant byte address 0x4 - core index']
  #allocation1 [shape = 'u32[72,128]{1,0:T(1,128)}', space=vmem, size = 0x9000, scoped, tag = 'internal scratch']
  #allocation2 [shape = 'f32[8,128]{1,0:T(8,128)}', space=vmem, size = 0x1000, scoped, tag = 'scratch operand']
  #allocation3 [shape = 'f32[8,128]{1,0:T(8,128)}', space=vmem, size = 0x1000, scoped, tag = 'scratch operand']
  #allocation4 [shape = 'f32[8,128]{1,0:T(8,128)}', space=vmem, size = 0x1000, scoped, tag = 'scratch operand']
  #allocation5 [shape = 'f32[8,128]{1,0:T(8,128)}', space=vmem, size = 0x1000, scoped, tag = 'scratch operand']
  %s0 = inlined_call_operand.hbm [shape: f32[9,8,16], index: 0, kind: input, shape index: {}]
  %s1 = inlined_call_operand.hbm [shape: f32[16,512], index: 1, kind: input, shape index: {}]
  %s2 = inlined_call_operand.hbm [shape: f32[128,512], index: 2, kind: input, shape index: {}]
  %s3 = inlined_call_operand.hbm [shape: f32[1,512], index: 3, kind: input, shape index: {}]
  %s4 = inlined_call_operand.hbm [shape: f32[128,512], index: 4, kind: input, shape index: {}]
  %s5 = inlined_call_operand.hbm [shape: f32[128,512], index: 5, kind: input, shape index: {}]
  %s6 = inlined_call_operand.vmem [shape: f32[1,512], index: 6, kind: input, shape index: {}]
  %s7 = inlined_call_operand.hbm [shape: f32[128,128], index: 7, kind: input, shape index: {}]
  %s8 = inlined_call_operand.vmem [shape: f32[1,128], index: 8, kind: input, shape index: {}]
  %s9 = inlined_call_operand.hbm [shape: f32[8,128], index: 9, kind: output, shape index: {}]
  %s10 = sld [smem:[#allocation0]]
  $region109: #{tpu_custom_call.1} parent=0
    _
  %s12 = ssub.s32 1, %s10
  %s13 = scalar_select 0, %s12, %s10
  $region1: #{tpu_custom_call.1} parent=0
    #allocation6 [shape = 'u8[24576]{0}', space=vmem, size = 0x6000, scoped, tag = 'input window, operand 0']
    #allocation7 [shape = 's32[2]{0}', space=sflag, size = 0x8, scoped, tag = 'scoped memory for tpu_custom_call.1']
    #allocation8 [shape = 's32[2]{0}', space=sflag, size = 0x8, scoped, tag = 'scoped memory for tpu_custom_call.1']
    #allocation9 [shape = 'u8[32768]{0}', space=vmem, size = 0x8000, scoped, tag = 'input window, operand 1, single buffered']
    #allocation10 [shape = 's32[1]{0}', space=sflag, size = 0x4, scoped, tag = 'scoped memory for tpu_custom_call.1']
    #allocation11 [shape = 'u8[262144]{0}', space=vmem, size = 0x40000, scoped, tag = 'input window, operand 2, single buffered']
    #allocation12 [shape = 'u8[2048]{0}', space=vmem, size = 0x800, scoped, tag = 'input window, operand 3, single buffered']
    #allocation13 [shape = 's32[1]{0}', space=sflag, size = 0x4, scoped, tag = 'scoped memory for tpu_custom_call.1']
    #allocation14 [shape = 'u8[262144]{0}', space=vmem, size = 0x40000, scoped, tag = 'input window, operand 4, single buffered']
    #allocation15 [shape = 'u8[262144]{0}', space=vmem, size = 0x40000, scoped, tag = 'input window, operand 5, single buffered']
    #allocation16 [shape = 's32[1]{0}', space=sflag, size = 0x4, scoped, tag = 'scoped memory for tpu_custom_call.1']
    #allocation17 [shape = 'u8[65536]{0}', space=vmem, size = 0x10000, scoped, tag = 'input window, operand 7, single buffered']
    #allocation18 [shape = 'u8[4096]{0}', space=vmem, size = 0x1000, scoped, tag = 'output window, operand 0, single buffered']
    %14 = vsyncpa [#allocation7], 0
    %s15 = scalar_lea.sflag [#allocation7], 1
    %16 = vsyncpa %s15, 0
    %17 = vsyncpa [#allocation10], 0
    %18 = vsyncpa [#allocation13], 0
    %19 = vsyncpa [#allocation16], 0
    %20 = vsyncpa [#allocation8], 0
    loop: start=0, step=1, limit=5
    $region2: #{tpu_custom_call.1} parent=1 // loop_pre_header
      _
    $region3: #{tpu_custom_call.1} parent=1 // loop_header
      %s22 = sphi 0, %s26
      %p23 = scmp.ge.s32.totalorder %s22, 5
      %s29 = sphi 0, %s41
      %s30 = sphi 0, %s37
      %s31 = sphi 0, %s29
      %s32 = sphi 0, %s30
      %s33 = sphi 0, %s31
      %s34 = sphi 0, %s32
      %s46 = sphi 0, %s48
      %s49 = sphi 0, %s46
      %s50 = sphi 0, %s49
      %s66 = sphi 0, %s50
      %s70 = sphi 0, %s70
      %s72 = sphi 0, %s70
      %s73 = sphi 0, %s72
      %s87 = sphi 0, %s73
      %s91 = sphi 0, %s91
      %s93 = sphi 0, %s91
      %s94 = sphi 0, %s93
      %s108 = sphi 0, %s94
      %s112 = sphi 0, %s112
      %s114 = sphi 0, %s112
      %s115 = sphi 0, %s114
      %s129 = sphi 0, %s115
      %s133 = sphi 0, %s133
      %s135 = sphi 0, %s133
      %s136 = sphi 0, %s135
      %s150 = sphi 0, %s136
      %s154 = sphi 0, %s154
      %s156 = sphi 0, %s154
      %s157 = sphi 0, %s156
      %s171 = sphi 0, %s157
      %s175 = sphi 0, %s175
      %s177 = sphi 0, %s175
      %s178 = sphi 0, %s177
      %s192 = sphi 0, %s178
      %s196 = sphi 0, %s196
      %s198 = sphi 0, %s196
      %s199 = sphi 0, %s198
      %s213 = sphi 0, %s199
      %s217 = sphi 0, %s217
      %s219 = sphi 0, %s217
      %s220 = sphi 0, %s219
      %s234 = sphi 0, %s220
      %s240 = sphi 0, %s242
      %s243 = sphi 0, %s240
      %s244 = sphi 0, %s243
      %s260 = sphi 0, %s244
    $region4: #{tpu_custom_call.1} parent=1 // loop_header_branch
      %25 = sbr.rel (%p23) target = $region8
    $region5: #{tpu_custom_call.1} parent=1 // loop_body
      %s27 = ssub.s32 %s22, 1
      %s28 = ssub.s32 %s22, 2
      %s35 = sadd.s32 1, %s30
      %p36 = scmp.ge.s32.totalorder %s35, 3
      %s37 = scalar_select %p36, 0, %s35
      %s38 = sadd.s32 1, %s29
      %s39 = scalar_select %p36, %s38, %s29
      %p40 = scmp.ge.s32.totalorder %s39, 1
      %s41 = scalar_select %p40, 0, %s39
      %s42 = ssub.s32 %s30, %s37
      %s43 = ssub.s32 %s29, %s41
      %s44 = sor.u32 %s42, %s43
      %p45 = scmp.eq.s32.totalorder %s44, 0
      %s47 = sadd.s32 %s46, 1
      %s48 = scalar_select %p45, %s46, %s47
      %p51 = pneg %p45
      %p52 = scmp.eq.s32.totalorder %s22, 2
      %p53 = por %p51, %p52
      %p54 = scmp.ne.s32.totalorder %s46, %s49
      %p55 = scmp.eq.s32.totalorder %s22, 0
      %p56 = por %p54, %p55
      %p57 = scmp.ne.s32.totalorder %s46, %s49
      %p58 = scmp.eq.s32.totalorder %s27, 2
      %p59 = por %p57, %p58
      %p60 = scmp.ne.s32.totalorder %s49, %s50
      %p61 = scmp.eq.s32.totalorder %s27, 0
      %p62 = por %p60, %p61
      %p63 = scmp.ne.s32.totalorder %s49, %s50
      %p64 = scmp.eq.s32.totalorder %s28, 2
      %p65 = por %p63, %p64
      %p67 = scmp.ne.s32.totalorder %s50, %s66
      %p68 = scmp.eq.s32.totalorder %s28, 0
      %p69 = por %p67, %p68
      %s71 = sadd.s32 %s70, 1
      %p74 = scmp.eq.s32.totalorder %s22, 2
      %p75 = scmp.ne.s32.totalorder %s70, %s72
      %p76 = scmp.eq.s32.totalorder %s22, 0
      %p77 = por %p75, %p76
      %p78 = scmp.ne.s32.totalorder %s70, %s72
      %p79 = scmp.eq.s32.totalorder %s27, 2
      %p80 = por %p78, %p79
      %p81 = scmp.ne.s32.totalorder %s72, %s73
      %p82 = scmp.eq.s32.totalorder %s27, 0
      %p83 = por %p81, %p82
      %p84 = scmp.ne.s32.totalorder %s72, %s73
      %p85 = scmp.eq.s32.totalorder %s28, 2
      %p86 = por %p84, %p85
      %p88 = scmp.ne.s32.totalorder %s73, %s87
      %p89 = scmp.eq.s32.totalorder %s28, 0
      %p90 = por %p88, %p89
      %s92 = sadd.s32 %s91, 1
      %p95 = scmp.eq.s32.totalorder %s22, 2
      %p96 = scmp.ne.s32.totalorder %s91, %s93
      %p97 = scmp.eq.s32.totalorder %s22, 0
      %p98 = por %p96, %p97
      %p99 = scmp.ne.s32.totalorder %s91, %s93
      %p100 = scmp.eq.s32.totalorder %s27, 2
      %p101 = por %p99, %p100
      %p102 = scmp.ne.s32.totalorder %s93, %s94
      %p103 = scmp.eq.s32.totalorder %s27, 0
      %p104 = por %p102, %p103
      %p105 = scmp.ne.s32.totalorder %s93, %s94
      %p106 = scmp.eq.s32.totalorder %s28, 2
      %p107 = por %p105, %p106
      %p109 = scmp.ne.s32.totalorder %s94, %s108
      %p110 = scmp.eq.s32.totalorder %s28, 0
      %p111 = por %p109, %p110
      %s113 = sadd.s32 %s112, 1
      %p116 = scmp.eq.s32.totalorder %s22, 2
      %p117 = scmp.ne.s32.totalorder %s112, %s114
      %p118 = scmp.eq.s32.totalorder %s22, 0
      %p119 = por %p117, %p118
      %p120 = scmp.ne.s32.totalorder %s112, %s114
      %p121 = scmp.eq.s32.totalorder %s27, 2
      %p122 = por %p120, %p121
      %p123 = scmp.ne.s32.totalorder %s114, %s115
      %p124 = scmp.eq.s32.totalorder %s27, 0
      %p125 = por %p123, %p124
      %p126 = scmp.ne.s32.totalorder %s114, %s115
      %p127 = scmp.eq.s32.totalorder %s28, 2
      %p128 = por %p126, %p127
      %p130 = scmp.ne.s32.totalorder %s115, %s129
      %p131 = scmp.eq.s32.totalorder %s28, 0
      %p132 = por %p130, %p131
      %s134 = sadd.s32 %s133, 1
      %p137 = scmp.eq.s32.totalorder %s22, 2
      %p138 = scmp.ne.s32.totalorder %s133, %s135
      %p139 = scmp.eq.s32.totalorder %s22, 0
      %p140 = por %p138, %p139
      %p141 = scmp.ne.s32.totalorder %s133, %s135
      %p142 = scmp.eq.s32.totalorder %s27, 2
      %p143 = por %p141, %p142
      %p144 = scmp.ne.s32.totalorder %s135, %s136
      %p145 = scmp.eq.s32.totalorder %s27, 0
      %p146 = por %p144, %p145
      %p147 = scmp.ne.s32.totalorder %s135, %s136
      %p148 = scmp.eq.s32.totalorder %s28, 2
      %p149 = por %p147, %p148
      %p151 = scmp.ne.s32.totalorder %s136, %s150
      %p152 = scmp.eq.s32.totalorder %s28, 0
      %p153 = por %p151, %p152
      %s155 = sadd.s32 %s154, 1
      %p158 = scmp.eq.s32.totalorder %s22, 2
      %p159 = scmp.ne.s32.totalorder %s154, %s156
      %p160 = scmp.eq.s32.totalorder %s22, 0
      %p161 = por %p159, %p160
      %p162 = scmp.ne.s32.totalorder %s154, %s156
      %p163 = scmp.eq.s32.totalorder %s27, 2
      %p164 = por %p162, %p163
      %p165 = scmp.ne.s32.totalorder %s156, %s157
      %p166 = scmp.eq.s32.totalorder %s27, 0
      %p167 = por %p165, %p166
      %p168 = scmp.ne.s32.totalorder %s156, %s157
      %p169 = scmp.eq.s32.totalorder %s28, 2
      %p170 = por %p168, %p169
      %p172 = scmp.ne.s32.totalorder %s157, %s171
      %p173 = scmp.eq.s32.totalorder %s28, 0
      %p174 = por %p172, %p173
      %s176 = sadd.s32 %s175, 1
      %p179 = scmp.eq.s32.totalorder %s22, 2
      %p180 = scmp.ne.s32.totalorder %s175, %s177
      %p181 = scmp.eq.s32.totalorder %s22, 0
      %p182 = por %p180, %p181
      %p183 = scmp.ne.s32.totalorder %s175, %s177
      %p184 = scmp.eq.s32.totalorder %s27, 2
      %p185 = por %p183, %p184
      %p186 = scmp.ne.s32.totalorder %s177, %s178
      %p187 = scmp.eq.s32.totalorder %s27, 0
      %p188 = por %p186, %p187
      %p189 = scmp.ne.s32.totalorder %s177, %s178
      %p190 = scmp.eq.s32.totalorder %s28, 2
      %p191 = por %p189, %p190
      %p193 = scmp.ne.s32.totalorder %s178, %s192
      %p194 = scmp.eq.s32.totalorder %s28, 0
      %p195 = por %p193, %p194
      %s197 = sadd.s32 %s196, 1
      %p200 = scmp.eq.s32.totalorder %s22, 2
      %p201 = scmp.ne.s32.totalorder %s196, %s198
      %p202 = scmp.eq.s32.totalorder %s22, 0
      %p203 = por %p201, %p202
      %p204 = scmp.ne.s32.totalorder %s196, %s198
      %p205 = scmp.eq.s32.totalorder %s27, 2
      %p206 = por %p204, %p205
      %p207 = scmp.ne.s32.totalorder %s198, %s199
      %p208 = scmp.eq.s32.totalorder %s27, 0
      %p209 = por %p207, %p208
      %p210 = scmp.ne.s32.totalorder %s198, %s199
      %p211 = scmp.eq.s32.totalorder %s28, 2
      %p212 = por %p210, %p211
      %p214 = scmp.ne.s32.totalorder %s199, %s213
      %p215 = scmp.eq.s32.totalorder %s28, 0
      %p216 = por %p214, %p215
      %s218 = sadd.s32 %s217, 1
      %p221 = scmp.eq.s32.totalorder %s22, 2
      %p222 = scmp.ne.s32.totalorder %s217, %s219
      %p223 = scmp.eq.s32.totalorder %s22, 0
      %p224 = por %p222, %p223
      %p225 = scmp.ne.s32.totalorder %s217, %s219
      %p226 = scmp.eq.s32.totalorder %s27, 2
      %p227 = por %p225, %p226
      %p228 = scmp.ne.s32.totalorder %s219, %s220
      %p229 = scmp.eq.s32.totalorder %s27, 0
      %p230 = por %p228, %p229
      %p231 = scmp.ne.s32.totalorder %s219, %s220
      %p232 = scmp.eq.s32.totalorder %s28, 2
      %p233 = por %p231, %p232
      %p235 = scmp.ne.s32.totalorder %s220, %s234
      %p236 = scmp.eq.s32.totalorder %s28, 0
      %p237 = por %p235, %p236
      %s238 = ssub.s32 %s29, %s41
      %p239 = scmp.eq.s32.totalorder %s238, 0
      %s241 = sadd.s32 %s240, 1
      %s242 = scalar_select %p239, %s240, %s241
      %p245 = pneg %p239
      %p246 = scmp.eq.s32.totalorder %s22, 2
      %p247 = por %p245, %p246
      %p248 = scmp.ne.s32.totalorder %s240, %s243
      %p249 = scmp.eq.s32.totalorder %s22, 0
      %p250 = por %p248, %p249
      %p251 = scmp.ne.s32.totalorder %s240, %s243
      %p252 = scmp.eq.s32.totalorder %s27, 2
      %p253 = por %p251, %p252
      %p254 = scmp.ne.s32.totalorder %s243, %s244
      %p255 = scmp.eq.s32.totalorder %s27, 0
      %p256 = por %p254, %p255
      %p257 = scmp.ne.s32.totalorder %s243, %s244
      %p258 = scmp.eq.s32.totalorder %s28, 2
      %p259 = por %p257, %p258
      %p261 = scmp.ne.s32.totalorder %s244, %s260
      %p262 = scmp.eq.s32.totalorder %s28, 0
      %p263 = por %p261, %p262
      %p264 = scmp.le.s32.totalorder 1, %s22
      %p265 = scmp.lt.s32.totalorder %s22, 4
      %p266 = pnand %p264, %p265
      %p267 = pneg %p266
      // Predicated region
      $region9: #{tpu_custom_call.1} parent=5 // pred_check
        _
      $region10: #{tpu_custom_call.1} parent=5 // pred_check_branch
        %269 = sbr.rel (%p266) target = $region12
      $region11: #{tpu_custom_call.1} parent=5 // pred_region
        %s270 = ssub.s32 %s22, 1
        // Predicated region
        $region13: #{tpu_custom_call.1} parent=11 // pred_check
          %p271 = pneg %p83
        $region14: #{tpu_custom_call.1} parent=11 // pred_check_branch
          %273 = sbr.rel (%p271) target = $region16
        $region15: #{tpu_custom_call.1} parent=11 // pred_region
          %275 = vsyncadd [#allocation10], 0
          %s276 = sshll.u32 %s1, 4
          %s277 = int_to_ptr.hbm [resolvable:$true] %s276
          %s278 = sshll.u32 [#allocation9], 4
          %s279 = int_to_ptr.vmem [resolvable:$true] %s278
          %284 = dma.hbm_to_vmem [thread:$0]  %s277, 1024, %s279, [#allocation10], 512, 512, 32
        $region16: #{tpu_custom_call.1} parent=11 // pred_fallthru
          _
        // Predicated region
        $region17: #{tpu_custom_call.1} parent=11 // pred_check
          %p285 = pneg %p104
        $region18: #{tpu_custom_call.1} parent=11 // pred_check_branch
          %287 = sbr.rel (%p285) target = $region20
        $region19: #{tpu_custom_call.1} parent=11 // pred_region
          %289 = vsyncadd [#allocation10], 0
          %s290 = sshll.u32 %s2, 4
          %s291 = int_to_ptr.hbm [resolvable:$true] %s290
          %s292 = sshll.u32 [#allocation11], 4
          %s293 = int_to_ptr.vmem [resolvable:$true] %s292
          %298 = dma.hbm_to_vmem [thread:$0]  %s291, 8192, %s293, [#allocation10], 512, 512, 32
        $region20: #{tpu_custom_call.1} parent=11 // pred_fallthru
          _
        // Predicated region
        $region21: #{tpu_custom_call.1} parent=11 // pred_check
          %p299 = pneg %p125
        $region22: #{tpu_custom_call.1} parent=11 // pred_check_branch
          %301 = sbr.rel (%p299) target = $region24
        $region23: #{tpu_custom_call.1} parent=11 // pred_region
          %303 = vsyncadd [#allocation13], 0
          %s305 = sshll.u32 %s3, 4
          %s306 = int_to_ptr.hbm [resolvable:$true] %s305
          %s307 = sshll.u32 [#allocation12], 4
          %s308 = int_to_ptr.vmem [resolvable:$true] %s307
          %310 = dma.hbm_to_vmem [thread:$0]  %s306, 64, %s308, [#allocation13]
        $region24: #{tpu_custom_call.1} parent=11 // pred_fallthru
          _
        // Predicated region
        $region25: #{tpu_custom_call.1} parent=11 // pred_check
          %p311 = pneg %p146
        $region26: #{tpu_custom_call.1} parent=11 // pred_check_branch
          %313 = sbr.rel (%p311) target = $region28
        $region27: #{tpu_custom_call.1} parent=11 // pred_region
          %315 = vsyncadd [#allocation13], 0
          %s316 = sshll.u32 %s4, 4
          %s317 = int_to_ptr.hbm [resolvable:$true] %s316
          %s318 = sshll.u32 [#allocation14], 4
          %s319 = int_to_ptr.vmem [resolvable:$true] %s318
          %324 = dma.hbm_to_vmem [thread:$0]  %s317, 8192, %s319, [#allocation13], 512, 512, 32
        $region28: #{tpu_custom_call.1} parent=11 // pred_fallthru
          _
        // Predicated region
        $region29: #{tpu_custom_call.1} parent=11 // pred_check
          %p325 = pneg %p167
        $region30: #{tpu_custom_call.1} parent=11 // pred_check_branch
          %327 = sbr.rel (%p325) target = $region32
        $region31: #{tpu_custom_call.1} parent=11 // pred_region
          %329 = vsyncadd [#allocation16], 0
          %s330 = sshll.u32 %s5, 4
          %s331 = int_to_ptr.hbm [resolvable:$true] %s330
          %s332 = sshll.u32 [#allocation15], 4
          %s333 = int_to_ptr.vmem [resolvable:$true] %s332
          %338 = dma.hbm_to_vmem [thread:$0]  %s331, 8192, %s333, [#allocation16], 512, 512, 32
        $region32: #{tpu_custom_call.1} parent=11 // pred_fallthru
          _
        // Predicated region
        $region33: #{tpu_custom_call.1} parent=11 // pred_check
          %p339 = pneg %p188
        $region34: #{tpu_custom_call.1} parent=11 // pred_check_branch
          %341 = sbr.rel (%p339) target = $region36
        $region35: #{tpu_custom_call.1} parent=11 // pred_region
          _
        $region36: #{tpu_custom_call.1} parent=11 // pred_fallthru
          _
        // Predicated region
        $region37: #{tpu_custom_call.1} parent=11 // pred_check
          %p342 = pneg %p209
        $region38: #{tpu_custom_call.1} parent=11 // pred_check_branch
          %344 = sbr.rel (%p342) target = $region40
        $region39: #{tpu_custom_call.1} parent=11 // pred_region
          %346 = vsyncadd [#allocation16], 0
          %s347 = sshll.u32 %s7, 4
          %s348 = int_to_ptr.hbm [resolvable:$true] %s347
          %s349 = sshll.u32 [#allocation17], 4
          %s350 = int_to_ptr.vmem [resolvable:$true] %s349
          %355 = dma.hbm_to_vmem [thread:$0]  %s348, 2048, %s350, [#allocation16], 128, 128, 8
        $region40: #{tpu_custom_call.1} parent=11 // pred_fallthru
          _
        // Predicated region
        $region41: #{tpu_custom_call.1} parent=11 // pred_check
          %p356 = pneg %p230
        $region42: #{tpu_custom_call.1} parent=11 // pred_check_branch
          %358 = sbr.rel (%p356) target = $region44
        $region43: #{tpu_custom_call.1} parent=11 // pred_region
          _
        $region44: #{tpu_custom_call.1} parent=11 // pred_fallthru
          _
      $region12: #{tpu_custom_call.1} parent=5 // pred_fallthru
        _
      %p359 = scmp.lt.s32.totalorder %s22, 3
      // Predicated region
      $region45: #{tpu_custom_call.1} parent=5 // pred_check
        %p360 = pneg %p359
      $region46: #{tpu_custom_call.1} parent=5 // pred_check_branch
        %362 = sbr.rel (%p360) target = $region48
      $region47: #{tpu_custom_call.1} parent=5 // pred_region
        // Predicated region
        $region49: #{tpu_custom_call.1} parent=47 // pred_check
          %p363 = pneg %p56
        $region50: #{tpu_custom_call.1} parent=47 // pred_check_branch
          %365 = sbr.rel (%p363) target = $region52
        $region51: #{tpu_custom_call.1} parent=47 // pred_region
          %s366 = sand.u32 %s46, 1
          %s367 = scalar_lea.sflag [#allocation7], %s366
          %s368 = sand.u32 %s46, 1
          %s369 = smul.addr %s368, 24
          %s370 = scalar_lea.vmem [#allocation6], %s369
          %s371 = smul.u32 3, %s30
          %373 = vsyncadd %s367, 0
          %s374 = sadd.s32 %s29, %s371
          %s375 = smul.addr %s374, 8
          %s376 = scalar_lea.hbm %s0, %s375
          %s377 = sshll.u32 %s376, 4
          %s378 = int_to_ptr.hbm [resolvable:$true] %s377
          %s379 = sshll.u32 %s370, 4
          %s380 = int_to_ptr.vmem [resolvable:$true] %s379
          %385 = dma.hbm_to_vmem [thread:$0]  %s378, 384, %s380, %s367, 128, 128, 8
        $region52: #{tpu_custom_call.1} parent=47 // pred_fallthru
          _
      $region48: #{tpu_custom_call.1} parent=5 // pred_fallthru
        _
      %p386 = scmp.le.s32.totalorder 1, %s22
      %p387 = scmp.lt.s32.totalorder %s22, 4
      %p388 = pnand %p386, %p387
      %p389 = pneg %p388
      // Predicated region
      $region53: #{tpu_custom_call.1} parent=5 // pred_check
        _
      $region54: #{tpu_custom_call.1} parent=5 // pred_check_branch
        %391 = sbr.rel (%p388) target = $region56
      $region55: #{tpu_custom_call.1} parent=5 // pred_region
        %s392 = ssub.s32 %s22, 1
        %s393 = sand.u32 %s49, 1
        %s394 = scalar_lea.sflag [#allocation7], %s393
        %s395 = sand.u32 %s49, 1
        %s396 = smul.addr %s395, 24
        %s397 = scalar_lea.vmem [#allocation6], %s396
        // Predicated region
        $region57: #{tpu_custom_call.1} parent=55 // pred_check
          %p398 = pneg %p62
        $region58: #{tpu_custom_call.1} parent=55 // pred_check_branch
          %400 = sbr.rel (%p398) target = $region60
        $region59: #{tpu_custom_call.1} parent=55 // pred_region
          %402 = dma.done %s394, 384
        $region60: #{tpu_custom_call.1} parent=55 // pred_fallthru
          _
        // Predicated region
        $region61: #{tpu_custom_call.1} parent=55 // pred_check
          %p403 = pneg %p83
        $region62: #{tpu_custom_call.1} parent=55 // pred_check_branch
          %405 = sbr.rel (%p403) target = $region64
        $region63: #{tpu_custom_call.1} parent=55 // pred_region
          %407 = dma.done [#allocation10], 1024
        $region64: #{tpu_custom_call.1} parent=55 // pred_fallthru
          _
        // Predicated region
        $region65: #{tpu_custom_call.1} parent=55 // pred_check
          %p408 = pneg %p104
        $region66: #{tpu_custom_call.1} parent=55 // pred_check_branch
          %410 = sbr.rel (%p408) target = $region68
        $region67: #{tpu_custom_call.1} parent=55 // pred_region
          %412 = dma.done [#allocation10], 8192
        $region68: #{tpu_custom_call.1} parent=55 // pred_fallthru
          _
        // Predicated region
        $region69: #{tpu_custom_call.1} parent=55 // pred_check
          %p413 = pneg %p125
        $region70: #{tpu_custom_call.1} parent=55 // pred_check_branch
          %415 = sbr.rel (%p413) target = $region72
        $region71: #{tpu_custom_call.1} parent=55 // pred_region
          %417 = dma.done [#allocation13], 64
        $region72: #{tpu_custom_call.1} parent=55 // pred_fallthru
          _
        // Predicated region
        $region73: #{tpu_custom_call.1} parent=55 // pred_check
          %p418 = pneg %p146
        $region74: #{tpu_custom_call.1} parent=55 // pred_check_branch
          %420 = sbr.rel (%p418) target = $region76
        $region75: #{tpu_custom_call.1} parent=55 // pred_region
          %422 = dma.done [#allocation13], 8192
        $region76: #{tpu_custom_call.1} parent=55 // pred_fallthru
          _
        // Predicated region
        $region77: #{tpu_custom_call.1} parent=55 // pred_check
          %p423 = pneg %p167
        $region78: #{tpu_custom_call.1} parent=55 // pred_check_branch
          %425 = sbr.rel (%p423) target = $region80
        $region79: #{tpu_custom_call.1} parent=55 // pred_region
          %427 = dma.done [#allocation16], 8192
        $region80: #{tpu_custom_call.1} parent=55 // pred_fallthru
          _
        // Predicated region
        $region81: #{tpu_custom_call.1} parent=55 // pred_check
          %p428 = pneg %p209
        $region82: #{tpu_custom_call.1} parent=55 // pred_check_branch
          %430 = sbr.rel (%p428) target = $region84
        $region83: #{tpu_custom_call.1} parent=55 // pred_region
          %432 = dma.done [#allocation16], 2048
        $region84: #{tpu_custom_call.1} parent=55 // pred_fallthru
          _
        %s433 = sand.u32 %s49, 1
        %s434 = scalar_lea.sflag [#allocation7], %s433
        %s435 = sand.u32 %s49, 1
        %s436 = smul.addr %s435, 24
        %s437 = scalar_lea.vmem [#allocation6], %s436
        %p438 = pneg %p62
        %p439 = pneg %p59
        %p440 = pneg %p83
        %p441 = pneg %p80
        %p442 = pneg %p104
        %p443 = pneg %p101
        %p444 = pneg %p125
        %p445 = pneg %p122
        %p446 = pneg %p146
        %p447 = pneg %p143
        %p448 = pneg %p167
        %p449 = pneg %p164
        %p450 = pneg %p188
        %p451 = pneg %p185
        %p452 = pneg %p209
        %p453 = pneg %p206
        %p454 = pneg %p230
        %p455 = pneg %p227
        %p456 = pneg %p256
        %p457 = pneg %p253
        %s458 = smul.u32 3, %s32
        %p459 = scmp.eq.s32.totalorder %s32, 0
        // Predicated region
        $region85: #{tpu_custom_call.1} parent=55 // pred_check
          %p460 = pneg %p459
        $region86: #{tpu_custom_call.1} parent=55 // pred_check_branch
          %462 = sbr.rel (%p460) target = $region88
        $region87: #{tpu_custom_call.1} parent=55 // pred_region
          %463 = vst [vmem:[#allocation2] sm:$0xff] 0.0
          %464 = vst [vmem:[#allocation3] sm:$0xff] 0.0
          %465 = vst [vmem:[#allocation4] sm:$0xff] 0.0
          %466 = vst [vmem:[#allocation5] sm:$0xff] 0.0
        $region88: #{tpu_custom_call.1} parent=55 // pred_fallthru
          _
        %v467 = vld [vmem:[#allocation12] sm:$0xf]
        %v469 = vperm.slane %v467, 0
        %v470 = vperm.slane %v467, 1
        %v471 = vperm.slane %v467, 2
        %v472 = vperm.slane %v467, 3
        %v477 = vld [vmem:[%s6] sm:$0xf]
        %v479 = vperm.slane %v477, 0
        %v480 = vperm.slane %v477, 1
        %v481 = vperm.slane %v477, 2
        %v482 = vperm.slane %v477, 3
        %p487 = scmp.ne.s32.totalorder %s32, 2
        // Predicated region
        $region89: #{tpu_custom_call.1} parent=55 // pred_check
          %p488 = pneg %p487
        $region90: #{tpu_custom_call.1} parent=55 // pred_check_branch
          %490 = sbr.rel (%p488) target = $region92
        $region91: #{tpu_custom_call.1} parent=55 // pred_region
          %v491 = vld [vmem:[#allocation2] sm:$0xff]
          %v492 = vld [vmem:[#allocation3] sm:$0xff]
          %v493 = vld [vmem:[#allocation4] sm:$0xff]
          %v494 = vld [vmem:[#allocation5] sm:$0xff]
          %v495 = vld [vmem:[%s397] sm:$0xff]
          %v496 = vld [vmem:[#allocation9] sm:$0xff]
          %v497 = vld [vmem:[#allocation9 + $0x8] sm:$0xff]
          %v498 = vld [vmem:[#allocation9 + $0x10] sm:$0xff]
          %v499 = vld [vmem:[#allocation9 + $0x18] sm:$0xff]
          %v500 = vld [vmem:[#allocation9 + $0x20] sm:$0xff]
          %v501 = vld [vmem:[#allocation9 + $0x28] sm:$0xff]
          %v502 = vld [vmem:[#allocation9 + $0x30] sm:$0xff]
          %v503 = vld [vmem:[#allocation9 + $0x38] sm:$0xff]
          %vm504 = vcmask 130048
          %v506 = vsel %vm504, %v495, 0
          %508 = vmatpush.msra.mxu0 0.0
          %509 = vmatpush.msra.mxu0 0.0
          %510 = vmatpush.msra.mxu0 0.0
          %511 = vmatpush.msra.mxu0 0.0
          %512 = vmatpush.msra.mxu0 0.0
          %513 = vmatpush.msra.mxu0 0.0
          %514 = vmatpush.msra.mxu0 0.0
          %515 = vmatpush.msra.mxu0 0.0
          %516 = vmatpush.msra.mxu0 0.0
          %517 = vmatpush.msra.mxu0 0.0
          %518 = vmatpush.msra.mxu0 0.0
          %519 = vmatpush.msra.mxu0 0.0
          %520 = vmatpush.msra.mxu0 0.0
          %521 = vmatpush.msra.mxu0 0.0
          %522 = vmatpush.msra.mxu0 %v500
          %523 = vmatpush.msra.mxu0 %v496
          %524 = vmatmul.f32.gmra.mxu0 %v506
          %v525 = vpop.f32.mrf.mxu0
          %v526 = vadd.f32 %v469, %v525
          %527 = vdwg.mxu0
          %528 = vmatpush.msra.mxu0 0.0
          %529 = vmatpush.msra.mxu0 0.0
          %530 = vmatpush.msra.mxu0 0.0
          %531 = vmatpush.msra.mxu0 0.0
          %532 = vmatpush.msra.mxu0 0.0
          %533 = vmatpush.msra.mxu0 0.0
          %534 = vmatpush.msra.mxu0 0.0
          %535 = vmatpush.msra.mxu0 0.0
          %536 = vmatpush.msra.mxu0 0.0
          %537 = vmatpush.msra.mxu0 0.0
          %538 = vmatpush.msra.mxu0 0.0
          %539 = vmatpush.msra.mxu0 0.0
          %540 = vmatpush.msra.mxu0 0.0
          %541 = vmatpush.msra.mxu0 0.0
          %542 = vmatpush.msra.mxu0 %v501
          %543 = vmatpush.msra.mxu0 %v497
          %544 = vmatmul.f32.gmra.mxu0 %v506
          %v545 = vpop.f32.mrf.mxu0
          %v546 = vadd.f32 %v470, %v545
          %547 = vdwg.mxu0
          %548 = vmatpush.msra.mxu0 0.0
          %549 = vmatpush.msra.mxu0 0.0
          %550 = vmatpush.msra.mxu0 0.0
          %551 = vmatpush.msra.mxu0 0.0
          %552 = vmatpush.msra.mxu0 0.0
          %553 = vmatpush.msra.mxu0 0.0
          %554 = vmatpush.msra.mxu0 0.0
          %555 = vmatpush.msra.mxu0 0.0
          %556 = vmatpush.msra.mxu0 0.0
          %557 = vmatpush.msra.mxu0 0.0
          %558 = vmatpush.msra.mxu0 0.0
          %559 = vmatpush.msra.mxu0 0.0
          %560 = vmatpush.msra.mxu0 0.0
          %561 = vmatpush.msra.mxu0 0.0
          %562 = vmatpush.msra.mxu0 %v502
          %563 = vmatpush.msra.mxu0 %v498
          %564 = vmatmul.f32.gmra.mxu0 %v506
          %v565 = vpop.f32.mrf.mxu0
          %v566 = vadd.f32 %v471, %v565
          %567 = vdwg.mxu0
          %568 = vmatpush.msra.mxu0 0.0
          %569 = vmatpush.msra.mxu0 0.0
          %570 = vmatpush.msra.mxu0 0.0
          %571 = vmatpush.msra.mxu0 0.0
          %572 = vmatpush.msra.mxu0 0.0
          %573 = vmatpush.msra.mxu0 0.0
          %574 = vmatpush.msra.mxu0 0.0
          %575 = vmatpush.msra.mxu0 0.0
          %576 = vmatpush.msra.mxu0 0.0
          %577 = vmatpush.msra.mxu0 0.0
          %578 = vmatpush.msra.mxu0 0.0
          %579 = vmatpush.msra.mxu0 0.0
          %580 = vmatpush.msra.mxu0 0.0
          %581 = vmatpush.msra.mxu0 0.0
          %582 = vmatpush.msra.mxu0 %v503
          %583 = vmatpush.msra.mxu0 %v499
          %584 = vmatmul.f32.gmra.mxu0 %v506
          %v585 = vpop.f32.mrf.mxu0
          %v586 = vadd.f32 %v472, %v585
          %587 = vdwg.mxu0
          %s588 = scalar_lea.vmem %s397, 8 [#allocation6]
          %v589 = vld [vmem:[%s588] sm:$0xff]
          %v591 = vsel %vm504, %v589, 0
          %593 = vmatpush.msra.mxu0 0.0
          %594 = vmatpush.msra.mxu0 0.0
          %595 = vmatpush.msra.mxu0 0.0
          %596 = vmatpush.msra.mxu0 0.0
          %597 = vmatpush.msra.mxu0 0.0
          %598 = vmatpush.msra.mxu0 0.0
          %599 = vmatpush.msra.mxu0 0.0
          %600 = vmatpush.msra.mxu0 0.0
          %601 = vmatpush.msra.mxu0 0.0
          %602 = vmatpush.msra.mxu0 0.0
          %603 = vmatpush.msra.mxu0 0.0
          %604 = vmatpush.msra.mxu0 0.0
          %605 = vmatpush.msra.mxu0 0.0
          %606 = vmatpush.msra.mxu0 0.0
          %607 = vmatpush.msra.mxu0 %v500
          %608 = vmatpush.msra.mxu0 %v496
          %609 = vmatmul.f32.gmra.mxu0 %v591
          %v610 = vpop.f32.mrf.mxu0
          %v611 = vadd.f32 %v469, %v610
          %612 = vdwg.mxu0
          %613 = vmatpush.msra.mxu0 0.0
          %614 = vmatpush.msra.mxu0 0.0
          %615 = vmatpush.msra.mxu0 0.0
          %616 = vmatpush.msra.mxu0 0.0
          %617 = vmatpush.msra.mxu0 0.0
          %618 = vmatpush.msra.mxu0 0.0
          %619 = vmatpush.msra.mxu0 0.0
          %620 = vmatpush.msra.mxu0 0.0
          %621 = vmatpush.msra.mxu0 0.0
          %622 = vmatpush.msra.mxu0 0.0
          %623 = vmatpush.msra.mxu0 0.0
          %624 = vmatpush.msra.mxu0 0.0
          %625 = vmatpush.msra.mxu0 0.0
          %626 = vmatpush.msra.mxu0 0.0
          %627 = vmatpush.msra.mxu0 %v501
          %628 = vmatpush.msra.mxu0 %v497
          %629 = vmatmul.f32.gmra.mxu0 %v591
          %v630 = vpop.f32.mrf.mxu0
          %v631 = vadd.f32 %v470, %v630
          %632 = vdwg.mxu0
          %633 = vmatpush.msra.mxu0 0.0
          %634 = vmatpush.msra.mxu0 0.0
          %635 = vmatpush.msra.mxu0 0.0
          %636 = vmatpush.msra.mxu0 0.0
          %637 = vmatpush.msra.mxu0 0.0
          %638 = vmatpush.msra.mxu0 0.0
          %639 = vmatpush.msra.mxu0 0.0
          %640 = vmatpush.msra.mxu0 0.0
          %641 = vmatpush.msra.mxu0 0.0
          %642 = vmatpush.msra.mxu0 0.0
          %643 = vmatpush.msra.mxu0 0.0
          %644 = vmatpush.msra.mxu0 0.0
          %645 = vmatpush.msra.mxu0 0.0
          %646 = vmatpush.msra.mxu0 0.0
          %647 = vmatpush.msra.mxu0 %v502
          %648 = vmatpush.msra.mxu0 %v498
          %649 = vmatmul.f32.gmra.mxu0 %v591
          %v650 = vpop.f32.mrf.mxu0
          %v651 = vadd.f32 %v471, %v650
          %652 = vdwg.mxu0
          %653 = vmatpush.msra.mxu0 0.0
          %654 = vmatpush.msra.mxu0 0.0
          %655 = vmatpush.msra.mxu0 0.0
          %656 = vmatpush.msra.mxu0 0.0
          %657 = vmatpush.msra.mxu0 0.0
          %658 = vmatpush.msra.mxu0 0.0
          %659 = vmatpush.msra.mxu0 0.0
          %660 = vmatpush.msra.mxu0 0.0
          %661 = vmatpush.msra.mxu0 0.0
          %662 = vmatpush.msra.mxu0 0.0
          %663 = vmatpush.msra.mxu0 0.0
          %664 = vmatpush.msra.mxu0 0.0
          %665 = vmatpush.msra.mxu0 0.0
          %666 = vmatpush.msra.mxu0 0.0
          %667 = vmatpush.msra.mxu0 %v503
          %668 = vmatpush.msra.mxu0 %v499
          %669 = vmatmul.f32.gmra.mxu0 %v591
          %v670 = vpop.f32.mrf.mxu0
          %v671 = vadd.f32 %v472, %v670
          %672 = vdwg.mxu0
          %v673 = vld [vmem:[#allocation15] sm:$0xff]
          %v674 = vld [vmem:[#allocation15 + $0x8] sm:$0xff]
          %v675 = vld [vmem:[#allocation15 + $0x10] sm:$0xff]
          %v676 = vld [vmem:[#allocation15 + $0x18] sm:$0xff]
          %v677 = vld [vmem:[#allocation15 + $0x20] sm:$0xff]
          %v678 = vld [vmem:[#allocation15 + $0x28] sm:$0xff]
          %v679 = vld [vmem:[#allocation15 + $0x30] sm:$0xff]
          %v680 = vld [vmem:[#allocation15 + $0x38] sm:$0xff]
          %v681 = vld [vmem:[#allocation15 + $0x40] sm:$0xff]
          %v682 = vld [vmem:[#allocation15 + $0x48] sm:$0xff]
          %v683 = vld [vmem:[#allocation15 + $0x50] sm:$0xff]
          %v684 = vld [vmem:[#allocation15 + $0x58] sm:$0xff]
          %v685 = vld [vmem:[#allocation15 + $0x60] sm:$0xff]
          %v686 = vld [vmem:[#allocation15 + $0x68] sm:$0xff]
          %v687 = vld [vmem:[#allocation15 + $0x70] sm:$0xff]
          %v688 = vld [vmem:[#allocation15 + $0x78] sm:$0xff]
          %v689 = vld [vmem:[#allocation15 + $0x80] sm:$0xff]
          %v690 = vld [vmem:[#allocation15 + $0x88] sm:$0xff]
          %v691 = vld [vmem:[#allocation15 + $0x90] sm:$0xff]
          %v692 = vld [vmem:[#allocation15 + $0x98] sm:$0xff]
          %v693 = vld [vmem:[#allocation15 + $0xa0] sm:$0xff]
          %v694 = vld [vmem:[#allocation15 + $0xa8] sm:$0xff]
          %v695 = vld [vmem:[#allocation15 + $0xb0] sm:$0xff]
          %v696 = vld [vmem:[#allocation15 + $0xb8] sm:$0xff]
          %v697 = vld [vmem:[#allocation15 + $0xc0] sm:$0xff]
          %v698 = vld [vmem:[#allocation15 + $0xc8] sm:$0xff]
          %v699 = vld [vmem:[#allocation15 + $0xd0] sm:$0xff]
          %v700 = vld [vmem:[#allocation15 + $0xd8] sm:$0xff]
          %v701 = vld [vmem:[#allocation15 + $0xe0] sm:$0xff]
          %v702 = vld [vmem:[#allocation15 + $0xe8] sm:$0xff]
          %v703 = vld [vmem:[#allocation15 + $0xf0] sm:$0xff]
          %v704 = vld [vmem:[#allocation15 + $0xf8] sm:$0xff]
          %v705 = vld [vmem:[#allocation15 + $0x100] sm:$0xff]
          %v706 = vld [vmem:[#allocation15 + $0x108] sm:$0xff]
          %v707 = vld [vmem:[#allocation15 + $0x110] sm:$0xff]
          %v708 = vld [vmem:[#allocation15 + $0x118] sm:$0xff]
          %v709 = vld [vmem:[#allocation15 + $0x120] sm:$0xff]
          %v710 = vld [vmem:[#allocation15 + $0x128] sm:$0xff]
          %v711 = vld [vmem:[#allocation15 + $0x130] sm:$0xff]
          %v712 = vld [vmem:[#allocation15 + $0x138] sm:$0xff]
          %v713 = vld [vmem:[#allocation15 + $0x140] sm:$0xff]
          %v714 = vld [vmem:[#allocation15 + $0x148] sm:$0xff]
          %v715 = vld [vmem:[#allocation15 + $0x150] sm:$0xff]
          %v716 = vld [vmem:[#allocation15 + $0x158] sm:$0xff]
          %v717 = vld [vmem:[#allocation15 + $0x160] sm:$0xff]
          %v718 = vld [vmem:[#allocation15 + $0x168] sm:$0xff]
          %v719 = vld [vmem:[#allocation15 + $0x170] sm:$0xff]
          %v720 = vld [vmem:[#allocation15 + $0x178] sm:$0xff]
          %v721 = vld [vmem:[#allocation15 + $0x180] sm:$0xff]
          %v722 = vld [vmem:[#allocation15 + $0x188] sm:$0xff]
          %v723 = vld [vmem:[#allocation15 + $0x190] sm:$0xff]
          %v724 = vld [vmem:[#allocation15 + $0x198] sm:$0xff]
          %v725 = vld [vmem:[#allocation15 + $0x1a0] sm:$0xff]
          %v726 = vld [vmem:[#allocation15 + $0x1a8] sm:$0xff]
          %v727 = vld [vmem:[#allocation15 + $0x1b0] sm:$0xff]
          %v728 = vld [vmem:[#allocation15 + $0x1b8] sm:$0xff]
          %v729 = vld [vmem:[#allocation15 + $0x1c0] sm:$0xff]
          %v730 = vld [vmem:[#allocation15 + $0x1c8] sm:$0xff]
          %v731 = vld [vmem:[#allocation15 + $0x1d0] sm:$0xff]
          %v732 = vld [vmem:[#allocation15 + $0x1d8] sm:$0xff]
          %v733 = vld [vmem:[#allocation15 + $0x1e0] sm:$0xff]
          %v734 = vld [vmem:[#allocation15 + $0x1e8] sm:$0xff]
          %v735 = vld [vmem:[#allocation15 + $0x1f0] sm:$0xff]
          %v736 = vld [vmem:[#allocation15 + $0x1f8] sm:$0xff]
          %737 = vmatpush.msra.mxu0 %v733
          %738 = vmatpush.msra.mxu0 %v729
          %739 = vmatpush.msra.mxu0 %v725
          %740 = vmatpush.msra.mxu0 %v721
          %741 = vmatpush.msra.mxu0 %v717
          %742 = vmatpush.msra.mxu0 %v713
          %743 = vmatpush.msra.mxu0 %v709
          %744 = vmatpush.msra.mxu0 %v705
          %745 = vmatpush.msra.mxu0 %v701
          %746 = vmatpush.msra.mxu0 %v697
          %747 = vmatpush.msra.mxu0 %v693
          %748 = vmatpush.msra.mxu0 %v689
          %749 = vmatpush.msra.mxu0 %v685
          %750 = vmatpush.msra.mxu0 %v681
          %751 = vmatpush.msra.mxu0 %v677
          %752 = vmatpush.msra.mxu0 %v673
          %753 = vmatmul.f32.gmra.mxu0 %v493
          %v754 = vpop.f32.mrf.mxu0
          %v755 = vadd.f32 %v479, %v754
          %756 = vdwg.mxu0
          %757 = vmatpush.msra.mxu0 %v734
          %758 = vmatpush.msra.mxu0 %v730
          %759 = vmatpush.msra.mxu0 %v726
          %760 = vmatpush.msra.mxu0 %v722
          %761 = vmatpush.msra.mxu0 %v718
          %762 = vmatpush.msra.mxu0 %v714
          %763 = vmatpush.msra.mxu0 %v710
          %764 = vmatpush.msra.mxu0 %v706
          %765 = vmatpush.msra.mxu0 %v702
          %766 = vmatpush.msra.mxu0 %v698
          %767 = vmatpush.msra.mxu0 %v694
          %768 = vmatpush.msra.mxu0 %v690
          %769 = vmatpush.msra.mxu0 %v686
          %770 = vmatpush.msra.mxu0 %v682
          %771 = vmatpush.msra.mxu0 %v678
          %772 = vmatpush.msra.mxu0 %v674
          %773 = vmatmul.f32.gmra.mxu0 %v493
          %v774 = vpop.f32.mrf.mxu0
          %v775 = vadd.f32 %v480, %v774
          %776 = vdwg.mxu0
          %777 = vmatpush.msra.mxu0 %v735
          %778 = vmatpush.msra.mxu0 %v731
          %779 = vmatpush.msra.mxu0 %v727
          %780 = vmatpush.msra.mxu0 %v723
          %781 = vmatpush.msra.mxu0 %v719
          %782 = vmatpush.msra.mxu0 %v715
          %783 = vmatpush.msra.mxu0 %v711
          %784 = vmatpush.msra.mxu0 %v707
          %785 = vmatpush.msra.mxu0 %v703
          %786 = vmatpush.msra.mxu0 %v699
          %787 = vmatpush.msra.mxu0 %v695
          %788 = vmatpush.msra.mxu0 %v691
          %789 = vmatpush.msra.mxu0 %v687
          %790 = vmatpush.msra.mxu0 %v683
          %791 = vmatpush.msra.mxu0 %v679
          %792 = vmatpush.msra.mxu0 %v675
          %793 = vmatmul.f32.gmra.mxu0 %v493
          %v794 = vpop.f32.mrf.mxu0
          %v795 = vadd.f32 %v481, %v794
          %796 = vdwg.mxu0
          %797 = vmatpush.msra.mxu0 %v736
          %798 = vmatpush.msra.mxu0 %v732
          %799 = vmatpush.msra.mxu0 %v728
          %800 = vmatpush.msra.mxu0 %v724
          %801 = vmatpush.msra.mxu0 %v720
          %802 = vmatpush.msra.mxu0 %v716
          %803 = vmatpush.msra.mxu0 %v712
          %804 = vmatpush.msra.mxu0 %v708
          %805 = vmatpush.msra.mxu0 %v704
          %806 = vmatpush.msra.mxu0 %v700
          %807 = vmatpush.msra.mxu0 %v696
          %808 = vmatpush.msra.mxu0 %v692
          %809 = vmatpush.msra.mxu0 %v688
          %810 = vmatpush.msra.mxu0 %v684
          %811 = vmatpush.msra.mxu0 %v680
          %812 = vmatpush.msra.mxu0 %v676
          %813 = vmatmul.f32.gmra.mxu0 %v493
          %v814 = vpop.f32.mrf.mxu0
          %v815 = vadd.f32 %v482, %v814
          %816 = vdwg.mxu0
          %v817 = vld [vmem:[#allocation11] sm:$0xff]
          %v818 = vld [vmem:[#allocation11 + $0x8] sm:$0xff]
          %v819 = vld [vmem:[#allocation11 + $0x10] sm:$0xff]
          %v820 = vld [vmem:[#allocation11 + $0x18] sm:$0xff]
          %v821 = vld [vmem:[#allocation11 + $0x20] sm:$0xff]
          %v822 = vld [vmem:[#allocation11 + $0x28] sm:$0xff]
          %v823 = vld [vmem:[#allocation11 + $0x30] sm:$0xff]
          %v824 = vld [vmem:[#allocation11 + $0x38] sm:$0xff]
          %v825 = vld [vmem:[#allocation11 + $0x40] sm:$0xff]
          %v826 = vld [vmem:[#allocation11 + $0x48] sm:$0xff]
          %v827 = vld [vmem:[#allocation11 + $0x50] sm:$0xff]
          %v828 = vld [vmem:[#allocation11 + $0x58] sm:$0xff]
          %v829 = vld [vmem:[#allocation11 + $0x60] sm:$0xff]
          %v830 = vld [vmem:[#allocation11 + $0x68] sm:$0xff]
          %v831 = vld [vmem:[#allocation11 + $0x70] sm:$0xff]
          %v832 = vld [vmem:[#allocation11 + $0x78] sm:$0xff]
          %v833 = vld [vmem:[#allocation11 + $0x80] sm:$0xff]
          %v834 = vld [vmem:[#allocation11 + $0x88] sm:$0xff]
          %v835 = vld [vmem:[#allocation11 + $0x90] sm:$0xff]
          %v836 = vld [vmem:[#allocation11 + $0x98] sm:$0xff]
          %v837 = vld [vmem:[#allocation11 + $0xa0] sm:$0xff]
          %v838 = vld [vmem:[#allocation11 + $0xa8] sm:$0xff]
          %v839 = vld [vmem:[#allocation11 + $0xb0] sm:$0xff]
          %v840 = vld [vmem:[#allocation11 + $0xb8] sm:$0xff]
          %v841 = vld [vmem:[#allocation11 + $0xc0] sm:$0xff]
          %v842 = vld [vmem:[#allocation11 + $0xc8] sm:$0xff]
          %v843 = vld [vmem:[#allocation11 + $0xd0] sm:$0xff]
          %v844 = vld [vmem:[#allocation11 + $0xd8] sm:$0xff]
          %v845 = vld [vmem:[#allocation11 + $0xe0] sm:$0xff]
          %v846 = vld [vmem:[#allocation11 + $0xe8] sm:$0xff]
          %v847 = vld [vmem:[#allocation11 + $0xf0] sm:$0xff]
          %v848 = vld [vmem:[#allocation11 + $0xf8] sm:$0xff]
          %v849 = vld [vmem:[#allocation11 + $0x100] sm:$0xff]
          %v850 = vld [vmem:[#allocation11 + $0x108] sm:$0xff]
          %v851 = vld [vmem:[#allocation11 + $0x110] sm:$0xff]
          %v852 = vld [vmem:[#allocation11 + $0x118] sm:$0xff]
          %v853 = vld [vmem:[#allocation11 + $0x120] sm:$0xff]
          %v854 = vld [vmem:[#allocation11 + $0x128] sm:$0xff]
          %v855 = vld [vmem:[#allocation11 + $0x130] sm:$0xff]
          %v856 = vld [vmem:[#allocation11 + $0x138] sm:$0xff]
          %v857 = vld [vmem:[#allocation11 + $0x140] sm:$0xff]
          %v858 = vld [vmem:[#allocation11 + $0x148] sm:$0xff]
          %v859 = vld [vmem:[#allocation11 + $0x150] sm:$0xff]
          %v860 = vld [vmem:[#allocation11 + $0x158] sm:$0xff]
          %v861 = vld [vmem:[#allocation11 + $0x160] sm:$0xff]
          %v862 = vld [vmem:[#allocation11 + $0x168] sm:$0xff]
          %v863 = vld [vmem:[#allocation11 + $0x170] sm:$0xff]
          %v864 = vld [vmem:[#allocation11 + $0x178] sm:$0xff]
          %v865 = vld [vmem:[#allocation11 + $0x180] sm:$0xff]
          %v866 = vld [vmem:[#allocation11 + $0x188] sm:$0xff]
          %v867 = vld [vmem:[#allocation11 + $0x190] sm:$0xff]
          %v868 = vld [vmem:[#allocation11 + $0x198] sm:$0xff]
          %v869 = vld [vmem:[#allocation11 + $0x1a0] sm:$0xff]
          %v870 = vld [vmem:[#allocation11 + $0x1a8] sm:$0xff]
          %v871 = vld [vmem:[#allocation11 + $0x1b0] sm:$0xff]
          %v872 = vld [vmem:[#allocation11 + $0x1b8] sm:$0xff]
          %v873 = vld [vmem:[#allocation11 + $0x1c0] sm:$0xff]
          %v874 = vld [vmem:[#allocation11 + $0x1c8] sm:$0xff]
          %v875 = vld [vmem:[#allocation11 + $0x1d0] sm:$0xff]
          %v876 = vld [vmem:[#allocation11 + $0x1d8] sm:$0xff]
          %v877 = vld [vmem:[#allocation11 + $0x1e0] sm:$0xff]
          %v878 = vld [vmem:[#allocation11 + $0x1e8] sm:$0xff]
          %v879 = vld [vmem:[#allocation11 + $0x1f0] sm:$0xff]
          %v880 = vld [vmem:[#allocation11 + $0x1f8] sm:$0xff]
          %881 = vmatpush.msra.mxu0 %v877
          %882 = vmatpush.msra.mxu0 %v873
          %883 = vmatpush.msra.mxu0 %v869
          %884 = vmatpush.msra.mxu0 %v865
          %885 = vmatpush.msra.mxu0 %v861
          %886 = vmatpush.msra.mxu0 %v857
          %887 = vmatpush.msra.mxu0 %v853
          %888 = vmatpush.msra.mxu0 %v849
          %889 = vmatpush.msra.mxu0 %v845
          %890 = vmatpush.msra.mxu0 %v841
          %891 = vmatpush.msra.mxu0 %v837
          %892 = vmatpush.msra.mxu0 %v833
          %893 = vmatpush.msra.mxu0 %v829
          %894 = vmatpush.msra.mxu0 %v825
          %895 = vmatpush.msra.mxu0 %v821
          %896 = vmatpush.msra.mxu0 %v817
          %897 = vmatmul.f32.gmra.mxu0 %v491
          %v898 = vpop.f32.mrf.mxu0
          %v899 = vadd.f32 0.0, %v898
          %900 = vdwg.mxu0
          %901 = vmatpush.msra.mxu0 %v878
          %902 = vmatpush.msra.mxu0 %v874
          %903 = vmatpush.msra.mxu0 %v870
          %904 = vmatpush.msra.mxu0 %v866
          %905 = vmatpush.msra.mxu0 %v862
          %906 = vmatpush.msra.mxu0 %v858
          %907 = vmatpush.msra.mxu0 %v854
          %908 = vmatpush.msra.mxu0 %v850
          %909 = vmatpush.msra.mxu0 %v846
          %910 = vmatpush.msra.mxu0 %v842
          %911 = vmatpush.msra.mxu0 %v838
          %912 = vmatpush.msra.mxu0 %v834
          %913 = vmatpush.msra.mxu0 %v830
          %914 = vmatpush.msra.mxu0 %v826
          %915 = vmatpush.msra.mxu0 %v822
          %916 = vmatpush.msra.mxu0 %v818
          %917 = vmatmul.f32.gmra.mxu0 %v491
          %v918 = vpop.f32.mrf.mxu0
          %v919 = vadd.f32 0.0, %v918
          %920 = vdwg.mxu0
          %921 = vmatpush.msra.mxu0 %v879
          %922 = vmatpush.msra.mxu0 %v875
          %923 = vmatpush.msra.mxu0 %v871
          %924 = vmatpush.msra.mxu0 %v867
          %925 = vmatpush.msra.mxu0 %v863
          %926 = vmatpush.msra.mxu0 %v859
          %927 = vmatpush.msra.mxu0 %v855
          %928 = vmatpush.msra.mxu0 %v851
          %929 = vmatpush.msra.mxu0 %v847
          %930 = vmatpush.msra.mxu0 %v843
          %931 = vmatpush.msra.mxu0 %v839
          %932 = vmatpush.msra.mxu0 %v835
          %933 = vmatpush.msra.mxu0 %v831
          %934 = vmatpush.msra.mxu0 %v827
          %935 = vmatpush.msra.mxu0 %v823
          %936 = vmatpush.msra.mxu0 %v819
          %937 = vmatmul.f32.gmra.mxu0 %v491
          %v938 = vpop.f32.mrf.mxu0
          %v939 = vadd.f32 0.0, %v938
          %940 = vdwg.mxu0
          %941 = vmatpush.msra.mxu0 %v880
          %942 = vmatpush.msra.mxu0 %v876
          %943 = vmatpush.msra.mxu0 %v872
          %944 = vmatpush.msra.mxu0 %v868
          %945 = vmatpush.msra.mxu0 %v864
          %946 = vmatpush.msra.mxu0 %v860
          %947 = vmatpush.msra.mxu0 %v856
          %948 = vmatpush.msra.mxu0 %v852
          %949 = vmatpush.msra.mxu0 %v848
          %950 = vmatpush.msra.mxu0 %v844
          %951 = vmatpush.msra.mxu0 %v840
          %952 = vmatpush.msra.mxu0 %v836
          %953 = vmatpush.msra.mxu0 %v832
          %954 = vmatpush.msra.mxu0 %v828
          %955 = vmatpush.msra.mxu0 %v824
          %956 = vmatpush.msra.mxu0 %v820
          %957 = vmatmul.f32.gmra.mxu0 %v491
          %v958 = vpop.f32.mrf.mxu0
          %v959 = vadd.f32 0.0, %v958
          %960 = vdwg.mxu0
          %v961 = vadd.f32 %v526, %v899
          %v962 = vadd.f32 %v546, %v919
          %v963 = vadd.f32 %v566, %v939
          %v964 = vadd.f32 %v586, %v959
          %v965 = vxor.u32 %v961, 2147483648
          %v966 = vmul.f32 %v965, 1.442695
          %v967 = vpow.pop %v966
          %v968 = vadd.f32 %v967, 1.0
          %v969 = vrcp.pop %v968
          %v970 = vmul.f32 %v968, %v969
          %v971 = vsub.f32 1.0, %v970
          %v972 = vmul.f32 %v969, %v971
          %v973 = vadd.f32 %v969, %v972
          %vm974 = vweird.f32 %v968
          %vm975 = vweird.f32 %v969
          %vm976 = vmor %vm974, %vm975
          %v977 = vsel %vm976, %v969, %v973
          %v978 = vand.u32 2147483647, %v968
          %vm979 = vcmp.eq.f32.partialorder %v978, 8.507059e+37
          %v980 = vand.u32 %v968, 2147483648
          %v981 = vor.u32 1.1754944e-38, %v980
          %v982 = vsel %vm979, %v981, %v977
          %v983 = vmul.f32 1.0, %v982
          %v984 = vxor.u32 %v962, 2147483648
          %v985 = vmul.f32 %v984, 1.442695
          %v986 = vpow.pop %v985
          %v987 = vadd.f32 %v986, 1.0
          %v988 = vrcp.pop %v987
          %v989 = vmul.f32 %v987, %v988
          %v990 = vsub.f32 1.0, %v989
          %v991 = vmul.f32 %v988, %v990
          %v992 = vadd.f32 %v988, %v991
          %vm993 = vweird.f32 %v987
          %vm994 = vweird.f32 %v988
          %vm995 = vmor %vm993, %vm994
          %v996 = vsel %vm995, %v988, %v992
          %v997 = vand.u32 2147483647, %v987
          %vm998 = vcmp.eq.f32.partialorder %v997, 8.507059e+37
          %v999 = vand.u32 %v987, 2147483648
          %v1000 = vor.u32 1.1754944e-38, %v999
          %v1001 = vsel %vm998, %v1000, %v996
          %v1002 = vmul.f32 1.0, %v1001
          %v1003 = vtanh.pop %v963
          %v1004 = vxor.u32 %v964, 2147483648
          %v1005 = vmul.f32 %v1004, 1.442695
          %v1006 = vpow.pop %v1005
          %v1007 = vadd.f32 %v1006, 1.0
          %v1008 = vrcp.pop %v1007
          %v1009 = vmul.f32 %v1007, %v1008
          %v1010 = vsub.f32 1.0, %v1009
          %v1011 = vmul.f32 %v1008, %v1010
          %v1012 = vadd.f32 %v1008, %v1011
          %vm1013 = vweird.f32 %v1007
          %vm1014 = vweird.f32 %v1008
          %vm1015 = vmor %vm1013, %vm1014
          %v1016 = vsel %vm1015, %v1008, %v1012
          %v1017 = vand.u32 2147483647, %v1007
          %vm1018 = vcmp.eq.f32.partialorder %v1017, 8.507059e+37
          %v1019 = vand.u32 %v1007, 2147483648
          %v1020 = vor.u32 1.1754944e-38, %v1019
          %v1021 = vsel %vm1018, %v1020, %v1016
          %v1022 = vmul.f32 1.0, %v1021
          %v1023 = vmul.f32 %v1002, %v492
          %v1024 = vmul.f32 %v983, %v1003
          %v1025 = vadd.f32 %v1023, %v1024
          %v1026 = vtanh.pop %v1025
          %v1027 = vmul.f32 %v1022, %v1026
          %v1028 = vld [vmem:[#allocation14] sm:$0xff]
          %v1029 = vld [vmem:[#allocation14 + $0x8] sm:$0xff]
          %v1030 = vld [vmem:[#allocation14 + $0x10] sm:$0xff]
          %v1031 = vld [vmem:[#allocation14 + $0x18] sm:$0xff]
          %v1032 = vld [vmem:[#allocation14 + $0x20] sm:$0xff]
          %v1033 = vld [vmem:[#allocation14 + $0x28] sm:$0xff]
          %v1034 = vld [vmem:[#allocation14 + $0x30] sm:$0xff]
          %v1035 = vld [vmem:[#allocation14 + $0x38] sm:$0xff]
          %v1036 = vld [vmem:[#allocation14 + $0x40] sm:$0xff]
          %v1037 = vld [vmem:[#allocation14 + $0x48] sm:$0xff]
          %v1038 = vld [vmem:[#allocation14 + $0x50] sm:$0xff]
          %v1039 = vld [vmem:[#allocation14 + $0x58] sm:$0xff]
          %v1040 = vld [vmem:[#allocation14 + $0x60] sm:$0xff]
          %v1041 = vld [vmem:[#allocation14 + $0x68] sm:$0xff]
          %v1042 = vld [vmem:[#allocation14 + $0x70] sm:$0xff]
          %v1043 = vld [vmem:[#allocation14 + $0x78] sm:$0xff]
          %v1044 = vld [vmem:[#allocation14 + $0x80] sm:$0xff]
          %v1045 = vld [vmem:[#allocation14 + $0x88] sm:$0xff]
          %v1046 = vld [vmem:[#allocation14 + $0x90] sm:$0xff]
          %v1047 = vld [vmem:[#allocation14 + $0x98] sm:$0xff]
          %v1048 = vld [vmem:[#allocation14 + $0xa0] sm:$0xff]
          %v1049 = vld [vmem:[#allocation14 + $0xa8] sm:$0xff]
          %v1050 = vld [vmem:[#allocation14 + $0xb0] sm:$0xff]
          %v1051 = vld [vmem:[#allocation14 + $0xb8] sm:$0xff]
          %v1052 = vld [vmem:[#allocation14 + $0xc0] sm:$0xff]
          %v1053 = vld [vmem:[#allocation14 + $0xc8] sm:$0xff]
          %v1054 = vld [vmem:[#allocation14 + $0xd0] sm:$0xff]
          %v1055 = vld [vmem:[#allocation14 + $0xd8] sm:$0xff]
          %v1056 = vld [vmem:[#allocation14 + $0xe0] sm:$0xff]
          %v1057 = vld [vmem:[#allocation14 + $0xe8] sm:$0xff]
          %v1058 = vld [vmem:[#allocation14 + $0xf0] sm:$0xff]
          %v1059 = vld [vmem:[#allocation14 + $0xf8] sm:$0xff]
          %v1060 = vld [vmem:[#allocation14 + $0x100] sm:$0xff]
          %v1061 = vld [vmem:[#allocation14 + $0x108] sm:$0xff]
          %v1062 = vld [vmem:[#allocation14 + $0x110] sm:$0xff]
          %v1063 = vld [vmem:[#allocation14 + $0x118] sm:$0xff]
          %v1064 = vld [vmem:[#allocation14 + $0x120] sm:$0xff]
          %v1065 = vld [vmem:[#allocation14 + $0x128] sm:$0xff]
          %v1066 = vld [vmem:[#allocation14 + $0x130] sm:$0xff]
          %v1067 = vld [vmem:[#allocation14 + $0x138] sm:$0xff]
          %v1068 = vld [vmem:[#allocation14 + $0x140] sm:$0xff]
          %v1069 = vld [vmem:[#allocation14 + $0x148] sm:$0xff]
          %v1070 = vld [vmem:[#allocation14 + $0x150] sm:$0xff]
          %v1071 = vld [vmem:[#allocation14 + $0x158] sm:$0xff]
          %v1072 = vld [vmem:[#allocation14 + $0x160] sm:$0xff]
          %v1073 = vld [vmem:[#allocation14 + $0x168] sm:$0xff]
          %v1074 = vld [vmem:[#allocation14 + $0x170] sm:$0xff]
          %v1075 = vld [vmem:[#allocation14 + $0x178] sm:$0xff]
          %v1076 = vld [vmem:[#allocation14 + $0x180] sm:$0xff]
          %v1077 = vld [vmem:[#allocation14 + $0x188] sm:$0xff]
          %v1078 = vld [vmem:[#allocation14 + $0x190] sm:$0xff]
          %v1079 = vld [vmem:[#allocation14 + $0x198] sm:$0xff]
          %v1080 = vld [vmem:[#allocation14 + $0x1a0] sm:$0xff]
          %v1081 = vld [vmem:[#allocation14 + $0x1a8] sm:$0xff]
          %v1082 = vld [vmem:[#allocation14 + $0x1b0] sm:$0xff]
          %v1083 = vld [vmem:[#allocation14 + $0x1b8] sm:$0xff]
          %v1084 = vld [vmem:[#allocation14 + $0x1c0] sm:$0xff]
          %v1085 = vld [vmem:[#allocation14 + $0x1c8] sm:$0xff]
          %v1086 = vld [vmem:[#allocation14 + $0x1d0] sm:$0xff]
          %v1087 = vld [vmem:[#allocation14 + $0x1d8] sm:$0xff]
          %v1088 = vld [vmem:[#allocation14 + $0x1e0] sm:$0xff]
          %v1089 = vld [vmem:[#allocation14 + $0x1e8] sm:$0xff]
          %v1090 = vld [vmem:[#allocation14 + $0x1f0] sm:$0xff]
          %v1091 = vld [vmem:[#allocation14 + $0x1f8] sm:$0xff]
          %1092 = vmatpush.msra.mxu0 %v1088
          %1093 = vmatpush.msra.mxu0 %v1084
          %1094 = vmatpush.msra.mxu0 %v1080
          %1095 = vmatpush.msra.mxu0 %v1076
          %1096 = vmatpush.msra.mxu0 %v1072
          %1097 = vmatpush.msra.mxu0 %v1068
          %1098 = vmatpush.msra.mxu0 %v1064
          %1099 = vmatpush.msra.mxu0 %v1060
          %1100 = vmatpush.msra.mxu0 %v1056
          %1101 = vmatpush.msra.mxu0 %v1052
          %1102 = vmatpush.msra.mxu0 %v1048
          %1103 = vmatpush.msra.mxu0 %v1044
          %1104 = vmatpush.msra.mxu0 %v1040
          %1105 = vmatpush.msra.mxu0 %v1036
          %1106 = vmatpush.msra.mxu0 %v1032
          %1107 = vmatpush.msra.mxu0 %v1028
          %1108 = vmatmul.f32.gmra.mxu0 %v1027
          %v1109 = vpop.f32.mrf.mxu0
          %v1110 = vadd.f32 0.0, %v1109
          %1111 = vdwg.mxu0
          %1112 = vmatpush.msra.mxu0 %v1089
          %1113 = vmatpush.msra.mxu0 %v1085
          %1114 = vmatpush.msra.mxu0 %v1081
          %1115 = vmatpush.msra.mxu0 %v1077
          %1116 = vmatpush.msra.mxu0 %v1073
          %1117 = vmatpush.msra.mxu0 %v1069
          %1118 = vmatpush.msra.mxu0 %v1065
          %1119 = vmatpush.msra.mxu0 %v1061
          %1120 = vmatpush.msra.mxu0 %v1057
          %1121 = vmatpush.msra.mxu0 %v1053
          %1122 = vmatpush.msra.mxu0 %v1049
          %1123 = vmatpush.msra.mxu0 %v1045
          %1124 = vmatpush.msra.mxu0 %v1041
          %1125 = vmatpush.msra.mxu0 %v1037
          %1126 = vmatpush.msra.mxu0 %v1033
          %1127 = vmatpush.msra.mxu0 %v1029
          %1128 = vmatmul.f32.gmra.mxu0 %v1027
          %v1129 = vpop.f32.mrf.mxu0
          %v1130 = vadd.f32 0.0, %v1129
          %1131 = vdwg.mxu0
          %1132 = vmatpush.msra.mxu0 %v1090
          %1133 = vmatpush.msra.mxu0 %v1086
          %1134 = vmatpush.msra.mxu0 %v1082
          %1135 = vmatpush.msra.mxu0 %v1078
          %1136 = vmatpush.msra.mxu0 %v1074
          %1137 = vmatpush.msra.mxu0 %v1070
          %1138 = vmatpush.msra.mxu0 %v1066
          %1139 = vmatpush.msra.mxu0 %v1062
          %1140 = vmatpush.msra.mxu0 %v1058
          %1141 = vmatpush.msra.mxu0 %v1054
          %1142 = vmatpush.msra.mxu0 %v1050
          %1143 = vmatpush.msra.mxu0 %v1046
          %1144 = vmatpush.msra.mxu0 %v1042
          %1145 = vmatpush.msra.mxu0 %v1038
          %1146 = vmatpush.msra.mxu0 %v1034
          %1147 = vmatpush.msra.mxu0 %v1030
          %1148 = vmatmul.f32.gmra.mxu0 %v1027
          %v1149 = vpop.f32.mrf.mxu0
          %v1150 = vadd.f32 0.0, %v1149
          %1151 = vdwg.mxu0
          %1152 = vmatpush.msra.mxu0 %v1091
          %1153 = vmatpush.msra.mxu0 %v1087
          %1154 = vmatpush.msra.mxu0 %v1083
          %1155 = vmatpush.msra.mxu0 %v1079
          %1156 = vmatpush.msra.mxu0 %v1075
          %1157 = vmatpush.msra.mxu0 %v1071
          %1158 = vmatpush.msra.mxu0 %v1067
          %1159 = vmatpush.msra.mxu0 %v1063
          %1160 = vmatpush.msra.mxu0 %v1059
          %1161 = vmatpush.msra.mxu0 %v1055
          %1162 = vmatpush.msra.mxu0 %v1051
          %1163 = vmatpush.msra.mxu0 %v1047
          %1164 = vmatpush.msra.mxu0 %v1043
          %1165 = vmatpush.msra.mxu0 %v1039
          %1166 = vmatpush.msra.mxu0 %v1035
          %1167 = vmatpush.msra.mxu0 %v1031
          %1168 = vmatmul.f32.gmra.mxu0 %v1027
          %v1169 = vpop.f32.mrf.mxu0
          %v1170 = vadd.f32 0.0, %v1169
          %1171 = vdwg.mxu0
          %v1172 = vadd.f32 %v755, %v1110
          %v1173 = vadd.f32 %v775, %v1130
          %v1174 = vadd.f32 %v795, %v1150
          %v1175 = vadd.f32 %v815, %v1170
          %v1176 = vxor.u32 %v1172, 2147483648
          %v1177 = vmul.f32 %v1176, 1.442695
          %v1178 = vpow.pop %v1177
          %v1179 = vadd.f32 %v1178, 1.0
          %v1180 = vrcp.pop %v1179
          %v1181 = vmul.f32 %v1179, %v1180
          %v1182 = vsub.f32 1.0, %v1181
          %v1183 = vmul.f32 %v1180, %v1182
          %v1184 = vadd.f32 %v1180, %v1183
          %vm1185 = vweird.f32 %v1179
          %vm1186 = vweird.f32 %v1180
          %vm1187 = vmor %vm1185, %vm1186
          %v1188 = vsel %vm1187, %v1180, %v1184
          %v1189 = vand.u32 2147483647, %v1179
          %vm1190 = vcmp.eq.f32.partialorder %v1189, 8.507059e+37
          %v1191 = vand.u32 %v1179, 2147483648
          %v1192 = vor.u32 1.1754944e-38, %v1191
          %v1193 = vsel %vm1190, %v1192, %v1188
          %v1194 = vmul.f32 1.0, %v1193
          %v1195 = vxor.u32 %v1173, 2147483648
          %v1196 = vmul.f32 %v1195, 1.442695
          %v1197 = vpow.pop %v1196
          %v1198 = vadd.f32 %v1197, 1.0
          %v1199 = vrcp.pop %v1198
          %v1200 = vmul.f32 %v1198, %v1199
          %v1201 = vsub.f32 1.0, %v1200
          %v1202 = vmul.f32 %v1199, %v1201
          %v1203 = vadd.f32 %v1199, %v1202
          %vm1204 = vweird.f32 %v1198
          %vm1205 = vweird.f32 %v1199
          %vm1206 = vmor %vm1204, %vm1205
          %v1207 = vsel %vm1206, %v1199, %v1203
          %v1208 = vand.u32 2147483647, %v1198
          %vm1209 = vcmp.eq.f32.partialorder %v1208, 8.507059e+37
          %v1210 = vand.u32 %v1198, 2147483648
          %v1211 = vor.u32 1.1754944e-38, %v1210
          %v1212 = vsel %vm1209, %v1211, %v1207
          %v1213 = vmul.f32 1.0, %v1212
          %v1214 = vtanh.pop %v1174
          %v1215 = vxor.u32 %v1175, 2147483648
          %v1216 = vmul.f32 %v1215, 1.442695
          %v1217 = vpow.pop %v1216
          %v1218 = vadd.f32 %v1217, 1.0
          %v1219 = vrcp.pop %v1218
          %v1220 = vmul.f32 %v1218, %v1219
          %v1221 = vsub.f32 1.0, %v1220
          %v1222 = vmul.f32 %v1219, %v1221
          %v1223 = vadd.f32 %v1219, %v1222
          %vm1224 = vweird.f32 %v1218
          %vm1225 = vweird.f32 %v1219
          %vm1226 = vmor %vm1224, %vm1225
          %v1227 = vsel %vm1226, %v1219, %v1223
          %v1228 = vand.u32 2147483647, %v1218
          %vm1229 = vcmp.eq.f32.partialorder %v1228, 8.507059e+37
          %v1230 = vand.u32 %v1218, 2147483648
          %v1231 = vor.u32 1.1754944e-38, %v1230
          %v1232 = vsel %vm1229, %v1231, %v1227
          %v1233 = vmul.f32 1.0, %v1232
          %v1234 = vmul.f32 %v1213, %v494
          %v1235 = vmul.f32 %v1194, %v1214
          %v1236 = vadd.f32 %v1234, %v1235
          %v1237 = vtanh.pop %v1236
          %v1238 = vmul.f32 %v1233, %v1237
          %s1239 = scalar_lea.vmem %s397, 16 [#allocation6]
          %v1240 = vld [vmem:[%s1239] sm:$0xff]
          %v1242 = vsel %vm504, %v1240, 0
          %1244 = vmatpush.msra.mxu0 0.0
          %1245 = vmatpush.msra.mxu0 0.0
          %1246 = vmatpush.msra.mxu0 0.0
          %1247 = vmatpush.msra.mxu0 0.0
          %1248 = vmatpush.msra.mxu0 0.0
          %1249 = vmatpush.msra.mxu0 0.0
          %1250 = vmatpush.msra.mxu0 0.0
          %1251 = vmatpush.msra.mxu0 0.0
          %1252 = vmatpush.msra.mxu0 0.0
          %1253 = vmatpush.msra.mxu0 0.0
          %1254 = vmatpush.msra.mxu0 0.0
          %1255 = vmatpush.msra.mxu0 0.0
          %1256 = vmatpush.msra.mxu0 0.0
          %1257 = vmatpush.msra.mxu0 0.0
          %1258 = vmatpush.msra.mxu0 %v500
          %1259 = vmatpush.msra.mxu0 %v496
          %1260 = vmatmul.f32.gmra.mxu0 %v1242
          %v1261 = vpop.f32.mrf.mxu0
          %v1262 = vadd.f32 %v469, %v1261
          %1263 = vdwg.mxu0
          %1264 = vmatpush.msra.mxu0 0.0
          %1265 = vmatpush.msra.mxu0 0.0
          %1266 = vmatpush.msra.mxu0 0.0
          %1267 = vmatpush.msra.mxu0 0.0
          %1268 = vmatpush.msra.mxu0 0.0
          %1269 = vmatpush.msra.mxu0 0.0
          %1270 = vmatpush.msra.mxu0 0.0
          %1271 = vmatpush.msra.mxu0 0.0
          %1272 = vmatpush.msra.mxu0 0.0
          %1273 = vmatpush.msra.mxu0 0.0
          %1274 = vmatpush.msra.mxu0 0.0
          %1275 = vmatpush.msra.mxu0 0.0
          %1276 = vmatpush.msra.mxu0 0.0
          %1277 = vmatpush.msra.mxu0 0.0
          %1278 = vmatpush.msra.mxu0 %v501
          %1279 = vmatpush.msra.mxu0 %v497
          %1280 = vmatmul.f32.gmra.mxu0 %v1242
          %v1281 = vpop.f32.mrf.mxu0
          %v1282 = vadd.f32 %v470, %v1281
          %1283 = vdwg.mxu0
          %1284 = vmatpush.msra.mxu0 0.0
          %1285 = vmatpush.msra.mxu0 0.0
          %1286 = vmatpush.msra.mxu0 0.0
          %1287 = vmatpush.msra.mxu0 0.0
          %1288 = vmatpush.msra.mxu0 0.0
          %1289 = vmatpush.msra.mxu0 0.0
          %1290 = vmatpush.msra.mxu0 0.0
          %1291 = vmatpush.msra.mxu0 0.0
          %1292 = vmatpush.msra.mxu0 0.0
          %1293 = vmatpush.msra.mxu0 0.0
          %1294 = vmatpush.msra.mxu0 0.0
          %1295 = vmatpush.msra.mxu0 0.0
          %1296 = vmatpush.msra.mxu0 0.0
          %1297 = vmatpush.msra.mxu0 0.0
          %1298 = vmatpush.msra.mxu0 %v502
          %1299 = vmatpush.msra.mxu0 %v498
          %1300 = vmatmul.f32.gmra.mxu0 %v1242
          %v1301 = vpop.f32.mrf.mxu0
          %v1302 = vadd.f32 %v471, %v1301
          %1303 = vdwg.mxu0
          %1304 = vmatpush.msra.mxu0 0.0
          %1305 = vmatpush.msra.mxu0 0.0
          %1306 = vmatpush.msra.mxu0 0.0
          %1307 = vmatpush.msra.mxu0 0.0
          %1308 = vmatpush.msra.mxu0 0.0
          %1309 = vmatpush.msra.mxu0 0.0
          %1310 = vmatpush.msra.mxu0 0.0
          %1311 = vmatpush.msra.mxu0 0.0
          %1312 = vmatpush.msra.mxu0 0.0
          %1313 = vmatpush.msra.mxu0 0.0
          %1314 = vmatpush.msra.mxu0 0.0
          %1315 = vmatpush.msra.mxu0 0.0
          %1316 = vmatpush.msra.mxu0 0.0
          %1317 = vmatpush.msra.mxu0 0.0
          %1318 = vmatpush.msra.mxu0 %v503
          %1319 = vmatpush.msra.mxu0 %v499
          %1320 = vmatmul.f32.gmra.mxu0 %v1242
          %v1321 = vpop.f32.mrf.mxu0
          %v1322 = vadd.f32 %v472, %v1321
          %1323 = vdwg.mxu0
          %1324 = vmatpush.msra.mxu0 %v733
          %1325 = vmatpush.msra.mxu0 %v729
          %1326 = vmatpush.msra.mxu0 %v725
          %1327 = vmatpush.msra.mxu0 %v721
          %1328 = vmatpush.msra.mxu0 %v717
          %1329 = vmatpush.msra.mxu0 %v713
          %1330 = vmatpush.msra.mxu0 %v709
          %1331 = vmatpush.msra.mxu0 %v705
          %1332 = vmatpush.msra.mxu0 %v701
          %1333 = vmatpush.msra.mxu0 %v697
          %1334 = vmatpush.msra.mxu0 %v693
          %1335 = vmatpush.msra.mxu0 %v689
          %1336 = vmatpush.msra.mxu0 %v685
          %1337 = vmatpush.msra.mxu0 %v681
          %1338 = vmatpush.msra.mxu0 %v677
          %1339 = vmatpush.msra.mxu0 %v673
          %1340 = vmatmul.f32.gmra.mxu0 %v1238
          %v1341 = vpop.f32.mrf.mxu0
          %v1342 = vadd.f32 %v479, %v1341
          %1343 = vdwg.mxu0
          %1344 = vmatpush.msra.mxu0 %v734
          %1345 = vmatpush.msra.mxu0 %v730
          %1346 = vmatpush.msra.mxu0 %v726
          %1347 = vmatpush.msra.mxu0 %v722
          %1348 = vmatpush.msra.mxu0 %v718
          %1349 = vmatpush.msra.mxu0 %v714
          %1350 = vmatpush.msra.mxu0 %v710
          %1351 = vmatpush.msra.mxu0 %v706
          %1352 = vmatpush.msra.mxu0 %v702
          %1353 = vmatpush.msra.mxu0 %v698
          %1354 = vmatpush.msra.mxu0 %v694
          %1355 = vmatpush.msra.mxu0 %v690
          %1356 = vmatpush.msra.mxu0 %v686
          %1357 = vmatpush.msra.mxu0 %v682
          %1358 = vmatpush.msra.mxu0 %v678
          %1359 = vmatpush.msra.mxu0 %v674
          %1360 = vmatmul.f32.gmra.mxu0 %v1238
          %v1361 = vpop.f32.mrf.mxu0
          %v1362 = vadd.f32 %v480, %v1361
          %1363 = vdwg.mxu0
          %1364 = vmatpush.msra.mxu0 %v735
          %1365 = vmatpush.msra.mxu0 %v731
          %1366 = vmatpush.msra.mxu0 %v727
          %1367 = vmatpush.msra.mxu0 %v723
          %1368 = vmatpush.msra.mxu0 %v719
          %1369 = vmatpush.msra.mxu0 %v715
          %1370 = vmatpush.msra.mxu0 %v711
          %1371 = vmatpush.msra.mxu0 %v707
          %1372 = vmatpush.msra.mxu0 %v703
          %1373 = vmatpush.msra.mxu0 %v699
          %1374 = vmatpush.msra.mxu0 %v695
          %1375 = vmatpush.msra.mxu0 %v691
          %1376 = vmatpush.msra.mxu0 %v687
          %1377 = vmatpush.msra.mxu0 %v683
          %1378 = vmatpush.msra.mxu0 %v679
          %1379 = vmatpush.msra.mxu0 %v675
          %1380 = vmatmul.f32.gmra.mxu0 %v1238
          %v1381 = vpop.f32.mrf.mxu0
          %v1382 = vadd.f32 %v481, %v1381
          %1383 = vdwg.mxu0
          %1384 = vmatpush.msra.mxu0 %v736
          %1385 = vmatpush.msra.mxu0 %v732
          %1386 = vmatpush.msra.mxu0 %v728
          %1387 = vmatpush.msra.mxu0 %v724
          %1388 = vmatpush.msra.mxu0 %v720
          %1389 = vmatpush.msra.mxu0 %v716
          %1390 = vmatpush.msra.mxu0 %v712
          %1391 = vmatpush.msra.mxu0 %v708
          %1392 = vmatpush.msra.mxu0 %v704
          %1393 = vmatpush.msra.mxu0 %v700
          %1394 = vmatpush.msra.mxu0 %v696
          %1395 = vmatpush.msra.mxu0 %v692
          %1396 = vmatpush.msra.mxu0 %v688
          %1397 = vmatpush.msra.mxu0 %v684
          %1398 = vmatpush.msra.mxu0 %v680
          %1399 = vmatpush.msra.mxu0 %v676
          %1400 = vmatmul.f32.gmra.mxu0 %v1238
          %v1401 = vpop.f32.mrf.mxu0
          %v1402 = vadd.f32 %v482, %v1401
          %1403 = vdwg.mxu0
          %1404 = vmatpush.msra.mxu0 %v877
          %1405 = vmatpush.msra.mxu0 %v873
          %1406 = vmatpush.msra.mxu0 %v869
          %1407 = vmatpush.msra.mxu0 %v865
          %1408 = vmatpush.msra.mxu0 %v861
          %1409 = vmatpush.msra.mxu0 %v857
          %1410 = vmatpush.msra.mxu0 %v853
          %1411 = vmatpush.msra.mxu0 %v849
          %1412 = vmatpush.msra.mxu0 %v845
          %1413 = vmatpush.msra.mxu0 %v841
          %1414 = vmatpush.msra.mxu0 %v837
          %1415 = vmatpush.msra.mxu0 %v833
          %1416 = vmatpush.msra.mxu0 %v829
          %1417 = vmatpush.msra.mxu0 %v825
          %1418 = vmatpush.msra.mxu0 %v821
          %1419 = vmatpush.msra.mxu0 %v817
          %1420 = vmatmul.f32.gmra.mxu0 %v1027
          %v1421 = vpop.f32.mrf.mxu0
          %v1422 = vadd.f32 0.0, %v1421
          %1423 = vdwg.mxu0
          %1424 = vmatpush.msra.mxu0 %v878
          %1425 = vmatpush.msra.mxu0 %v874
          %1426 = vmatpush.msra.mxu0 %v870
          %1427 = vmatpush.msra.mxu0 %v866
          %1428 = vmatpush.msra.mxu0 %v862
          %1429 = vmatpush.msra.mxu0 %v858
          %1430 = vmatpush.msra.mxu0 %v854
          %1431 = vmatpush.msra.mxu0 %v850
          %1432 = vmatpush.msra.mxu0 %v846
          %1433 = vmatpush.msra.mxu0 %v842
          %1434 = vmatpush.msra.mxu0 %v838
          %1435 = vmatpush.msra.mxu0 %v834
          %1436 = vmatpush.msra.mxu0 %v830
          %1437 = vmatpush.msra.mxu0 %v826
          %1438 = vmatpush.msra.mxu0 %v822
          %1439 = vmatpush.msra.mxu0 %v818
          %1440 = vmatmul.f32.gmra.mxu0 %v1027
          %v1441 = vpop.f32.mrf.mxu0
          %v1442 = vadd.f32 0.0, %v1441
          %1443 = vdwg.mxu0
          %1444 = vmatpush.msra.mxu0 %v879
          %1445 = vmatpush.msra.mxu0 %v875
          %1446 = vmatpush.msra.mxu0 %v871
          %1447 = vmatpush.msra.mxu0 %v867
          %1448 = vmatpush.msra.mxu0 %v863
          %1449 = vmatpush.msra.mxu0 %v859
          %1450 = vmatpush.msra.mxu0 %v855
          %1451 = vmatpush.msra.mxu0 %v851
          %1452 = vmatpush.msra.mxu0 %v847
          %1453 = vmatpush.msra.mxu0 %v843
          %1454 = vmatpush.msra.mxu0 %v839
          %1455 = vmatpush.msra.mxu0 %v835
          %1456 = vmatpush.msra.mxu0 %v831
          %1457 = vmatpush.msra.mxu0 %v827
          %1458 = vmatpush.msra.mxu0 %v823
          %1459 = vmatpush.msra.mxu0 %v819
          %1460 = vmatmul.f32.gmra.mxu0 %v1027
          %v1461 = vpop.f32.mrf.mxu0
          %v1462 = vadd.f32 0.0, %v1461
          %1463 = vdwg.mxu0
          %1464 = vmatpush.msra.mxu0 %v880
          %1465 = vmatpush.msra.mxu0 %v876
          %1466 = vmatpush.msra.mxu0 %v872
          %1467 = vmatpush.msra.mxu0 %v868
          %1468 = vmatpush.msra.mxu0 %v864
          %1469 = vmatpush.msra.mxu0 %v860
          %1470 = vmatpush.msra.mxu0 %v856
          %1471 = vmatpush.msra.mxu0 %v852
          %1472 = vmatpush.msra.mxu0 %v848
          %1473 = vmatpush.msra.mxu0 %v844
          %1474 = vmatpush.msra.mxu0 %v840
          %1475 = vmatpush.msra.mxu0 %v836
          %1476 = vmatpush.msra.mxu0 %v832
          %1477 = vmatpush.msra.mxu0 %v828
          %1478 = vmatpush.msra.mxu0 %v824
          %1479 = vmatpush.msra.mxu0 %v820
          %1480 = vmatmul.f32.gmra.mxu0 %v1027
          %v1481 = vpop.f32.mrf.mxu0
          %v1482 = vadd.f32 0.0, %v1481
          %1483 = vdwg.mxu0
          %v1484 = vadd.f32 %v611, %v1422
          %v1485 = vadd.f32 %v631, %v1442
          %v1486 = vadd.f32 %v651, %v1462
          %v1487 = vadd.f32 %v671, %v1482
          %v1488 = vxor.u32 %v1484, 2147483648
          %v1489 = vmul.f32 %v1488, 1.442695
          %v1490 = vpow.pop %v1489
          %v1491 = vadd.f32 %v1490, 1.0
          %v1492 = vrcp.pop %v1491
          %v1493 = vmul.f32 %v1491, %v1492
          %v1494 = vsub.f32 1.0, %v1493
          %v1495 = vmul.f32 %v1492, %v1494
          %v1496 = vadd.f32 %v1492, %v1495
          %vm1497 = vweird.f32 %v1491
          %vm1498 = vweird.f32 %v1492
          %vm1499 = vmor %vm1497, %vm1498
          %v1500 = vsel %vm1499, %v1492, %v1496
          %v1501 = vand.u32 2147483647, %v1491
          %vm1502 = vcmp.eq.f32.partialorder %v1501, 8.507059e+37
          %v1503 = vand.u32 %v1491, 2147483648
          %v1504 = vor.u32 1.1754944e-38, %v1503
          %v1505 = vsel %vm1502, %v1504, %v1500
          %v1506 = vmul.f32 1.0, %v1505
          %v1507 = vxor.u32 %v1485, 2147483648
          %v1508 = vmul.f32 %v1507, 1.442695
          %v1509 = vpow.pop %v1508
          %v1510 = vadd.f32 %v1509, 1.0
          %v1511 = vrcp.pop %v1510
          %v1512 = vmul.f32 %v1510, %v1511
          %v1513 = vsub.f32 1.0, %v1512
          %v1514 = vmul.f32 %v1511, %v1513
          %v1515 = vadd.f32 %v1511, %v1514
          %vm1516 = vweird.f32 %v1510
          %vm1517 = vweird.f32 %v1511
          %vm1518 = vmor %vm1516, %vm1517
          %v1519 = vsel %vm1518, %v1511, %v1515
          %v1520 = vand.u32 2147483647, %v1510
          %vm1521 = vcmp.eq.f32.partialorder %v1520, 8.507059e+37
          %v1522 = vand.u32 %v1510, 2147483648
          %v1523 = vor.u32 1.1754944e-38, %v1522
          %v1524 = vsel %vm1521, %v1523, %v1519
          %v1525 = vmul.f32 1.0, %v1524
          %v1526 = vtanh.pop %v1486
          %v1527 = vxor.u32 %v1487, 2147483648
          %v1528 = vmul.f32 %v1527, 1.442695
          %v1529 = vpow.pop %v1528
          %v1530 = vadd.f32 %v1529, 1.0
          %v1531 = vrcp.pop %v1530
          %v1532 = vmul.f32 %v1530, %v1531
          %v1533 = vsub.f32 1.0, %v1532
          %v1534 = vmul.f32 %v1531, %v1533
          %v1535 = vadd.f32 %v1531, %v1534
          %vm1536 = vweird.f32 %v1530
          %vm1537 = vweird.f32 %v1531
          %vm1538 = vmor %vm1536, %vm1537
          %v1539 = vsel %vm1538, %v1531, %v1535
          %v1540 = vand.u32 2147483647, %v1530
          %vm1541 = vcmp.eq.f32.partialorder %v1540, 8.507059e+37
          %v1542 = vand.u32 %v1530, 2147483648
          %v1543 = vor.u32 1.1754944e-38, %v1542
          %v1544 = vsel %vm1541, %v1543, %v1539
          %v1545 = vmul.f32 1.0, %v1544
          %v1546 = vmul.f32 %v1525, %v1025
          %v1547 = vmul.f32 %v1506, %v1526
          %v1548 = vadd.f32 %v1546, %v1547
          %v1549 = vtanh.pop %v1548
          %v1550 = vmul.f32 %v1545, %v1549
          %1551 = vmatpush.msra.mxu0 %v1088
          %1552 = vmatpush.msra.mxu0 %v1084
          %1553 = vmatpush.msra.mxu0 %v1080
          %1554 = vmatpush.msra.mxu0 %v1076
          %1555 = vmatpush.msra.mxu0 %v1072
          %1556 = vmatpush.msra.mxu0 %v1068
          %1557 = vmatpush.msra.mxu0 %v1064
          %1558 = vmatpush.msra.mxu0 %v1060
          %1559 = vmatpush.msra.mxu0 %v1056
          %1560 = vmatpush.msra.mxu0 %v1052
          %1561 = vmatpush.msra.mxu0 %v1048
          %1562 = vmatpush.msra.mxu0 %v1044
          %1563 = vmatpush.msra.mxu0 %v1040
          %1564 = vmatpush.msra.mxu0 %v1036
          %1565 = vmatpush.msra.mxu0 %v1032
          %1566 = vmatpush.msra.mxu0 %v1028
          %1567 = vmatmul.f32.gmra.mxu0 %v1550
          %v1568 = vpop.f32.mrf.mxu0
          %v1569 = vadd.f32 0.0, %v1568
          %1570 = vdwg.mxu0
          %1571 = vmatpush.msra.mxu0 %v1089
          %1572 = vmatpush.msra.mxu0 %v1085
          %1573 = vmatpush.msra.mxu0 %v1081
          %1574 = vmatpush.msra.mxu0 %v1077
          %1575 = vmatpush.msra.mxu0 %v1073
          %1576 = vmatpush.msra.mxu0 %v1069
          %1577 = vmatpush.msra.mxu0 %v1065
          %1578 = vmatpush.msra.mxu0 %v1061
          %1579 = vmatpush.msra.mxu0 %v1057
          %1580 = vmatpush.msra.mxu0 %v1053
          %1581 = vmatpush.msra.mxu0 %v1049
          %1582 = vmatpush.msra.mxu0 %v1045
          %1583 = vmatpush.msra.mxu0 %v1041
          %1584 = vmatpush.msra.mxu0 %v1037
          %1585 = vmatpush.msra.mxu0 %v1033
          %1586 = vmatpush.msra.mxu0 %v1029
          %1587 = vmatmul.f32.gmra.mxu0 %v1550
          %v1588 = vpop.f32.mrf.mxu0
          %v1589 = vadd.f32 0.0, %v1588
          %1590 = vdwg.mxu0
          %1591 = vmatpush.msra.mxu0 %v1090
          %1592 = vmatpush.msra.mxu0 %v1086
          %1593 = vmatpush.msra.mxu0 %v1082
          %1594 = vmatpush.msra.mxu0 %v1078
          %1595 = vmatpush.msra.mxu0 %v1074
          %1596 = vmatpush.msra.mxu0 %v1070
          %1597 = vmatpush.msra.mxu0 %v1066
          %1598 = vmatpush.msra.mxu0 %v1062
          %1599 = vmatpush.msra.mxu0 %v1058
          %1600 = vmatpush.msra.mxu0 %v1054
          %1601 = vmatpush.msra.mxu0 %v1050
          %1602 = vmatpush.msra.mxu0 %v1046
          %1603 = vmatpush.msra.mxu0 %v1042
          %1604 = vmatpush.msra.mxu0 %v1038
          %1605 = vmatpush.msra.mxu0 %v1034
          %1606 = vmatpush.msra.mxu0 %v1030
          %1607 = vmatmul.f32.gmra.mxu0 %v1550
          %v1608 = vpop.f32.mrf.mxu0
          %v1609 = vadd.f32 0.0, %v1608
          %1610 = vdwg.mxu0
          %1611 = vmatpush.msra.mxu0 %v1091
          %1612 = vmatpush.msra.mxu0 %v1087
          %1613 = vmatpush.msra.mxu0 %v1083
          %1614 = vmatpush.msra.mxu0 %v1079
          %1615 = vmatpush.msra.mxu0 %v1075
          %1616 = vmatpush.msra.mxu0 %v1071
          %1617 = vmatpush.msra.mxu0 %v1067
          %1618 = vmatpush.msra.mxu0 %v1063
          %1619 = vmatpush.msra.mxu0 %v1059
          %1620 = vmatpush.msra.mxu0 %v1055
          %1621 = vmatpush.msra.mxu0 %v1051
          %1622 = vmatpush.msra.mxu0 %v1047
          %1623 = vmatpush.msra.mxu0 %v1043
          %1624 = vmatpush.msra.mxu0 %v1039
          %1625 = vmatpush.msra.mxu0 %v1035
          %1626 = vmatpush.msra.mxu0 %v1031
          %1627 = vmatmul.f32.gmra.mxu0 %v1550
          %v1628 = vpop.f32.mrf.mxu0
          %v1629 = vadd.f32 0.0, %v1628
          %1630 = vdwg.mxu0
          %v1631 = vadd.f32 %v1342, %v1569
          %v1632 = vadd.f32 %v1362, %v1589
          %v1633 = vadd.f32 %v1382, %v1609
          %v1634 = vadd.f32 %v1402, %v1629
          %v1635 = vxor.u32 %v1631, 2147483648
          %v1636 = vmul.f32 %v1635, 1.442695
          %v1637 = vpow.pop %v1636
          %v1638 = vadd.f32 %v1637, 1.0
          %v1639 = vrcp.pop %v1638
          %v1640 = vmul.f32 %v1638, %v1639
          %v1641 = vsub.f32 1.0, %v1640
          %v1642 = vmul.f32 %v1639, %v1641
          %v1643 = vadd.f32 %v1639, %v1642
          %vm1644 = vweird.f32 %v1638
          %vm1645 = vweird.f32 %v1639
          %vm1646 = vmor %vm1644, %vm1645
          %v1647 = vsel %vm1646, %v1639, %v1643
          %v1648 = vand.u32 2147483647, %v1638
          %vm1649 = vcmp.eq.f32.partialorder %v1648, 8.507059e+37
          %v1650 = vand.u32 %v1638, 2147483648
          %v1651 = vor.u32 1.1754944e-38, %v1650
          %v1652 = vsel %vm1649, %v1651, %v1647
          %v1653 = vmul.f32 1.0, %v1652
          %v1654 = vxor.u32 %v1632, 2147483648
          %v1655 = vmul.f32 %v1654, 1.442695
          %v1656 = vpow.pop %v1655
          %v1657 = vadd.f32 %v1656, 1.0
          %v1658 = vrcp.pop %v1657
          %v1659 = vmul.f32 %v1657, %v1658
          %v1660 = vsub.f32 1.0, %v1659
          %v1661 = vmul.f32 %v1658, %v1660
          %v1662 = vadd.f32 %v1658, %v1661
          %vm1663 = vweird.f32 %v1657
          %vm1664 = vweird.f32 %v1658
          %vm1665 = vmor %vm1663, %vm1664
          %v1666 = vsel %vm1665, %v1658, %v1662
          %v1667 = vand.u32 2147483647, %v1657
          %vm1668 = vcmp.eq.f32.partialorder %v1667, 8.507059e+37
          %v1669 = vand.u32 %v1657, 2147483648
          %v1670 = vor.u32 1.1754944e-38, %v1669
          %v1671 = vsel %vm1668, %v1670, %v1666
          %v1672 = vmul.f32 1.0, %v1671
          %v1673 = vtanh.pop %v1633
          %v1674 = vxor.u32 %v1634, 2147483648
          %v1675 = vmul.f32 %v1674, 1.442695
          %v1676 = vpow.pop %v1675
          %v1677 = vadd.f32 %v1676, 1.0
          %v1678 = vrcp.pop %v1677
          %v1679 = vmul.f32 %v1677, %v1678
          %v1680 = vsub.f32 1.0, %v1679
          %v1681 = vmul.f32 %v1678, %v1680
          %v1682 = vadd.f32 %v1678, %v1681
          %vm1683 = vweird.f32 %v1677
          %vm1684 = vweird.f32 %v1678
          %vm1685 = vmor %vm1683, %vm1684
          %v1686 = vsel %vm1685, %v1678, %v1682
          %v1687 = vand.u32 2147483647, %v1677
          %vm1688 = vcmp.eq.f32.partialorder %v1687, 8.507059e+37
          %v1689 = vand.u32 %v1677, 2147483648
          %v1690 = vor.u32 1.1754944e-38, %v1689
          %v1691 = vsel %vm1688, %v1690, %v1686
          %v1692 = vmul.f32 1.0, %v1691
          %v1693 = vmul.f32 %v1672, %v1236
          %v1694 = vmul.f32 %v1653, %v1673
          %v1695 = vadd.f32 %v1693, %v1694
          %v1696 = vtanh.pop %v1695
          %v1697 = vmul.f32 %v1692, %v1696
          %1698 = vmatpush.msra.mxu0 %v733
          %1699 = vmatpush.msra.mxu0 %v729
          %1700 = vmatpush.msra.mxu0 %v725
          %1701 = vmatpush.msra.mxu0 %v721
          %1702 = vmatpush.msra.mxu0 %v717
          %1703 = vmatpush.msra.mxu0 %v713
          %1704 = vmatpush.msra.mxu0 %v709
          %1705 = vmatpush.msra.mxu0 %v705
          %1706 = vmatpush.msra.mxu0 %v701
          %1707 = vmatpush.msra.mxu0 %v697
          %1708 = vmatpush.msra.mxu0 %v693
          %1709 = vmatpush.msra.mxu0 %v689
          %1710 = vmatpush.msra.mxu0 %v685
          %1711 = vmatpush.msra.mxu0 %v681
          %1712 = vmatpush.msra.mxu0 %v677
          %1713 = vmatpush.msra.mxu0 %v673
          %1714 = vmatmul.f32.gmra.mxu0 %v1697
          %v1715 = vpop.f32.mrf.mxu0
          %v1716 = vadd.f32 %v479, %v1715
          %1717 = vdwg.mxu0
          %1718 = vmatpush.msra.mxu0 %v734
          %1719 = vmatpush.msra.mxu0 %v730
          %1720 = vmatpush.msra.mxu0 %v726
          %1721 = vmatpush.msra.mxu0 %v722
          %1722 = vmatpush.msra.mxu0 %v718
          %1723 = vmatpush.msra.mxu0 %v714
          %1724 = vmatpush.msra.mxu0 %v710
          %1725 = vmatpush.msra.mxu0 %v706
          %1726 = vmatpush.msra.mxu0 %v702
          %1727 = vmatpush.msra.mxu0 %v698
          %1728 = vmatpush.msra.mxu0 %v694
          %1729 = vmatpush.msra.mxu0 %v690
          %1730 = vmatpush.msra.mxu0 %v686
          %1731 = vmatpush.msra.mxu0 %v682
          %1732 = vmatpush.msra.mxu0 %v678
          %1733 = vmatpush.msra.mxu0 %v674
          %1734 = vmatmul.f32.gmra.mxu0 %v1697
          %v1735 = vpop.f32.mrf.mxu0
          %v1736 = vadd.f32 %v480, %v1735
          %1737 = vdwg.mxu0
          %1738 = vmatpush.msra.mxu0 %v735
          %1739 = vmatpush.msra.mxu0 %v731
          %1740 = vmatpush.msra.mxu0 %v727
          %1741 = vmatpush.msra.mxu0 %v723
          %1742 = vmatpush.msra.mxu0 %v719
          %1743 = vmatpush.msra.mxu0 %v715
          %1744 = vmatpush.msra.mxu0 %v711
          %1745 = vmatpush.msra.mxu0 %v707
          %1746 = vmatpush.msra.mxu0 %v703
          %1747 = vmatpush.msra.mxu0 %v699
          %1748 = vmatpush.msra.mxu0 %v695
          %1749 = vmatpush.msra.mxu0 %v691
          %1750 = vmatpush.msra.mxu0 %v687
          %1751 = vmatpush.msra.mxu0 %v683
          %1752 = vmatpush.msra.mxu0 %v679
          %1753 = vmatpush.msra.mxu0 %v675
          %1754 = vmatmul.f32.gmra.mxu0 %v1697
          %v1755 = vpop.f32.mrf.mxu0
          %v1756 = vadd.f32 %v481, %v1755
          %1757 = vdwg.mxu0
          %1758 = vmatpush.msra.mxu0 %v736
          %1759 = vmatpush.msra.mxu0 %v732
          %1760 = vmatpush.msra.mxu0 %v728
          %1761 = vmatpush.msra.mxu0 %v724
          %1762 = vmatpush.msra.mxu0 %v720
          %1763 = vmatpush.msra.mxu0 %v716
          %1764 = vmatpush.msra.mxu0 %v712
          %1765 = vmatpush.msra.mxu0 %v708
          %1766 = vmatpush.msra.mxu0 %v704
          %1767 = vmatpush.msra.mxu0 %v700
          %1768 = vmatpush.msra.mxu0 %v696
          %1769 = vmatpush.msra.mxu0 %v692
          %1770 = vmatpush.msra.mxu0 %v688
          %1771 = vmatpush.msra.mxu0 %v684
          %1772 = vmatpush.msra.mxu0 %v680
          %1773 = vmatpush.msra.mxu0 %v676
          %1774 = vmatmul.f32.gmra.mxu0 %v1697
          %v1775 = vpop.f32.mrf.mxu0
          %v1776 = vadd.f32 %v482, %v1775
          %1777 = vdwg.mxu0
          %1778 = vmatpush.msra.mxu0 %v877
          %1779 = vmatpush.msra.mxu0 %v873
          %1780 = vmatpush.msra.mxu0 %v869
          %1781 = vmatpush.msra.mxu0 %v865
          %1782 = vmatpush.msra.mxu0 %v861
          %1783 = vmatpush.msra.mxu0 %v857
          %1784 = vmatpush.msra.mxu0 %v853
          %1785 = vmatpush.msra.mxu0 %v849
          %1786 = vmatpush.msra.mxu0 %v845
          %1787 = vmatpush.msra.mxu0 %v841
          %1788 = vmatpush.msra.mxu0 %v837
          %1789 = vmatpush.msra.mxu0 %v833
          %1790 = vmatpush.msra.mxu0 %v829
          %1791 = vmatpush.msra.mxu0 %v825
          %1792 = vmatpush.msra.mxu0 %v821
          %1793 = vmatpush.msra.mxu0 %v817
          %1794 = vmatmul.f32.gmra.mxu0 %v1550
          %v1795 = vpop.f32.mrf.mxu0
          %v1796 = vadd.f32 0.0, %v1795
          %1797 = vdwg.mxu0
          %1798 = vmatpush.msra.mxu0 %v878
          %1799 = vmatpush.msra.mxu0 %v874
          %1800 = vmatpush.msra.mxu0 %v870
          %1801 = vmatpush.msra.mxu0 %v866
          %1802 = vmatpush.msra.mxu0 %v862
          %1803 = vmatpush.msra.mxu0 %v858
          %1804 = vmatpush.msra.mxu0 %v854
          %1805 = vmatpush.msra.mxu0 %v850
          %1806 = vmatpush.msra.mxu0 %v846
          %1807 = vmatpush.msra.mxu0 %v842
          %1808 = vmatpush.msra.mxu0 %v838
          %1809 = vmatpush.msra.mxu0 %v834
          %1810 = vmatpush.msra.mxu0 %v830
          %1811 = vmatpush.msra.mxu0 %v826
          %1812 = vmatpush.msra.mxu0 %v822
          %1813 = vmatpush.msra.mxu0 %v818
          %1814 = vmatmul.f32.gmra.mxu0 %v1550
          %v1815 = vpop.f32.mrf.mxu0
          %v1816 = vadd.f32 0.0, %v1815
          %1817 = vdwg.mxu0
          %1818 = vmatpush.msra.mxu0 %v879
          %1819 = vmatpush.msra.mxu0 %v875
          %1820 = vmatpush.msra.mxu0 %v871
          %1821 = vmatpush.msra.mxu0 %v867
          %1822 = vmatpush.msra.mxu0 %v863
          %1823 = vmatpush.msra.mxu0 %v859
          %1824 = vmatpush.msra.mxu0 %v855
          %1825 = vmatpush.msra.mxu0 %v851
          %1826 = vmatpush.msra.mxu0 %v847
          %1827 = vmatpush.msra.mxu0 %v843
          %1828 = vmatpush.msra.mxu0 %v839
          %1829 = vmatpush.msra.mxu0 %v835
          %1830 = vmatpush.msra.mxu0 %v831
          %1831 = vmatpush.msra.mxu0 %v827
          %1832 = vmatpush.msra.mxu0 %v823
          %1833 = vmatpush.msra.mxu0 %v819
          %1834 = vmatmul.f32.gmra.mxu0 %v1550
          %v1835 = vpop.f32.mrf.mxu0
          %v1836 = vadd.f32 0.0, %v1835
          %1837 = vdwg.mxu0
          %1838 = vmatpush.msra.mxu0 %v880
          %1839 = vmatpush.msra.mxu0 %v876
          %1840 = vmatpush.msra.mxu0 %v872
          %1841 = vmatpush.msra.mxu0 %v868
          %1842 = vmatpush.msra.mxu0 %v864
          %1843 = vmatpush.msra.mxu0 %v860
          %1844 = vmatpush.msra.mxu0 %v856
          %1845 = vmatpush.msra.mxu0 %v852
          %1846 = vmatpush.msra.mxu0 %v848
          %1847 = vmatpush.msra.mxu0 %v844
          %1848 = vmatpush.msra.mxu0 %v840
          %1849 = vmatpush.msra.mxu0 %v836
          %1850 = vmatpush.msra.mxu0 %v832
          %1851 = vmatpush.msra.mxu0 %v828
          %1852 = vmatpush.msra.mxu0 %v824
          %1853 = vmatpush.msra.mxu0 %v820
          %1854 = vmatmul.f32.gmra.mxu0 %v1550
          %v1855 = vpop.f32.mrf.mxu0
          %v1856 = vadd.f32 0.0, %v1855
          %1857 = vdwg.mxu0
          %v1858 = vadd.f32 %v1262, %v1796
          %v1859 = vadd.f32 %v1282, %v1816
          %v1860 = vadd.f32 %v1302, %v1836
          %v1861 = vadd.f32 %v1322, %v1856
          %v1862 = vxor.u32 %v1858, 2147483648
          %v1863 = vmul.f32 %v1862, 1.442695
          %v1864 = vpow.pop %v1863
          %v1865 = vadd.f32 %v1864, 1.0
          %v1866 = vrcp.pop %v1865
          %v1867 = vmul.f32 %v1865, %v1866
          %v1868 = vsub.f32 1.0, %v1867
          %v1869 = vmul.f32 %v1866, %v1868
          %v1870 = vadd.f32 %v1866, %v1869
          %vm1871 = vweird.f32 %v1865
          %vm1872 = vweird.f32 %v1866
          %vm1873 = vmor %vm1871, %vm1872
          %v1874 = vsel %vm1873, %v1866, %v1870
          %v1875 = vand.u32 2147483647, %v1865
          %vm1876 = vcmp.eq.f32.partialorder %v1875, 8.507059e+37
          %v1877 = vand.u32 %v1865, 2147483648
          %v1878 = vor.u32 1.1754944e-38, %v1877
          %v1879 = vsel %vm1876, %v1878, %v1874
          %v1880 = vmul.f32 1.0, %v1879
          %v1881 = vxor.u32 %v1859, 2147483648
          %v1882 = vmul.f32 %v1881, 1.442695
          %v1883 = vpow.pop %v1882
          %v1884 = vadd.f32 %v1883, 1.0
          %v1885 = vrcp.pop %v1884
          %v1886 = vmul.f32 %v1884, %v1885
          %v1887 = vsub.f32 1.0, %v1886
          %v1888 = vmul.f32 %v1885, %v1887
          %v1889 = vadd.f32 %v1885, %v1888
          %vm1890 = vweird.f32 %v1884
          %vm1891 = vweird.f32 %v1885
          %vm1892 = vmor %vm1890, %vm1891
          %v1893 = vsel %vm1892, %v1885, %v1889
          %v1894 = vand.u32 2147483647, %v1884
          %vm1895 = vcmp.eq.f32.partialorder %v1894, 8.507059e+37
          %v1896 = vand.u32 %v1884, 2147483648
          %v1897 = vor.u32 1.1754944e-38, %v1896
          %v1898 = vsel %vm1895, %v1897, %v1893
          %v1899 = vmul.f32 1.0, %v1898
          %v1900 = vtanh.pop %v1860
          %v1901 = vxor.u32 %v1861, 2147483648
          %v1902 = vmul.f32 %v1901, 1.442695
          %v1903 = vpow.pop %v1902
          %v1904 = vadd.f32 %v1903, 1.0
          %v1905 = vrcp.pop %v1904
          %v1906 = vmul.f32 %v1904, %v1905
          %v1907 = vsub.f32 1.0, %v1906
          %v1908 = vmul.f32 %v1905, %v1907
          %v1909 = vadd.f32 %v1905, %v1908
          %vm1910 = vweird.f32 %v1904
          %vm1911 = vweird.f32 %v1905
          %vm1912 = vmor %vm1910, %vm1911
          %v1913 = vsel %vm1912, %v1905, %v1909
          %v1914 = vand.u32 2147483647, %v1904
          %vm1915 = vcmp.eq.f32.partialorder %v1914, 8.507059e+37
          %v1916 = vand.u32 %v1904, 2147483648
          %v1917 = vor.u32 1.1754944e-38, %v1916
          %v1918 = vsel %vm1915, %v1917, %v1913
          %v1919 = vmul.f32 1.0, %v1918
          %v1920 = vmul.f32 %v1899, %v1548
          %v1921 = vmul.f32 %v1880, %v1900
          %v1922 = vadd.f32 %v1920, %v1921
          %v1923 = vtanh.pop %v1922
          %v1924 = vmul.f32 %v1919, %v1923
          %1925 = vmatpush.msra.mxu0 %v1088
          %1926 = vmatpush.msra.mxu0 %v1084
          %1927 = vmatpush.msra.mxu0 %v1080
          %1928 = vmatpush.msra.mxu0 %v1076
          %1929 = vmatpush.msra.mxu0 %v1072
          %1930 = vmatpush.msra.mxu0 %v1068
          %1931 = vmatpush.msra.mxu0 %v1064
          %1932 = vmatpush.msra.mxu0 %v1060
          %1933 = vmatpush.msra.mxu0 %v1056
          %1934 = vmatpush.msra.mxu0 %v1052
          %1935 = vmatpush.msra.mxu0 %v1048
          %1936 = vmatpush.msra.mxu0 %v1044
          %1937 = vmatpush.msra.mxu0 %v1040
          %1938 = vmatpush.msra.mxu0 %v1036
          %1939 = vmatpush.msra.mxu0 %v1032
          %1940 = vmatpush.msra.mxu0 %v1028
          %1941 = vmatmul.f32.gmra.mxu0 %v1924
          %v1942 = vpop.f32.mrf.mxu0
          %v1943 = vadd.f32 0.0, %v1942
          %1944 = vdwg.mxu0
          %1945 = vmatpush.msra.mxu0 %v1089
          %1946 = vmatpush.msra.mxu0 %v1085
          %1947 = vmatpush.msra.mxu0 %v1081
          %1948 = vmatpush.msra.mxu0 %v1077
          %1949 = vmatpush.msra.mxu0 %v1073
          %1950 = vmatpush.msra.mxu0 %v1069
          %1951 = vmatpush.msra.mxu0 %v1065
          %1952 = vmatpush.msra.mxu0 %v1061
          %1953 = vmatpush.msra.mxu0 %v1057
          %1954 = vmatpush.msra.mxu0 %v1053
          %1955 = vmatpush.msra.mxu0 %v1049
          %1956 = vmatpush.msra.mxu0 %v1045
          %1957 = vmatpush.msra.mxu0 %v1041
          %1958 = vmatpush.msra.mxu0 %v1037
          %1959 = vmatpush.msra.mxu0 %v1033
          %1960 = vmatpush.msra.mxu0 %v1029
          %1961 = vmatmul.f32.gmra.mxu0 %v1924
          %v1962 = vpop.f32.mrf.mxu0
          %v1963 = vadd.f32 0.0, %v1962
          %1964 = vdwg.mxu0
          %1965 = vmatpush.msra.mxu0 %v1090
          %1966 = vmatpush.msra.mxu0 %v1086
          %1967 = vmatpush.msra.mxu0 %v1082
          %1968 = vmatpush.msra.mxu0 %v1078
          %1969 = vmatpush.msra.mxu0 %v1074
          %1970 = vmatpush.msra.mxu0 %v1070
          %1971 = vmatpush.msra.mxu0 %v1066
          %1972 = vmatpush.msra.mxu0 %v1062
          %1973 = vmatpush.msra.mxu0 %v1058
          %1974 = vmatpush.msra.mxu0 %v1054
          %1975 = vmatpush.msra.mxu0 %v1050
          %1976 = vmatpush.msra.mxu0 %v1046
          %1977 = vmatpush.msra.mxu0 %v1042
          %1978 = vmatpush.msra.mxu0 %v1038
          %1979 = vmatpush.msra.mxu0 %v1034
          %1980 = vmatpush.msra.mxu0 %v1030
          %1981 = vmatmul.f32.gmra.mxu0 %v1924
          %v1982 = vpop.f32.mrf.mxu0
          %v1983 = vadd.f32 0.0, %v1982
          %1984 = vdwg.mxu0
          %1985 = vmatpush.msra.mxu0 %v1091
          %1986 = vmatpush.msra.mxu0 %v1087
          %1987 = vmatpush.msra.mxu0 %v1083
          %1988 = vmatpush.msra.mxu0 %v1079
          %1989 = vmatpush.msra.mxu0 %v1075
          %1990 = vmatpush.msra.mxu0 %v1071
          %1991 = vmatpush.msra.mxu0 %v1067
          %1992 = vmatpush.msra.mxu0 %v1063
          %1993 = vmatpush.msra.mxu0 %v1059
          %1994 = vmatpush.msra.mxu0 %v1055
          %1995 = vmatpush.msra.mxu0 %v1051
          %1996 = vmatpush.msra.mxu0 %v1047
          %1997 = vmatpush.msra.mxu0 %v1043
          %1998 = vmatpush.msra.mxu0 %v1039
          %1999 = vmatpush.msra.mxu0 %v1035
          %2000 = vmatpush.msra.mxu0 %v1031
          %2001 = vmatmul.f32.gmra.mxu0 %v1924
          %v2002 = vpop.f32.mrf.mxu0
          %v2003 = vadd.f32 0.0, %v2002
          %2004 = vdwg.mxu0
          %v2005 = vadd.f32 %v1716, %v1943
          %v2006 = vadd.f32 %v1736, %v1963
          %v2007 = vadd.f32 %v1756, %v1983
          %v2008 = vadd.f32 %v1776, %v2003
          %v2009 = vxor.u32 %v2005, 2147483648
          %v2010 = vmul.f32 %v2009, 1.442695
          %v2011 = vpow.pop %v2010
          %v2012 = vadd.f32 %v2011, 1.0
          %v2013 = vrcp.pop %v2012
          %v2014 = vmul.f32 %v2012, %v2013
          %v2015 = vsub.f32 1.0, %v2014
          %v2016 = vmul.f32 %v2013, %v2015
          %v2017 = vadd.f32 %v2013, %v2016
          %vm2018 = vweird.f32 %v2012
          %vm2019 = vweird.f32 %v2013
          %vm2020 = vmor %vm2018, %vm2019
          %v2021 = vsel %vm2020, %v2013, %v2017
          %v2022 = vand.u32 2147483647, %v2012
          %vm2023 = vcmp.eq.f32.partialorder %v2022, 8.507059e+37
          %v2024 = vand.u32 %v2012, 2147483648
          %v2025 = vor.u32 1.1754944e-38, %v2024
          %v2026 = vsel %vm2023, %v2025, %v2021
          %v2027 = vmul.f32 1.0, %v2026
          %v2028 = vxor.u32 %v2006, 2147483648
          %v2029 = vmul.f32 %v2028, 1.442695
          %v2030 = vpow.pop %v2029
          %v2031 = vadd.f32 %v2030, 1.0
          %v2032 = vrcp.pop %v2031
          %v2033 = vmul.f32 %v2031, %v2032
          %v2034 = vsub.f32 1.0, %v2033
          %v2035 = vmul.f32 %v2032, %v2034
          %v2036 = vadd.f32 %v2032, %v2035
          %vm2037 = vweird.f32 %v2031
          %vm2038 = vweird.f32 %v2032
          %vm2039 = vmor %vm2037, %vm2038
          %v2040 = vsel %vm2039, %v2032, %v2036
          %v2041 = vand.u32 2147483647, %v2031
          %vm2042 = vcmp.eq.f32.partialorder %v2041, 8.507059e+37
          %v2043 = vand.u32 %v2031, 2147483648
          %v2044 = vor.u32 1.1754944e-38, %v2043
          %v2045 = vsel %vm2042, %v2044, %v2040
          %v2046 = vmul.f32 1.0, %v2045
          %v2047 = vtanh.pop %v2007
          %v2048 = vxor.u32 %v2008, 2147483648
          %v2049 = vmul.f32 %v2048, 1.442695
          %v2050 = vpow.pop %v2049
          %v2051 = vadd.f32 %v2050, 1.0
          %v2052 = vrcp.pop %v2051
          %v2053 = vmul.f32 %v2051, %v2052
          %v2054 = vsub.f32 1.0, %v2053
          %v2055 = vmul.f32 %v2052, %v2054
          %v2056 = vadd.f32 %v2052, %v2055
          %vm2057 = vweird.f32 %v2051
          %vm2058 = vweird.f32 %v2052
          %vm2059 = vmor %vm2057, %vm2058
          %v2060 = vsel %vm2059, %v2052, %v2056
          %v2061 = vand.u32 2147483647, %v2051
          %vm2062 = vcmp.eq.f32.partialorder %v2061, 8.507059e+37
          %v2063 = vand.u32 %v2051, 2147483648
          %v2064 = vor.u32 1.1754944e-38, %v2063
          %v2065 = vsel %vm2062, %v2064, %v2060
          %v2066 = vmul.f32 1.0, %v2065
          %v2067 = vmul.f32 %v2046, %v1695
          %v2068 = vmul.f32 %v2027, %v2047
          %v2069 = vadd.f32 %v2067, %v2068
          %v2070 = vtanh.pop %v2069
          %v2071 = vmul.f32 %v2066, %v2070
          %2072 = vst [vmem:[#allocation2] sm:$0xff] %v1924
          %2073 = vst [vmem:[#allocation3] sm:$0xff] %v1922
          %2074 = vst [vmem:[#allocation4] sm:$0xff] %v2071
          %2075 = vst [vmem:[#allocation5] sm:$0xff] %v2069
        $region92: #{tpu_custom_call.1} parent=55 // pred_fallthru
          _
        %p2076 = scmp.eq.s32.totalorder %s32, 2
        // Predicated region
        $region93: #{tpu_custom_call.1} parent=55 // pred_check
          %p2077 = pneg %p2076
        $region94: #{tpu_custom_call.1} parent=55 // pred_check_branch
          %2079 = sbr.rel (%p2077) target = $region96
        $region95: #{tpu_custom_call.1} parent=55 // pred_region
          %v2080 = vld [vmem:[#allocation2] sm:$0xff]
          %v2081 = vld [vmem:[#allocation3] sm:$0xff]
          %v2082 = vld [vmem:[#allocation4] sm:$0xff]
          %v2083 = vld [vmem:[#allocation5] sm:$0xff]
          %v2084 = vld [vmem:[%s397] sm:$0xff]
          %v2085 = vld [vmem:[#allocation9] sm:$0xff]
          %v2086 = vld [vmem:[#allocation9 + $0x8] sm:$0xff]
          %v2087 = vld [vmem:[#allocation9 + $0x10] sm:$0xff]
          %v2088 = vld [vmem:[#allocation9 + $0x18] sm:$0xff]
          %v2089 = vld [vmem:[#allocation9 + $0x20] sm:$0xff]
          %v2090 = vld [vmem:[#allocation9 + $0x28] sm:$0xff]
          %v2091 = vld [vmem:[#allocation9 + $0x30] sm:$0xff]
          %v2092 = vld [vmem:[#allocation9 + $0x38] sm:$0xff]
          %vm2093 = vcmask 130048
          %v2095 = vsel %vm2093, %v2084, 0
          %2097 = vmatpush.msra.mxu0 0.0
          %2098 = vmatpush.msra.mxu0 0.0
          %2099 = vmatpush.msra.mxu0 0.0
          %2100 = vmatpush.msra.mxu0 0.0
          %2101 = vmatpush.msra.mxu0 0.0
          %2102 = vmatpush.msra.mxu0 0.0
          %2103 = vmatpush.msra.mxu0 0.0
          %2104 = vmatpush.msra.mxu0 0.0
          %2105 = vmatpush.msra.mxu0 0.0
          %2106 = vmatpush.msra.mxu0 0.0
          %2107 = vmatpush.msra.mxu0 0.0
          %2108 = vmatpush.msra.mxu0 0.0
          %2109 = vmatpush.msra.mxu0 0.0
          %2110 = vmatpush.msra.mxu0 0.0
          %2111 = vmatpush.msra.mxu0 %v2089
          %2112 = vmatpush.msra.mxu0 %v2085
          %2113 = vmatmul.f32.gmra.mxu0 %v2095
          %v2114 = vpop.f32.mrf.mxu0
          %v2115 = vadd.f32 %v469, %v2114
          %2116 = vdwg.mxu0
          %2117 = vmatpush.msra.mxu0 0.0
          %2118 = vmatpush.msra.mxu0 0.0
          %2119 = vmatpush.msra.mxu0 0.0
          %2120 = vmatpush.msra.mxu0 0.0
          %2121 = vmatpush.msra.mxu0 0.0
          %2122 = vmatpush.msra.mxu0 0.0
          %2123 = vmatpush.msra.mxu0 0.0
          %2124 = vmatpush.msra.mxu0 0.0
          %2125 = vmatpush.msra.mxu0 0.0
          %2126 = vmatpush.msra.mxu0 0.0
          %2127 = vmatpush.msra.mxu0 0.0
          %2128 = vmatpush.msra.mxu0 0.0
          %2129 = vmatpush.msra.mxu0 0.0
          %2130 = vmatpush.msra.mxu0 0.0
          %2131 = vmatpush.msra.mxu0 %v2090
          %2132 = vmatpush.msra.mxu0 %v2086
          %2133 = vmatmul.f32.gmra.mxu0 %v2095
          %v2134 = vpop.f32.mrf.mxu0
          %v2135 = vadd.f32 %v470, %v2134
          %2136 = vdwg.mxu0
          %2137 = vmatpush.msra.mxu0 0.0
          %2138 = vmatpush.msra.mxu0 0.0
          %2139 = vmatpush.msra.mxu0 0.0
          %2140 = vmatpush.msra.mxu0 0.0
          %2141 = vmatpush.msra.mxu0 0.0
          %2142 = vmatpush.msra.mxu0 0.0
          %2143 = vmatpush.msra.mxu0 0.0
          %2144 = vmatpush.msra.mxu0 0.0
          %2145 = vmatpush.msra.mxu0 0.0
          %2146 = vmatpush.msra.mxu0 0.0
          %2147 = vmatpush.msra.mxu0 0.0
          %2148 = vmatpush.msra.mxu0 0.0
          %2149 = vmatpush.msra.mxu0 0.0
          %2150 = vmatpush.msra.mxu0 0.0
          %2151 = vmatpush.msra.mxu0 %v2091
          %2152 = vmatpush.msra.mxu0 %v2087
          %2153 = vmatmul.f32.gmra.mxu0 %v2095
          %v2154 = vpop.f32.mrf.mxu0
          %v2155 = vadd.f32 %v471, %v2154
          %2156 = vdwg.mxu0
          %2157 = vmatpush.msra.mxu0 0.0
          %2158 = vmatpush.msra.mxu0 0.0
          %2159 = vmatpush.msra.mxu0 0.0
          %2160 = vmatpush.msra.mxu0 0.0
          %2161 = vmatpush.msra.mxu0 0.0
          %2162 = vmatpush.msra.mxu0 0.0
          %2163 = vmatpush.msra.mxu0 0.0
          %2164 = vmatpush.msra.mxu0 0.0
          %2165 = vmatpush.msra.mxu0 0.0
          %2166 = vmatpush.msra.mxu0 0.0
          %2167 = vmatpush.msra.mxu0 0.0
          %2168 = vmatpush.msra.mxu0 0.0
          %2169 = vmatpush.msra.mxu0 0.0
          %2170 = vmatpush.msra.mxu0 0.0
          %2171 = vmatpush.msra.mxu0 %v2092
          %2172 = vmatpush.msra.mxu0 %v2088
          %2173 = vmatmul.f32.gmra.mxu0 %v2095
          %v2174 = vpop.f32.mrf.mxu0
          %v2175 = vadd.f32 %v472, %v2174
          %2176 = vdwg.mxu0
          %s2177 = scalar_lea.vmem %s397, 8 [#allocation6]
          %v2178 = vld [vmem:[%s2177] sm:$0xff]
          %v2180 = vsel %vm2093, %v2178, 0
          %2182 = vmatpush.msra.mxu0 0.0
          %2183 = vmatpush.msra.mxu0 0.0
          %2184 = vmatpush.msra.mxu0 0.0
          %2185 = vmatpush.msra.mxu0 0.0
          %2186 = vmatpush.msra.mxu0 0.0
          %2187 = vmatpush.msra.mxu0 0.0
          %2188 = vmatpush.msra.mxu0 0.0
          %2189 = vmatpush.msra.mxu0 0.0
          %2190 = vmatpush.msra.mxu0 0.0
          %2191 = vmatpush.msra.mxu0 0.0
          %2192 = vmatpush.msra.mxu0 0.0
          %2193 = vmatpush.msra.mxu0 0.0
          %2194 = vmatpush.msra.mxu0 0.0
          %2195 = vmatpush.msra.mxu0 0.0
          %2196 = vmatpush.msra.mxu0 %v2089
          %2197 = vmatpush.msra.mxu0 %v2085
          %2198 = vmatmul.f32.gmra.mxu0 %v2180
          %v2199 = vpop.f32.mrf.mxu0
          %v2200 = vadd.f32 %v469, %v2199
          %2201 = vdwg.mxu0
          %2202 = vmatpush.msra.mxu0 0.0
          %2203 = vmatpush.msra.mxu0 0.0
          %2204 = vmatpush.msra.mxu0 0.0
          %2205 = vmatpush.msra.mxu0 0.0
          %2206 = vmatpush.msra.mxu0 0.0
          %2207 = vmatpush.msra.mxu0 0.0
          %2208 = vmatpush.msra.mxu0 0.0
          %2209 = vmatpush.msra.mxu0 0.0
          %2210 = vmatpush.msra.mxu0 0.0
          %2211 = vmatpush.msra.mxu0 0.0
          %2212 = vmatpush.msra.mxu0 0.0
          %2213 = vmatpush.msra.mxu0 0.0
          %2214 = vmatpush.msra.mxu0 0.0
          %2215 = vmatpush.msra.mxu0 0.0
          %2216 = vmatpush.msra.mxu0 %v2090
          %2217 = vmatpush.msra.mxu0 %v2086
          %2218 = vmatmul.f32.gmra.mxu0 %v2180
          %v2219 = vpop.f32.mrf.mxu0
          %v2220 = vadd.f32 %v470, %v2219
          %2221 = vdwg.mxu0
          %2222 = vmatpush.msra.mxu0 0.0
          %2223 = vmatpush.msra.mxu0 0.0
          %2224 = vmatpush.msra.mxu0 0.0
          %2225 = vmatpush.msra.mxu0 0.0
          %2226 = vmatpush.msra.mxu0 0.0
          %2227 = vmatpush.msra.mxu0 0.0
          %2228 = vmatpush.msra.mxu0 0.0
          %2229 = vmatpush.msra.mxu0 0.0
          %2230 = vmatpush.msra.mxu0 0.0
          %2231 = vmatpush.msra.mxu0 0.0
          %2232 = vmatpush.msra.mxu0 0.0
          %2233 = vmatpush.msra.mxu0 0.0
          %2234 = vmatpush.msra.mxu0 0.0
          %2235 = vmatpush.msra.mxu0 0.0
          %2236 = vmatpush.msra.mxu0 %v2091
          %2237 = vmatpush.msra.mxu0 %v2087
          %2238 = vmatmul.f32.gmra.mxu0 %v2180
          %v2239 = vpop.f32.mrf.mxu0
          %v2240 = vadd.f32 %v471, %v2239
          %2241 = vdwg.mxu0
          %2242 = vmatpush.msra.mxu0 0.0
          %2243 = vmatpush.msra.mxu0 0.0
          %2244 = vmatpush.msra.mxu0 0.0
          %2245 = vmatpush.msra.mxu0 0.0
          %2246 = vmatpush.msra.mxu0 0.0
          %2247 = vmatpush.msra.mxu0 0.0
          %2248 = vmatpush.msra.mxu0 0.0
          %2249 = vmatpush.msra.mxu0 0.0
          %2250 = vmatpush.msra.mxu0 0.0
          %2251 = vmatpush.msra.mxu0 0.0
          %2252 = vmatpush.msra.mxu0 0.0
          %2253 = vmatpush.msra.mxu0 0.0
          %2254 = vmatpush.msra.mxu0 0.0
          %2255 = vmatpush.msra.mxu0 0.0
          %2256 = vmatpush.msra.mxu0 %v2092
          %2257 = vmatpush.msra.mxu0 %v2088
          %2258 = vmatmul.f32.gmra.mxu0 %v2180
          %v2259 = vpop.f32.mrf.mxu0
          %v2260 = vadd.f32 %v472, %v2259
          %2261 = vdwg.mxu0
          %v2262 = vld [vmem:[#allocation15] sm:$0xff]
          %v2263 = vld [vmem:[#allocation15 + $0x8] sm:$0xff]
          %v2264 = vld [vmem:[#allocation15 + $0x10] sm:$0xff]
          %v2265 = vld [vmem:[#allocation15 + $0x18] sm:$0xff]
          %v2266 = vld [vmem:[#allocation15 + $0x20] sm:$0xff]
          %v2267 = vld [vmem:[#allocation15 + $0x28] sm:$0xff]
          %v2268 = vld [vmem:[#allocation15 + $0x30] sm:$0xff]
          %v2269 = vld [vmem:[#allocation15 + $0x38] sm:$0xff]
          %v2270 = vld [vmem:[#allocation15 + $0x40] sm:$0xff]
          %v2271 = vld [vmem:[#allocation15 + $0x48] sm:$0xff]
          %v2272 = vld [vmem:[#allocation15 + $0x50] sm:$0xff]
          %v2273 = vld [vmem:[#allocation15 + $0x58] sm:$0xff]
          %v2274 = vld [vmem:[#allocation15 + $0x60] sm:$0xff]
          %v2275 = vld [vmem:[#allocation15 + $0x68] sm:$0xff]
          %v2276 = vld [vmem:[#allocation15 + $0x70] sm:$0xff]
          %v2277 = vld [vmem:[#allocation15 + $0x78] sm:$0xff]
          %v2278 = vld [vmem:[#allocation15 + $0x80] sm:$0xff]
          %v2279 = vld [vmem:[#allocation15 + $0x88] sm:$0xff]
          %v2280 = vld [vmem:[#allocation15 + $0x90] sm:$0xff]
          %v2281 = vld [vmem:[#allocation15 + $0x98] sm:$0xff]
          %v2282 = vld [vmem:[#allocation15 + $0xa0] sm:$0xff]
          %v2283 = vld [vmem:[#allocation15 + $0xa8] sm:$0xff]
          %v2284 = vld [vmem:[#allocation15 + $0xb0] sm:$0xff]
          %v2285 = vld [vmem:[#allocation15 + $0xb8] sm:$0xff]
          %v2286 = vld [vmem:[#allocation15 + $0xc0] sm:$0xff]
          %v2287 = vld [vmem:[#allocation15 + $0xc8] sm:$0xff]
          %v2288 = vld [vmem:[#allocation15 + $0xd0] sm:$0xff]
          %v2289 = vld [vmem:[#allocation15 + $0xd8] sm:$0xff]
          %v2290 = vld [vmem:[#allocation15 + $0xe0] sm:$0xff]
          %v2291 = vld [vmem:[#allocation15 + $0xe8] sm:$0xff]
          %v2292 = vld [vmem:[#allocation15 + $0xf0] sm:$0xff]
          %v2293 = vld [vmem:[#allocation15 + $0xf8] sm:$0xff]
          %v2294 = vld [vmem:[#allocation15 + $0x100] sm:$0xff]
          %v2295 = vld [vmem:[#allocation15 + $0x108] sm:$0xff]
          %v2296 = vld [vmem:[#allocation15 + $0x110] sm:$0xff]
          %v2297 = vld [vmem:[#allocation15 + $0x118] sm:$0xff]
          %v2298 = vld [vmem:[#allocation15 + $0x120] sm:$0xff]
          %v2299 = vld [vmem:[#allocation15 + $0x128] sm:$0xff]
          %v2300 = vld [vmem:[#allocation15 + $0x130] sm:$0xff]
          %v2301 = vld [vmem:[#allocation15 + $0x138] sm:$0xff]
          %v2302 = vld [vmem:[#allocation15 + $0x140] sm:$0xff]
          %v2303 = vld [vmem:[#allocation15 + $0x148] sm:$0xff]
          %v2304 = vld [vmem:[#allocation15 + $0x150] sm:$0xff]
          %v2305 = vld [vmem:[#allocation15 + $0x158] sm:$0xff]
          %v2306 = vld [vmem:[#allocation15 + $0x160] sm:$0xff]
          %v2307 = vld [vmem:[#allocation15 + $0x168] sm:$0xff]
          %v2308 = vld [vmem:[#allocation15 + $0x170] sm:$0xff]
          %v2309 = vld [vmem:[#allocation15 + $0x178] sm:$0xff]
          %v2310 = vld [vmem:[#allocation15 + $0x180] sm:$0xff]
          %v2311 = vld [vmem:[#allocation15 + $0x188] sm:$0xff]
          %v2312 = vld [vmem:[#allocation15 + $0x190] sm:$0xff]
          %v2313 = vld [vmem:[#allocation15 + $0x198] sm:$0xff]
          %v2314 = vld [vmem:[#allocation15 + $0x1a0] sm:$0xff]
          %v2315 = vld [vmem:[#allocation15 + $0x1a8] sm:$0xff]
          %v2316 = vld [vmem:[#allocation15 + $0x1b0] sm:$0xff]
          %v2317 = vld [vmem:[#allocation15 + $0x1b8] sm:$0xff]
          %v2318 = vld [vmem:[#allocation15 + $0x1c0] sm:$0xff]
          %v2319 = vld [vmem:[#allocation15 + $0x1c8] sm:$0xff]
          %v2320 = vld [vmem:[#allocation15 + $0x1d0] sm:$0xff]
          %v2321 = vld [vmem:[#allocation15 + $0x1d8] sm:$0xff]
          %v2322 = vld [vmem:[#allocation15 + $0x1e0] sm:$0xff]
          %v2323 = vld [vmem:[#allocation15 + $0x1e8] sm:$0xff]
          %v2324 = vld [vmem:[#allocation15 + $0x1f0] sm:$0xff]
          %v2325 = vld [vmem:[#allocation15 + $0x1f8] sm:$0xff]
          %2326 = vmatpush.msra.mxu0 %v2322
          %2327 = vmatpush.msra.mxu0 %v2318
          %2328 = vmatpush.msra.mxu0 %v2314
          %2329 = vmatpush.msra.mxu0 %v2310
          %2330 = vmatpush.msra.mxu0 %v2306
          %2331 = vmatpush.msra.mxu0 %v2302
          %2332 = vmatpush.msra.mxu0 %v2298
          %2333 = vmatpush.msra.mxu0 %v2294
          %2334 = vmatpush.msra.mxu0 %v2290
          %2335 = vmatpush.msra.mxu0 %v2286
          %2336 = vmatpush.msra.mxu0 %v2282
          %2337 = vmatpush.msra.mxu0 %v2278
          %2338 = vmatpush.msra.mxu0 %v2274
          %2339 = vmatpush.msra.mxu0 %v2270
          %2340 = vmatpush.msra.mxu0 %v2266
          %2341 = vmatpush.msra.mxu0 %v2262
          %2342 = vmatmul.f32.gmra.mxu0 %v2082
          %v2343 = vpop.f32.mrf.mxu0
          %v2344 = vadd.f32 %v479, %v2343
          %2345 = vdwg.mxu0
          %2346 = vmatpush.msra.mxu0 %v2323
          %2347 = vmatpush.msra.mxu0 %v2319
          %2348 = vmatpush.msra.mxu0 %v2315
          %2349 = vmatpush.msra.mxu0 %v2311
          %2350 = vmatpush.msra.mxu0 %v2307
          %2351 = vmatpush.msra.mxu0 %v2303
          %2352 = vmatpush.msra.mxu0 %v2299
          %2353 = vmatpush.msra.mxu0 %v2295
          %2354 = vmatpush.msra.mxu0 %v2291
          %2355 = vmatpush.msra.mxu0 %v2287
          %2356 = vmatpush.msra.mxu0 %v2283
          %2357 = vmatpush.msra.mxu0 %v2279
          %2358 = vmatpush.msra.mxu0 %v2275
          %2359 = vmatpush.msra.mxu0 %v2271
          %2360 = vmatpush.msra.mxu0 %v2267
          %2361 = vmatpush.msra.mxu0 %v2263
          %2362 = vmatmul.f32.gmra.mxu0 %v2082
          %v2363 = vpop.f32.mrf.mxu0
          %v2364 = vadd.f32 %v480, %v2363
          %2365 = vdwg.mxu0
          %2366 = vmatpush.msra.mxu0 %v2324
          %2367 = vmatpush.msra.mxu0 %v2320
          %2368 = vmatpush.msra.mxu0 %v2316
          %2369 = vmatpush.msra.mxu0 %v2312
          %2370 = vmatpush.msra.mxu0 %v2308
          %2371 = vmatpush.msra.mxu0 %v2304
          %2372 = vmatpush.msra.mxu0 %v2300
          %2373 = vmatpush.msra.mxu0 %v2296
          %2374 = vmatpush.msra.mxu0 %v2292
          %2375 = vmatpush.msra.mxu0 %v2288
          %2376 = vmatpush.msra.mxu0 %v2284
          %2377 = vmatpush.msra.mxu0 %v2280
          %2378 = vmatpush.msra.mxu0 %v2276
          %2379 = vmatpush.msra.mxu0 %v2272
          %2380 = vmatpush.msra.mxu0 %v2268
          %2381 = vmatpush.msra.mxu0 %v2264
          %2382 = vmatmul.f32.gmra.mxu0 %v2082
          %v2383 = vpop.f32.mrf.mxu0
          %v2384 = vadd.f32 %v481, %v2383
          %2385 = vdwg.mxu0
          %2386 = vmatpush.msra.mxu0 %v2325
          %2387 = vmatpush.msra.mxu0 %v2321
          %2388 = vmatpush.msra.mxu0 %v2317
          %2389 = vmatpush.msra.mxu0 %v2313
          %2390 = vmatpush.msra.mxu0 %v2309
          %2391 = vmatpush.msra.mxu0 %v2305
          %2392 = vmatpush.msra.mxu0 %v2301
          %2393 = vmatpush.msra.mxu0 %v2297
          %2394 = vmatpush.msra.mxu0 %v2293
          %2395 = vmatpush.msra.mxu0 %v2289
          %2396 = vmatpush.msra.mxu0 %v2285
          %2397 = vmatpush.msra.mxu0 %v2281
          %2398 = vmatpush.msra.mxu0 %v2277
          %2399 = vmatpush.msra.mxu0 %v2273
          %2400 = vmatpush.msra.mxu0 %v2269
          %2401 = vmatpush.msra.mxu0 %v2265
          %2402 = vmatmul.f32.gmra.mxu0 %v2082
          %v2403 = vpop.f32.mrf.mxu0
          %v2404 = vadd.f32 %v482, %v2403
          %2405 = vdwg.mxu0
          %v2406 = vld [vmem:[#allocation11] sm:$0xff]
          %v2407 = vld [vmem:[#allocation11 + $0x8] sm:$0xff]
          %v2408 = vld [vmem:[#allocation11 + $0x10] sm:$0xff]
          %v2409 = vld [vmem:[#allocation11 + $0x18] sm:$0xff]
          %v2410 = vld [vmem:[#allocation11 + $0x20] sm:$0xff]
          %v2411 = vld [vmem:[#allocation11 + $0x28] sm:$0xff]
          %v2412 = vld [vmem:[#allocation11 + $0x30] sm:$0xff]
          %v2413 = vld [vmem:[#allocation11 + $0x38] sm:$0xff]
          %v2414 = vld [vmem:[#allocation11 + $0x40] sm:$0xff]
          %v2415 = vld [vmem:[#allocation11 + $0x48] sm:$0xff]
          %v2416 = vld [vmem:[#allocation11 + $0x50] sm:$0xff]
          %v2417 = vld [vmem:[#allocation11 + $0x58] sm:$0xff]
          %v2418 = vld [vmem:[#allocation11 + $0x60] sm:$0xff]
          %v2419 = vld [vmem:[#allocation11 + $0x68] sm:$0xff]
          %v2420 = vld [vmem:[#allocation11 + $0x70] sm:$0xff]
          %v2421 = vld [vmem:[#allocation11 + $0x78] sm:$0xff]
          %v2422 = vld [vmem:[#allocation11 + $0x80] sm:$0xff]
          %v2423 = vld [vmem:[#allocation11 + $0x88] sm:$0xff]
          %v2424 = vld [vmem:[#allocation11 + $0x90] sm:$0xff]
          %v2425 = vld [vmem:[#allocation11 + $0x98] sm:$0xff]
          %v2426 = vld [vmem:[#allocation11 + $0xa0] sm:$0xff]
          %v2427 = vld [vmem:[#allocation11 + $0xa8] sm:$0xff]
          %v2428 = vld [vmem:[#allocation11 + $0xb0] sm:$0xff]
          %v2429 = vld [vmem:[#allocation11 + $0xb8] sm:$0xff]
          %v2430 = vld [vmem:[#allocation11 + $0xc0] sm:$0xff]
          %v2431 = vld [vmem:[#allocation11 + $0xc8] sm:$0xff]
          %v2432 = vld [vmem:[#allocation11 + $0xd0] sm:$0xff]
          %v2433 = vld [vmem:[#allocation11 + $0xd8] sm:$0xff]
          %v2434 = vld [vmem:[#allocation11 + $0xe0] sm:$0xff]
          %v2435 = vld [vmem:[#allocation11 + $0xe8] sm:$0xff]
          %v2436 = vld [vmem:[#allocation11 + $0xf0] sm:$0xff]
          %v2437 = vld [vmem:[#allocation11 + $0xf8] sm:$0xff]
          %v2438 = vld [vmem:[#allocation11 + $0x100] sm:$0xff]
          %v2439 = vld [vmem:[#allocation11 + $0x108] sm:$0xff]
          %v2440 = vld [vmem:[#allocation11 + $0x110] sm:$0xff]
          %v2441 = vld [vmem:[#allocation11 + $0x118] sm:$0xff]
          %v2442 = vld [vmem:[#allocation11 + $0x120] sm:$0xff]
          %v2443 = vld [vmem:[#allocation11 + $0x128] sm:$0xff]
          %v2444 = vld [vmem:[#allocation11 + $0x130] sm:$0xff]
          %v2445 = vld [vmem:[#allocation11 + $0x138] sm:$0xff]
          %v2446 = vld [vmem:[#allocation11 + $0x140] sm:$0xff]
          %v2447 = vld [vmem:[#allocation11 + $0x148] sm:$0xff]
          %v2448 = vld [vmem:[#allocation11 + $0x150] sm:$0xff]
          %v2449 = vld [vmem:[#allocation11 + $0x158] sm:$0xff]
          %v2450 = vld [vmem:[#allocation11 + $0x160] sm:$0xff]
          %v2451 = vld [vmem:[#allocation11 + $0x168] sm:$0xff]
          %v2452 = vld [vmem:[#allocation11 + $0x170] sm:$0xff]
          %v2453 = vld [vmem:[#allocation11 + $0x178] sm:$0xff]
          %v2454 = vld [vmem:[#allocation11 + $0x180] sm:$0xff]
          %v2455 = vld [vmem:[#allocation11 + $0x188] sm:$0xff]
          %v2456 = vld [vmem:[#allocation11 + $0x190] sm:$0xff]
          %v2457 = vld [vmem:[#allocation11 + $0x198] sm:$0xff]
          %v2458 = vld [vmem:[#allocation11 + $0x1a0] sm:$0xff]
          %v2459 = vld [vmem:[#allocation11 + $0x1a8] sm:$0xff]
          %v2460 = vld [vmem:[#allocation11 + $0x1b0] sm:$0xff]
          %v2461 = vld [vmem:[#allocation11 + $0x1b8] sm:$0xff]
          %v2462 = vld [vmem:[#allocation11 + $0x1c0] sm:$0xff]
          %v2463 = vld [vmem:[#allocation11 + $0x1c8] sm:$0xff]
          %v2464 = vld [vmem:[#allocation11 + $0x1d0] sm:$0xff]
          %v2465 = vld [vmem:[#allocation11 + $0x1d8] sm:$0xff]
          %v2466 = vld [vmem:[#allocation11 + $0x1e0] sm:$0xff]
          %v2467 = vld [vmem:[#allocation11 + $0x1e8] sm:$0xff]
          %v2468 = vld [vmem:[#allocation11 + $0x1f0] sm:$0xff]
          %v2469 = vld [vmem:[#allocation11 + $0x1f8] sm:$0xff]
          %2470 = vmatpush.msra.mxu0 %v2466
          %2471 = vmatpush.msra.mxu0 %v2462
          %2472 = vmatpush.msra.mxu0 %v2458
          %2473 = vmatpush.msra.mxu0 %v2454
          %2474 = vmatpush.msra.mxu0 %v2450
          %2475 = vmatpush.msra.mxu0 %v2446
          %2476 = vmatpush.msra.mxu0 %v2442
          %2477 = vmatpush.msra.mxu0 %v2438
          %2478 = vmatpush.msra.mxu0 %v2434
          %2479 = vmatpush.msra.mxu0 %v2430
          %2480 = vmatpush.msra.mxu0 %v2426
          %2481 = vmatpush.msra.mxu0 %v2422
          %2482 = vmatpush.msra.mxu0 %v2418
          %2483 = vmatpush.msra.mxu0 %v2414
          %2484 = vmatpush.msra.mxu0 %v2410
          %2485 = vmatpush.msra.mxu0 %v2406
          %2486 = vmatmul.f32.gmra.mxu0 %v2080
          %v2487 = vpop.f32.mrf.mxu0
          %v2488 = vadd.f32 0.0, %v2487
          %2489 = vdwg.mxu0
          %2490 = vmatpush.msra.mxu0 %v2467
          %2491 = vmatpush.msra.mxu0 %v2463
          %2492 = vmatpush.msra.mxu0 %v2459
          %2493 = vmatpush.msra.mxu0 %v2455
          %2494 = vmatpush.msra.mxu0 %v2451
          %2495 = vmatpush.msra.mxu0 %v2447
          %2496 = vmatpush.msra.mxu0 %v2443
          %2497 = vmatpush.msra.mxu0 %v2439
          %2498 = vmatpush.msra.mxu0 %v2435
          %2499 = vmatpush.msra.mxu0 %v2431
          %2500 = vmatpush.msra.mxu0 %v2427
          %2501 = vmatpush.msra.mxu0 %v2423
          %2502 = vmatpush.msra.mxu0 %v2419
          %2503 = vmatpush.msra.mxu0 %v2415
          %2504 = vmatpush.msra.mxu0 %v2411
          %2505 = vmatpush.msra.mxu0 %v2407
          %2506 = vmatmul.f32.gmra.mxu0 %v2080
          %v2507 = vpop.f32.mrf.mxu0
          %v2508 = vadd.f32 0.0, %v2507
          %2509 = vdwg.mxu0
          %2510 = vmatpush.msra.mxu0 %v2468
          %2511 = vmatpush.msra.mxu0 %v2464
          %2512 = vmatpush.msra.mxu0 %v2460
          %2513 = vmatpush.msra.mxu0 %v2456
          %2514 = vmatpush.msra.mxu0 %v2452
          %2515 = vmatpush.msra.mxu0 %v2448
          %2516 = vmatpush.msra.mxu0 %v2444
          %2517 = vmatpush.msra.mxu0 %v2440
          %2518 = vmatpush.msra.mxu0 %v2436
          %2519 = vmatpush.msra.mxu0 %v2432
          %2520 = vmatpush.msra.mxu0 %v2428
          %2521 = vmatpush.msra.mxu0 %v2424
          %2522 = vmatpush.msra.mxu0 %v2420
          %2523 = vmatpush.msra.mxu0 %v2416
          %2524 = vmatpush.msra.mxu0 %v2412
          %2525 = vmatpush.msra.mxu0 %v2408
          %2526 = vmatmul.f32.gmra.mxu0 %v2080
          %v2527 = vpop.f32.mrf.mxu0
          %v2528 = vadd.f32 0.0, %v2527
          %2529 = vdwg.mxu0
          %2530 = vmatpush.msra.mxu0 %v2469
          %2531 = vmatpush.msra.mxu0 %v2465
          %2532 = vmatpush.msra.mxu0 %v2461
          %2533 = vmatpush.msra.mxu0 %v2457
          %2534 = vmatpush.msra.mxu0 %v2453
          %2535 = vmatpush.msra.mxu0 %v2449
          %2536 = vmatpush.msra.mxu0 %v2445
          %2537 = vmatpush.msra.mxu0 %v2441
          %2538 = vmatpush.msra.mxu0 %v2437
          %2539 = vmatpush.msra.mxu0 %v2433
          %2540 = vmatpush.msra.mxu0 %v2429
          %2541 = vmatpush.msra.mxu0 %v2425
          %2542 = vmatpush.msra.mxu0 %v2421
          %2543 = vmatpush.msra.mxu0 %v2417
          %2544 = vmatpush.msra.mxu0 %v2413
          %2545 = vmatpush.msra.mxu0 %v2409
          %2546 = vmatmul.f32.gmra.mxu0 %v2080
          %v2547 = vpop.f32.mrf.mxu0
          %v2548 = vadd.f32 0.0, %v2547
          %2549 = vdwg.mxu0
          %v2550 = vadd.f32 %v2115, %v2488
          %v2551 = vadd.f32 %v2135, %v2508
          %v2552 = vadd.f32 %v2155, %v2528
          %v2553 = vadd.f32 %v2175, %v2548
          %v2554 = vxor.u32 %v2550, 2147483648
          %v2555 = vmul.f32 %v2554, 1.442695
          %v2556 = vpow.pop %v2555
          %v2557 = vadd.f32 %v2556, 1.0
          %v2558 = vrcp.pop %v2557
          %v2559 = vmul.f32 %v2557, %v2558
          %v2560 = vsub.f32 1.0, %v2559
          %v2561 = vmul.f32 %v2558, %v2560
          %v2562 = vadd.f32 %v2558, %v2561
          %vm2563 = vweird.f32 %v2557
          %vm2564 = vweird.f32 %v2558
          %vm2565 = vmor %vm2563, %vm2564
          %v2566 = vsel %vm2565, %v2558, %v2562
          %v2567 = vand.u32 2147483647, %v2557
          %vm2568 = vcmp.eq.f32.partialorder %v2567, 8.507059e+37
          %v2569 = vand.u32 %v2557, 2147483648
          %v2570 = vor.u32 1.1754944e-38, %v2569
          %v2571 = vsel %vm2568, %v2570, %v2566
          %v2572 = vmul.f32 1.0, %v2571
          %v2573 = vxor.u32 %v2551, 2147483648
          %v2574 = vmul.f32 %v2573, 1.442695
          %v2575 = vpow.pop %v2574
          %v2576 = vadd.f32 %v2575, 1.0
          %v2577 = vrcp.pop %v2576
          %v2578 = vmul.f32 %v2576, %v2577
          %v2579 = vsub.f32 1.0, %v2578
          %v2580 = vmul.f32 %v2577, %v2579
          %v2581 = vadd.f32 %v2577, %v2580
          %vm2582 = vweird.f32 %v2576
          %vm2583 = vweird.f32 %v2577
          %vm2584 = vmor %vm2582, %vm2583
          %v2585 = vsel %vm2584, %v2577, %v2581
          %v2586 = vand.u32 2147483647, %v2576
          %vm2587 = vcmp.eq.f32.partialorder %v2586, 8.507059e+37
          %v2588 = vand.u32 %v2576, 2147483648
          %v2589 = vor.u32 1.1754944e-38, %v2588
          %v2590 = vsel %vm2587, %v2589, %v2585
          %v2591 = vmul.f32 1.0, %v2590
          %v2592 = vtanh.pop %v2552
          %v2593 = vxor.u32 %v2553, 2147483648
          %v2594 = vmul.f32 %v2593, 1.442695
          %v2595 = vpow.pop %v2594
          %v2596 = vadd.f32 %v2595, 1.0
          %v2597 = vrcp.pop %v2596
          %v2598 = vmul.f32 %v2596, %v2597
          %v2599 = vsub.f32 1.0, %v2598
          %v2600 = vmul.f32 %v2597, %v2599
          %v2601 = vadd.f32 %v2597, %v2600
          %vm2602 = vweird.f32 %v2596
          %vm2603 = vweird.f32 %v2597
          %vm2604 = vmor %vm2602, %vm2603
          %v2605 = vsel %vm2604, %v2597, %v2601
          %v2606 = vand.u32 2147483647, %v2596
          %vm2607 = vcmp.eq.f32.partialorder %v2606, 8.507059e+37
          %v2608 = vand.u32 %v2596, 2147483648
          %v2609 = vor.u32 1.1754944e-38, %v2608
          %v2610 = vsel %vm2607, %v2609, %v2605
          %v2611 = vmul.f32 1.0, %v2610
          %v2612 = vmul.f32 %v2591, %v2081
          %v2613 = vmul.f32 %v2572, %v2592
          %v2614 = vadd.f32 %v2612, %v2613
          %v2615 = vtanh.pop %v2614
          %v2616 = vmul.f32 %v2611, %v2615
          %v2617 = vld [vmem:[#allocation14] sm:$0xff]
          %v2618 = vld [vmem:[#allocation14 + $0x8] sm:$0xff]
          %v2619 = vld [vmem:[#allocation14 + $0x10] sm:$0xff]
          %v2620 = vld [vmem:[#allocation14 + $0x18] sm:$0xff]
          %v2621 = vld [vmem:[#allocation14 + $0x20] sm:$0xff]
          %v2622 = vld [vmem:[#allocation14 + $0x28] sm:$0xff]
          %v2623 = vld [vmem:[#allocation14 + $0x30] sm:$0xff]
          %v2624 = vld [vmem:[#allocation14 + $0x38] sm:$0xff]
          %v2625 = vld [vmem:[#allocation14 + $0x40] sm:$0xff]
          %v2626 = vld [vmem:[#allocation14 + $0x48] sm:$0xff]
          %v2627 = vld [vmem:[#allocation14 + $0x50] sm:$0xff]
          %v2628 = vld [vmem:[#allocation14 + $0x58] sm:$0xff]
          %v2629 = vld [vmem:[#allocation14 + $0x60] sm:$0xff]
          %v2630 = vld [vmem:[#allocation14 + $0x68] sm:$0xff]
          %v2631 = vld [vmem:[#allocation14 + $0x70] sm:$0xff]
          %v2632 = vld [vmem:[#allocation14 + $0x78] sm:$0xff]
          %v2633 = vld [vmem:[#allocation14 + $0x80] sm:$0xff]
          %v2634 = vld [vmem:[#allocation14 + $0x88] sm:$0xff]
          %v2635 = vld [vmem:[#allocation14 + $0x90] sm:$0xff]
          %v2636 = vld [vmem:[#allocation14 + $0x98] sm:$0xff]
          %v2637 = vld [vmem:[#allocation14 + $0xa0] sm:$0xff]
          %v2638 = vld [vmem:[#allocation14 + $0xa8] sm:$0xff]
          %v2639 = vld [vmem:[#allocation14 + $0xb0] sm:$0xff]
          %v2640 = vld [vmem:[#allocation14 + $0xb8] sm:$0xff]
          %v2641 = vld [vmem:[#allocation14 + $0xc0] sm:$0xff]
          %v2642 = vld [vmem:[#allocation14 + $0xc8] sm:$0xff]
          %v2643 = vld [vmem:[#allocation14 + $0xd0] sm:$0xff]
          %v2644 = vld [vmem:[#allocation14 + $0xd8] sm:$0xff]
          %v2645 = vld [vmem:[#allocation14 + $0xe0] sm:$0xff]
          %v2646 = vld [vmem:[#allocation14 + $0xe8] sm:$0xff]
          %v2647 = vld [vmem:[#allocation14 + $0xf0] sm:$0xff]
          %v2648 = vld [vmem:[#allocation14 + $0xf8] sm:$0xff]
          %v2649 = vld [vmem:[#allocation14 + $0x100] sm:$0xff]
          %v2650 = vld [vmem:[#allocation14 + $0x108] sm:$0xff]
          %v2651 = vld [vmem:[#allocation14 + $0x110] sm:$0xff]
          %v2652 = vld [vmem:[#allocation14 + $0x118] sm:$0xff]
          %v2653 = vld [vmem:[#allocation14 + $0x120] sm:$0xff]
          %v2654 = vld [vmem:[#allocation14 + $0x128] sm:$0xff]
          %v2655 = vld [vmem:[#allocation14 + $0x130] sm:$0xff]
          %v2656 = vld [vmem:[#allocation14 + $0x138] sm:$0xff]
          %v2657 = vld [vmem:[#allocation14 + $0x140] sm:$0xff]
          %v2658 = vld [vmem:[#allocation14 + $0x148] sm:$0xff]
          %v2659 = vld [vmem:[#allocation14 + $0x150] sm:$0xff]
          %v2660 = vld [vmem:[#allocation14 + $0x158] sm:$0xff]
          %v2661 = vld [vmem:[#allocation14 + $0x160] sm:$0xff]
          %v2662 = vld [vmem:[#allocation14 + $0x168] sm:$0xff]
          %v2663 = vld [vmem:[#allocation14 + $0x170] sm:$0xff]
          %v2664 = vld [vmem:[#allocation14 + $0x178] sm:$0xff]
          %v2665 = vld [vmem:[#allocation14 + $0x180] sm:$0xff]
          %v2666 = vld [vmem:[#allocation14 + $0x188] sm:$0xff]
          %v2667 = vld [vmem:[#allocation14 + $0x190] sm:$0xff]
          %v2668 = vld [vmem:[#allocation14 + $0x198] sm:$0xff]
          %v2669 = vld [vmem:[#allocation14 + $0x1a0] sm:$0xff]
          %v2670 = vld [vmem:[#allocation14 + $0x1a8] sm:$0xff]
          %v2671 = vld [vmem:[#allocation14 + $0x1b0] sm:$0xff]
          %v2672 = vld [vmem:[#allocation14 + $0x1b8] sm:$0xff]
          %v2673 = vld [vmem:[#allocation14 + $0x1c0] sm:$0xff]
          %v2674 = vld [vmem:[#allocation14 + $0x1c8] sm:$0xff]
          %v2675 = vld [vmem:[#allocation14 + $0x1d0] sm:$0xff]
          %v2676 = vld [vmem:[#allocation14 + $0x1d8] sm:$0xff]
          %v2677 = vld [vmem:[#allocation14 + $0x1e0] sm:$0xff]
          %v2678 = vld [vmem:[#allocation14 + $0x1e8] sm:$0xff]
          %v2679 = vld [vmem:[#allocation14 + $0x1f0] sm:$0xff]
          %v2680 = vld [vmem:[#allocation14 + $0x1f8] sm:$0xff]
          %2681 = vmatpush.msra.mxu0 %v2677
          %2682 = vmatpush.msra.mxu0 %v2673
          %2683 = vmatpush.msra.mxu0 %v2669
          %2684 = vmatpush.msra.mxu0 %v2665
          %2685 = vmatpush.msra.mxu0 %v2661
          %2686 = vmatpush.msra.mxu0 %v2657
          %2687 = vmatpush.msra.mxu0 %v2653
          %2688 = vmatpush.msra.mxu0 %v2649
          %2689 = vmatpush.msra.mxu0 %v2645
          %2690 = vmatpush.msra.mxu0 %v2641
          %2691 = vmatpush.msra.mxu0 %v2637
          %2692 = vmatpush.msra.mxu0 %v2633
          %2693 = vmatpush.msra.mxu0 %v2629
          %2694 = vmatpush.msra.mxu0 %v2625
          %2695 = vmatpush.msra.mxu0 %v2621
          %2696 = vmatpush.msra.mxu0 %v2617
          %2697 = vmatmul.f32.gmra.mxu0 %v2616
          %v2698 = vpop.f32.mrf.mxu0
          %v2699 = vadd.f32 0.0, %v2698
          %2700 = vdwg.mxu0
          %2701 = vmatpush.msra.mxu0 %v2678
          %2702 = vmatpush.msra.mxu0 %v2674
          %2703 = vmatpush.msra.mxu0 %v2670
          %2704 = vmatpush.msra.mxu0 %v2666
          %2705 = vmatpush.msra.mxu0 %v2662
          %2706 = vmatpush.msra.mxu0 %v2658
          %2707 = vmatpush.msra.mxu0 %v2654
          %2708 = vmatpush.msra.mxu0 %v2650
          %2709 = vmatpush.msra.mxu0 %v2646
          %2710 = vmatpush.msra.mxu0 %v2642
          %2711 = vmatpush.msra.mxu0 %v2638
          %2712 = vmatpush.msra.mxu0 %v2634
          %2713 = vmatpush.msra.mxu0 %v2630
          %2714 = vmatpush.msra.mxu0 %v2626
          %2715 = vmatpush.msra.mxu0 %v2622
          %2716 = vmatpush.msra.mxu0 %v2618
          %2717 = vmatmul.f32.gmra.mxu0 %v2616
          %v2718 = vpop.f32.mrf.mxu0
          %v2719 = vadd.f32 0.0, %v2718
          %2720 = vdwg.mxu0
          %2721 = vmatpush.msra.mxu0 %v2679
          %2722 = vmatpush.msra.mxu0 %v2675
          %2723 = vmatpush.msra.mxu0 %v2671
          %2724 = vmatpush.msra.mxu0 %v2667
          %2725 = vmatpush.msra.mxu0 %v2663
          %2726 = vmatpush.msra.mxu0 %v2659
          %2727 = vmatpush.msra.mxu0 %v2655
          %2728 = vmatpush.msra.mxu0 %v2651
          %2729 = vmatpush.msra.mxu0 %v2647
          %2730 = vmatpush.msra.mxu0 %v2643
          %2731 = vmatpush.msra.mxu0 %v2639
          %2732 = vmatpush.msra.mxu0 %v2635
          %2733 = vmatpush.msra.mxu0 %v2631
          %2734 = vmatpush.msra.mxu0 %v2627
          %2735 = vmatpush.msra.mxu0 %v2623
          %2736 = vmatpush.msra.mxu0 %v2619
          %2737 = vmatmul.f32.gmra.mxu0 %v2616
          %v2738 = vpop.f32.mrf.mxu0
          %v2739 = vadd.f32 0.0, %v2738
          %2740 = vdwg.mxu0
          %2741 = vmatpush.msra.mxu0 %v2680
          %2742 = vmatpush.msra.mxu0 %v2676
          %2743 = vmatpush.msra.mxu0 %v2672
          %2744 = vmatpush.msra.mxu0 %v2668
          %2745 = vmatpush.msra.mxu0 %v2664
          %2746 = vmatpush.msra.mxu0 %v2660
          %2747 = vmatpush.msra.mxu0 %v2656
          %2748 = vmatpush.msra.mxu0 %v2652
          %2749 = vmatpush.msra.mxu0 %v2648
          %2750 = vmatpush.msra.mxu0 %v2644
          %2751 = vmatpush.msra.mxu0 %v2640
          %2752 = vmatpush.msra.mxu0 %v2636
          %2753 = vmatpush.msra.mxu0 %v2632
          %2754 = vmatpush.msra.mxu0 %v2628
          %2755 = vmatpush.msra.mxu0 %v2624
          %2756 = vmatpush.msra.mxu0 %v2620
          %2757 = vmatmul.f32.gmra.mxu0 %v2616
          %v2758 = vpop.f32.mrf.mxu0
          %v2759 = vadd.f32 0.0, %v2758
          %2760 = vdwg.mxu0
          %v2761 = vadd.f32 %v2344, %v2699
          %v2762 = vadd.f32 %v2364, %v2719
          %v2763 = vadd.f32 %v2384, %v2739
          %v2764 = vadd.f32 %v2404, %v2759
          %v2765 = vxor.u32 %v2761, 2147483648
          %v2766 = vmul.f32 %v2765, 1.442695
          %v2767 = vpow.pop %v2766
          %v2768 = vadd.f32 %v2767, 1.0
          %v2769 = vrcp.pop %v2768
          %v2770 = vmul.f32 %v2768, %v2769
          %v2771 = vsub.f32 1.0, %v2770
          %v2772 = vmul.f32 %v2769, %v2771
          %v2773 = vadd.f32 %v2769, %v2772
          %vm2774 = vweird.f32 %v2768
          %vm2775 = vweird.f32 %v2769
          %vm2776 = vmor %vm2774, %vm2775
          %v2777 = vsel %vm2776, %v2769, %v2773
          %v2778 = vand.u32 2147483647, %v2768
          %vm2779 = vcmp.eq.f32.partialorder %v2778, 8.507059e+37
          %v2780 = vand.u32 %v2768, 2147483648
          %v2781 = vor.u32 1.1754944e-38, %v2780
          %v2782 = vsel %vm2779, %v2781, %v2777
          %v2783 = vmul.f32 1.0, %v2782
          %v2784 = vxor.u32 %v2762, 2147483648
          %v2785 = vmul.f32 %v2784, 1.442695
          %v2786 = vpow.pop %v2785
          %v2787 = vadd.f32 %v2786, 1.0
          %v2788 = vrcp.pop %v2787
          %v2789 = vmul.f32 %v2787, %v2788
          %v2790 = vsub.f32 1.0, %v2789
          %v2791 = vmul.f32 %v2788, %v2790
          %v2792 = vadd.f32 %v2788, %v2791
          %vm2793 = vweird.f32 %v2787
          %vm2794 = vweird.f32 %v2788
          %vm2795 = vmor %vm2793, %vm2794
          %v2796 = vsel %vm2795, %v2788, %v2792
          %v2797 = vand.u32 2147483647, %v2787
          %vm2798 = vcmp.eq.f32.partialorder %v2797, 8.507059e+37
          %v2799 = vand.u32 %v2787, 2147483648
          %v2800 = vor.u32 1.1754944e-38, %v2799
          %v2801 = vsel %vm2798, %v2800, %v2796
          %v2802 = vmul.f32 1.0, %v2801
          %v2803 = vtanh.pop %v2763
          %v2804 = vxor.u32 %v2764, 2147483648
          %v2805 = vmul.f32 %v2804, 1.442695
          %v2806 = vpow.pop %v2805
          %v2807 = vadd.f32 %v2806, 1.0
          %v2808 = vrcp.pop %v2807
          %v2809 = vmul.f32 %v2807, %v2808
          %v2810 = vsub.f32 1.0, %v2809
          %v2811 = vmul.f32 %v2808, %v2810
          %v2812 = vadd.f32 %v2808, %v2811
          %vm2813 = vweird.f32 %v2807
          %vm2814 = vweird.f32 %v2808
          %vm2815 = vmor %vm2813, %vm2814
          %v2816 = vsel %vm2815, %v2808, %v2812
          %v2817 = vand.u32 2147483647, %v2807
          %vm2818 = vcmp.eq.f32.partialorder %v2817, 8.507059e+37
          %v2819 = vand.u32 %v2807, 2147483648
          %v2820 = vor.u32 1.1754944e-38, %v2819
          %v2821 = vsel %vm2818, %v2820, %v2816
          %v2822 = vmul.f32 1.0, %v2821
          %v2823 = vmul.f32 %v2802, %v2083
          %v2824 = vmul.f32 %v2783, %v2803
          %v2825 = vadd.f32 %v2823, %v2824
          %v2826 = vtanh.pop %v2825
          %v2827 = vmul.f32 %v2822, %v2826
          %2828 = vmatpush.msra.mxu0 %v2322
          %2829 = vmatpush.msra.mxu0 %v2318
          %2830 = vmatpush.msra.mxu0 %v2314
          %2831 = vmatpush.msra.mxu0 %v2310
          %2832 = vmatpush.msra.mxu0 %v2306
          %2833 = vmatpush.msra.mxu0 %v2302
          %2834 = vmatpush.msra.mxu0 %v2298
          %2835 = vmatpush.msra.mxu0 %v2294
          %2836 = vmatpush.msra.mxu0 %v2290
          %2837 = vmatpush.msra.mxu0 %v2286
          %2838 = vmatpush.msra.mxu0 %v2282
          %2839 = vmatpush.msra.mxu0 %v2278
          %2840 = vmatpush.msra.mxu0 %v2274
          %2841 = vmatpush.msra.mxu0 %v2270
          %2842 = vmatpush.msra.mxu0 %v2266
          %2843 = vmatpush.msra.mxu0 %v2262
          %2844 = vmatmul.f32.gmra.mxu0 %v2827
          %v2845 = vpop.f32.mrf.mxu0
          %v2846 = vadd.f32 %v479, %v2845
          %2847 = vdwg.mxu0
          %2848 = vmatpush.msra.mxu0 %v2323
          %2849 = vmatpush.msra.mxu0 %v2319
          %2850 = vmatpush.msra.mxu0 %v2315
          %2851 = vmatpush.msra.mxu0 %v2311
          %2852 = vmatpush.msra.mxu0 %v2307
          %2853 = vmatpush.msra.mxu0 %v2303
          %2854 = vmatpush.msra.mxu0 %v2299
          %2855 = vmatpush.msra.mxu0 %v2295
          %2856 = vmatpush.msra.mxu0 %v2291
          %2857 = vmatpush.msra.mxu0 %v2287
          %2858 = vmatpush.msra.mxu0 %v2283
          %2859 = vmatpush.msra.mxu0 %v2279
          %2860 = vmatpush.msra.mxu0 %v2275
          %2861 = vmatpush.msra.mxu0 %v2271
          %2862 = vmatpush.msra.mxu0 %v2267
          %2863 = vmatpush.msra.mxu0 %v2263
          %2864 = vmatmul.f32.gmra.mxu0 %v2827
          %v2865 = vpop.f32.mrf.mxu0
          %v2866 = vadd.f32 %v480, %v2865
          %2867 = vdwg.mxu0
          %2868 = vmatpush.msra.mxu0 %v2324
          %2869 = vmatpush.msra.mxu0 %v2320
          %2870 = vmatpush.msra.mxu0 %v2316
          %2871 = vmatpush.msra.mxu0 %v2312
          %2872 = vmatpush.msra.mxu0 %v2308
          %2873 = vmatpush.msra.mxu0 %v2304
          %2874 = vmatpush.msra.mxu0 %v2300
          %2875 = vmatpush.msra.mxu0 %v2296
          %2876 = vmatpush.msra.mxu0 %v2292
          %2877 = vmatpush.msra.mxu0 %v2288
          %2878 = vmatpush.msra.mxu0 %v2284
          %2879 = vmatpush.msra.mxu0 %v2280
          %2880 = vmatpush.msra.mxu0 %v2276
          %2881 = vmatpush.msra.mxu0 %v2272
          %2882 = vmatpush.msra.mxu0 %v2268
          %2883 = vmatpush.msra.mxu0 %v2264
          %2884 = vmatmul.f32.gmra.mxu0 %v2827
          %v2885 = vpop.f32.mrf.mxu0
          %v2886 = vadd.f32 %v481, %v2885
          %2887 = vdwg.mxu0
          %2888 = vmatpush.msra.mxu0 %v2325
          %2889 = vmatpush.msra.mxu0 %v2321
          %2890 = vmatpush.msra.mxu0 %v2317
          %2891 = vmatpush.msra.mxu0 %v2313
          %2892 = vmatpush.msra.mxu0 %v2309
          %2893 = vmatpush.msra.mxu0 %v2305
          %2894 = vmatpush.msra.mxu0 %v2301
          %2895 = vmatpush.msra.mxu0 %v2297
          %2896 = vmatpush.msra.mxu0 %v2293
          %2897 = vmatpush.msra.mxu0 %v2289
          %2898 = vmatpush.msra.mxu0 %v2285
          %2899 = vmatpush.msra.mxu0 %v2281
          %2900 = vmatpush.msra.mxu0 %v2277
          %2901 = vmatpush.msra.mxu0 %v2273
          %2902 = vmatpush.msra.mxu0 %v2269
          %2903 = vmatpush.msra.mxu0 %v2265
          %2904 = vmatmul.f32.gmra.mxu0 %v2827
          %v2905 = vpop.f32.mrf.mxu0
          %v2906 = vadd.f32 %v482, %v2905
          %2907 = vdwg.mxu0
          %2908 = vmatpush.msra.mxu0 %v2466
          %2909 = vmatpush.msra.mxu0 %v2462
          %2910 = vmatpush.msra.mxu0 %v2458
          %2911 = vmatpush.msra.mxu0 %v2454
          %2912 = vmatpush.msra.mxu0 %v2450
          %2913 = vmatpush.msra.mxu0 %v2446
          %2914 = vmatpush.msra.mxu0 %v2442
          %2915 = vmatpush.msra.mxu0 %v2438
          %2916 = vmatpush.msra.mxu0 %v2434
          %2917 = vmatpush.msra.mxu0 %v2430
          %2918 = vmatpush.msra.mxu0 %v2426
          %2919 = vmatpush.msra.mxu0 %v2422
          %2920 = vmatpush.msra.mxu0 %v2418
          %2921 = vmatpush.msra.mxu0 %v2414
          %2922 = vmatpush.msra.mxu0 %v2410
          %2923 = vmatpush.msra.mxu0 %v2406
          %2924 = vmatmul.f32.gmra.mxu0 %v2616
          %v2925 = vpop.f32.mrf.mxu0
          %v2926 = vadd.f32 0.0, %v2925
          %2927 = vdwg.mxu0
          %2928 = vmatpush.msra.mxu0 %v2467
          %2929 = vmatpush.msra.mxu0 %v2463
          %2930 = vmatpush.msra.mxu0 %v2459
          %2931 = vmatpush.msra.mxu0 %v2455
          %2932 = vmatpush.msra.mxu0 %v2451
          %2933 = vmatpush.msra.mxu0 %v2447
          %2934 = vmatpush.msra.mxu0 %v2443
          %2935 = vmatpush.msra.mxu0 %v2439
          %2936 = vmatpush.msra.mxu0 %v2435
          %2937 = vmatpush.msra.mxu0 %v2431
          %2938 = vmatpush.msra.mxu0 %v2427
          %2939 = vmatpush.msra.mxu0 %v2423
          %2940 = vmatpush.msra.mxu0 %v2419
          %2941 = vmatpush.msra.mxu0 %v2415
          %2942 = vmatpush.msra.mxu0 %v2411
          %2943 = vmatpush.msra.mxu0 %v2407
          %2944 = vmatmul.f32.gmra.mxu0 %v2616
          %v2945 = vpop.f32.mrf.mxu0
          %v2946 = vadd.f32 0.0, %v2945
          %2947 = vdwg.mxu0
          %2948 = vmatpush.msra.mxu0 %v2468
          %2949 = vmatpush.msra.mxu0 %v2464
          %2950 = vmatpush.msra.mxu0 %v2460
          %2951 = vmatpush.msra.mxu0 %v2456
          %2952 = vmatpush.msra.mxu0 %v2452
          %2953 = vmatpush.msra.mxu0 %v2448
          %2954 = vmatpush.msra.mxu0 %v2444
          %2955 = vmatpush.msra.mxu0 %v2440
          %2956 = vmatpush.msra.mxu0 %v2436
          %2957 = vmatpush.msra.mxu0 %v2432
          %2958 = vmatpush.msra.mxu0 %v2428
          %2959 = vmatpush.msra.mxu0 %v2424
          %2960 = vmatpush.msra.mxu0 %v2420
          %2961 = vmatpush.msra.mxu0 %v2416
          %2962 = vmatpush.msra.mxu0 %v2412
          %2963 = vmatpush.msra.mxu0 %v2408
          %2964 = vmatmul.f32.gmra.mxu0 %v2616
          %v2965 = vpop.f32.mrf.mxu0
          %v2966 = vadd.f32 0.0, %v2965
          %2967 = vdwg.mxu0
          %2968 = vmatpush.msra.mxu0 %v2469
          %2969 = vmatpush.msra.mxu0 %v2465
          %2970 = vmatpush.msra.mxu0 %v2461
          %2971 = vmatpush.msra.mxu0 %v2457
          %2972 = vmatpush.msra.mxu0 %v2453
          %2973 = vmatpush.msra.mxu0 %v2449
          %2974 = vmatpush.msra.mxu0 %v2445
          %2975 = vmatpush.msra.mxu0 %v2441
          %2976 = vmatpush.msra.mxu0 %v2437
          %2977 = vmatpush.msra.mxu0 %v2433
          %2978 = vmatpush.msra.mxu0 %v2429
          %2979 = vmatpush.msra.mxu0 %v2425
          %2980 = vmatpush.msra.mxu0 %v2421
          %2981 = vmatpush.msra.mxu0 %v2417
          %2982 = vmatpush.msra.mxu0 %v2413
          %2983 = vmatpush.msra.mxu0 %v2409
          %2984 = vmatmul.f32.gmra.mxu0 %v2616
          %v2985 = vpop.f32.mrf.mxu0
          %v2986 = vadd.f32 0.0, %v2985
          %2987 = vdwg.mxu0
          %v2988 = vadd.f32 %v2200, %v2926
          %v2989 = vadd.f32 %v2220, %v2946
          %v2990 = vadd.f32 %v2240, %v2966
          %v2991 = vadd.f32 %v2260, %v2986
          %v2992 = vxor.u32 %v2988, 2147483648
          %v2993 = vmul.f32 %v2992, 1.442695
          %v2994 = vpow.pop %v2993
          %v2995 = vadd.f32 %v2994, 1.0
          %v2996 = vrcp.pop %v2995
          %v2997 = vmul.f32 %v2995, %v2996
          %v2998 = vsub.f32 1.0, %v2997
          %v2999 = vmul.f32 %v2996, %v2998
          %v3000 = vadd.f32 %v2996, %v2999
          %vm3001 = vweird.f32 %v2995
          %vm3002 = vweird.f32 %v2996
          %vm3003 = vmor %vm3001, %vm3002
          %v3004 = vsel %vm3003, %v2996, %v3000
          %v3005 = vand.u32 2147483647, %v2995
          %vm3006 = vcmp.eq.f32.partialorder %v3005, 8.507059e+37
          %v3007 = vand.u32 %v2995, 2147483648
          %v3008 = vor.u32 1.1754944e-38, %v3007
          %v3009 = vsel %vm3006, %v3008, %v3004
          %v3010 = vmul.f32 1.0, %v3009
          %v3011 = vxor.u32 %v2989, 2147483648
          %v3012 = vmul.f32 %v3011, 1.442695
          %v3013 = vpow.pop %v3012
          %v3014 = vadd.f32 %v3013, 1.0
          %v3015 = vrcp.pop %v3014
          %v3016 = vmul.f32 %v3014, %v3015
          %v3017 = vsub.f32 1.0, %v3016
          %v3018 = vmul.f32 %v3015, %v3017
          %v3019 = vadd.f32 %v3015, %v3018
          %vm3020 = vweird.f32 %v3014
          %vm3021 = vweird.f32 %v3015
          %vm3022 = vmor %vm3020, %vm3021
          %v3023 = vsel %vm3022, %v3015, %v3019
          %v3024 = vand.u32 2147483647, %v3014
          %vm3025 = vcmp.eq.f32.partialorder %v3024, 8.507059e+37
          %v3026 = vand.u32 %v3014, 2147483648
          %v3027 = vor.u32 1.1754944e-38, %v3026
          %v3028 = vsel %vm3025, %v3027, %v3023
          %v3029 = vmul.f32 1.0, %v3028
          %v3030 = vtanh.pop %v2990
          %v3031 = vxor.u32 %v2991, 2147483648
          %v3032 = vmul.f32 %v3031, 1.442695
          %v3033 = vpow.pop %v3032
          %v3034 = vadd.f32 %v3033, 1.0
          %v3035 = vrcp.pop %v3034
          %v3036 = vmul.f32 %v3034, %v3035
          %v3037 = vsub.f32 1.0, %v3036
          %v3038 = vmul.f32 %v3035, %v3037
          %v3039 = vadd.f32 %v3035, %v3038
          %vm3040 = vweird.f32 %v3034
          %vm3041 = vweird.f32 %v3035
          %vm3042 = vmor %vm3040, %vm3041
          %v3043 = vsel %vm3042, %v3035, %v3039
          %v3044 = vand.u32 2147483647, %v3034
          %vm3045 = vcmp.eq.f32.partialorder %v3044, 8.507059e+37
          %v3046 = vand.u32 %v3034, 2147483648
          %v3047 = vor.u32 1.1754944e-38, %v3046
          %v3048 = vsel %vm3045, %v3047, %v3043
          %v3049 = vmul.f32 1.0, %v3048
          %v3050 = vmul.f32 %v3029, %v2614
          %v3051 = vmul.f32 %v3010, %v3030
          %v3052 = vadd.f32 %v3050, %v3051
          %v3053 = vtanh.pop %v3052
          %v3054 = vmul.f32 %v3049, %v3053
          %3055 = vmatpush.msra.mxu0 %v2677
          %3056 = vmatpush.msra.mxu0 %v2673
          %3057 = vmatpush.msra.mxu0 %v2669
          %3058 = vmatpush.msra.mxu0 %v2665
          %3059 = vmatpush.msra.mxu0 %v2661
          %3060 = vmatpush.msra.mxu0 %v2657
          %3061 = vmatpush.msra.mxu0 %v2653
          %3062 = vmatpush.msra.mxu0 %v2649
          %3063 = vmatpush.msra.mxu0 %v2645
          %3064 = vmatpush.msra.mxu0 %v2641
          %3065 = vmatpush.msra.mxu0 %v2637
          %3066 = vmatpush.msra.mxu0 %v2633
          %3067 = vmatpush.msra.mxu0 %v2629
          %3068 = vmatpush.msra.mxu0 %v2625
          %3069 = vmatpush.msra.mxu0 %v2621
          %3070 = vmatpush.msra.mxu0 %v2617
          %3071 = vmatmul.f32.gmra.mxu0 %v3054
          %v3072 = vpop.f32.mrf.mxu0
          %v3073 = vadd.f32 0.0, %v3072
          %3074 = vdwg.mxu0
          %3075 = vmatpush.msra.mxu0 %v2678
          %3076 = vmatpush.msra.mxu0 %v2674
          %3077 = vmatpush.msra.mxu0 %v2670
          %3078 = vmatpush.msra.mxu0 %v2666
          %3079 = vmatpush.msra.mxu0 %v2662
          %3080 = vmatpush.msra.mxu0 %v2658
          %3081 = vmatpush.msra.mxu0 %v2654
          %3082 = vmatpush.msra.mxu0 %v2650
          %3083 = vmatpush.msra.mxu0 %v2646
          %3084 = vmatpush.msra.mxu0 %v2642
          %3085 = vmatpush.msra.mxu0 %v2638
          %3086 = vmatpush.msra.mxu0 %v2634
          %3087 = vmatpush.msra.mxu0 %v2630
          %3088 = vmatpush.msra.mxu0 %v2626
          %3089 = vmatpush.msra.mxu0 %v2622
          %3090 = vmatpush.msra.mxu0 %v2618
          %3091 = vmatmul.f32.gmra.mxu0 %v3054
          %v3092 = vpop.f32.mrf.mxu0
          %v3093 = vadd.f32 0.0, %v3092
          %3094 = vdwg.mxu0
          %3095 = vmatpush.msra.mxu0 %v2679
          %3096 = vmatpush.msra.mxu0 %v2675
          %3097 = vmatpush.msra.mxu0 %v2671
          %3098 = vmatpush.msra.mxu0 %v2667
          %3099 = vmatpush.msra.mxu0 %v2663
          %3100 = vmatpush.msra.mxu0 %v2659
          %3101 = vmatpush.msra.mxu0 %v2655
          %3102 = vmatpush.msra.mxu0 %v2651
          %3103 = vmatpush.msra.mxu0 %v2647
          %3104 = vmatpush.msra.mxu0 %v2643
          %3105 = vmatpush.msra.mxu0 %v2639
          %3106 = vmatpush.msra.mxu0 %v2635
          %3107 = vmatpush.msra.mxu0 %v2631
          %3108 = vmatpush.msra.mxu0 %v2627
          %3109 = vmatpush.msra.mxu0 %v2623
          %3110 = vmatpush.msra.mxu0 %v2619
          %3111 = vmatmul.f32.gmra.mxu0 %v3054
          %v3112 = vpop.f32.mrf.mxu0
          %v3113 = vadd.f32 0.0, %v3112
          %3114 = vdwg.mxu0
          %3115 = vmatpush.msra.mxu0 %v2680
          %3116 = vmatpush.msra.mxu0 %v2676
          %3117 = vmatpush.msra.mxu0 %v2672
          %3118 = vmatpush.msra.mxu0 %v2668
          %3119 = vmatpush.msra.mxu0 %v2664
          %3120 = vmatpush.msra.mxu0 %v2660
          %3121 = vmatpush.msra.mxu0 %v2656
          %3122 = vmatpush.msra.mxu0 %v2652
          %3123 = vmatpush.msra.mxu0 %v2648
          %3124 = vmatpush.msra.mxu0 %v2644
          %3125 = vmatpush.msra.mxu0 %v2640
          %3126 = vmatpush.msra.mxu0 %v2636
          %3127 = vmatpush.msra.mxu0 %v2632
          %3128 = vmatpush.msra.mxu0 %v2628
          %3129 = vmatpush.msra.mxu0 %v2624
          %3130 = vmatpush.msra.mxu0 %v2620
          %3131 = vmatmul.f32.gmra.mxu0 %v3054
          %v3132 = vpop.f32.mrf.mxu0
          %v3133 = vadd.f32 0.0, %v3132
          %3134 = vdwg.mxu0
          %v3135 = vadd.f32 %v2846, %v3073
          %v3136 = vadd.f32 %v2866, %v3093
          %v3137 = vadd.f32 %v2886, %v3113
          %v3138 = vadd.f32 %v2906, %v3133
          %v3139 = vxor.u32 %v3135, 2147483648
          %v3140 = vmul.f32 %v3139, 1.442695
          %v3141 = vpow.pop %v3140
          %v3142 = vadd.f32 %v3141, 1.0
          %v3143 = vrcp.pop %v3142
          %v3144 = vmul.f32 %v3142, %v3143
          %v3145 = vsub.f32 1.0, %v3144
          %v3146 = vmul.f32 %v3143, %v3145
          %v3147 = vadd.f32 %v3143, %v3146
          %vm3148 = vweird.f32 %v3142
          %vm3149 = vweird.f32 %v3143
          %vm3150 = vmor %vm3148, %vm3149
          %v3151 = vsel %vm3150, %v3143, %v3147
          %v3152 = vand.u32 2147483647, %v3142
          %vm3153 = vcmp.eq.f32.partialorder %v3152, 8.507059e+37
          %v3154 = vand.u32 %v3142, 2147483648
          %v3155 = vor.u32 1.1754944e-38, %v3154
          %v3156 = vsel %vm3153, %v3155, %v3151
          %v3157 = vmul.f32 1.0, %v3156
          %v3158 = vxor.u32 %v3136, 2147483648
          %v3159 = vmul.f32 %v3158, 1.442695
          %v3160 = vpow.pop %v3159
          %v3161 = vadd.f32 %v3160, 1.0
          %v3162 = vrcp.pop %v3161
          %v3163 = vmul.f32 %v3161, %v3162
          %v3164 = vsub.f32 1.0, %v3163
          %v3165 = vmul.f32 %v3162, %v3164
          %v3166 = vadd.f32 %v3162, %v3165
          %vm3167 = vweird.f32 %v3161
          %vm3168 = vweird.f32 %v3162
          %vm3169 = vmor %vm3167, %vm3168
          %v3170 = vsel %vm3169, %v3162, %v3166
          %v3171 = vand.u32 2147483647, %v3161
          %vm3172 = vcmp.eq.f32.partialorder %v3171, 8.507059e+37
          %v3173 = vand.u32 %v3161, 2147483648
          %v3174 = vor.u32 1.1754944e-38, %v3173
          %v3175 = vsel %vm3172, %v3174, %v3170
          %v3176 = vmul.f32 1.0, %v3175
          %v3177 = vtanh.pop %v3137
          %v3178 = vxor.u32 %v3138, 2147483648
          %v3179 = vmul.f32 %v3178, 1.442695
          %v3180 = vpow.pop %v3179
          %v3181 = vadd.f32 %v3180, 1.0
          %v3182 = vrcp.pop %v3181
          %v3183 = vmul.f32 %v3181, %v3182
          %v3184 = vsub.f32 1.0, %v3183
          %v3185 = vmul.f32 %v3182, %v3184
          %v3186 = vadd.f32 %v3182, %v3185
          %vm3187 = vweird.f32 %v3181
          %vm3188 = vweird.f32 %v3182
          %vm3189 = vmor %vm3187, %vm3188
          %v3190 = vsel %vm3189, %v3182, %v3186
          %v3191 = vand.u32 2147483647, %v3181
          %vm3192 = vcmp.eq.f32.partialorder %v3191, 8.507059e+37
          %v3193 = vand.u32 %v3181, 2147483648
          %v3194 = vor.u32 1.1754944e-38, %v3193
          %v3195 = vsel %vm3192, %v3194, %v3190
          %v3196 = vmul.f32 1.0, %v3195
          %v3197 = vmul.f32 %v3176, %v2825
          %v3198 = vmul.f32 %v3157, %v3177
          %v3199 = vadd.f32 %v3197, %v3198
          %v3200 = vtanh.pop %v3199
          %v3201 = vmul.f32 %v3196, %v3200
          %3202 = vst [vmem:[#allocation2] sm:$0xff] %v3054
          %3203 = vst [vmem:[#allocation3] sm:$0xff] %v3052
          %3204 = vst [vmem:[#allocation4] sm:$0xff] %v3201
          %3205 = vst [vmem:[#allocation5] sm:$0xff] %v3199
          %v3206 = vld [vmem:[#allocation4] sm:$0xff]
          %v3207 = vld [vmem:[#allocation17] sm:$0xff]
          %v3208 = vld [vmem:[#allocation17 + $0x8] sm:$0xff]
          %v3209 = vld [vmem:[#allocation17 + $0x10] sm:$0xff]
          %v3210 = vld [vmem:[#allocation17 + $0x18] sm:$0xff]
          %v3211 = vld [vmem:[#allocation17 + $0x20] sm:$0xff]
          %v3212 = vld [vmem:[#allocation17 + $0x28] sm:$0xff]
          %v3213 = vld [vmem:[#allocation17 + $0x30] sm:$0xff]
          %v3214 = vld [vmem:[#allocation17 + $0x38] sm:$0xff]
          %v3215 = vld [vmem:[#allocation17 + $0x40] sm:$0xff]
          %v3216 = vld [vmem:[#allocation17 + $0x48] sm:$0xff]
          %v3217 = vld [vmem:[#allocation17 + $0x50] sm:$0xff]
          %v3218 = vld [vmem:[#allocation17 + $0x58] sm:$0xff]
          %v3219 = vld [vmem:[#allocation17 + $0x60] sm:$0xff]
          %v3220 = vld [vmem:[#allocation17 + $0x68] sm:$0xff]
          %v3221 = vld [vmem:[#allocation17 + $0x70] sm:$0xff]
          %v3222 = vld [vmem:[#allocation17 + $0x78] sm:$0xff]
          %v3223 = vld [vmem:[%s8] sm:$0x1]
          %v3225 = vperm.slane %v3223, 0
          %3227 = vmatpush.msra.mxu0 %v3222
          %3228 = vmatpush.msra.mxu0 %v3221
          %3229 = vmatpush.msra.mxu0 %v3220
          %3230 = vmatpush.msra.mxu0 %v3219
          %3231 = vmatpush.msra.mxu0 %v3218
          %3232 = vmatpush.msra.mxu0 %v3217
          %3233 = vmatpush.msra.mxu0 %v3216
          %3234 = vmatpush.msra.mxu0 %v3215
          %3235 = vmatpush.msra.mxu0 %v3214
          %3236 = vmatpush.msra.mxu0 %v3213
          %3237 = vmatpush.msra.mxu0 %v3212
          %3238 = vmatpush.msra.mxu0 %v3211
          %3239 = vmatpush.msra.mxu0 %v3210
          %3240 = vmatpush.msra.mxu0 %v3209
          %3241 = vmatpush.msra.mxu0 %v3208
          %3242 = vmatpush.msra.mxu0 %v3207
          %3243 = vmatmul.f32.gmra.mxu0 %v3206
          %v3244 = vpop.f32.mrf.mxu0
          %v3245 = vadd.f32 %v3225, %v3244
          %3246 = vdwg.mxu0
          %3247 = vst [vmem:[#allocation18] sm:$0xff] %v3245
        $region96: #{tpu_custom_call.1} parent=55 // pred_fallthru
          _
        // Predicated region
        $region97: #{tpu_custom_call.1} parent=55 // pred_check
          %p3248 = pneg %p253
        $region98: #{tpu_custom_call.1} parent=55 // pred_check_branch
          %3250 = sbr.rel (%p3248) target = $region100
        $region99: #{tpu_custom_call.1} parent=55 // pred_region
          %3252 = vsyncadd [#allocation8], 0
          %s3253 = smul.addr %s31, 8
          %s3254 = scalar_lea.hbm %s9, %s3253
          %s3256 = sshll.u32 [#allocation18], 4
          %s3257 = int_to_ptr.vmem [resolvable:$true] %s3256
          %s3258 = sshll.u32 %s3254, 4
          %s3259 = int_to_ptr.hbm [resolvable:$true] %s3258
          %3261 = dma.vmem_to_hbm [thread:$0]  %s3257, 128, %s3259, [#allocation8]
        $region100: #{tpu_custom_call.1} parent=55 // pred_fallthru
          _
        // Predicated region
        $region101: #{tpu_custom_call.1} parent=55 // pred_check
          %p3262 = pneg %p253
        $region102: #{tpu_custom_call.1} parent=55 // pred_check_branch
          %3264 = sbr.rel (%p3262) target = $region104
        $region103: #{tpu_custom_call.1} parent=55 // pred_region
          %3266 = dma.done [#allocation8], 128
        $region104: #{tpu_custom_call.1} parent=55 // pred_fallthru
          _
      $region56: #{tpu_custom_call.1} parent=5 // pred_fallthru
        _
      %p3267 = scmp.le.s32.totalorder 2, %s22
      // Predicated region
      $region105: #{tpu_custom_call.1} parent=5 // pred_check
        %p3268 = pneg %p3267
      $region106: #{tpu_custom_call.1} parent=5 // pred_check_branch
        %3270 = sbr.rel (%p3268) target = $region108
      $region107: #{tpu_custom_call.1} parent=5 // pred_region
        %s3271 = ssub.s32 %s22, 2
      $region108: #{tpu_custom_call.1} parent=5 // pred_fallthru
        _
    $region6: #{tpu_custom_call.1} parent=1 // loop_footer
      %s26 = sadd.s32 1, %s22
    $region7: #{tpu_custom_call.1} parent=1 // loop_footer_branch
      %21 = sbr.rel target = $region3
    $region8: #{tpu_custom_call.1} parent=1 // loop_exit
      _
    %3272 = vsyncpa [#allocation7], 1
    %s3273 = scalar_lea.sflag [#allocation7], 1
    %3274 = vsyncpa %s3273, 1
    %3275 = vsyncpa [#allocation10], 1
    %3276 = vsyncpa [#allocation13], 1
    %3277 = vsyncpa [#allocation16], 1
    %3278 = vsyncpa [#allocation8], 1
    %s3279 = scalar_lea.sflag [#allocation8], 1
    %3280 = vsyncpa %s3279, 1

// kernel: tpu_custom_call.1
$region0: #{tpu_custom_call.1}
  #allocation0 [shape = 'u32[]', space=smem, size = 0x4, offset = 0x4, fixed_abs, tag = 'smem constant byte address 0x4 - core index']
  #allocation1 [shape = 'u32[72,128]{1,0:T(1,128)}', space=vmem, size = 0x9000, scoped, tag = 'internal scratch']
  #allocation2 [shape = 'f32[8,128]{1,0:T(8,128)}', space=vmem, size = 0x1000, scoped, tag = 'scratch operand']
  #allocation3 [shape = 'f32[8,128]{1,0:T(8,128)}', space=vmem, size = 0x1000, scoped, tag = 'scratch operand']
  #allocation4 [shape = 'f32[8,128]{1,0:T(8,128)}', space=vmem, size = 0x1000, scoped, tag = 'scratch operand']
  #allocation5 [shape = 'f32[8,128]{1,0:T(8,128)}', space=vmem, size = 0x1000, scoped, tag = 'scratch operand']
  %s0 = inlined_call_operand.hbm [shape: f32[9,8,16], index: 0, kind: input, shape index: {}]
  %s1 = inlined_call_operand.hbm [shape: f32[16,512], index: 1, kind: input, shape index: {}]
  %s2 = inlined_call_operand.hbm [shape: f32[128,512], index: 2, kind: input, shape index: {}]
  %s3 = inlined_call_operand.hbm [shape: f32[1,512], index: 3, kind: input, shape index: {}]
  %s4 = inlined_call_operand.hbm [shape: f32[128,512], index: 4, kind: input, shape index: {}]
  %s5 = inlined_call_operand.hbm [shape: f32[128,512], index: 5, kind: input, shape index: {}]
  %s6 = inlined_call_operand.vmem [shape: f32[1,512], index: 6, kind: input, shape index: {}]
  %s7 = inlined_call_operand.hbm [shape: f32[128,128], index: 7, kind: input, shape index: {}]
  %s8 = inlined_call_operand.vmem [shape: f32[1,128], index: 8, kind: input, shape index: {}]
  %s9 = inlined_call_operand.hbm [shape: f32[8,128], index: 9, kind: output, shape index: {}]
  %s10 = sld [smem:[#allocation0]]
  $region109: #{tpu_custom_call.1} parent=0
    _
  %s12 = ssub.s32 1, %s10
  %s13 = scalar_select 0, %s12, %s10
  $region1: #{tpu_custom_call.1} parent=0
    #allocation6 [shape = 'u8[24576]{0}', space=vmem, size = 0x6000, scoped, tag = 'input window, operand 0']
    #allocation7 [shape = 's32[2]{0}', space=sflag, size = 0x8, scoped, tag = 'scoped memory for tpu_custom_call.1']
    #allocation8 [shape = 's32[2]{0}', space=sflag, size = 0x8, scoped, tag = 'scoped memory for tpu_custom_call.1']
    #allocation9 [shape = 'u8[32768]{0}', space=vmem, size = 0x8000, scoped, tag = 'input window, operand 1, single buffered']
    #allocation10 [shape = 's32[1]{0}', space=sflag, size = 0x4, scoped, tag = 'scoped memory for tpu_custom_call.1']
    #allocation11 [shape = 'u8[262144]{0}', space=vmem, size = 0x40000, scoped, tag = 'input window, operand 2, single buffered']
    #allocation12 [shape = 'u8[2048]{0}', space=vmem, size = 0x800, scoped, tag = 'input window, operand 3, single buffered']
    #allocation13 [shape = 's32[1]{0}', space=sflag, size = 0x4, scoped, tag = 'scoped memory for tpu_custom_call.1']
    #allocation14 [shape = 'u8[262144]{0}', space=vmem, size = 0x40000, scoped, tag = 'input window, operand 4, single buffered']
    #allocation15 [shape = 'u8[262144]{0}', space=vmem, size = 0x40000, scoped, tag = 'input window, operand 5, single buffered']
    #allocation16 [shape = 's32[1]{0}', space=sflag, size = 0x4, scoped, tag = 'scoped memory for tpu_custom_call.1']
    #allocation17 [shape = 'u8[65536]{0}', space=vmem, size = 0x10000, scoped, tag = 'input window, operand 7, single buffered']
    #allocation18 [shape = 'u8[4096]{0}', space=vmem, size = 0x1000, scoped, tag = 'output window, operand 0, single buffered']
    %14 = vsyncpa [#allocation7], 0
    %s15 = scalar_lea.sflag [#allocation7], 1
    %16 = vsyncpa %s15, 0
    %17 = vsyncpa [#allocation10], 0
    %18 = vsyncpa [#allocation13], 0
    %19 = vsyncpa [#allocation16], 0
    %20 = vsyncpa [#allocation8], 0
    loop: start=0, step=1, limit=5
    $region2: #{tpu_custom_call.1} parent=1 // loop_pre_header
      _
    $region3: #{tpu_custom_call.1} parent=1 // loop_header
      %s22 = sphi 0, %s26
      %p23 = scmp.ge.s32.totalorder %s22, 5
      %s29 = sphi 0, %s41
      %s30 = sphi 0, %s37
      %s31 = sphi 0, %s29
      %s32 = sphi 0, %s30
      %s33 = sphi 0, %s31
      %s34 = sphi 0, %s32
      %s46 = sphi 0, %s48
      %s49 = sphi 0, %s46
      %s50 = sphi 0, %s49
      %s66 = sphi 0, %s50
      %s70 = sphi 0, %s70
      %s72 = sphi 0, %s70
      %s73 = sphi 0, %s72
      %s87 = sphi 0, %s73
      %s91 = sphi 0, %s91
      %s93 = sphi 0, %s91
      %s94 = sphi 0, %s93
      %s108 = sphi 0, %s94
      %s112 = sphi 0, %s112
      %s114 = sphi 0, %s112
      %s115 = sphi 0, %s114
      %s129 = sphi 0, %s115
      %s133 = sphi 0, %s133
      %s135 = sphi 0, %s133
      %s136 = sphi 0, %s135
      %s150 = sphi 0, %s136
      %s154 = sphi 0, %s154
      %s156 = sphi 0, %s154
      %s157 = sphi 0, %s156
      %s171 = sphi 0, %s157
      %s175 = sphi 0, %s175
      %s177 = sphi 0, %s175
      %s178 = sphi 0, %s177
      %s192 = sphi 0, %s178
      %s196 = sphi 0, %s196
      %s198 = sphi 0, %s196
      %s199 = sphi 0, %s198
      %s213 = sphi 0, %s199
      %s217 = sphi 0, %s217
      %s219 = sphi 0, %s217
      %s220 = sphi 0, %s219
      %s234 = sphi 0, %s220
      %s240 = sphi 0, %s242
      %s243 = sphi 0, %s240
      %s244 = sphi 0, %s243
      %s260 = sphi 0, %s244
    $region4: #{tpu_custom_call.1} parent=1 // loop_header_branch
      %25 = sbr.rel (%p23) target = $region8
    $region5: #{tpu_custom_call.1} parent=1 // loop_body
      %s27 = ssub.s32 %s22, 1
      %s28 = ssub.s32 %s22, 2
      %s35 = sadd.s32 1, %s30
      %p36 = scmp.ge.s32.totalorder %s35, 3
      %s37 = scalar_select %p36, 0, %s35
      %s38 = sadd.s32 1, %s29
      %s39 = scalar_select %p36, %s38, %s29
      %p40 = scmp.ge.s32.totalorder %s39, 1
      %s41 = scalar_select %p40, 0, %s39
      %s42 = ssub.s32 %s30, %s37
      %s43 = ssub.s32 %s29, %s41
      %s44 = sor.u32 %s42, %s43
      %p45 = scmp.eq.s32.totalorder %s44, 0
      %s47 = sadd.s32 %s46, 1
      %s48 = scalar_select %p45, %s46, %s47
      %p51 = pneg %p45
      %p52 = scmp.eq.s32.totalorder %s22, 2
      %p53 = por %p51, %p52
      %p54 = scmp.ne.s32.totalorder %s46, %s49
      %p55 = scmp.eq.s32.totalorder %s22, 0
      %p56 = por %p54, %p55
      %p57 = scmp.ne.s32.totalorder %s46, %s49
      %p58 = scmp.eq.s32.totalorder %s27, 2
      %p59 = por %p57, %p58
      %p60 = scmp.ne.s32.totalorder %s49, %s50
      %p61 = scmp.eq.s32.totalorder %s27, 0
      %p62 = por %p60, %p61
      %p63 = scmp.ne.s32.totalorder %s49, %s50
      %p64 = scmp.eq.s32.totalorder %s28, 2
      %p65 = por %p63, %p64
      %p67 = scmp.ne.s32.totalorder %s50, %s66
      %p68 = scmp.eq.s32.totalorder %s28, 0
      %p69 = por %p67, %p68
      %s71 = sadd.s32 %s70, 1
      %p74 = scmp.eq.s32.totalorder %s22, 2
      %p75 = scmp.ne.s32.totalorder %s70, %s72
      %p76 = scmp.eq.s32.totalorder %s22, 0
      %p77 = por %p75, %p76
      %p78 = scmp.ne.s32.totalorder %s70, %s72
      %p79 = scmp.eq.s32.totalorder %s27, 2
      %p80 = por %p78, %p79
      %p81 = scmp.ne.s32.totalorder %s72, %s73
      %p82 = scmp.eq.s32.totalorder %s27, 0
      %p83 = por %p81, %p82
      %p84 = scmp.ne.s32.totalorder %s72, %s73
      %p85 = scmp.eq.s32.totalorder %s28, 2
      %p86 = por %p84, %p85
      %p88 = scmp.ne.s32.totalorder %s73, %s87
      %p89 = scmp.eq.s32.totalorder %s28, 0
      %p90 = por %p88, %p89
      %s92 = sadd.s32 %s91, 1
      %p95 = scmp.eq.s32.totalorder %s22, 2
      %p96 = scmp.ne.s32.totalorder %s91, %s93
      %p97 = scmp.eq.s32.totalorder %s22, 0
      %p98 = por %p96, %p97
      %p99 = scmp.ne.s32.totalorder %s91, %s93
      %p100 = scmp.eq.s32.totalorder %s27, 2
      %p101 = por %p99, %p100
      %p102 = scmp.ne.s32.totalorder %s93, %s94
      %p103 = scmp.eq.s32.totalorder %s27, 0
      %p104 = por %p102, %p103
      %p105 = scmp.ne.s32.totalorder %s93, %s94
      %p106 = scmp.eq.s32.totalorder %s28, 2
      %p107 = por %p105, %p106
      %p109 = scmp.ne.s32.totalorder %s94, %s108
      %p110 = scmp.eq.s32.totalorder %s28, 0
      %p111 = por %p109, %p110
      %s113 = sadd.s32 %s112, 1
      %p116 = scmp.eq.s32.totalorder %s22, 2
      %p117 = scmp.ne.s32.totalorder %s112, %s114
      %p118 = scmp.eq.s32.totalorder %s22, 0
      %p119 = por %p117, %p118
      %p120 = scmp.ne.s32.totalorder %s112, %s114
      %p121 = scmp.eq.s32.totalorder %s27, 2
      %p122 = por %p120, %p121
      %p123 = scmp.ne.s32.totalorder %s114, %s115
      %p124 = scmp.eq.s32.totalorder %s27, 0
      %p125 = por %p123, %p124
      %p126 = scmp.ne.s32.totalorder %s114, %s115
      %p127 = scmp.eq.s32.totalorder %s28, 2
      %p128 = por %p126, %p127
      %p130 = scmp.ne.s32.totalorder %s115, %s129
      %p131 = scmp.eq.s32.totalorder %s28, 0
      %p132 = por %p130, %p131
      %s134 = sadd.s32 %s133, 1
      %p137 = scmp.eq.s32.totalorder %s22, 2
      %p138 = scmp.ne.s32.totalorder %s133, %s135
      %p139 = scmp.eq.s32.totalorder %s22, 0
      %p140 = por %p138, %p139
      %p141 = scmp.ne.s32.totalorder %s133, %s135
      %p142 = scmp.eq.s32.totalorder %s27, 2
      %p143 = por %p141, %p142
      %p144 = scmp.ne.s32.totalorder %s135, %s136
      %p145 = scmp.eq.s32.totalorder %s27, 0
      %p146 = por %p144, %p145
      %p147 = scmp.ne.s32.totalorder %s135, %s136
      %p148 = scmp.eq.s32.totalorder %s28, 2
      %p149 = por %p147, %p148
      %p151 = scmp.ne.s32.totalorder %s136, %s150
      %p152 = scmp.eq.s32.totalorder %s28, 0
      %p153 = por %p151, %p152
      %s155 = sadd.s32 %s154, 1
      %p158 = scmp.eq.s32.totalorder %s22, 2
      %p159 = scmp.ne.s32.totalorder %s154, %s156
      %p160 = scmp.eq.s32.totalorder %s22, 0
      %p161 = por %p159, %p160
      %p162 = scmp.ne.s32.totalorder %s154, %s156
      %p163 = scmp.eq.s32.totalorder %s27, 2
      %p164 = por %p162, %p163
      %p165 = scmp.ne.s32.totalorder %s156, %s157
      %p166 = scmp.eq.s32.totalorder %s27, 0
      %p167 = por %p165, %p166
      %p168 = scmp.ne.s32.totalorder %s156, %s157
      %p169 = scmp.eq.s32.totalorder %s28, 2
      %p170 = por %p168, %p169
      %p172 = scmp.ne.s32.totalorder %s157, %s171
      %p173 = scmp.eq.s32.totalorder %s28, 0
      %p174 = por %p172, %p173
      %s176 = sadd.s32 %s175, 1
      %p179 = scmp.eq.s32.totalorder %s22, 2
      %p180 = scmp.ne.s32.totalorder %s175, %s177
      %p181 = scmp.eq.s32.totalorder %s22, 0
      %p182 = por %p180, %p181
      %p183 = scmp.ne.s32.totalorder %s175, %s177
      %p184 = scmp.eq.s32.totalorder %s27, 2
      %p185 = por %p183, %p184
      %p186 = scmp.ne.s32.totalorder %s177, %s178
      %p187 = scmp.eq.s32.totalorder %s27, 0
      %p188 = por %p186, %p187
      %p189 = scmp.ne.s32.totalorder %s177, %s178
      %p190 = scmp.eq.s32.totalorder %s28, 2
      %p191 = por %p189, %p190
      %p193 = scmp.ne.s32.totalorder %s178, %s192
      %p194 = scmp.eq.s32.totalorder %s28, 0
      %p195 = por %p193, %p194
      %s197 = sadd.s32 %s196, 1
      %p200 = scmp.eq.s32.totalorder %s22, 2
      %p201 = scmp.ne.s32.totalorder %s196, %s198
      %p202 = scmp.eq.s32.totalorder %s22, 0
      %p203 = por %p201, %p202
      %p204 = scmp.ne.s32.totalorder %s196, %s198
      %p205 = scmp.eq.s32.totalorder %s27, 2
      %p206 = por %p204, %p205
      %p207 = scmp.ne.s32.totalorder %s198, %s199
      %p208 = scmp.eq.s32.totalorder %s27, 0
      %p209 = por %p207, %p208
      %p210 = scmp.ne.s32.totalorder %s198, %s199
      %p211 = scmp.eq.s32.totalorder %s28, 2
      %p212 = por %p210, %p211
      %p214 = scmp.ne.s32.totalorder %s199, %s213
      %p215 = scmp.eq.s32.totalorder %s28, 0
      %p216 = por %p214, %p215
      %s218 = sadd.s32 %s217, 1
      %p221 = scmp.eq.s32.totalorder %s22, 2
      %p222 = scmp.ne.s32.totalorder %s217, %s219
      %p223 = scmp.eq.s32.totalorder %s22, 0
      %p224 = por %p222, %p223
      %p225 = scmp.ne.s32.totalorder %s217, %s219
      %p226 = scmp.eq.s32.totalorder %s27, 2
      %p227 = por %p225, %p226
      %p228 = scmp.ne.s32.totalorder %s219, %s220
      %p229 = scmp.eq.s32.totalorder %s27, 0
      %p230 = por %p228, %p229
      %p231 = scmp.ne.s32.totalorder %s219, %s220
      %p232 = scmp.eq.s32.totalorder %s28, 2
      %p233 = por %p231, %p232
      %p235 = scmp.ne.s32.totalorder %s220, %s234
      %p236 = scmp.eq.s32.totalorder %s28, 0
      %p237 = por %p235, %p236
      %s238 = ssub.s32 %s29, %s41
      %p239 = scmp.eq.s32.totalorder %s238, 0
      %s241 = sadd.s32 %s240, 1
      %s242 = scalar_select %p239, %s240, %s241
      %p245 = pneg %p239
      %p246 = scmp.eq.s32.totalorder %s22, 2
      %p247 = por %p245, %p246
      %p248 = scmp.ne.s32.totalorder %s240, %s243
      %p249 = scmp.eq.s32.totalorder %s22, 0
      %p250 = por %p248, %p249
      %p251 = scmp.ne.s32.totalorder %s240, %s243
      %p252 = scmp.eq.s32.totalorder %s27, 2
      %p253 = por %p251, %p252
      %p254 = scmp.ne.s32.totalorder %s243, %s244
      %p255 = scmp.eq.s32.totalorder %s27, 0
      %p256 = por %p254, %p255
      %p257 = scmp.ne.s32.totalorder %s243, %s244
      %p258 = scmp.eq.s32.totalorder %s28, 2
      %p259 = por %p257, %p258
      %p261 = scmp.ne.s32.totalorder %s244, %s260
      %p262 = scmp.eq.s32.totalorder %s28, 0
      %p263 = por %p261, %p262
      %p264 = scmp.le.s32.totalorder 1, %s22
      %p265 = scmp.lt.s32.totalorder %s22, 4
      %p266 = pnand %p264, %p265
      %p267 = pneg %p266
      // Predicated region
      $region9: #{tpu_custom_call.1} parent=5 // pred_check
        _
      $region10: #{tpu_custom_call.1} parent=5 // pred_check_branch
        %269 = sbr.rel (%p266) target = $region12
      $region11: #{tpu_custom_call.1} parent=5 // pred_region
        %s270 = ssub.s32 %s22, 1
        // Predicated region
        $region13: #{tpu_custom_call.1} parent=11 // pred_check
          %p271 = pneg %p83
        $region14: #{tpu_custom_call.1} parent=11 // pred_check_branch
          %273 = sbr.rel (%p271) target = $region16
        $region15: #{tpu_custom_call.1} parent=11 // pred_region
          %275 = vsyncadd [#allocation10], 0
          %s276 = sshll.u32 %s1, 4
          %s277 = int_to_ptr.hbm [resolvable:$true] %s276
          %s278 = sshll.u32 [#allocation9], 4
          %s279 = int_to_ptr.vmem [resolvable:$true] %s278
          %284 = dma.hbm_to_vmem [thread:$0]  %s277, 1024, %s279, [#allocation10], 512, 512, 32
        $region16: #{tpu_custom_call.1} parent=11 // pred_fallthru
          _
        // Predicated region
        $region17: #{tpu_custom_call.1} parent=11 // pred_check
          %p285 = pneg %p104
        $region18: #{tpu_custom_call.1} parent=11 // pred_check_branch
          %287 = sbr.rel (%p285) target = $region20
        $region19: #{tpu_custom_call.1} parent=11 // pred_region
          %289 = vsyncadd [#allocation10], 0
          %s290 = sshll.u32 %s2, 4
          %s291 = int_to_ptr.hbm [resolvable:$true] %s290
          %s292 = sshll.u32 [#allocation11], 4
          %s293 = int_to_ptr.vmem [resolvable:$true] %s292
          %298 = dma.hbm_to_vmem [thread:$0]  %s291, 8192, %s293, [#allocation10], 512, 512, 32
        $region20: #{tpu_custom_call.1} parent=11 // pred_fallthru
          _
        // Predicated region
        $region21: #{tpu_custom_call.1} parent=11 // pred_check
          %p299 = pneg %p125
        $region22: #{tpu_custom_call.1} parent=11 // pred_check_branch
          %301 = sbr.rel (%p299) target = $region24
        $region23: #{tpu_custom_call.1} parent=11 // pred_region
          %303 = vsyncadd [#allocation13], 0
          %s305 = sshll.u32 %s3, 4
          %s306 = int_to_ptr.hbm [resolvable:$true] %s305
          %s307 = sshll.u32 [#allocation12], 4
          %s308 = int_to_ptr.vmem [resolvable:$true] %s307
          %310 = dma.hbm_to_vmem [thread:$0]  %s306, 64, %s308, [#allocation13]
        $region24: #{tpu_custom_call.1} parent=11 // pred_fallthru
          _
        // Predicated region
        $region25: #{tpu_custom_call.1} parent=11 // pred_check
          %p311 = pneg %p146
        $region26: #{tpu_custom_call.1} parent=11 // pred_check_branch
          %313 = sbr.rel (%p311) target = $region28
        $region27: #{tpu_custom_call.1} parent=11 // pred_region
          %315 = vsyncadd [#allocation13], 0
          %s316 = sshll.u32 %s4, 4
          %s317 = int_to_ptr.hbm [resolvable:$true] %s316
          %s318 = sshll.u32 [#allocation14], 4
          %s319 = int_to_ptr.vmem [resolvable:$true] %s318
          %324 = dma.hbm_to_vmem [thread:$0]  %s317, 8192, %s319, [#allocation13], 512, 512, 32
        $region28: #{tpu_custom_call.1} parent=11 // pred_fallthru
          _
        // Predicated region
        $region29: #{tpu_custom_call.1} parent=11 // pred_check
          %p325 = pneg %p167
        $region30: #{tpu_custom_call.1} parent=11 // pred_check_branch
          %327 = sbr.rel (%p325) target = $region32
        $region31: #{tpu_custom_call.1} parent=11 // pred_region
          %329 = vsyncadd [#allocation16], 0
          %s330 = sshll.u32 %s5, 4
          %s331 = int_to_ptr.hbm [resolvable:$true] %s330
          %s332 = sshll.u32 [#allocation15], 4
          %s333 = int_to_ptr.vmem [resolvable:$true] %s332
          %338 = dma.hbm_to_vmem [thread:$0]  %s331, 8192, %s333, [#allocation16], 512, 512, 32
        $region32: #{tpu_custom_call.1} parent=11 // pred_fallthru
          _
        // Predicated region
        $region33: #{tpu_custom_call.1} parent=11 // pred_check
          %p339 = pneg %p188
        $region34: #{tpu_custom_call.1} parent=11 // pred_check_branch
          %341 = sbr.rel (%p339) target = $region36
        $region35: #{tpu_custom_call.1} parent=11 // pred_region
          _
        $region36: #{tpu_custom_call.1} parent=11 // pred_fallthru
          _
        // Predicated region
        $region37: #{tpu_custom_call.1} parent=11 // pred_check
          %p342 = pneg %p209
        $region38: #{tpu_custom_call.1} parent=11 // pred_check_branch
          %344 = sbr.rel (%p342) target = $region40
        $region39: #{tpu_custom_call.1} parent=11 // pred_region
          %346 = vsyncadd [#allocation16], 0
          %s347 = sshll.u32 %s7, 4
          %s348 = int_to_ptr.hbm [resolvable:$true] %s347
          %s349 = sshll.u32 [#allocation17], 4
          %s350 = int_to_ptr.vmem [resolvable:$true] %s349
          %355 = dma.hbm_to_vmem [thread:$0]  %s348, 2048, %s350, [#allocation16], 128, 128, 8
        $region40: #{tpu_custom_call.1} parent=11 // pred_fallthru
          _
        // Predicated region
        $region41: #{tpu_custom_call.1} parent=11 // pred_check
          %p356 = pneg %p230
        $region42: #{tpu_custom_call.1} parent=11 // pred_check_branch
          %358 = sbr.rel (%p356) target = $region44
        $region43: #{tpu_custom_call.1} parent=11 // pred_region
          _
        $region44: #{tpu_custom_call.1} parent=11 // pred_fallthru
          _
      $region12: #{tpu_custom_call.1} parent=5 // pred_fallthru
        _
      %p359 = scmp.lt.s32.totalorder %s22, 3
      // Predicated region
      $region45: #{tpu_custom_call.1} parent=5 // pred_check
        %p360 = pneg %p359
      $region46: #{tpu_custom_call.1} parent=5 // pred_check_branch
        %362 = sbr.rel (%p360) target = $region48
      $region47: #{tpu_custom_call.1} parent=5 // pred_region
        // Predicated region
        $region49: #{tpu_custom_call.1} parent=47 // pred_check
          %p363 = pneg %p56
        $region50: #{tpu_custom_call.1} parent=47 // pred_check_branch
          %365 = sbr.rel (%p363) target = $region52
        $region51: #{tpu_custom_call.1} parent=47 // pred_region
          %s366 = sand.u32 %s46, 1
          %s367 = scalar_lea.sflag [#allocation7], %s366
          %s368 = sand.u32 %s46, 1
          %s369 = smul.addr %s368, 24
          %s370 = scalar_lea.vmem [#allocation6], %s369
          %s371 = smul.u32 3, %s30
          %373 = vsyncadd %s367, 0
          %s374 = sadd.s32 %s29, %s371
          %s375 = smul.addr %s374, 8
          %s376 = scalar_lea.hbm %s0, %s375
          %s377 = sshll.u32 %s376, 4
          %s378 = int_to_ptr.hbm [resolvable:$true] %s377
          %s379 = sshll.u32 %s370, 4
          %s380 = int_to_ptr.vmem [resolvable:$true] %s379
          %385 = dma.hbm_to_vmem [thread:$0]  %s378, 384, %s380, %s367, 128, 128, 8
        $region52: #{tpu_custom_call.1} parent=47 // pred_fallthru
          _
      $region48: #{tpu_custom_call.1} parent=5 // pred_fallthru
        _
      %p386 = scmp.le.s32.totalorder 1, %s22
      %p387 = scmp.lt.s32.totalorder %s22, 4
      %p388 = pnand %p386, %p387
      %p389 = pneg %p388
      // Predicated region
      $region53: #{tpu_custom_call.1} parent=5 // pred_check
        _
      $region54: #{tpu_custom_call.1} parent=5 // pred_check_branch
        %391 = sbr.rel (%p388) target = $region56
      $region55: #{tpu_custom_call.1} parent=5 // pred_region
        %s392 = ssub.s32 %s22, 1
        %s393 = sand.u32 %s49, 1
        %s394 = scalar_lea.sflag [#allocation7], %s393
        %s395 = sand.u32 %s49, 1
        %s396 = smul.addr %s395, 24
        %s397 = scalar_lea.vmem [#allocation6], %s396
        // Predicated region
        $region57: #{tpu_custom_call.1} parent=55 // pred_check
          %p398 = pneg %p62
        $region58: #{tpu_custom_call.1} parent=55 // pred_check_branch
          %400 = sbr.rel (%p398) target = $region60
        $region59: #{tpu_custom_call.1} parent=55 // pred_region
          %402 = dma.done %s394, 384
        $region60: #{tpu_custom_call.1} parent=55 // pred_fallthru
          _
        // Predicated region
        $region61: #{tpu_custom_call.1} parent=55 // pred_check
          %p403 = pneg %p83
        $region62: #{tpu_custom_call.1} parent=55 // pred_check_branch
          %405 = sbr.rel (%p403) target = $region64
        $region63: #{tpu_custom_call.1} parent=55 // pred_region
          %407 = dma.done [#allocation10], 1024
        $region64: #{tpu_custom_call.1} parent=55 // pred_fallthru
          _
        // Predicated region
        $region65: #{tpu_custom_call.1} parent=55 // pred_check
          %p408 = pneg %p104
        $region66: #{tpu_custom_call.1} parent=55 // pred_check_branch
          %410 = sbr.rel (%p408) target = $region68
        $region67: #{tpu_custom_call.1} parent=55 // pred_region
          %412 = dma.done [#allocation10], 8192
        $region68: #{tpu_custom_call.1} parent=55 // pred_fallthru
          _
        // Predicated region
        $region69: #{tpu_custom_call.1} parent=55 // pred_check
          %p413 = pneg %p125
        $region70: #{tpu_custom_call.1} parent=55 // pred_check_branch
          %415 = sbr.rel (%p413) target = $region72
        $region71: #{tpu_custom_call.1} parent=55 // pred_region
          %417 = dma.done [#allocation13], 64
        $region72: #{tpu_custom_call.1} parent=55 // pred_fallthru
          _
        // Predicated region
        $region73: #{tpu_custom_call.1} parent=55 // pred_check
          %p418 = pneg %p146
        $region74: #{tpu_custom_call.1} parent=55 // pred_check_branch
          %420 = sbr.rel (%p418) target = $region76
        $region75: #{tpu_custom_call.1} parent=55 // pred_region
          %422 = dma.done [#allocation13], 8192
        $region76: #{tpu_custom_call.1} parent=55 // pred_fallthru
          _
        // Predicated region
        $region77: #{tpu_custom_call.1} parent=55 // pred_check
          %p423 = pneg %p167
        $region78: #{tpu_custom_call.1} parent=55 // pred_check_branch
          %425 = sbr.rel (%p423) target = $region80
        $region79: #{tpu_custom_call.1} parent=55 // pred_region
          %427 = dma.done [#allocation16], 8192
        $region80: #{tpu_custom_call.1} parent=55 // pred_fallthru
          _
        // Predicated region
        $region81: #{tpu_custom_call.1} parent=55 // pred_check
          %p428 = pneg %p209
        $region82: #{tpu_custom_call.1} parent=55 // pred_check_branch
          %430 = sbr.rel (%p428) target = $region84
        $region83: #{tpu_custom_call.1} parent=55 // pred_region
          %432 = dma.done [#allocation16], 2048
        $region84: #{tpu_custom_call.1} parent=55 // pred_fallthru
          _
        %s433 = sand.u32 %s49, 1
        %s434 = scalar_lea.sflag [#allocation7], %s433
        %s435 = sand.u32 %s49, 1
        %s436 = smul.addr %s435, 24
        %s437 = scalar_lea.vmem [#allocation6], %s436
        %p438 = pneg %p62
        %p439 = pneg %p59
        %p440 = pneg %p83
        %p441 = pneg %p80
        %p442 = pneg %p104
        %p443 = pneg %p101
        %p444 = pneg %p125
        %p445 = pneg %p122
        %p446 = pneg %p146
        %p447 = pneg %p143
        %p448 = pneg %p167
        %p449 = pneg %p164
        %p450 = pneg %p188
        %p451 = pneg %p185
        %p452 = pneg %p209
        %p453 = pneg %p206
        %p454 = pneg %p230
        %p455 = pneg %p227
        %p456 = pneg %p256
        %p457 = pneg %p253
        %s458 = smul.u32 3, %s32
        %p459 = scmp.eq.s32.totalorder %s32, 0
        // Predicated region
        $region85: #{tpu_custom_call.1} parent=55 // pred_check
          %p460 = pneg %p459
        $region86: #{tpu_custom_call.1} parent=55 // pred_check_branch
          %462 = sbr.rel (%p460) target = $region88
        $region87: #{tpu_custom_call.1} parent=55 // pred_region
          %463 = vst [vmem:[#allocation2] sm:$0xff] 0.0
          %464 = vst [vmem:[#allocation3] sm:$0xff] 0.0
          %465 = vst [vmem:[#allocation4] sm:$0xff] 0.0
          %466 = vst [vmem:[#allocation5] sm:$0xff] 0.0
        $region88: #{tpu_custom_call.1} parent=55 // pred_fallthru
          _
        %v467 = vld [vmem:[#allocation12] sm:$0xf]
        %v469 = vperm.slane %v467, 0
        %v470 = vperm.slane %v467, 1
        %v471 = vperm.slane %v467, 2
        %v472 = vperm.slane %v467, 3
        %v477 = vld [vmem:[%s6] sm:$0xf]
        %v479 = vperm.slane %v477, 0
        %v480 = vperm.slane %v477, 1
        %v481 = vperm.slane %v477, 2
        %v482 = vperm.slane %v477, 3
        %p487 = scmp.ne.s32.totalorder %s32, 2
        // Predicated region
        $region89: #{tpu_custom_call.1} parent=55 // pred_check
          %p488 = pneg %p487
        $region90: #{tpu_custom_call.1} parent=55 // pred_check_branch
          %490 = sbr.rel (%p488) target = $region92
        $region91: #{tpu_custom_call.1} parent=55 // pred_region
          %v491 = vld [vmem:[#allocation2] sm:$0xff]
          %v492 = vld [vmem:[#allocation3] sm:$0xff]
          %v493 = vld [vmem:[#allocation4] sm:$0xff]
          %v494 = vld [vmem:[#allocation5] sm:$0xff]
          %v495 = vld [vmem:[%s397] sm:$0xff]
          %v496 = vld [vmem:[#allocation9] sm:$0xff]
          %v497 = vld [vmem:[#allocation9 + $0x8] sm:$0xff]
          %v498 = vld [vmem:[#allocation9 + $0x10] sm:$0xff]
          %v499 = vld [vmem:[#allocation9 + $0x18] sm:$0xff]
          %v500 = vld [vmem:[#allocation9 + $0x20] sm:$0xff]
          %v501 = vld [vmem:[#allocation9 + $0x28] sm:$0xff]
          %v502 = vld [vmem:[#allocation9 + $0x30] sm:$0xff]
          %v503 = vld [vmem:[#allocation9 + $0x38] sm:$0xff]
          %vm504 = vcmask 130048
          %v506 = vsel %vm504, %v495, 0
          %508 = vmatpush.msra.mxu0 0.0
          %509 = vmatpush.msra.mxu0 0.0
          %510 = vmatpush.msra.mxu0 0.0
          %511 = vmatpush.msra.mxu0 0.0
          %512 = vmatpush.msra.mxu0 0.0
          %513 = vmatpush.msra.mxu0 0.0
          %514 = vmatpush.msra.mxu0 0.0
          %515 = vmatpush.msra.mxu0 0.0
          %516 = vmatpush.msra.mxu0 0.0
          %517 = vmatpush.msra.mxu0 0.0
          %518 = vmatpush.msra.mxu0 0.0
          %519 = vmatpush.msra.mxu0 0.0
          %520 = vmatpush.msra.mxu0 0.0
          %521 = vmatpush.msra.mxu0 0.0
          %522 = vmatpush.msra.mxu0 %v500
          %523 = vmatpush.msra.mxu0 %v496
          %524 = vmatmul.f32.gmra.mxu0 %v506
          %v525 = vpop.f32.mrf.mxu0
          %v526 = vadd.f32 %v469, %v525
          %527 = vdwg.mxu0
          %528 = vmatpush.msra.mxu0 0.0
          %529 = vmatpush.msra.mxu0 0.0
          %530 = vmatpush.msra.mxu0 0.0
          %531 = vmatpush.msra.mxu0 0.0
          %532 = vmatpush.msra.mxu0 0.0
          %533 = vmatpush.msra.mxu0 0.0
          %534 = vmatpush.msra.mxu0 0.0
          %535 = vmatpush.msra.mxu0 0.0
          %536 = vmatpush.msra.mxu0 0.0
          %537 = vmatpush.msra.mxu0 0.0
          %538 = vmatpush.msra.mxu0 0.0
          %539 = vmatpush.msra.mxu0 0.0
          %540 = vmatpush.msra.mxu0 0.0
          %541 = vmatpush.msra.mxu0 0.0
          %542 = vmatpush.msra.mxu0 %v501
          %543 = vmatpush.msra.mxu0 %v497
          %544 = vmatmul.f32.gmra.mxu0 %v506
          %v545 = vpop.f32.mrf.mxu0
          %v546 = vadd.f32 %v470, %v545
          %547 = vdwg.mxu0
          %548 = vmatpush.msra.mxu0 0.0
          %549 = vmatpush.msra.mxu0 0.0
          %550 = vmatpush.msra.mxu0 0.0
          %551 = vmatpush.msra.mxu0 0.0
          %552 = vmatpush.msra.mxu0 0.0
          %553 = vmatpush.msra.mxu0 0.0
          %554 = vmatpush.msra.mxu0 0.0
          %555 = vmatpush.msra.mxu0 0.0
          %556 = vmatpush.msra.mxu0 0.0
          %557 = vmatpush.msra.mxu0 0.0
          %558 = vmatpush.msra.mxu0 0.0
          %559 = vmatpush.msra.mxu0 0.0
          %560 = vmatpush.msra.mxu0 0.0
          %561 = vmatpush.msra.mxu0 0.0
          %562 = vmatpush.msra.mxu0 %v502
          %563 = vmatpush.msra.mxu0 %v498
          %564 = vmatmul.f32.gmra.mxu0 %v506
          %v565 = vpop.f32.mrf.mxu0
          %v566 = vadd.f32 %v471, %v565
          %567 = vdwg.mxu0
          %568 = vmatpush.msra.mxu0 0.0
          %569 = vmatpush.msra.mxu0 0.0
          %570 = vmatpush.msra.mxu0 0.0
          %571 = vmatpush.msra.mxu0 0.0
          %572 = vmatpush.msra.mxu0 0.0
          %573 = vmatpush.msra.mxu0 0.0
          %574 = vmatpush.msra.mxu0 0.0
          %575 = vmatpush.msra.mxu0 0.0
          %576 = vmatpush.msra.mxu0 0.0
          %577 = vmatpush.msra.mxu0 0.0
          %578 = vmatpush.msra.mxu0 0.0
          %579 = vmatpush.msra.mxu0 0.0
          %580 = vmatpush.msra.mxu0 0.0
          %581 = vmatpush.msra.mxu0 0.0
          %582 = vmatpush.msra.mxu0 %v503
          %583 = vmatpush.msra.mxu0 %v499
          %584 = vmatmul.f32.gmra.mxu0 %v506
          %v585 = vpop.f32.mrf.mxu0
          %v586 = vadd.f32 %v472, %v585
          %587 = vdwg.mxu0
          %s588 = scalar_lea.vmem %s397, 8 [#allocation6]
          %v589 = vld [vmem:[%s588] sm:$0xff]
          %v591 = vsel %vm504, %v589, 0
          %593 = vmatpush.msra.mxu0 0.0
          %594 = vmatpush.msra.mxu0 0.0
          %595 = vmatpush.msra.mxu0 0.0
          %596 = vmatpush.msra.mxu0 0.0
          %597 = vmatpush.msra.mxu0 0.0
          %598 = vmatpush.msra.mxu0 0.0
          %599 = vmatpush.msra.mxu0 0.0
          %600 = vmatpush.msra.mxu0 0.0
          %601 = vmatpush.msra.mxu0 0.0
          %602 = vmatpush.msra.mxu0 0.0
          %603 = vmatpush.msra.mxu0 0.0
          %604 = vmatpush.msra.mxu0 0.0
          %605 = vmatpush.msra.mxu0 0.0
          %606 = vmatpush.msra.mxu0 0.0
          %607 = vmatpush.msra.mxu0 %v500
          %608 = vmatpush.msra.mxu0 %v496
          %609 = vmatmul.f32.gmra.mxu0 %v591
          %v610 = vpop.f32.mrf.mxu0
          %v611 = vadd.f32 %v469, %v610
          %612 = vdwg.mxu0
          %613 = vmatpush.msra.mxu0 0.0
          %614 = vmatpush.msra.mxu0 0.0
          %615 = vmatpush.msra.mxu0 0.0
          %616 = vmatpush.msra.mxu0 0.0
          %617 = vmatpush.msra.mxu0 0.0
          %618 = vmatpush.msra.mxu0 0.0
          %619 = vmatpush.msra.mxu0 0.0
          %620 = vmatpush.msra.mxu0 0.0
          %621 = vmatpush.msra.mxu0 0.0
          %622 = vmatpush.msra.mxu0 0.0
          %623 = vmatpush.msra.mxu0 0.0
          %624 = vmatpush.msra.mxu0 0.0
          %625 = vmatpush.msra.mxu0 0.0
          %626 = vmatpush.msra.mxu0 0.0
          %627 = vmatpush.msra.mxu0 %v501
          %628 = vmatpush.msra.mxu0 %v497
          %629 = vmatmul.f32.gmra.mxu0 %v591
          %v630 = vpop.f32.mrf.mxu0
          %v631 = vadd.f32 %v470, %v630
          %632 = vdwg.mxu0
          %633 = vmatpush.msra.mxu0 0.0
          %634 = vmatpush.msra.mxu0 0.0
          %635 = vmatpush.msra.mxu0 0.0
          %636 = vmatpush.msra.mxu0 0.0
          %637 = vmatpush.msra.mxu0 0.0
          %638 = vmatpush.msra.mxu0 0.0
          %639 = vmatpush.msra.mxu0 0.0
          %640 = vmatpush.msra.mxu0 0.0
          %641 = vmatpush.msra.mxu0 0.0
          %642 = vmatpush.msra.mxu0 0.0
          %643 = vmatpush.msra.mxu0 0.0
          %644 = vmatpush.msra.mxu0 0.0
          %645 = vmatpush.msra.mxu0 0.0
          %646 = vmatpush.msra.mxu0 0.0
          %647 = vmatpush.msra.mxu0 %v502
          %648 = vmatpush.msra.mxu0 %v498
          %649 = vmatmul.f32.gmra.mxu0 %v591
          %v650 = vpop.f32.mrf.mxu0
          %v651 = vadd.f32 %v471, %v650
          %652 = vdwg.mxu0
          %653 = vmatpush.msra.mxu0 0.0
          %654 = vmatpush.msra.mxu0 0.0
          %655 = vmatpush.msra.mxu0 0.0
          %656 = vmatpush.msra.mxu0 0.0
          %657 = vmatpush.msra.mxu0 0.0
          %658 = vmatpush.msra.mxu0 0.0
          %659 = vmatpush.msra.mxu0 0.0
          %660 = vmatpush.msra.mxu0 0.0
          %661 = vmatpush.msra.mxu0 0.0
          %662 = vmatpush.msra.mxu0 0.0
          %663 = vmatpush.msra.mxu0 0.0
          %664 = vmatpush.msra.mxu0 0.0
          %665 = vmatpush.msra.mxu0 0.0
          %666 = vmatpush.msra.mxu0 0.0
          %667 = vmatpush.msra.mxu0 %v503
          %668 = vmatpush.msra.mxu0 %v499
          %669 = vmatmul.f32.gmra.mxu0 %v591
          %v670 = vpop.f32.mrf.mxu0
          %v671 = vadd.f32 %v472, %v670
          %672 = vdwg.mxu0
          %v673 = vld [vmem:[#allocation15] sm:$0xff]
          %v674 = vld [vmem:[#allocation15 + $0x8] sm:$0xff]
          %v675 = vld [vmem:[#allocation15 + $0x10] sm:$0xff]
          %v676 = vld [vmem:[#allocation15 + $0x18] sm:$0xff]
          %v677 = vld [vmem:[#allocation15 + $0x20] sm:$0xff]
          %v678 = vld [vmem:[#allocation15 + $0x28] sm:$0xff]
          %v679 = vld [vmem:[#allocation15 + $0x30] sm:$0xff]
          %v680 = vld [vmem:[#allocation15 + $0x38] sm:$0xff]
          %v681 = vld [vmem:[#allocation15 + $0x40] sm:$0xff]
          %v682 = vld [vmem:[#allocation15 + $0x48] sm:$0xff]
          %v683 = vld [vmem:[#allocation15 + $0x50] sm:$0xff]
          %v684 = vld [vmem:[#allocation15 + $0x58] sm:$0xff]
          %v685 = vld [vmem:[#allocation15 + $0x60] sm:$0xff]
          %v686 = vld [vmem:[#allocation15 + $0x68] sm:$0xff]
          %v687 = vld [vmem:[#allocation15 + $0x70] sm:$0xff]
          %v688 = vld [vmem:[#allocation15 + $0x78] sm:$0xff]
          %v689 = vld [vmem:[#allocation15 + $0x80] sm:$0xff]
          %v690 = vld [vmem:[#allocation15 + $0x88] sm:$0xff]
          %v691 = vld [vmem:[#allocation15 + $0x90] sm:$0xff]
          %v692 = vld [vmem:[#allocation15 + $0x98] sm:$0xff]
          %v693 = vld [vmem:[#allocation15 + $0xa0] sm:$0xff]
          %v694 = vld [vmem:[#allocation15 + $0xa8] sm:$0xff]
          %v695 = vld [vmem:[#allocation15 + $0xb0] sm:$0xff]
          %v696 = vld [vmem:[#allocation15 + $0xb8] sm:$0xff]
          %v697 = vld [vmem:[#allocation15 + $0xc0] sm:$0xff]
          %v698 = vld [vmem:[#allocation15 + $0xc8] sm:$0xff]
          %v699 = vld [vmem:[#allocation15 + $0xd0] sm:$0xff]
          %v700 = vld [vmem:[#allocation15 + $0xd8] sm:$0xff]
          %v701 = vld [vmem:[#allocation15 + $0xe0] sm:$0xff]
          %v702 = vld [vmem:[#allocation15 + $0xe8] sm:$0xff]
          %v703 = vld [vmem:[#allocation15 + $0xf0] sm:$0xff]
          %v704 = vld [vmem:[#allocation15 + $0xf8] sm:$0xff]
          %v705 = vld [vmem:[#allocation15 + $0x100] sm:$0xff]
          %v706 = vld [vmem:[#allocation15 + $0x108] sm:$0xff]
          %v707 = vld [vmem:[#allocation15 + $0x110] sm:$0xff]
          %v708 = vld [vmem:[#allocation15 + $0x118] sm:$0xff]
          %v709 = vld [vmem:[#allocation15 + $0x120] sm:$0xff]
          %v710 = vld [vmem:[#allocation15 + $0x128] sm:$0xff]
          %v711 = vld [vmem:[#allocation15 + $0x130] sm:$0xff]
          %v712 = vld [vmem:[#allocation15 + $0x138] sm:$0xff]
          %v713 = vld [vmem:[#allocation15 + $0x140] sm:$0xff]
          %v714 = vld [vmem:[#allocation15 + $0x148] sm:$0xff]
          %v715 = vld [vmem:[#allocation15 + $0x150] sm:$0xff]
          %v716 = vld [vmem:[#allocation15 + $0x158] sm:$0xff]
          %v717 = vld [vmem:[#allocation15 + $0x160] sm:$0xff]
          %v718 = vld [vmem:[#allocation15 + $0x168] sm:$0xff]
          %v719 = vld [vmem:[#allocation15 + $0x170] sm:$0xff]
          %v720 = vld [vmem:[#allocation15 + $0x178] sm:$0xff]
          %v721 = vld [vmem:[#allocation15 + $0x180] sm:$0xff]
          %v722 = vld [vmem:[#allocation15 + $0x188] sm:$0xff]
          %v723 = vld [vmem:[#allocation15 + $0x190] sm:$0xff]
          %v724 = vld [vmem:[#allocation15 + $0x198] sm:$0xff]
          %v725 = vld [vmem:[#allocation15 + $0x1a0] sm:$0xff]
          %v726 = vld [vmem:[#allocation15 + $0x1a8] sm:$0xff]
          %v727 = vld [vmem:[#allocation15 + $0x1b0] sm:$0xff]
          %v728 = vld [vmem:[#allocation15 + $0x1b8] sm:$0xff]
          %v729 = vld [vmem:[#allocation15 + $0x1c0] sm:$0xff]
          %v730 = vld [vmem:[#allocation15 + $0x1c8] sm:$0xff]
          %v731 = vld [vmem:[#allocation15 + $0x1d0] sm:$0xff]
          %v732 = vld [vmem:[#allocation15 + $0x1d8] sm:$0xff]
          %v733 = vld [vmem:[#allocation15 + $0x1e0] sm:$0xff]
          %v734 = vld [vmem:[#allocation15 + $0x1e8] sm:$0xff]
          %v735 = vld [vmem:[#allocation15 + $0x1f0] sm:$0xff]
          %v736 = vld [vmem:[#allocation15 + $0x1f8] sm:$0xff]
          %737 = vmatpush.msra.mxu0 %v733
          %738 = vmatpush.msra.mxu0 %v729
          %739 = vmatpush.msra.mxu0 %v725
          %740 = vmatpush.msra.mxu0 %v721
          %741 = vmatpush.msra.mxu0 %v717
          %742 = vmatpush.msra.mxu0 %v713
          %743 = vmatpush.msra.mxu0 %v709
          %744 = vmatpush.msra.mxu0 %v705
          %745 = vmatpush.msra.mxu0 %v701
          %746 = vmatpush.msra.mxu0 %v697
          %747 = vmatpush.msra.mxu0 %v693
          %748 = vmatpush.msra.mxu0 %v689
          %749 = vmatpush.msra.mxu0 %v685
          %750 = vmatpush.msra.mxu0 %v681
          %751 = vmatpush.msra.mxu0 %v677
          %752 = vmatpush.msra.mxu0 %v673
          %753 = vmatmul.f32.gmra.mxu0 %v493
          %v754 = vpop.f32.mrf.mxu0
          %v755 = vadd.f32 %v479, %v754
          %756 = vdwg.mxu0
          %757 = vmatpush.msra.mxu0 %v734
          %758 = vmatpush.msra.mxu0 %v730
          %759 = vmatpush.msra.mxu0 %v726
          %760 = vmatpush.msra.mxu0 %v722
          %761 = vmatpush.msra.mxu0 %v718
          %762 = vmatpush.msra.mxu0 %v714
          %763 = vmatpush.msra.mxu0 %v710
          %764 = vmatpush.msra.mxu0 %v706
          %765 = vmatpush.msra.mxu0 %v702
          %766 = vmatpush.msra.mxu0 %v698
          %767 = vmatpush.msra.mxu0 %v694
          %768 = vmatpush.msra.mxu0 %v690
          %769 = vmatpush.msra.mxu0 %v686
          %770 = vmatpush.msra.mxu0 %v682
          %771 = vmatpush.msra.mxu0 %v678
          %772 = vmatpush.msra.mxu0 %v674
          %773 = vmatmul.f32.gmra.mxu0 %v493
          %v774 = vpop.f32.mrf.mxu0
          %v775 = vadd.f32 %v480, %v774
          %776 = vdwg.mxu0
          %777 = vmatpush.msra.mxu0 %v735
          %778 = vmatpush.msra.mxu0 %v731
          %779 = vmatpush.msra.mxu0 %v727
          %780 = vmatpush.msra.mxu0 %v723
          %781 = vmatpush.msra.mxu0 %v719
          %782 = vmatpush.msra.mxu0 %v715
          %783 = vmatpush.msra.mxu0 %v711
          %784 = vmatpush.msra.mxu0 %v707
          %785 = vmatpush.msra.mxu0 %v703
          %786 = vmatpush.msra.mxu0 %v699
          %787 = vmatpush.msra.mxu0 %v695
          %788 = vmatpush.msra.mxu0 %v691
          %789 = vmatpush.msra.mxu0 %v687
          %790 = vmatpush.msra.mxu0 %v683
          %791 = vmatpush.msra.mxu0 %v679
          %792 = vmatpush.msra.mxu0 %v675
          %793 = vmatmul.f32.gmra.mxu0 %v493
          %v794 = vpop.f32.mrf.mxu0
          %v795 = vadd.f32 %v481, %v794
          %796 = vdwg.mxu0
          %797 = vmatpush.msra.mxu0 %v736
          %798 = vmatpush.msra.mxu0 %v732
          %799 = vmatpush.msra.mxu0 %v728
          %800 = vmatpush.msra.mxu0 %v724
          %801 = vmatpush.msra.mxu0 %v720
          %802 = vmatpush.msra.mxu0 %v716
          %803 = vmatpush.msra.mxu0 %v712
          %804 = vmatpush.msra.mxu0 %v708
          %805 = vmatpush.msra.mxu0 %v704
          %806 = vmatpush.msra.mxu0 %v700
          %807 = vmatpush.msra.mxu0 %v696
          %808 = vmatpush.msra.mxu0 %v692
          %809 = vmatpush.msra.mxu0 %v688
          %810 = vmatpush.msra.mxu0 %v684
          %811 = vmatpush.msra.mxu0 %v680
          %812 = vmatpush.msra.mxu0 %v676
          %813 = vmatmul.f32.gmra.mxu0 %v493
          %v814 = vpop.f32.mrf.mxu0
          %v815 = vadd.f32 %v482, %v814
          %816 = vdwg.mxu0
          %v817 = vld [vmem:[#allocation11] sm:$0xff]
          %v818 = vld [vmem:[#allocation11 + $0x8] sm:$0xff]
          %v819 = vld [vmem:[#allocation11 + $0x10] sm:$0xff]
          %v820 = vld [vmem:[#allocation11 + $0x18] sm:$0xff]
          %v821 = vld [vmem:[#allocation11 + $0x20] sm:$0xff]
          %v822 = vld [vmem:[#allocation11 + $0x28] sm:$0xff]
          %v823 = vld [vmem:[#allocation11 + $0x30] sm:$0xff]
          %v824 = vld [vmem:[#allocation11 + $0x38] sm:$0xff]
          %v825 = vld [vmem:[#allocation11 + $0x40] sm:$0xff]
          %v826 = vld [vmem:[#allocation11 + $0x48] sm:$0xff]
          %v827 = vld [vmem:[#allocation11 + $0x50] sm:$0xff]
          %v828 = vld [vmem:[#allocation11 + $0x58] sm:$0xff]
          %v829 = vld [vmem:[#allocation11 + $0x60] sm:$0xff]
          %v830 = vld [vmem:[#allocation11 + $0x68] sm:$0xff]
          %v831 = vld [vmem:[#allocation11 + $0x70] sm:$0xff]
          %v832 = vld [vmem:[#allocation11 + $0x78] sm:$0xff]
          %v833 = vld [vmem:[#allocation11 + $0x80] sm:$0xff]
          %v834 = vld [vmem:[#allocation11 + $0x88] sm:$0xff]
          %v835 = vld [vmem:[#allocation11 + $0x90] sm:$0xff]
          %v836 = vld [vmem:[#allocation11 + $0x98] sm:$0xff]
          %v837 = vld [vmem:[#allocation11 + $0xa0] sm:$0xff]
          %v838 = vld [vmem:[#allocation11 + $0xa8] sm:$0xff]
          %v839 = vld [vmem:[#allocation11 + $0xb0] sm:$0xff]
          %v840 = vld [vmem:[#allocation11 + $0xb8] sm:$0xff]
          %v841 = vld [vmem:[#allocation11 + $0xc0] sm:$0xff]
          %v842 = vld [vmem:[#allocation11 + $0xc8] sm:$0xff]
          %v843 = vld [vmem:[#allocation11 + $0xd0] sm:$0xff]
          %v844 = vld [vmem:[#allocation11 + $0xd8] sm:$0xff]
          %v845 = vld [vmem:[#allocation11 + $0xe0] sm:$0xff]
          %v846 = vld [vmem:[#allocation11 + $0xe8] sm:$0xff]
          %v847 = vld [vmem:[#allocation11 + $0xf0] sm:$0xff]
          %v848 = vld [vmem:[#allocation11 + $0xf8] sm:$0xff]
          %v849 = vld [vmem:[#allocation11 + $0x100] sm:$0xff]
          %v850 = vld [vmem:[#allocation11 + $0x108] sm:$0xff]
          %v851 = vld [vmem:[#allocation11 + $0x110] sm:$0xff]
          %v852 = vld [vmem:[#allocation11 + $0x118] sm:$0xff]
          %v853 = vld [vmem:[#allocation11 + $0x120] sm:$0xff]
          %v854 = vld [vmem:[#allocation11 + $0x128] sm:$0xff]
          %v855 = vld [vmem:[#allocation11 + $0x130] sm:$0xff]
          %v856 = vld [vmem:[#allocation11 + $0x138] sm:$0xff]
          %v857 = vld [vmem:[#allocation11 + $0x140] sm:$0xff]
          %v858 = vld [vmem:[#allocation11 + $0x148] sm:$0xff]
          %v859 = vld [vmem:[#allocation11 + $0x150] sm:$0xff]
          %v860 = vld [vmem:[#allocation11 + $0x158] sm:$0xff]
          %v861 = vld [vmem:[#allocation11 + $0x160] sm:$0xff]
          %v862 = vld [vmem:[#allocation11 + $0x168] sm:$0xff]
          %v863 = vld [vmem:[#allocation11 + $0x170] sm:$0xff]
          %v864 = vld [vmem:[#allocation11 + $0x178] sm:$0xff]
          %v865 = vld [vmem:[#allocation11 + $0x180] sm:$0xff]
          %v866 = vld [vmem:[#allocation11 + $0x188] sm:$0xff]
          %v867 = vld [vmem:[#allocation11 + $0x190] sm:$0xff]
          %v868 = vld [vmem:[#allocation11 + $0x198] sm:$0xff]
          %v869 = vld [vmem:[#allocation11 + $0x1a0] sm:$0xff]
          %v870 = vld [vmem:[#allocation11 + $0x1a8] sm:$0xff]
          %v871 = vld [vmem:[#allocation11 + $0x1b0] sm:$0xff]
          %v872 = vld [vmem:[#allocation11 + $0x1b8] sm:$0xff]
          %v873 = vld [vmem:[#allocation11 + $0x1c0] sm:$0xff]
          %v874 = vld [vmem:[#allocation11 + $0x1c8] sm:$0xff]
          %v875 = vld [vmem:[#allocation11 + $0x1d0] sm:$0xff]
          %v876 = vld [vmem:[#allocation11 + $0x1d8] sm:$0xff]
          %v877 = vld [vmem:[#allocation11 + $0x1e0] sm:$0xff]
          %v878 = vld [vmem:[#allocation11 + $0x1e8] sm:$0xff]
          %v879 = vld [vmem:[#allocation11 + $0x1f0] sm:$0xff]
          %v880 = vld [vmem:[#allocation11 + $0x1f8] sm:$0xff]
          %881 = vmatpush.msra.mxu0 %v877
          %882 = vmatpush.msra.mxu0 %v873
          %883 = vmatpush.msra.mxu0 %v869
          %884 = vmatpush.msra.mxu0 %v865
          %885 = vmatpush.msra.mxu0 %v861
          %886 = vmatpush.msra.mxu0 %v857
          %887 = vmatpush.msra.mxu0 %v853
          %888 = vmatpush.msra.mxu0 %v849
          %889 = vmatpush.msra.mxu0 %v845
          %890 = vmatpush.msra.mxu0 %v841
          %891 = vmatpush.msra.mxu0 %v837
          %892 = vmatpush.msra.mxu0 %v833
          %893 = vmatpush.msra.mxu0 %v829
          %894 = vmatpush.msra.mxu0 %v825
          %895 = vmatpush.msra.mxu0 %v821
          %896 = vmatpush.msra.mxu0 %v817
          %897 = vmatmul.f32.gmra.mxu0 %v491
          %v898 = vpop.f32.mrf.mxu0
          %v899 = vadd.f32 0.0, %v898
          %900 = vdwg.mxu0
          %901 = vmatpush.msra.mxu0 %v878
          %902 = vmatpush.msra.mxu0 %v874
          %903 = vmatpush.msra.mxu0 %v870
          %904 = vmatpush.msra.mxu0 %v866
          %905 = vmatpush.msra.mxu0 %v862
          %906 = vmatpush.msra.mxu0 %v858
          %907 = vmatpush.msra.mxu0 %v854
          %908 = vmatpush.msra.mxu0 %v850
          %909 = vmatpush.msra.mxu0 %v846
          %910 = vmatpush.msra.mxu0 %v842
          %911 = vmatpush.msra.mxu0 %v838
          %912 = vmatpush.msra.mxu0 %v834
          %913 = vmatpush.msra.mxu0 %v830
          %914 = vmatpush.msra.mxu0 %v826
          %915 = vmatpush.msra.mxu0 %v822
          %916 = vmatpush.msra.mxu0 %v818
          %917 = vmatmul.f32.gmra.mxu0 %v491
          %v918 = vpop.f32.mrf.mxu0
          %v919 = vadd.f32 0.0, %v918
          %920 = vdwg.mxu0
          %921 = vmatpush.msra.mxu0 %v879
          %922 = vmatpush.msra.mxu0 %v875
          %923 = vmatpush.msra.mxu0 %v871
          %924 = vmatpush.msra.mxu0 %v867
          %925 = vmatpush.msra.mxu0 %v863
          %926 = vmatpush.msra.mxu0 %v859
          %927 = vmatpush.msra.mxu0 %v855
          %928 = vmatpush.msra.mxu0 %v851
          %929 = vmatpush.msra.mxu0 %v847
          %930 = vmatpush.msra.mxu0 %v843
          %931 = vmatpush.msra.mxu0 %v839
          %932 = vmatpush.msra.mxu0 %v835
          %933 = vmatpush.msra.mxu0 %v831
          %934 = vmatpush.msra.mxu0 %v827
          %935 = vmatpush.msra.mxu0 %v823
          %936 = vmatpush.msra.mxu0 %v819
          %937 = vmatmul.f32.gmra.mxu0 %v491
          %v938 = vpop.f32.mrf.mxu0
          %v939 = vadd.f32 0.0, %v938
          %940 = vdwg.mxu0
          %941 = vmatpush.msra.mxu0 %v880
          %942 = vmatpush.msra.mxu0 %v876
          %943 = vmatpush.msra.mxu0 %v872
          %944 = vmatpush.msra.mxu0 %v868
          %945 = vmatpush.msra.mxu0 %v864
          %946 = vmatpush.msra.mxu0 %v860
          %947 = vmatpush.msra.mxu0 %v856
          %948 = vmatpush.msra.mxu0 %v852
          %949 = vmatpush.msra.mxu0 %v848
          %950 = vmatpush.msra.mxu0 %v844
          %951 = vmatpush.msra.mxu0 %v840
          %952 = vmatpush.msra.mxu0 %v836
          %953 = vmatpush.msra.mxu0 %v832
          %954 = vmatpush.msra.mxu0 %v828
          %955 = vmatpush.msra.mxu0 %v824
          %956 = vmatpush.msra.mxu0 %v820
          %957 = vmatmul.f32.gmra.mxu0 %v491
          %v958 = vpop.f32.mrf.mxu0
          %v959 = vadd.f32 0.0, %v958
          %960 = vdwg.mxu0
          %v961 = vadd.f32 %v526, %v899
          %v962 = vadd.f32 %v546, %v919
          %v963 = vadd.f32 %v566, %v939
          %v964 = vadd.f32 %v586, %v959
          %v965 = vxor.u32 %v961, 2147483648
          %v966 = vmul.f32 %v965, 1.442695
          %v967 = vpow.pop %v966
          %v968 = vadd.f32 %v967, 1.0
          %v969 = vrcp.pop %v968
          %v970 = vmul.f32 %v968, %v969
          %v971 = vsub.f32 1.0, %v970
          %v972 = vmul.f32 %v969, %v971
          %v973 = vadd.f32 %v969, %v972
          %vm974 = vweird.f32 %v968
          %vm975 = vweird.f32 %v969
          %vm976 = vmor %vm974, %vm975
          %v977 = vsel %vm976, %v969, %v973
          %v978 = vand.u32 2147483647, %v968
          %vm979 = vcmp.eq.f32.partialorder %v978, 8.507059e+37
          %v980 = vand.u32 %v968, 2147483648
          %v981 = vor.u32 1.1754944e-38, %v980
          %v982 = vsel %vm979, %v981, %v977
          %v983 = vmul.f32 1.0, %v982
          %v984 = vxor.u32 %v962, 2147483648
          %v985 = vmul.f32 %v984, 1.442695
          %v986 = vpow.pop %v985
          %v987 = vadd.f32 %v986, 1.0
          %v988 = vrcp.pop %v987
          %v989 = vmul.f32 %v987, %v988
          %v990 = vsub.f32 1.0, %v989
          %v991 = vmul.f32 %v988, %v990
          %v992 = vadd.f32 %v988, %v991
          %vm993 = vweird.f32 %v987
          %vm994 = vweird.f32 %v988
          %vm995 = vmor %vm993, %vm994
          %v996 = vsel %vm995, %v988, %v992
          %v997 = vand.u32 2147483647, %v987
          %vm998 = vcmp.eq.f32.partialorder %v997, 8.507059e+37
          %v999 = vand.u32 %v987, 2147483648
          %v1000 = vor.u32 1.1754944e-38, %v999
          %v1001 = vsel %vm998, %v1000, %v996
          %v1002 = vmul.f32 1.0, %v1001
          %v1003 = vtanh.pop %v963
          %v1004 = vxor.u32 %v964, 2147483648
          %v1005 = vmul.f32 %v1004, 1.442695
          %v1006 = vpow.pop %v1005
          %v1007 = vadd.f32 %v1006, 1.0
          %v1008 = vrcp.pop %v1007
          %v1009 = vmul.f32 %v1007, %v1008
          %v1010 = vsub.f32 1.0, %v1009
          %v1011 = vmul.f32 %v1008, %v1010
          %v1012 = vadd.f32 %v1008, %v1011
          %vm1013 = vweird.f32 %v1007
          %vm1014 = vweird.f32 %v1008
          %vm1015 = vmor %vm1013, %vm1014
          %v1016 = vsel %vm1015, %v1008, %v1012
          %v1017 = vand.u32 2147483647, %v1007
          %vm1018 = vcmp.eq.f32.partialorder %v1017, 8.507059e+37
          %v1019 = vand.u32 %v1007, 2147483648
          %v1020 = vor.u32 1.1754944e-38, %v1019
          %v1021 = vsel %vm1018, %v1020, %v1016
          %v1022 = vmul.f32 1.0, %v1021
          %v1023 = vmul.f32 %v1002, %v492
          %v1024 = vmul.f32 %v983, %v1003
          %v1025 = vadd.f32 %v1023, %v1024
          %v1026 = vtanh.pop %v1025
          %v1027 = vmul.f32 %v1022, %v1026
          %v1028 = vld [vmem:[#allocation14] sm:$0xff]
          %v1029 = vld [vmem:[#allocation14 + $0x8] sm:$0xff]
          %v1030 = vld [vmem:[#allocation14 + $0x10] sm:$0xff]
          %v1031 = vld [vmem:[#allocation14 + $0x18] sm:$0xff]
          %v1032 = vld [vmem:[#allocation14 + $0x20] sm:$0xff]
          %v1033 = vld [vmem:[#allocation14 + $0x28] sm:$0xff]
          %v1034 = vld [vmem:[#allocation14 + $0x30] sm:$0xff]
          %v1035 = vld [vmem:[#allocation14 + $0x38] sm:$0xff]
          %v1036 = vld [vmem:[#allocation14 + $0x40] sm:$0xff]
          %v1037 = vld [vmem:[#allocation14 + $0x48] sm:$0xff]
          %v1038 = vld [vmem:[#allocation14 + $0x50] sm:$0xff]
          %v1039 = vld [vmem:[#allocation14 + $0x58] sm:$0xff]
          %v1040 = vld [vmem:[#allocation14 + $0x60] sm:$0xff]
          %v1041 = vld [vmem:[#allocation14 + $0x68] sm:$0xff]
          %v1042 = vld [vmem:[#allocation14 + $0x70] sm:$0xff]
          %v1043 = vld [vmem:[#allocation14 + $0x78] sm:$0xff]
          %v1044 = vld [vmem:[#allocation14 + $0x80] sm:$0xff]
          %v1045 = vld [vmem:[#allocation14 + $0x88] sm:$0xff]
          %v1046 = vld [vmem:[#allocation14 + $0x90] sm:$0xff]
          %v1047 = vld [vmem:[#allocation14 + $0x98] sm:$0xff]
          %v1048 = vld [vmem:[#allocation14 + $0xa0] sm:$0xff]
          %v1049 = vld [vmem:[#allocation14 + $0xa8] sm:$0xff]
          %v1050 = vld [vmem:[#allocation14 + $0xb0] sm:$0xff]
          %v1051 = vld [vmem:[#allocation14 + $0xb8] sm:$0xff]
          %v1052 = vld [vmem:[#allocation14 + $0xc0] sm:$0xff]
          %v1053 = vld [vmem:[#allocation14 + $0xc8] sm:$0xff]
          %v1054 = vld [vmem:[#allocation14 + $0xd0] sm:$0xff]
          %v1055 = vld [vmem:[#allocation14 + $0xd8] sm:$0xff]
          %v1056 = vld [vmem:[#allocation14 + $0xe0] sm:$0xff]
          %v1057 = vld [vmem:[#allocation14 + $0xe8] sm:$0xff]
          %v1058 = vld [vmem:[#allocation14 + $0xf0] sm:$0xff]
          %v1059 = vld [vmem:[#allocation14 + $0xf8] sm:$0xff]
          %v1060 = vld [vmem:[#allocation14 + $0x100] sm:$0xff]
          %v1061 = vld [vmem:[#allocation14 + $0x108] sm:$0xff]
          %v1062 = vld [vmem:[#allocation14 + $0x110] sm:$0xff]
          %v1063 = vld [vmem:[#allocation14 + $0x118] sm:$0xff]
          %v1064 = vld [vmem:[#allocation14 + $0x120] sm:$0xff]
          %v1065 = vld [vmem:[#allocation14 + $0x128] sm:$0xff]
          %v1066 = vld [vmem:[#allocation14 + $0x130] sm:$0xff]
          %v1067 = vld [vmem:[#allocation14 + $0x138] sm:$0xff]
          %v1068 = vld [vmem:[#allocation14 + $0x140] sm:$0xff]
          %v1069 = vld [vmem:[#allocation14 + $0x148] sm:$0xff]
          %v1070 = vld [vmem:[#allocation14 + $0x150] sm:$0xff]
          %v1071 = vld [vmem:[#allocation14 + $0x158] sm:$0xff]
          %v1072 = vld [vmem:[#allocation14 + $0x160] sm:$0xff]
          %v1073 = vld [vmem:[#allocation14 + $0x168] sm:$0xff]
          %v1074 = vld [vmem:[#allocation14 + $0x170] sm:$0xff]
          %v1075 = vld [vmem:[#allocation14 + $0x178] sm:$0xff]
          %v1076 = vld [vmem:[#allocation14 + $0x180] sm:$0xff]
          %v1077 = vld [vmem:[#allocation14 + $0x188] sm:$0xff]
          %v1078 = vld [vmem:[#allocation14 + $0x190] sm:$0xff]
          %v1079 = vld [vmem:[#allocation14 + $0x198] sm:$0xff]
          %v1080 = vld [vmem:[#allocation14 + $0x1a0] sm:$0xff]
          %v1081 = vld [vmem:[#allocation14 + $0x1a8] sm:$0xff]
          %v1082 = vld [vmem:[#allocation14 + $0x1b0] sm:$0xff]
          %v1083 = vld [vmem:[#allocation14 + $0x1b8] sm:$0xff]
          %v1084 = vld [vmem:[#allocation14 + $0x1c0] sm:$0xff]
          %v1085 = vld [vmem:[#allocation14 + $0x1c8] sm:$0xff]
          %v1086 = vld [vmem:[#allocation14 + $0x1d0] sm:$0xff]
          %v1087 = vld [vmem:[#allocation14 + $0x1d8] sm:$0xff]
          %v1088 = vld [vmem:[#allocation14 + $0x1e0] sm:$0xff]
          %v1089 = vld [vmem:[#allocation14 + $0x1e8] sm:$0xff]
          %v1090 = vld [vmem:[#allocation14 + $0x1f0] sm:$0xff]
          %v1091 = vld [vmem:[#allocation14 + $0x1f8] sm:$0xff]
          %1092 = vmatpush.msra.mxu0 %v1088
          %1093 = vmatpush.msra.mxu0 %v1084
          %1094 = vmatpush.msra.mxu0 %v1080
          %1095 = vmatpush.msra.mxu0 %v1076
          %1096 = vmatpush.msra.mxu0 %v1072
          %1097 = vmatpush.msra.mxu0 %v1068
          %1098 = vmatpush.msra.mxu0 %v1064
          %1099 = vmatpush.msra.mxu0 %v1060
          %1100 = vmatpush.msra.mxu0 %v1056
          %1101 = vmatpush.msra.mxu0 %v1052
          %1102 = vmatpush.msra.mxu0 %v1048
          %1103 = vmatpush.msra.mxu0 %v1044
          %1104 = vmatpush.msra.mxu0 %v1040
          %1105 = vmatpush.msra.mxu0 %v1036
          %1106 = vmatpush.msra.mxu0 %v1032
          %1107 = vmatpush.msra.mxu0 %v1028
          %1108 = vmatmul.f32.gmra.mxu0 %v1027
          %v1109 = vpop.f32.mrf.mxu0
          %v1110 = vadd.f32 0.0, %v1109
          %1111 = vdwg.mxu0
          %1112 = vmatpush.msra.mxu0 %v1089
          %1113 = vmatpush.msra.mxu0 %v1085
          %1114 = vmatpush.msra.mxu0 %v1081
          %1115 = vmatpush.msra.mxu0 %v1077
          %1116 = vmatpush.msra.mxu0 %v1073
          %1117 = vmatpush.msra.mxu0 %v1069
          %1118 = vmatpush.msra.mxu0 %v1065
          %1119 = vmatpush.msra.mxu0 %v1061
          %1120 = vmatpush.msra.mxu0 %v1057
          %1121 = vmatpush.msra.mxu0 %v1053
          %1122 = vmatpush.msra.mxu0 %v1049
          %1123 = vmatpush.msra.mxu0 %v1045
          %1124 = vmatpush.msra.mxu0 %v1041
          %1125 = vmatpush.msra.mxu0 %v1037
          %1126 = vmatpush.msra.mxu0 %v1033
          %1127 = vmatpush.msra.mxu0 %v1029
          %1128 = vmatmul.f32.gmra.mxu0 %v1027
          %v1129 = vpop.f32.mrf.mxu0
          %v1130 = vadd.f32 0.0, %v1129
          %1131 = vdwg.mxu0
          %1132 = vmatpush.msra.mxu0 %v1090
          %1133 = vmatpush.msra.mxu0 %v1086
          %1134 = vmatpush.msra.mxu0 %v1082
          %1135 = vmatpush.msra.mxu0 %v1078
          %1136 = vmatpush.msra.mxu0 %v1074
          %1137 = vmatpush.msra.mxu0 %v1070
          %1138 = vmatpush.msra.mxu0 %v1066
          %1139 = vmatpush.msra.mxu0 %v1062
          %1140 = vmatpush.msra.mxu0 %v1058
          %1141 = vmatpush.msra.mxu0 %v1054
          %1142 = vmatpush.msra.mxu0 %v1050
          %1143 = vmatpush.msra.mxu0 %v1046
          %1144 = vmatpush.msra.mxu0 %v1042
          %1145 = vmatpush.msra.mxu0 %v1038
          %1146 = vmatpush.msra.mxu0 %v1034
          %1147 = vmatpush.msra.mxu0 %v1030
          %1148 = vmatmul.f32.gmra.mxu0 %v1027
          %v1149 = vpop.f32.mrf.mxu0
          %v1150 = vadd.f32 0.0, %v1149
          %1151 = vdwg.mxu0
          %1152 = vmatpush.msra.mxu0 %v1091
          %1153 = vmatpush.msra.mxu0 %v1087
          %1154 = vmatpush.msra.mxu0 %v1083
          %1155 = vmatpush.msra.mxu0 %v1079
          %1156 = vmatpush.msra.mxu0 %v1075
          %1157 = vmatpush.msra.mxu0 %v1071
          %1158 = vmatpush.msra.mxu0 %v1067
          %1159 = vmatpush.msra.mxu0 %v1063
          %1160 = vmatpush.msra.mxu0 %v1059
          %1161 = vmatpush.msra.mxu0 %v1055
          %1162 = vmatpush.msra.mxu0 %v1051
          %1163 = vmatpush.msra.mxu0 %v1047
          %1164 = vmatpush.msra.mxu0 %v1043
          %1165 = vmatpush.msra.mxu0 %v1039
          %1166 = vmatpush.msra.mxu0 %v1035
          %1167 = vmatpush.msra.mxu0 %v1031
          %1168 = vmatmul.f32.gmra.mxu0 %v1027
          %v1169 = vpop.f32.mrf.mxu0
          %v1170 = vadd.f32 0.0, %v1169
          %1171 = vdwg.mxu0
          %v1172 = vadd.f32 %v755, %v1110
          %v1173 = vadd.f32 %v775, %v1130
          %v1174 = vadd.f32 %v795, %v1150
          %v1175 = vadd.f32 %v815, %v1170
          %v1176 = vxor.u32 %v1172, 2147483648
          %v1177 = vmul.f32 %v1176, 1.442695
          %v1178 = vpow.pop %v1177
          %v1179 = vadd.f32 %v1178, 1.0
          %v1180 = vrcp.pop %v1179
          %v1181 = vmul.f32 %v1179, %v1180
          %v1182 = vsub.f32 1.0, %v1181
          %v1183 = vmul.f32 %v1180, %v1182
          %v1184 = vadd.f32 %v1180, %v1183
          %vm1185 = vweird.f32 %v1179
          %vm1186 = vweird.f32 %v1180
          %vm1187 = vmor %vm1185, %vm1186
          %v1188 = vsel %vm1187, %v1180, %v1184
          %v1189 = vand.u32 2147483647, %v1179
          %vm1190 = vcmp.eq.f32.partialorder %v1189, 8.507059e+37
          %v1191 = vand.u32 %v1179, 2147483648
          %v1192 = vor.u32 1.1754944e-38, %v1191
          %v1193 = vsel %vm1190, %v1192, %v1188
          %v1194 = vmul.f32 1.0, %v1193
          %v1195 = vxor.u32 %v1173, 2147483648
          %v1196 = vmul.f32 %v1195, 1.442695
          %v1197 = vpow.pop %v1196
          %v1198 = vadd.f32 %v1197, 1.0
          %v1199 = vrcp.pop %v1198
          %v1200 = vmul.f32 %v1198, %v1199
          %v1201 = vsub.f32 1.0, %v1200
          %v1202 = vmul.f32 %v1199, %v1201
          %v1203 = vadd.f32 %v1199, %v1202
          %vm1204 = vweird.f32 %v1198
          %vm1205 = vweird.f32 %v1199
          %vm1206 = vmor %vm1204, %vm1205
          %v1207 = vsel %vm1206, %v1199, %v1203
          %v1208 = vand.u32 2147483647, %v1198
          %vm1209 = vcmp.eq.f32.partialorder %v1208, 8.507059e+37
          %v1210 = vand.u32 %v1198, 2147483648
          %v1211 = vor.u32 1.1754944e-38, %v1210
          %v1212 = vsel %vm1209, %v1211, %v1207
          %v1213 = vmul.f32 1.0, %v1212
          %v1214 = vtanh.pop %v1174
          %v1215 = vxor.u32 %v1175, 2147483648
          %v1216 = vmul.f32 %v1215, 1.442695
          %v1217 = vpow.pop %v1216
          %v1218 = vadd.f32 %v1217, 1.0
          %v1219 = vrcp.pop %v1218
          %v1220 = vmul.f32 %v1218, %v1219
          %v1221 = vsub.f32 1.0, %v1220
          %v1222 = vmul.f32 %v1219, %v1221
          %v1223 = vadd.f32 %v1219, %v1222
          %vm1224 = vweird.f32 %v1218
          %vm1225 = vweird.f32 %v1219
          %vm1226 = vmor %vm1224, %vm1225
          %v1227 = vsel %vm1226, %v1219, %v1223
          %v1228 = vand.u32 2147483647, %v1218
          %vm1229 = vcmp.eq.f32.partialorder %v1228, 8.507059e+37
          %v1230 = vand.u32 %v1218, 2147483648
          %v1231 = vor.u32 1.1754944e-38, %v1230
          %v1232 = vsel %vm1229, %v1231, %v1227
          %v1233 = vmul.f32 1.0, %v1232
          %v1234 = vmul.f32 %v1213, %v494
          %v1235 = vmul.f32 %v1194, %v1214
          %v1236 = vadd.f32 %v1234, %v1235
          %v1237 = vtanh.pop %v1236
          %v1238 = vmul.f32 %v1233, %v1237
          %s1239 = scalar_lea.vmem %s397, 16 [#allocation6]
          %v1240 = vld [vmem:[%s1239] sm:$0xff]
          %v1242 = vsel %vm504, %v1240, 0
          %1244 = vmatpush.msra.mxu0 0.0
          %1245 = vmatpush.msra.mxu0 0.0
          %1246 = vmatpush.msra.mxu0 0.0
          %1247 = vmatpush.msra.mxu0 0.0
          %1248 = vmatpush.msra.mxu0 0.0
          %1249 = vmatpush.msra.mxu0 0.0
          %1250 = vmatpush.msra.mxu0 0.0
          %1251 = vmatpush.msra.mxu0 0.0
          %1252 = vmatpush.msra.mxu0 0.0
          %1253 = vmatpush.msra.mxu0 0.0
          %1254 = vmatpush.msra.mxu0 0.0
          %1255 = vmatpush.msra.mxu0 0.0
          %1256 = vmatpush.msra.mxu0 0.0
          %1257 = vmatpush.msra.mxu0 0.0
          %1258 = vmatpush.msra.mxu0 %v500
          %1259 = vmatpush.msra.mxu0 %v496
          %1260 = vmatmul.f32.gmra.mxu0 %v1242
          %v1261 = vpop.f32.mrf.mxu0
          %v1262 = vadd.f32 %v469, %v1261
          %1263 = vdwg.mxu0
          %1264 = vmatpush.msra.mxu0 0.0
          %1265 = vmatpush.msra.mxu0 0.0
          %1266 = vmatpush.msra.mxu0 0.0
          %1267 = vmatpush.msra.mxu0 0.0
          %1268 = vmatpush.msra.mxu0 0.0
          %1269 = vmatpush.msra.mxu0 0.0
          %1270 = vmatpush.msra.mxu0 0.0
          %1271 = vmatpush.msra.mxu0 0.0
          %1272 = vmatpush.msra.mxu0 0.0
          %1273 = vmatpush.msra.mxu0 0.0
          %1274 = vmatpush.msra.mxu0 0.0
          %1275 = vmatpush.msra.mxu0 0.0
          %1276 = vmatpush.msra.mxu0 0.0
          %1277 = vmatpush.msra.mxu0 0.0
          %1278 = vmatpush.msra.mxu0 %v501
          %1279 = vmatpush.msra.mxu0 %v497
          %1280 = vmatmul.f32.gmra.mxu0 %v1242
          %v1281 = vpop.f32.mrf.mxu0
          %v1282 = vadd.f32 %v470, %v1281
          %1283 = vdwg.mxu0
          %1284 = vmatpush.msra.mxu0 0.0
          %1285 = vmatpush.msra.mxu0 0.0
          %1286 = vmatpush.msra.mxu0 0.0
          %1287 = vmatpush.msra.mxu0 0.0
          %1288 = vmatpush.msra.mxu0 0.0
          %1289 = vmatpush.msra.mxu0 0.0
          %1290 = vmatpush.msra.mxu0 0.0
          %1291 = vmatpush.msra.mxu0 0.0
          %1292 = vmatpush.msra.mxu0 0.0
          %1293 = vmatpush.msra.mxu0 0.0
          %1294 = vmatpush.msra.mxu0 0.0
          %1295 = vmatpush.msra.mxu0 0.0
          %1296 = vmatpush.msra.mxu0 0.0
          %1297 = vmatpush.msra.mxu0 0.0
          %1298 = vmatpush.msra.mxu0 %v502
          %1299 = vmatpush.msra.mxu0 %v498
          %1300 = vmatmul.f32.gmra.mxu0 %v1242
          %v1301 = vpop.f32.mrf.mxu0
          %v1302 = vadd.f32 %v471, %v1301
          %1303 = vdwg.mxu0
          %1304 = vmatpush.msra.mxu0 0.0
          %1305 = vmatpush.msra.mxu0 0.0
          %1306 = vmatpush.msra.mxu0 0.0
          %1307 = vmatpush.msra.mxu0 0.0
          %1308 = vmatpush.msra.mxu0 0.0
          %1309 = vmatpush.msra.mxu0 0.0
          %1310 = vmatpush.msra.mxu0 0.0
          %1311 = vmatpush.msra.mxu0 0.0
          %1312 = vmatpush.msra.mxu0 0.0
          %1313 = vmatpush.msra.mxu0 0.0
          %1314 = vmatpush.msra.mxu0 0.0
          %1315 = vmatpush.msra.mxu0 0.0
          %1316 = vmatpush.msra.mxu0 0.0
          %1317 = vmatpush.msra.mxu0 0.0
          %1318 = vmatpush.msra.mxu0 %v503
          %1319 = vmatpush.msra.mxu0 %v499
          %1320 = vmatmul.f32.gmra.mxu0 %v1242
          %v1321 = vpop.f32.mrf.mxu0
          %v1322 = vadd.f32 %v472, %v1321
          %1323 = vdwg.mxu0
          %1324 = vmatpush.msra.mxu0 %v733
          %1325 = vmatpush.msra.mxu0 %v729
          %1326 = vmatpush.msra.mxu0 %v725
          %1327 = vmatpush.msra.mxu0 %v721
          %1328 = vmatpush.msra.mxu0 %v717
          %1329 = vmatpush.msra.mxu0 %v713
          %1330 = vmatpush.msra.mxu0 %v709
          %1331 = vmatpush.msra.mxu0 %v705
          %1332 = vmatpush.msra.mxu0 %v701
          %1333 = vmatpush.msra.mxu0 %v697
          %1334 = vmatpush.msra.mxu0 %v693
          %1335 = vmatpush.msra.mxu0 %v689
          %1336 = vmatpush.msra.mxu0 %v685
          %1337 = vmatpush.msra.mxu0 %v681
          %1338 = vmatpush.msra.mxu0 %v677
          %1339 = vmatpush.msra.mxu0 %v673
          %1340 = vmatmul.f32.gmra.mxu0 %v1238
          %v1341 = vpop.f32.mrf.mxu0
          %v1342 = vadd.f32 %v479, %v1341
          %1343 = vdwg.mxu0
          %1344 = vmatpush.msra.mxu0 %v734
          %1345 = vmatpush.msra.mxu0 %v730
          %1346 = vmatpush.msra.mxu0 %v726
          %1347 = vmatpush.msra.mxu0 %v722
          %1348 = vmatpush.msra.mxu0 %v718
          %1349 = vmatpush.msra.mxu0 %v714
          %1350 = vmatpush.msra.mxu0 %v710
          %1351 = vmatpush.msra.mxu0 %v706
          %1352 = vmatpush.msra.mxu0 %v702
          %1353 = vmatpush.msra.mxu0 %v698
          %1354 = vmatpush.msra.mxu0 %v694
          %1355 = vmatpush.msra.mxu0 %v690
          %1356 = vmatpush.msra.mxu0 %v686
          %1357 = vmatpush.msra.mxu0 %v682
          %1358 = vmatpush.msra.mxu0 %v678
          %1359 = vmatpush.msra.mxu0 %v674
          %1360 = vmatmul.f32.gmra.mxu0 %v1238
          %v1361 = vpop.f32.mrf.mxu0
          %v1362 = vadd.f32 %v480, %v1361
          %1363 = vdwg.mxu0
          %1364 = vmatpush.msra.mxu0 %v735
          %1365 = vmatpush.msra.mxu0 %v731
          %1366 = vmatpush.msra.mxu0 %v727
          %1367 = vmatpush.msra.mxu0 %v723
          %1368 = vmatpush.msra.mxu0 %v719
          %1369 = vmatpush.msra.mxu0 %v715
          %1370 = vmatpush.msra.mxu0 %v711
          %1371 = vmatpush.msra.mxu0 %v707
          %1372 = vmatpush.msra.mxu0 %v703
          %1373 = vmatpush.msra.mxu0 %v699
          %1374 = vmatpush.msra.mxu0 %v695
          %1375 = vmatpush.msra.mxu0 %v691
          %1376 = vmatpush.msra.mxu0 %v687
          %1377 = vmatpush.msra.mxu0 %v683
          %1378 = vmatpush.msra.mxu0 %v679
          %1379 = vmatpush.msra.mxu0 %v675
          %1380 = vmatmul.f32.gmra.mxu0 %v1238
          %v1381 = vpop.f32.mrf.mxu0
          %v1382 = vadd.f32 %v481, %v1381
          %1383 = vdwg.mxu0
          %1384 = vmatpush.msra.mxu0 %v736
          %1385 = vmatpush.msra.mxu0 %v732
          %1386 = vmatpush.msra.mxu0 %v728
          %1387 = vmatpush.msra.mxu0 %v724
          %1388 = vmatpush.msra.mxu0 %v720
          %1389 = vmatpush.msra.mxu0 %v716
          %1390 = vmatpush.msra.mxu0 %v712
          %1391 = vmatpush.msra.mxu0 %v708
          %1392 = vmatpush.msra.mxu0 %v704
          %1393 = vmatpush.msra.mxu0 %v700
          %1394 = vmatpush.msra.mxu0 %v696
          %1395 = vmatpush.msra.mxu0 %v692
          %1396 = vmatpush.msra.mxu0 %v688
          %1397 = vmatpush.msra.mxu0 %v684
          %1398 = vmatpush.msra.mxu0 %v680
          %1399 = vmatpush.msra.mxu0 %v676
          %1400 = vmatmul.f32.gmra.mxu0 %v1238
          %v1401 = vpop.f32.mrf.mxu0
          %v1402 = vadd.f32 %v482, %v1401
          %1403 = vdwg.mxu0
          %1404 = vmatpush.msra.mxu0 %v877
          %1405 = vmatpush.msra.mxu0 %v873
          %1406 = vmatpush.msra.mxu0 %v869
          %1407 = vmatpush.msra.mxu0 %v865
          %1408 = vmatpush.msra.mxu0 %v861
          %1409 = vmatpush.msra.mxu0 %v857
          %1410 = vmatpush.msra.mxu0 %v853
          %1411 = vmatpush.msra.mxu0 %v849
          %1412 = vmatpush.msra.mxu0 %v845
          %1413 = vmatpush.msra.mxu0 %v841
          %1414 = vmatpush.msra.mxu0 %v837
          %1415 = vmatpush.msra.mxu0 %v833
          %1416 = vmatpush.msra.mxu0 %v829
          %1417 = vmatpush.msra.mxu0 %v825
          %1418 = vmatpush.msra.mxu0 %v821
          %1419 = vmatpush.msra.mxu0 %v817
          %1420 = vmatmul.f32.gmra.mxu0 %v1027
          %v1421 = vpop.f32.mrf.mxu0
          %v1422 = vadd.f32 0.0, %v1421
          %1423 = vdwg.mxu0
          %1424 = vmatpush.msra.mxu0 %v878
          %1425 = vmatpush.msra.mxu0 %v874
          %1426 = vmatpush.msra.mxu0 %v870
          %1427 = vmatpush.msra.mxu0 %v866
          %1428 = vmatpush.msra.mxu0 %v862
          %1429 = vmatpush.msra.mxu0 %v858
          %1430 = vmatpush.msra.mxu0 %v854
          %1431 = vmatpush.msra.mxu0 %v850
          %1432 = vmatpush.msra.mxu0 %v846
          %1433 = vmatpush.msra.mxu0 %v842
          %1434 = vmatpush.msra.mxu0 %v838
          %1435 = vmatpush.msra.mxu0 %v834
          %1436 = vmatpush.msra.mxu0 %v830
          %1437 = vmatpush.msra.mxu0 %v826
          %1438 = vmatpush.msra.mxu0 %v822
          %1439 = vmatpush.msra.mxu0 %v818
          %1440 = vmatmul.f32.gmra.mxu0 %v1027
          %v1441 = vpop.f32.mrf.mxu0
          %v1442 = vadd.f32 0.0, %v1441
          %1443 = vdwg.mxu0
          %1444 = vmatpush.msra.mxu0 %v879
          %1445 = vmatpush.msra.mxu0 %v875
          %1446 = vmatpush.msra.mxu0 %v871
          %1447 = vmatpush.msra.mxu0 %v867
          %1448 = vmatpush.msra.mxu0 %v863
          %1449 = vmatpush.msra.mxu0 %v859
          %1450 = vmatpush.msra.mxu0 %v855
          %1451 = vmatpush.msra.mxu0 %v851
          %1452 = vmatpush.msra.mxu0 %v847
          %1453 = vmatpush.msra.mxu0 %v843
          %1454 = vmatpush.msra.mxu0 %v839
          %1455 = vmatpush.msra.mxu0 %v835
          %1456 = vmatpush.msra.mxu0 %v831
          %1457 = vmatpush.msra.mxu0 %v827
          %1458 = vmatpush.msra.mxu0 %v823
          %1459 = vmatpush.msra.mxu0 %v819
          %1460 = vmatmul.f32.gmra.mxu0 %v1027
          %v1461 = vpop.f32.mrf.mxu0
          %v1462 = vadd.f32 0.0, %v1461
          %1463 = vdwg.mxu0
          %1464 = vmatpush.msra.mxu0 %v880
          %1465 = vmatpush.msra.mxu0 %v876
          %1466 = vmatpush.msra.mxu0 %v872
          %1467 = vmatpush.msra.mxu0 %v868
          %1468 = vmatpush.msra.mxu0 %v864
          %1469 = vmatpush.msra.mxu0 %v860
          %1470 = vmatpush.msra.mxu0 %v856
          %1471 = vmatpush.msra.mxu0 %v852
          %1472 = vmatpush.msra.mxu0 %v848
          %1473 = vmatpush.msra.mxu0 %v844
          %1474 = vmatpush.msra.mxu0 %v840
          %1475 = vmatpush.msra.mxu0 %v836
          %1476 = vmatpush.msra.mxu0 %v832
          %1477 = vmatpush.msra.mxu0 %v828
          %1478 = vmatpush.msra.mxu0 %v824
          %1479 = vmatpush.msra.mxu0 %v820
          %1480 = vmatmul.f32.gmra.mxu0 %v1027
          %v1481 = vpop.f32.mrf.mxu0
          %v1482 = vadd.f32 0.0, %v1481
          %1483 = vdwg.mxu0
          %v1484 = vadd.f32 %v611, %v1422
          %v1485 = vadd.f32 %v631, %v1442
          %v1486 = vadd.f32 %v651, %v1462
          %v1487 = vadd.f32 %v671, %v1482
          %v1488 = vxor.u32 %v1484, 2147483648
          %v1489 = vmul.f32 %v1488, 1.442695
          %v1490 = vpow.pop %v1489
          %v1491 = vadd.f32 %v1490, 1.0
          %v1492 = vrcp.pop %v1491
          %v1493 = vmul.f32 %v1491, %v1492
          %v1494 = vsub.f32 1.0, %v1493
          %v1495 = vmul.f32 %v1492, %v1494
          %v1496 = vadd.f32 %v1492, %v1495
          %vm1497 = vweird.f32 %v1491
          %vm1498 = vweird.f32 %v1492
          %vm1499 = vmor %vm1497, %vm1498
          %v1500 = vsel %vm1499, %v1492, %v1496
          %v1501 = vand.u32 2147483647, %v1491
          %vm1502 = vcmp.eq.f32.partialorder %v1501, 8.507059e+37
          %v1503 = vand.u32 %v1491, 2147483648
          %v1504 = vor.u32 1.1754944e-38, %v1503
          %v1505 = vsel %vm1502, %v1504, %v1500
          %v1506 = vmul.f32 1.0, %v1505
          %v1507 = vxor.u32 %v1485, 2147483648
          %v1508 = vmul.f32 %v1507, 1.442695
          %v1509 = vpow.pop %v1508
          %v1510 = vadd.f32 %v1509, 1.0
          %v1511 = vrcp.pop %v1510
          %v1512 = vmul.f32 %v1510, %v1511
          %v1513 = vsub.f32 1.0, %v1512
          %v1514 = vmul.f32 %v1511, %v1513
          %v1515 = vadd.f32 %v1511, %v1514
          %vm1516 = vweird.f32 %v1510
          %vm1517 = vweird.f32 %v1511
          %vm1518 = vmor %vm1516, %vm1517
          %v1519 = vsel %vm1518, %v1511, %v1515
          %v1520 = vand.u32 2147483647, %v1510
          %vm1521 = vcmp.eq.f32.partialorder %v1520, 8.507059e+37
          %v1522 = vand.u32 %v1510, 2147483648
          %v1523 = vor.u32 1.1754944e-38, %v1522
          %v1524 = vsel %vm1521, %v1523, %v1519
          %v1525 = vmul.f32 1.0, %v1524
          %v1526 = vtanh.pop %v1486
          %v1527 = vxor.u32 %v1487, 2147483648
          %v1528 = vmul.f32 %v1527, 1.442695
          %v1529 = vpow.pop %v1528
          %v1530 = vadd.f32 %v1529, 1.0
          %v1531 = vrcp.pop %v1530
          %v1532 = vmul.f32 %v1530, %v1531
          %v1533 = vsub.f32 1.0, %v1532
          %v1534 = vmul.f32 %v1531, %v1533
          %v1535 = vadd.f32 %v1531, %v1534
          %vm1536 = vweird.f32 %v1530
          %vm1537 = vweird.f32 %v1531
          %vm1538 = vmor %vm1536, %vm1537
          %v1539 = vsel %vm1538, %v1531, %v1535
          %v1540 = vand.u32 2147483647, %v1530
          %vm1541 = vcmp.eq.f32.partialorder %v1540, 8.507059e+37
          %v1542 = vand.u32 %v1530, 2147483648
          %v1543 = vor.u32 1.1754944e-38, %v1542
          %v1544 = vsel %vm1541, %v1543, %v1539
          %v1545 = vmul.f32 1.0, %v1544
          %v1546 = vmul.f32 %v1525, %v1025
          %v1547 = vmul.f32 %v1506, %v1526
          %v1548 = vadd.f32 %v1546, %v1547
          %v1549 = vtanh.pop %v1548
          %v1550 = vmul.f32 %v1545, %v1549
          %1551 = vmatpush.msra.mxu0 %v1088
          %1552 = vmatpush.msra.mxu0 %v1084
          %1553 = vmatpush.msra.mxu0 %v1080
          %1554 = vmatpush.msra.mxu0 %v1076
          %1555 = vmatpush.msra.mxu0 %v1072
          %1556 = vmatpush.msra.mxu0 %v1068
          %1557 = vmatpush.msra.mxu0 %v1064
          %1558 = vmatpush.msra.mxu0 %v1060
          %1559 = vmatpush.msra.mxu0 %v1056
          %1560 = vmatpush.msra.mxu0 %v1052
          %1561 = vmatpush.msra.mxu0 %v1048
          %1562 = vmatpush.msra.mxu0 %v1044
          %1563 = vmatpush.msra.mxu0 %v1040
          %1564 = vmatpush.msra.mxu0 %v1036
          %1565 = vmatpush.msra.mxu0 %v1032
          %1566 = vmatpush.msra.mxu0 %v1028
          %1567 = vmatmul.f32.gmra.mxu0 %v1550
          %v1568 = vpop.f32.mrf.mxu0
          %v1569 = vadd.f32 0.0, %v1568
          %1570 = vdwg.mxu0
          %1571 = vmatpush.msra.mxu0 %v1089
          %1572 = vmatpush.msra.mxu0 %v1085
          %1573 = vmatpush.msra.mxu0 %v1081
          %1574 = vmatpush.msra.mxu0 %v1077
          %1575 = vmatpush.msra.mxu0 %v1073
          %1576 = vmatpush.msra.mxu0 %v1069
          %1577 = vmatpush.msra.mxu0 %v1065
          %1578 = vmatpush.msra.mxu0 %v1061
          %1579 = vmatpush.msra.mxu0 %v1057
          %1580 = vmatpush.msra.mxu0 %v1053
          %1581 = vmatpush.msra.mxu0 %v1049
          %1582 = vmatpush.msra.mxu0 %v1045
          %1583 = vmatpush.msra.mxu0 %v1041
          %1584 = vmatpush.msra.mxu0 %v1037
          %1585 = vmatpush.msra.mxu0 %v1033
          %1586 = vmatpush.msra.mxu0 %v1029
          %1587 = vmatmul.f32.gmra.mxu0 %v1550
          %v1588 = vpop.f32.mrf.mxu0
          %v1589 = vadd.f32 0.0, %v1588
          %1590 = vdwg.mxu0
          %1591 = vmatpush.msra.mxu0 %v1090
          %1592 = vmatpush.msra.mxu0 %v1086
          %1593 = vmatpush.msra.mxu0 %v1082
          %1594 = vmatpush.msra.mxu0 %v1078
          %1595 = vmatpush.msra.mxu0 %v1074
          %1596 = vmatpush.msra.mxu0 %v1070
          %1597 = vmatpush.msra.mxu0 %v1066
          %1598 = vmatpush.msra.mxu0 %v1062
          %1599 = vmatpush.msra.mxu0 %v1058
          %1600 = vmatpush.msra.mxu0 %v1054
          %1601 = vmatpush.msra.mxu0 %v1050
          %1602 = vmatpush.msra.mxu0 %v1046
          %1603 = vmatpush.msra.mxu0 %v1042
          %1604 = vmatpush.msra.mxu0 %v1038
          %1605 = vmatpush.msra.mxu0 %v1034
          %1606 = vmatpush.msra.mxu0 %v1030
          %1607 = vmatmul.f32.gmra.mxu0 %v1550
          %v1608 = vpop.f32.mrf.mxu0
          %v1609 = vadd.f32 0.0, %v1608
          %1610 = vdwg.mxu0
          %1611 = vmatpush.msra.mxu0 %v1091
          %1612 = vmatpush.msra.mxu0 %v1087
          %1613 = vmatpush.msra.mxu0 %v1083
          %1614 = vmatpush.msra.mxu0 %v1079
          %1615 = vmatpush.msra.mxu0 %v1075
          %1616 = vmatpush.msra.mxu0 %v1071
          %1617 = vmatpush.msra.mxu0 %v1067
          %1618 = vmatpush.msra.mxu0 %v1063
          %1619 = vmatpush.msra.mxu0 %v1059
          %1620 = vmatpush.msra.mxu0 %v1055
          %1621 = vmatpush.msra.mxu0 %v1051
          %1622 = vmatpush.msra.mxu0 %v1047
          %1623 = vmatpush.msra.mxu0 %v1043
          %1624 = vmatpush.msra.mxu0 %v1039
          %1625 = vmatpush.msra.mxu0 %v1035
          %1626 = vmatpush.msra.mxu0 %v1031
          %1627 = vmatmul.f32.gmra.mxu0 %v1550
          %v1628 = vpop.f32.mrf.mxu0
          %v1629 = vadd.f32 0.0, %v1628
          %1630 = vdwg.mxu0
          %v1631 = vadd.f32 %v1342, %v1569
          %v1632 = vadd.f32 %v1362, %v1589
          %v1633 = vadd.f32 %v1382, %v1609
          %v1634 = vadd.f32 %v1402, %v1629
          %v1635 = vxor.u32 %v1631, 2147483648
          %v1636 = vmul.f32 %v1635, 1.442695
          %v1637 = vpow.pop %v1636
          %v1638 = vadd.f32 %v1637, 1.0
          %v1639 = vrcp.pop %v1638
          %v1640 = vmul.f32 %v1638, %v1639
          %v1641 = vsub.f32 1.0, %v1640
          %v1642 = vmul.f32 %v1639, %v1641
          %v1643 = vadd.f32 %v1639, %v1642
          %vm1644 = vweird.f32 %v1638
          %vm1645 = vweird.f32 %v1639
          %vm1646 = vmor %vm1644, %vm1645
          %v1647 = vsel %vm1646, %v1639, %v1643
          %v1648 = vand.u32 2147483647, %v1638
          %vm1649 = vcmp.eq.f32.partialorder %v1648, 8.507059e+37
          %v1650 = vand.u32 %v1638, 2147483648
          %v1651 = vor.u32 1.1754944e-38, %v1650
          %v1652 = vsel %vm1649, %v1651, %v1647
          %v1653 = vmul.f32 1.0, %v1652
          %v1654 = vxor.u32 %v1632, 2147483648
          %v1655 = vmul.f32 %v1654, 1.442695
          %v1656 = vpow.pop %v1655
          %v1657 = vadd.f32 %v1656, 1.0
          %v1658 = vrcp.pop %v1657
          %v1659 = vmul.f32 %v1657, %v1658
          %v1660 = vsub.f32 1.0, %v1659
          %v1661 = vmul.f32 %v1658, %v1660
          %v1662 = vadd.f32 %v1658, %v1661
          %vm1663 = vweird.f32 %v1657
          %vm1664 = vweird.f32 %v1658
          %vm1665 = vmor %vm1663, %vm1664
          %v1666 = vsel %vm1665, %v1658, %v1662
          %v1667 = vand.u32 2147483647, %v1657
          %vm1668 = vcmp.eq.f32.partialorder %v1667, 8.507059e+37
          %v1669 = vand.u32 %v1657, 2147483648
          %v1670 = vor.u32 1.1754944e-38, %v1669
          %v1671 = vsel %vm1668, %v1670, %v1666
          %v1672 = vmul.f32 1.0, %v1671
          %v1673 = vtanh.pop %v1633
          %v1674 = vxor.u32 %v1634, 2147483648
          %v1675 = vmul.f32 %v1674, 1.442695
          %v1676 = vpow.pop %v1675
          %v1677 = vadd.f32 %v1676, 1.0
          %v1678 = vrcp.pop %v1677
          %v1679 = vmul.f32 %v1677, %v1678
          %v1680 = vsub.f32 1.0, %v1679
          %v1681 = vmul.f32 %v1678, %v1680
          %v1682 = vadd.f32 %v1678, %v1681
          %vm1683 = vweird.f32 %v1677
          %vm1684 = vweird.f32 %v1678
          %vm1685 = vmor %vm1683, %vm1684
          %v1686 = vsel %vm1685, %v1678, %v1682
          %v1687 = vand.u32 2147483647, %v1677
          %vm1688 = vcmp.eq.f32.partialorder %v1687, 8.507059e+37
          %v1689 = vand.u32 %v1677, 2147483648
          %v1690 = vor.u32 1.1754944e-38, %v1689
          %v1691 = vsel %vm1688, %v1690, %v1686
          %v1692 = vmul.f32 1.0, %v1691
          %v1693 = vmul.f32 %v1672, %v1236
          %v1694 = vmul.f32 %v1653, %v1673
          %v1695 = vadd.f32 %v1693, %v1694
          %v1696 = vtanh.pop %v1695
          %v1697 = vmul.f32 %v1692, %v1696
          %1698 = vmatpush.msra.mxu0 %v733
          %1699 = vmatpush.msra.mxu0 %v729
          %1700 = vmatpush.msra.mxu0 %v725
          %1701 = vmatpush.msra.mxu0 %v721
          %1702 = vmatpush.msra.mxu0 %v717
          %1703 = vmatpush.msra.mxu0 %v713
          %1704 = vmatpush.msra.mxu0 %v709
          %1705 = vmatpush.msra.mxu0 %v705
          %1706 = vmatpush.msra.mxu0 %v701
          %1707 = vmatpush.msra.mxu0 %v697
          %1708 = vmatpush.msra.mxu0 %v693
          %1709 = vmatpush.msra.mxu0 %v689
          %1710 = vmatpush.msra.mxu0 %v685
          %1711 = vmatpush.msra.mxu0 %v681
          %1712 = vmatpush.msra.mxu0 %v677
          %1713 = vmatpush.msra.mxu0 %v673
          %1714 = vmatmul.f32.gmra.mxu0 %v1697
          %v1715 = vpop.f32.mrf.mxu0
          %v1716 = vadd.f32 %v479, %v1715
          %1717 = vdwg.mxu0
          %1718 = vmatpush.msra.mxu0 %v734
          %1719 = vmatpush.msra.mxu0 %v730
          %1720 = vmatpush.msra.mxu0 %v726
          %1721 = vmatpush.msra.mxu0 %v722
          %1722 = vmatpush.msra.mxu0 %v718
          %1723 = vmatpush.msra.mxu0 %v714
          %1724 = vmatpush.msra.mxu0 %v710
          %1725 = vmatpush.msra.mxu0 %v706
          %1726 = vmatpush.msra.mxu0 %v702
          %1727 = vmatpush.msra.mxu0 %v698
          %1728 = vmatpush.msra.mxu0 %v694
          %1729 = vmatpush.msra.mxu0 %v690
          %1730 = vmatpush.msra.mxu0 %v686
          %1731 = vmatpush.msra.mxu0 %v682
          %1732 = vmatpush.msra.mxu0 %v678
          %1733 = vmatpush.msra.mxu0 %v674
          %1734 = vmatmul.f32.gmra.mxu0 %v1697
          %v1735 = vpop.f32.mrf.mxu0
          %v1736 = vadd.f32 %v480, %v1735
          %1737 = vdwg.mxu0
          %1738 = vmatpush.msra.mxu0 %v735
          %1739 = vmatpush.msra.mxu0 %v731
          %1740 = vmatpush.msra.mxu0 %v727
          %1741 = vmatpush.msra.mxu0 %v723
          %1742 = vmatpush.msra.mxu0 %v719
          %1743 = vmatpush.msra.mxu0 %v715
          %1744 = vmatpush.msra.mxu0 %v711
          %1745 = vmatpush.msra.mxu0 %v707
          %1746 = vmatpush.msra.mxu0 %v703
          %1747 = vmatpush.msra.mxu0 %v699
          %1748 = vmatpush.msra.mxu0 %v695
          %1749 = vmatpush.msra.mxu0 %v691
          %1750 = vmatpush.msra.mxu0 %v687
          %1751 = vmatpush.msra.mxu0 %v683
          %1752 = vmatpush.msra.mxu0 %v679
          %1753 = vmatpush.msra.mxu0 %v675
          %1754 = vmatmul.f32.gmra.mxu0 %v1697
          %v1755 = vpop.f32.mrf.mxu0
          %v1756 = vadd.f32 %v481, %v1755
          %1757 = vdwg.mxu0
          %1758 = vmatpush.msra.mxu0 %v736
          %1759 = vmatpush.msra.mxu0 %v732
          %1760 = vmatpush.msra.mxu0 %v728
          %1761 = vmatpush.msra.mxu0 %v724
          %1762 = vmatpush.msra.mxu0 %v720
          %1763 = vmatpush.msra.mxu0 %v716
          %1764 = vmatpush.msra.mxu0 %v712
          %1765 = vmatpush.msra.mxu0 %v708
          %1766 = vmatpush.msra.mxu0 %v704
          %1767 = vmatpush.msra.mxu0 %v700
          %1768 = vmatpush.msra.mxu0 %v696
          %1769 = vmatpush.msra.mxu0 %v692
          %1770 = vmatpush.msra.mxu0 %v688
          %1771 = vmatpush.msra.mxu0 %v684
          %1772 = vmatpush.msra.mxu0 %v680
          %1773 = vmatpush.msra.mxu0 %v676
          %1774 = vmatmul.f32.gmra.mxu0 %v1697
          %v1775 = vpop.f32.mrf.mxu0
          %v1776 = vadd.f32 %v482, %v1775
          %1777 = vdwg.mxu0
          %1778 = vmatpush.msra.mxu0 %v877
          %1779 = vmatpush.msra.mxu0 %v873
          %1780 = vmatpush.msra.mxu0 %v869
          %1781 = vmatpush.msra.mxu0 %v865
          %1782 = vmatpush.msra.mxu0 %v861
          %1783 = vmatpush.msra.mxu0 %v857
          %1784 = vmatpush.msra.mxu0 %v853
          %1785 = vmatpush.msra.mxu0 %v849
          %1786 = vmatpush.msra.mxu0 %v845
          %1787 = vmatpush.msra.mxu0 %v841
          %1788 = vmatpush.msra.mxu0 %v837
          %1789 = vmatpush.msra.mxu0 %v833
          %1790 = vmatpush.msra.mxu0 %v829
          %1791 = vmatpush.msra.mxu0 %v825
          %1792 = vmatpush.msra.mxu0 %v821
          %1793 = vmatpush.msra.mxu0 %v817
          %1794 = vmatmul.f32.gmra.mxu0 %v1550
          %v1795 = vpop.f32.mrf.mxu0
          %v1796 = vadd.f32 0.0, %v1795
          %1797 = vdwg.mxu0
          %1798 = vmatpush.msra.mxu0 %v878
          %1799 = vmatpush.msra.mxu0 %v874
          %1800 = vmatpush.msra.mxu0 %v870
          %1801 = vmatpush.msra.mxu0 %v866
          %1802 = vmatpush.msra.mxu0 %v862
          %1803 = vmatpush.msra.mxu0 %v858
          %1804 = vmatpush.msra.mxu0 %v854
          %1805 = vmatpush.msra.mxu0 %v850
          %1806 = vmatpush.msra.mxu0 %v846
          %1807 = vmatpush.msra.mxu0 %v842
          %1808 = vmatpush.msra.mxu0 %v838
          %1809 = vmatpush.msra.mxu0 %v834
          %1810 = vmatpush.msra.mxu0 %v830
          %1811 = vmatpush.msra.mxu0 %v826
          %1812 = vmatpush.msra.mxu0 %v822
          %1813 = vmatpush.msra.mxu0 %v818
          %1814 = vmatmul.f32.gmra.mxu0 %v1550
          %v1815 = vpop.f32.mrf.mxu0
          %v1816 = vadd.f32 0.0, %v1815
          %1817 = vdwg.mxu0
          %1818 = vmatpush.msra.mxu0 %v879
          %1819 = vmatpush.msra.mxu0 %v875
          %1820 = vmatpush.msra.mxu0 %v871
          %1821 = vmatpush.msra.mxu0 %v867
          %1822 = vmatpush.msra.mxu0 %v863
          %1823 = vmatpush.msra.mxu0 %v859
          %1824 = vmatpush.msra.mxu0 %v855
          %1825 = vmatpush.msra.mxu0 %v851
          %1826 = vmatpush.msra.mxu0 %v847
          %1827 = vmatpush.msra.mxu0 %v843
          %1828 = vmatpush.msra.mxu0 %v839
          %1829 = vmatpush.msra.mxu0 %v835
          %1830 = vmatpush.msra.mxu0 %v831
          %1831 = vmatpush.msra.mxu0 %v827
          %1832 = vmatpush.msra.mxu0 %v823
          %1833 = vmatpush.msra.mxu0 %v819
          %1834 = vmatmul.f32.gmra.mxu0 %v1550
          %v1835 = vpop.f32.mrf.mxu0
          %v1836 = vadd.f32 0.0, %v1835
          %1837 = vdwg.mxu0
          %1838 = vmatpush.msra.mxu0 %v880
          %1839 = vmatpush.msra.mxu0 %v876
          %1840 = vmatpush.msra.mxu0 %v872
          %1841 = vmatpush.msra.mxu0 %v868
          %1842 = vmatpush.msra.mxu0 %v864
          %1843 = vmatpush.msra.mxu0 %v860
          %1844 = vmatpush.msra.mxu0 %v856
          %1845 = vmatpush.msra.mxu0 %v852
          %1846 = vmatpush.msra.mxu0 %v848
          %1847 = vmatpush.msra.mxu0 %v844
          %1848 = vmatpush.msra.mxu0 %v840
          %1849 = vmatpush.msra.mxu0 %v836
          %1850 = vmatpush.msra.mxu0 %v832
          %1851 = vmatpush.msra.mxu0 %v828
          %1852 = vmatpush.msra.mxu0 %v824
          %1853 = vmatpush.msra.mxu0 %v820
          %1854 = vmatmul.f32.gmra.mxu0 %v1550
          %v1855 = vpop.f32.mrf.mxu0
          %v1856 = vadd.f32 0.0, %v1855
          %1857 = vdwg.mxu0
          %v1858 = vadd.f32 %v1262, %v1796
          %v1859 = vadd.f32 %v1282, %v1816
          %v1860 = vadd.f32 %v1302, %v1836
          %v1861 = vadd.f32 %v1322, %v1856
          %v1862 = vxor.u32 %v1858, 2147483648
          %v1863 = vmul.f32 %v1862, 1.442695
          %v1864 = vpow.pop %v1863
          %v1865 = vadd.f32 %v1864, 1.0
          %v1866 = vrcp.pop %v1865
          %v1867 = vmul.f32 %v1865, %v1866
          %v1868 = vsub.f32 1.0, %v1867
          %v1869 = vmul.f32 %v1866, %v1868
          %v1870 = vadd.f32 %v1866, %v1869
          %vm1871 = vweird.f32 %v1865
          %vm1872 = vweird.f32 %v1866
          %vm1873 = vmor %vm1871, %vm1872
          %v1874 = vsel %vm1873, %v1866, %v1870
          %v1875 = vand.u32 2147483647, %v1865
          %vm1876 = vcmp.eq.f32.partialorder %v1875, 8.507059e+37
          %v1877 = vand.u32 %v1865, 2147483648
          %v1878 = vor.u32 1.1754944e-38, %v1877
          %v1879 = vsel %vm1876, %v1878, %v1874
          %v1880 = vmul.f32 1.0, %v1879
          %v1881 = vxor.u32 %v1859, 2147483648
          %v1882 = vmul.f32 %v1881, 1.442695
          %v1883 = vpow.pop %v1882
          %v1884 = vadd.f32 %v1883, 1.0
          %v1885 = vrcp.pop %v1884
          %v1886 = vmul.f32 %v1884, %v1885
          %v1887 = vsub.f32 1.0, %v1886
          %v1888 = vmul.f32 %v1885, %v1887
          %v1889 = vadd.f32 %v1885, %v1888
          %vm1890 = vweird.f32 %v1884
          %vm1891 = vweird.f32 %v1885
          %vm1892 = vmor %vm1890, %vm1891
          %v1893 = vsel %vm1892, %v1885, %v1889
          %v1894 = vand.u32 2147483647, %v1884
          %vm1895 = vcmp.eq.f32.partialorder %v1894, 8.507059e+37
          %v1896 = vand.u32 %v1884, 2147483648
          %v1897 = vor.u32 1.1754944e-38, %v1896
          %v1898 = vsel %vm1895, %v1897, %v1893
          %v1899 = vmul.f32 1.0, %v1898
          %v1900 = vtanh.pop %v1860
          %v1901 = vxor.u32 %v1861, 2147483648
          %v1902 = vmul.f32 %v1901, 1.442695
          %v1903 = vpow.pop %v1902
          %v1904 = vadd.f32 %v1903, 1.0
          %v1905 = vrcp.pop %v1904
          %v1906 = vmul.f32 %v1904, %v1905
          %v1907 = vsub.f32 1.0, %v1906
          %v1908 = vmul.f32 %v1905, %v1907
          %v1909 = vadd.f32 %v1905, %v1908
          %vm1910 = vweird.f32 %v1904
          %vm1911 = vweird.f32 %v1905
          %vm1912 = vmor %vm1910, %vm1911
          %v1913 = vsel %vm1912, %v1905, %v1909
          %v1914 = vand.u32 2147483647, %v1904
          %vm1915 = vcmp.eq.f32.partialorder %v1914, 8.507059e+37
          %v1916 = vand.u32 %v1904, 2147483648
          %v1917 = vor.u32 1.1754944e-38, %v1916
          %v1918 = vsel %vm1915, %v1917, %v1913
          %v1919 = vmul.f32 1.0, %v1918
          %v1920 = vmul.f32 %v1899, %v1548
          %v1921 = vmul.f32 %v1880, %v1900
          %v1922 = vadd.f32 %v1920, %v1921
          %v1923 = vtanh.pop %v1922
          %v1924 = vmul.f32 %v1919, %v1923
          %1925 = vmatpush.msra.mxu0 %v1088
          %1926 = vmatpush.msra.mxu0 %v1084
          %1927 = vmatpush.msra.mxu0 %v1080
          %1928 = vmatpush.msra.mxu0 %v1076
          %1929 = vmatpush.msra.mxu0 %v1072
          %1930 = vmatpush.msra.mxu0 %v1068
          %1931 = vmatpush.msra.mxu0 %v1064
          %1932 = vmatpush.msra.mxu0 %v1060
          %1933 = vmatpush.msra.mxu0 %v1056
          %1934 = vmatpush.msra.mxu0 %v1052
          %1935 = vmatpush.msra.mxu0 %v1048
          %1936 = vmatpush.msra.mxu0 %v1044
          %1937 = vmatpush.msra.mxu0 %v1040
          %1938 = vmatpush.msra.mxu0 %v1036
          %1939 = vmatpush.msra.mxu0 %v1032
          %1940 = vmatpush.msra.mxu0 %v1028
          %1941 = vmatmul.f32.gmra.mxu0 %v1924
          %v1942 = vpop.f32.mrf.mxu0
          %v1943 = vadd.f32 0.0, %v1942
          %1944 = vdwg.mxu0
          %1945 = vmatpush.msra.mxu0 %v1089
          %1946 = vmatpush.msra.mxu0 %v1085
          %1947 = vmatpush.msra.mxu0 %v1081
          %1948 = vmatpush.msra.mxu0 %v1077
          %1949 = vmatpush.msra.mxu0 %v1073
          %1950 = vmatpush.msra.mxu0 %v1069
          %1951 = vmatpush.msra.mxu0 %v1065
          %1952 = vmatpush.msra.mxu0 %v1061
          %1953 = vmatpush.msra.mxu0 %v1057
          %1954 = vmatpush.msra.mxu0 %v1053
          %1955 = vmatpush.msra.mxu0 %v1049
          %1956 = vmatpush.msra.mxu0 %v1045
          %1957 = vmatpush.msra.mxu0 %v1041
          %1958 = vmatpush.msra.mxu0 %v1037
          %1959 = vmatpush.msra.mxu0 %v1033
          %1960 = vmatpush.msra.mxu0 %v1029
          %1961 = vmatmul.f32.gmra.mxu0 %v1924
          %v1962 = vpop.f32.mrf.mxu0
          %v1963 = vadd.f32 0.0, %v1962
          %1964 = vdwg.mxu0
          %1965 = vmatpush.msra.mxu0 %v1090
          %1966 = vmatpush.msra.mxu0 %v1086
          %1967 = vmatpush.msra.mxu0 %v1082
          %1968 = vmatpush.msra.mxu0 %v1078
          %1969 = vmatpush.msra.mxu0 %v1074
          %1970 = vmatpush.msra.mxu0 %v1070
          %1971 = vmatpush.msra.mxu0 %v1066
          %1972 = vmatpush.msra.mxu0 %v1062
          %1973 = vmatpush.msra.mxu0 %v1058
          %1974 = vmatpush.msra.mxu0 %v1054
          %1975 = vmatpush.msra.mxu0 %v1050
          %1976 = vmatpush.msra.mxu0 %v1046
          %1977 = vmatpush.msra.mxu0 %v1042
          %1978 = vmatpush.msra.mxu0 %v1038
          %1979 = vmatpush.msra.mxu0 %v1034
          %1980 = vmatpush.msra.mxu0 %v1030
          %1981 = vmatmul.f32.gmra.mxu0 %v1924
          %v1982 = vpop.f32.mrf.mxu0
          %v1983 = vadd.f32 0.0, %v1982
          %1984 = vdwg.mxu0
          %1985 = vmatpush.msra.mxu0 %v1091
          %1986 = vmatpush.msra.mxu0 %v1087
          %1987 = vmatpush.msra.mxu0 %v1083
          %1988 = vmatpush.msra.mxu0 %v1079
          %1989 = vmatpush.msra.mxu0 %v1075
          %1990 = vmatpush.msra.mxu0 %v1071
          %1991 = vmatpush.msra.mxu0 %v1067
          %1992 = vmatpush.msra.mxu0 %v1063
          %1993 = vmatpush.msra.mxu0 %v1059
          %1994 = vmatpush.msra.mxu0 %v1055
          %1995 = vmatpush.msra.mxu0 %v1051
          %1996 = vmatpush.msra.mxu0 %v1047
          %1997 = vmatpush.msra.mxu0 %v1043
          %1998 = vmatpush.msra.mxu0 %v1039
          %1999 = vmatpush.msra.mxu0 %v1035
          %2000 = vmatpush.msra.mxu0 %v1031
          %2001 = vmatmul.f32.gmra.mxu0 %v1924
          %v2002 = vpop.f32.mrf.mxu0
          %v2003 = vadd.f32 0.0, %v2002
          %2004 = vdwg.mxu0
          %v2005 = vadd.f32 %v1716, %v1943
          %v2006 = vadd.f32 %v1736, %v1963
          %v2007 = vadd.f32 %v1756, %v1983
          %v2008 = vadd.f32 %v1776, %v2003
          %v2009 = vxor.u32 %v2005, 2147483648
          %v2010 = vmul.f32 %v2009, 1.442695
          %v2011 = vpow.pop %v2010
          %v2012 = vadd.f32 %v2011, 1.0
          %v2013 = vrcp.pop %v2012
          %v2014 = vmul.f32 %v2012, %v2013
          %v2015 = vsub.f32 1.0, %v2014
          %v2016 = vmul.f32 %v2013, %v2015
          %v2017 = vadd.f32 %v2013, %v2016
          %vm2018 = vweird.f32 %v2012
          %vm2019 = vweird.f32 %v2013
          %vm2020 = vmor %vm2018, %vm2019
          %v2021 = vsel %vm2020, %v2013, %v2017
          %v2022 = vand.u32 2147483647, %v2012
          %vm2023 = vcmp.eq.f32.partialorder %v2022, 8.507059e+37
          %v2024 = vand.u32 %v2012, 2147483648
          %v2025 = vor.u32 1.1754944e-38, %v2024
          %v2026 = vsel %vm2023, %v2025, %v2021
          %v2027 = vmul.f32 1.0, %v2026
          %v2028 = vxor.u32 %v2006, 2147483648
          %v2029 = vmul.f32 %v2028, 1.442695
          %v2030 = vpow.pop %v2029
          %v2031 = vadd.f32 %v2030, 1.0
          %v2032 = vrcp.pop %v2031
          %v2033 = vmul.f32 %v2031, %v2032
          %v2034 = vsub.f32 1.0, %v2033
          %v2035 = vmul.f32 %v2032, %v2034
          %v2036 = vadd.f32 %v2032, %v2035
          %vm2037 = vweird.f32 %v2031
          %vm2038 = vweird.f32 %v2032
          %vm2039 = vmor %vm2037, %vm2038
          %v2040 = vsel %vm2039, %v2032, %v2036
          %v2041 = vand.u32 2147483647, %v2031
          %vm2042 = vcmp.eq.f32.partialorder %v2041, 8.507059e+37
          %v2043 = vand.u32 %v2031, 2147483648
          %v2044 = vor.u32 1.1754944e-38, %v2043
          %v2045 = vsel %vm2042, %v2044, %v2040
          %v2046 = vmul.f32 1.0, %v2045
          %v2047 = vtanh.pop %v2007
          %v2048 = vxor.u32 %v2008, 2147483648
          %v2049 = vmul.f32 %v2048, 1.442695
          %v2050 = vpow.pop %v2049
          %v2051 = vadd.f32 %v2050, 1.0
          %v2052 = vrcp.pop %v2051
          %v2053 = vmul.f32 %v2051, %v2052
          %v2054 = vsub.f32 1.0, %v2053
          %v2055 = vmul.f32 %v2052, %v2054
          %v2056 = vadd.f32 %v2052, %v2055
          %vm2057 = vweird.f32 %v2051
          %vm2058 = vweird.f32 %v2052
          %vm2059 = vmor %vm2057, %vm2058
          %v2060 = vsel %vm2059, %v2052, %v2056
          %v2061 = vand.u32 2147483647, %v2051
          %vm2062 = vcmp.eq.f32.partialorder %v2061, 8.507059e+37
          %v2063 = vand.u32 %v2051, 2147483648
          %v2064 = vor.u32 1.1754944e-38, %v2063
          %v2065 = vsel %vm2062, %v2064, %v2060
          %v2066 = vmul.f32 1.0, %v2065
          %v2067 = vmul.f32 %v2046, %v1695
          %v2068 = vmul.f32 %v2027, %v2047
          %v2069 = vadd.f32 %v2067, %v2068
          %v2070 = vtanh.pop %v2069
          %v2071 = vmul.f32 %v2066, %v2070
          %2072 = vst [vmem:[#allocation2] sm:$0xff] %v1924
          %2073 = vst [vmem:[#allocation3] sm:$0xff] %v1922
          %2074 = vst [vmem:[#allocation4] sm:$0xff] %v2071
          %2075 = vst [vmem:[#allocation5] sm:$0xff] %v2069
        $region92: #{tpu_custom_call.1} parent=55 // pred_fallthru
          _
        %p2076 = scmp.eq.s32.totalorder %s32, 2
        // Predicated region
        $region93: #{tpu_custom_call.1} parent=55 // pred_check
          %p2077 = pneg %p2076
        $region94: #{tpu_custom_call.1} parent=55 // pred_check_branch
          %2079 = sbr.rel (%p2077) target = $region96
        $region95: #{tpu_custom_call.1} parent=55 // pred_region
          %v2080 = vld [vmem:[#allocation2] sm:$0xff]
          %v2081 = vld [vmem:[#allocation3] sm:$0xff]
          %v2082 = vld [vmem:[#allocation4] sm:$0xff]
          %v2083 = vld [vmem:[#allocation5] sm:$0xff]
          %v2084 = vld [vmem:[%s397] sm:$0xff]
          %v2085 = vld [vmem:[#allocation9] sm:$0xff]
          %v2086 = vld [vmem:[#allocation9 + $0x8] sm:$0xff]
          %v2087 = vld [vmem:[#allocation9 + $0x10] sm:$0xff]
          %v2088 = vld [vmem:[#allocation9 + $0x18] sm:$0xff]
          %v2089 = vld [vmem:[#allocation9 + $0x20] sm:$0xff]
          %v2090 = vld [vmem:[#allocation9 + $0x28] sm:$0xff]
          %v2091 = vld [vmem:[#allocation9 + $0x30] sm:$0xff]
          %v2092 = vld [vmem:[#allocation9 + $0x38] sm:$0xff]
          %vm2093 = vcmask 130048
          %v2095 = vsel %vm2093, %v2084, 0
          %2097 = vmatpush.msra.mxu0 0.0
          %2098 = vmatpush.msra.mxu0 0.0
          %2099 = vmatpush.msra.mxu0 0.0
          %2100 = vmatpush.msra.mxu0 0.0
          %2101 = vmatpush.msra.mxu0 0.0
          %2102 = vmatpush.msra.mxu0 0.0
          %2103 = vmatpush.msra.mxu0 0.0
          %2104 = vmatpush.msra.mxu0 0.0
          %2105 = vmatpush.msra.mxu0 0.0
          %2106 = vmatpush.msra.mxu0 0.0
          %2107 = vmatpush.msra.mxu0 0.0
          %2108 = vmatpush.msra.mxu0 0.0
          %2109 = vmatpush.msra.mxu0 0.0
          %2110 = vmatpush.msra.mxu0 0.0
          %2111 = vmatpush.msra.mxu0 %v2089
          %2112 = vmatpush.msra.mxu0 %v2085
          %2113 = vmatmul.f32.gmra.mxu0 %v2095
          %v2114 = vpop.f32.mrf.mxu0
          %v2115 = vadd.f32 %v469, %v2114
          %2116 = vdwg.mxu0
          %2117 = vmatpush.msra.mxu0 0.0
          %2118 = vmatpush.msra.mxu0 0.0
          %2119 = vmatpush.msra.mxu0 0.0
          %2120 = vmatpush.msra.mxu0 0.0
          %2121 = vmatpush.msra.mxu0 0.0
          %2122 = vmatpush.msra.mxu0 0.0
          %2123 = vmatpush.msra.mxu0 0.0
          %2124 = vmatpush.msra.mxu0 0.0
          %2125 = vmatpush.msra.mxu0 0.0
          %2126 = vmatpush.msra.mxu0 0.0
          %2127 = vmatpush.msra.mxu0 0.0
          %2128 = vmatpush.msra.mxu0 0.0
          %2129 = vmatpush.msra.mxu0 0.0
          %2130 = vmatpush.msra.mxu0 0.0
          %2131 = vmatpush.msra.mxu0 %v2090
          %2132 = vmatpush.msra.mxu0 %v2086
          %2133 = vmatmul.f32.gmra.mxu0 %v2095
          %v2134 = vpop.f32.mrf.mxu0
          %v2135 = vadd.f32 %v470, %v2134
          %2136 = vdwg.mxu0
          %2137 = vmatpush.msra.mxu0 0.0
          %2138 = vmatpush.msra.mxu0 0.0
          %2139 = vmatpush.msra.mxu0 0.0
          %2140 = vmatpush.msra.mxu0 0.0
          %2141 = vmatpush.msra.mxu0 0.0
          %2142 = vmatpush.msra.mxu0 0.0
          %2143 = vmatpush.msra.mxu0 0.0
          %2144 = vmatpush.msra.mxu0 0.0
          %2145 = vmatpush.msra.mxu0 0.0
          %2146 = vmatpush.msra.mxu0 0.0
          %2147 = vmatpush.msra.mxu0 0.0
          %2148 = vmatpush.msra.mxu0 0.0
          %2149 = vmatpush.msra.mxu0 0.0
          %2150 = vmatpush.msra.mxu0 0.0
          %2151 = vmatpush.msra.mxu0 %v2091
          %2152 = vmatpush.msra.mxu0 %v2087
          %2153 = vmatmul.f32.gmra.mxu0 %v2095
          %v2154 = vpop.f32.mrf.mxu0
          %v2155 = vadd.f32 %v471, %v2154
          %2156 = vdwg.mxu0
          %2157 = vmatpush.msra.mxu0 0.0
          %2158 = vmatpush.msra.mxu0 0.0
          %2159 = vmatpush.msra.mxu0 0.0
          %2160 = vmatpush.msra.mxu0 0.0
          %2161 = vmatpush.msra.mxu0 0.0
          %2162 = vmatpush.msra.mxu0 0.0
          %2163 = vmatpush.msra.mxu0 0.0
          %2164 = vmatpush.msra.mxu0 0.0
          %2165 = vmatpush.msra.mxu0 0.0
          %2166 = vmatpush.msra.mxu0 0.0
          %2167 = vmatpush.msra.mxu0 0.0
          %2168 = vmatpush.msra.mxu0 0.0
          %2169 = vmatpush.msra.mxu0 0.0
          %2170 = vmatpush.msra.mxu0 0.0
          %2171 = vmatpush.msra.mxu0 %v2092
          %2172 = vmatpush.msra.mxu0 %v2088
          %2173 = vmatmul.f32.gmra.mxu0 %v2095
          %v2174 = vpop.f32.mrf.mxu0
          %v2175 = vadd.f32 %v472, %v2174
          %2176 = vdwg.mxu0
          %s2177 = scalar_lea.vmem %s397, 8 [#allocation6]
          %v2178 = vld [vmem:[%s2177] sm:$0xff]
          %v2180 = vsel %vm2093, %v2178, 0
          %2182 = vmatpush.msra.mxu0 0.0
          %2183 = vmatpush.msra.mxu0 0.0
          %2184 = vmatpush.msra.mxu0 0.0
          %2185 = vmatpush.msra.mxu0 0.0
          %2186 = vmatpush.msra.mxu0 0.0
          %2187 = vmatpush.msra.mxu0 0.0
          %2188 = vmatpush.msra.mxu0 0.0
          %2189 = vmatpush.msra.mxu0 0.0
          %2190 = vmatpush.msra.mxu0 0.0
          %2191 = vmatpush.msra.mxu0 0.0
          %2192 = vmatpush.msra.mxu0 0.0
          %2193 = vmatpush.msra.mxu0 0.0
          %2194 = vmatpush.msra.mxu0 0.0
          %2195 = vmatpush.msra.mxu0 0.0
          %2196 = vmatpush.msra.mxu0 %v2089
          %2197 = vmatpush.msra.mxu0 %v2085
          %2198 = vmatmul.f32.gmra.mxu0 %v2180
          %v2199 = vpop.f32.mrf.mxu0
          %v2200 = vadd.f32 %v469, %v2199
          %2201 = vdwg.mxu0
          %2202 = vmatpush.msra.mxu0 0.0
          %2203 = vmatpush.msra.mxu0 0.0
          %2204 = vmatpush.msra.mxu0 0.0
          %2205 = vmatpush.msra.mxu0 0.0
          %2206 = vmatpush.msra.mxu0 0.0
          %2207 = vmatpush.msra.mxu0 0.0
          %2208 = vmatpush.msra.mxu0 0.0
          %2209 = vmatpush.msra.mxu0 0.0
          %2210 = vmatpush.msra.mxu0 0.0
          %2211 = vmatpush.msra.mxu0 0.0
          %2212 = vmatpush.msra.mxu0 0.0
          %2213 = vmatpush.msra.mxu0 0.0
          %2214 = vmatpush.msra.mxu0 0.0
          %2215 = vmatpush.msra.mxu0 0.0
          %2216 = vmatpush.msra.mxu0 %v2090
          %2217 = vmatpush.msra.mxu0 %v2086
          %2218 = vmatmul.f32.gmra.mxu0 %v2180
          %v2219 = vpop.f32.mrf.mxu0
          %v2220 = vadd.f32 %v470, %v2219
          %2221 = vdwg.mxu0
          %2222 = vmatpush.msra.mxu0 0.0
          %2223 = vmatpush.msra.mxu0 0.0
          %2224 = vmatpush.msra.mxu0 0.0
          %2225 = vmatpush.msra.mxu0 0.0
          %2226 = vmatpush.msra.mxu0 0.0
          %2227 = vmatpush.msra.mxu0 0.0
          %2228 = vmatpush.msra.mxu0 0.0
          %2229 = vmatpush.msra.mxu0 0.0
          %2230 = vmatpush.msra.mxu0 0.0
          %2231 = vmatpush.msra.mxu0 0.0
          %2232 = vmatpush.msra.mxu0 0.0
          %2233 = vmatpush.msra.mxu0 0.0
          %2234 = vmatpush.msra.mxu0 0.0
          %2235 = vmatpush.msra.mxu0 0.0
          %2236 = vmatpush.msra.mxu0 %v2091
          %2237 = vmatpush.msra.mxu0 %v2087
          %2238 = vmatmul.f32.gmra.mxu0 %v2180
          %v2239 = vpop.f32.mrf.mxu0
          %v2240 = vadd.f32 %v471, %v2239
          %2241 = vdwg.mxu0
          %2242 = vmatpush.msra.mxu0 0.0
          %2243 = vmatpush.msra.mxu0 0.0
          %2244 = vmatpush.msra.mxu0 0.0
          %2245 = vmatpush.msra.mxu0 0.0
          %2246 = vmatpush.msra.mxu0 0.0
          %2247 = vmatpush.msra.mxu0 0.0
          %2248 = vmatpush.msra.mxu0 0.0
          %2249 = vmatpush.msra.mxu0 0.0
          %2250 = vmatpush.msra.mxu0 0.0
          %2251 = vmatpush.msra.mxu0 0.0
          %2252 = vmatpush.msra.mxu0 0.0
          %2253 = vmatpush.msra.mxu0 0.0
          %2254 = vmatpush.msra.mxu0 0.0
          %2255 = vmatpush.msra.mxu0 0.0
          %2256 = vmatpush.msra.mxu0 %v2092
          %2257 = vmatpush.msra.mxu0 %v2088
          %2258 = vmatmul.f32.gmra.mxu0 %v2180
          %v2259 = vpop.f32.mrf.mxu0
          %v2260 = vadd.f32 %v472, %v2259
          %2261 = vdwg.mxu0
          %v2262 = vld [vmem:[#allocation15] sm:$0xff]
          %v2263 = vld [vmem:[#allocation15 + $0x8] sm:$0xff]
          %v2264 = vld [vmem:[#allocation15 + $0x10] sm:$0xff]
          %v2265 = vld [vmem:[#allocation15 + $0x18] sm:$0xff]
          %v2266 = vld [vmem:[#allocation15 + $0x20] sm:$0xff]
          %v2267 = vld [vmem:[#allocation15 + $0x28] sm:$0xff]
          %v2268 = vld [vmem:[#allocation15 + $0x30] sm:$0xff]
          %v2269 = vld [vmem:[#allocation15 + $0x38] sm:$0xff]
          %v2270 = vld [vmem:[#allocation15 + $0x40] sm:$0xff]
          %v2271 = vld [vmem:[#allocation15 + $0x48] sm:$0xff]
          %v2272 = vld [vmem:[#allocation15 + $0x50] sm:$0xff]
          %v2273 = vld [vmem:[#allocation15 + $0x58] sm:$0xff]
          %v2274 = vld [vmem:[#allocation15 + $0x60] sm:$0xff]
          %v2275 = vld [vmem:[#allocation15 + $0x68] sm:$0xff]
          %v2276 = vld [vmem:[#allocation15 + $0x70] sm:$0xff]
          %v2277 = vld [vmem:[#allocation15 + $0x78] sm:$0xff]
          %v2278 = vld [vmem:[#allocation15 + $0x80] sm:$0xff]
          %v2279 = vld [vmem:[#allocation15 + $0x88] sm:$0xff]
          %v2280 = vld [vmem:[#allocation15 + $0x90] sm:$0xff]
          %v2281 = vld [vmem:[#allocation15 + $0x98] sm:$0xff]
          %v2282 = vld [vmem:[#allocation15 + $0xa0] sm:$0xff]
          %v2283 = vld [vmem:[#allocation15 + $0xa8] sm:$0xff]
          %v2284 = vld [vmem:[#allocation15 + $0xb0] sm:$0xff]
          %v2285 = vld [vmem:[#allocation15 + $0xb8] sm:$0xff]
          %v2286 = vld [vmem:[#allocation15 + $0xc0] sm:$0xff]
          %v2287 = vld [vmem:[#allocation15 + $0xc8] sm:$0xff]
          %v2288 = vld [vmem:[#allocation15 + $0xd0] sm:$0xff]
          %v2289 = vld [vmem:[#allocation15 + $0xd8] sm:$0xff]
          %v2290 = vld [vmem:[#allocation15 + $0xe0] sm:$0xff]
          %v2291 = vld [vmem:[#allocation15 + $0xe8] sm:$0xff]
          %v2292 = vld [vmem:[#allocation15 + $0xf0] sm:$0xff]
          %v2293 = vld [vmem:[#allocation15 + $0xf8] sm:$0xff]
          %v2294 = vld [vmem:[#allocation15 + $0x100] sm:$0xff]
          %v2295 = vld [vmem:[#allocation15 + $0x108] sm:$0xff]
          %v2296 = vld [vmem:[#allocation15 + $0x110] sm:$0xff]
          %v2297 = vld [vmem:[#allocation15 + $0x118] sm:$0xff]
          %v2298 = vld [vmem:[#allocation15 + $0x120] sm:$0xff]
          %v2299 = vld [vmem:[#allocation15 + $0x128] sm:$0xff]
          %v2300 = vld [vmem:[#allocation15 + $0x130] sm:$0xff]
          %v2301 = vld [vmem:[#allocation15 + $0x138] sm:$0xff]
          %v2302 = vld [vmem:[#allocation15 + $0x140] sm:$0xff]
          %v2303 = vld [vmem:[#allocation15 + $0x148] sm:$0xff]
          %v2304 = vld [vmem:[#allocation15 + $0x150] sm:$0xff]
          %v2305 = vld [vmem:[#allocation15 + $0x158] sm:$0xff]
          %v2306 = vld [vmem:[#allocation15 + $0x160] sm:$0xff]
          %v2307 = vld [vmem:[#allocation15 + $0x168] sm:$0xff]
          %v2308 = vld [vmem:[#allocation15 + $0x170] sm:$0xff]
          %v2309 = vld [vmem:[#allocation15 + $0x178] sm:$0xff]
          %v2310 = vld [vmem:[#allocation15 + $0x180] sm:$0xff]
          %v2311 = vld [vmem:[#allocation15 + $0x188] sm:$0xff]
          %v2312 = vld [vmem:[#allocation15 + $0x190] sm:$0xff]
          %v2313 = vld [vmem:[#allocation15 + $0x198] sm:$0xff]
          %v2314 = vld [vmem:[#allocation15 + $0x1a0] sm:$0xff]
          %v2315 = vld [vmem:[#allocation15 + $0x1a8] sm:$0xff]
          %v2316 = vld [vmem:[#allocation15 + $0x1b0] sm:$0xff]
          %v2317 = vld [vmem:[#allocation15 + $0x1b8] sm:$0xff]
          %v2318 = vld [vmem:[#allocation15 + $0x1c0] sm:$0xff]
          %v2319 = vld [vmem:[#allocation15 + $0x1c8] sm:$0xff]
          %v2320 = vld [vmem:[#allocation15 + $0x1d0] sm:$0xff]
          %v2321 = vld [vmem:[#allocation15 + $0x1d8] sm:$0xff]
          %v2322 = vld [vmem:[#allocation15 + $0x1e0] sm:$0xff]
          %v2323 = vld [vmem:[#allocation15 + $0x1e8] sm:$0xff]
          %v2324 = vld [vmem:[#allocation15 + $0x1f0] sm:$0xff]
          %v2325 = vld [vmem:[#allocation15 + $0x1f8] sm:$0xff]
          %2326 = vmatpush.msra.mxu0 %v2322
          %2327 = vmatpush.msra.mxu0 %v2318
          %2328 = vmatpush.msra.mxu0 %v2314
          %2329 = vmatpush.msra.mxu0 %v2310
          %2330 = vmatpush.msra.mxu0 %v2306
          %2331 = vmatpush.msra.mxu0 %v2302
          %2332 = vmatpush.msra.mxu0 %v2298
          %2333 = vmatpush.msra.mxu0 %v2294
          %2334 = vmatpush.msra.mxu0 %v2290
          %2335 = vmatpush.msra.mxu0 %v2286
          %2336 = vmatpush.msra.mxu0 %v2282
          %2337 = vmatpush.msra.mxu0 %v2278
          %2338 = vmatpush.msra.mxu0 %v2274
          %2339 = vmatpush.msra.mxu0 %v2270
          %2340 = vmatpush.msra.mxu0 %v2266
          %2341 = vmatpush.msra.mxu0 %v2262
          %2342 = vmatmul.f32.gmra.mxu0 %v2082
          %v2343 = vpop.f32.mrf.mxu0
          %v2344 = vadd.f32 %v479, %v2343
          %2345 = vdwg.mxu0
          %2346 = vmatpush.msra.mxu0 %v2323
          %2347 = vmatpush.msra.mxu0 %v2319
          %2348 = vmatpush.msra.mxu0 %v2315
          %2349 = vmatpush.msra.mxu0 %v2311
          %2350 = vmatpush.msra.mxu0 %v2307
          %2351 = vmatpush.msra.mxu0 %v2303
          %2352 = vmatpush.msra.mxu0 %v2299
          %2353 = vmatpush.msra.mxu0 %v2295
          %2354 = vmatpush.msra.mxu0 %v2291
          %2355 = vmatpush.msra.mxu0 %v2287
          %2356 = vmatpush.msra.mxu0 %v2283
          %2357 = vmatpush.msra.mxu0 %v2279
          %2358 = vmatpush.msra.mxu0 %v2275
          %2359 = vmatpush.msra.mxu0 %v2271
          %2360 = vmatpush.msra.mxu0 %v2267
          %2361 = vmatpush.msra.mxu0 %v2263
          %2362 = vmatmul.f32.gmra.mxu0 %v2082
          %v2363 = vpop.f32.mrf.mxu0
          %v2364 = vadd.f32 %v480, %v2363
          %2365 = vdwg.mxu0
          %2366 = vmatpush.msra.mxu0 %v2324
          %2367 = vmatpush.msra.mxu0 %v2320
          %2368 = vmatpush.msra.mxu0 %v2316
          %2369 = vmatpush.msra.mxu0 %v2312
          %2370 = vmatpush.msra.mxu0 %v2308
          %2371 = vmatpush.msra.mxu0 %v2304
          %2372 = vmatpush.msra.mxu0 %v2300
          %2373 = vmatpush.msra.mxu0 %v2296
          %2374 = vmatpush.msra.mxu0 %v2292
          %2375 = vmatpush.msra.mxu0 %v2288
          %2376 = vmatpush.msra.mxu0 %v2284
          %2377 = vmatpush.msra.mxu0 %v2280
          %2378 = vmatpush.msra.mxu0 %v2276
          %2379 = vmatpush.msra.mxu0 %v2272
          %2380 = vmatpush.msra.mxu0 %v2268
          %2381 = vmatpush.msra.mxu0 %v2264
          %2382 = vmatmul.f32.gmra.mxu0 %v2082
          %v2383 = vpop.f32.mrf.mxu0
          %v2384 = vadd.f32 %v481, %v2383
          %2385 = vdwg.mxu0
          %2386 = vmatpush.msra.mxu0 %v2325
          %2387 = vmatpush.msra.mxu0 %v2321
          %2388 = vmatpush.msra.mxu0 %v2317
          %2389 = vmatpush.msra.mxu0 %v2313
          %2390 = vmatpush.msra.mxu0 %v2309
          %2391 = vmatpush.msra.mxu0 %v2305
          %2392 = vmatpush.msra.mxu0 %v2301
          %2393 = vmatpush.msra.mxu0 %v2297
          %2394 = vmatpush.msra.mxu0 %v2293
          %2395 = vmatpush.msra.mxu0 %v2289
          %2396 = vmatpush.msra.mxu0 %v2285
          %2397 = vmatpush.msra.mxu0 %v2281
          %2398 = vmatpush.msra.mxu0 %v2277
          %2399 = vmatpush.msra.mxu0 %v2273
          %2400 = vmatpush.msra.mxu0 %v2269
          %2401 = vmatpush.msra.mxu0 %v2265
          %2402 = vmatmul.f32.gmra.mxu0 %v2082
          %v2403 = vpop.f32.mrf.mxu0
          %v2404 = vadd.f32 %v482, %v2403
          %2405 = vdwg.mxu0
          %v2406 = vld [vmem:[#allocation11] sm:$0xff]
          %v2407 = vld [vmem:[#allocation11 + $0x8] sm:$0xff]
          %v2408 = vld [vmem:[#allocation11 + $0x10] sm:$0xff]
          %v2409 = vld [vmem:[#allocation11 + $0x18] sm:$0xff]
          %v2410 = vld [vmem:[#allocation11 + $0x20] sm:$0xff]
          %v2411 = vld [vmem:[#allocation11 + $0x28] sm:$0xff]
          %v2412 = vld [vmem:[#allocation11 + $0x30] sm:$0xff]
          %v2413 = vld [vmem:[#allocation11 + $0x38] sm:$0xff]
          %v2414 = vld [vmem:[#allocation11 + $0x40] sm:$0xff]
          %v2415 = vld [vmem:[#allocation11 + $0x48] sm:$0xff]
          %v2416 = vld [vmem:[#allocation11 + $0x50] sm:$0xff]
          %v2417 = vld [vmem:[#allocation11 + $0x58] sm:$0xff]
          %v2418 = vld [vmem:[#allocation11 + $0x60] sm:$0xff]
          %v2419 = vld [vmem:[#allocation11 + $0x68] sm:$0xff]
          %v2420 = vld [vmem:[#allocation11 + $0x70] sm:$0xff]
          %v2421 = vld [vmem:[#allocation11 + $0x78] sm:$0xff]
          %v2422 = vld [vmem:[#allocation11 + $0x80] sm:$0xff]
          %v2423 = vld [vmem:[#allocation11 + $0x88] sm:$0xff]
          %v2424 = vld [vmem:[#allocation11 + $0x90] sm:$0xff]
          %v2425 = vld [vmem:[#allocation11 + $0x98] sm:$0xff]
          %v2426 = vld [vmem:[#allocation11 + $0xa0] sm:$0xff]
          %v2427 = vld [vmem:[#allocation11 + $0xa8] sm:$0xff]
          %v2428 = vld [vmem:[#allocation11 + $0xb0] sm:$0xff]
          %v2429 = vld [vmem:[#allocation11 + $0xb8] sm:$0xff]
          %v2430 = vld [vmem:[#allocation11 + $0xc0] sm:$0xff]
          %v2431 = vld [vmem:[#allocation11 + $0xc8] sm:$0xff]
          %v2432 = vld [vmem:[#allocation11 + $0xd0] sm:$0xff]
          %v2433 = vld [vmem:[#allocation11 + $0xd8] sm:$0xff]
          %v2434 = vld [vmem:[#allocation11 + $0xe0] sm:$0xff]
          %v2435 = vld [vmem:[#allocation11 + $0xe8] sm:$0xff]
          %v2436 = vld [vmem:[#allocation11 + $0xf0] sm:$0xff]
          %v2437 = vld [vmem:[#allocation11 + $0xf8] sm:$0xff]
          %v2438 = vld [vmem:[#allocation11 + $0x100] sm:$0xff]
          %v2439 = vld [vmem:[#allocation11 + $0x108] sm:$0xff]
          %v2440 = vld [vmem:[#allocation11 + $0x110] sm:$0xff]
          %v2441 = vld [vmem:[#allocation11 + $0x118] sm:$0xff]
          %v2442 = vld [vmem:[#allocation11 + $0x120] sm:$0xff]
          %v2443 = vld [vmem:[#allocation11 + $0x128] sm:$0xff]
          %v2444 = vld [vmem:[#allocation11 + $0x130] sm:$0xff]
          %v2445 = vld [vmem:[#allocation11 + $0x138] sm:$0xff]
          %v2446 = vld [vmem:[#allocation11 + $0x140] sm:$0xff]
          %v2447 = vld [vmem:[#allocation11 + $0x148] sm:$0xff]
          %v2448 = vld [vmem:[#allocation11 + $0x150] sm:$0xff]
          %v2449 = vld [vmem:[#allocation11 + $0x158] sm:$0xff]
          %v2450 = vld [vmem:[#allocation11 + $0x160] sm:$0xff]
          %v2451 = vld [vmem:[#allocation11 + $0x168] sm:$0xff]
          %v2452 = vld [vmem:[#allocation11 + $0x170] sm:$0xff]
          %v2453 = vld [vmem:[#allocation11 + $0x178] sm:$0xff]
          %v2454 = vld [vmem:[#allocation11 + $0x180] sm:$0xff]
          %v2455 = vld [vmem:[#allocation11 + $0x188] sm:$0xff]
          %v2456 = vld [vmem:[#allocation11 + $0x190] sm:$0xff]
          %v2457 = vld [vmem:[#allocation11 + $0x198] sm:$0xff]
          %v2458 = vld [vmem:[#allocation11 + $0x1a0] sm:$0xff]
          %v2459 = vld [vmem:[#allocation11 + $0x1a8] sm:$0xff]
          %v2460 = vld [vmem:[#allocation11 + $0x1b0] sm:$0xff]
          %v2461 = vld [vmem:[#allocation11 + $0x1b8] sm:$0xff]
          %v2462 = vld [vmem:[#allocation11 + $0x1c0] sm:$0xff]
          %v2463 = vld [vmem:[#allocation11 + $0x1c8] sm:$0xff]
          %v2464 = vld [vmem:[#allocation11 + $0x1d0] sm:$0xff]
          %v2465 = vld [vmem:[#allocation11 + $0x1d8] sm:$0xff]
          %v2466 = vld [vmem:[#allocation11 + $0x1e0] sm:$0xff]
          %v2467 = vld [vmem:[#allocation11 + $0x1e8] sm:$0xff]
          %v2468 = vld [vmem:[#allocation11 + $0x1f0] sm:$0xff]
          %v2469 = vld [vmem:[#allocation11 + $0x1f8] sm:$0xff]
          %2470 = vmatpush.msra.mxu0 %v2466
          %2471 = vmatpush.msra.mxu0 %v2462
          %2472 = vmatpush.msra.mxu0 %v2458
          %2473 = vmatpush.msra.mxu0 %v2454
          %2474 = vmatpush.msra.mxu0 %v2450
          %2475 = vmatpush.msra.mxu0 %v2446
          %2476 = vmatpush.msra.mxu0 %v2442
          %2477 = vmatpush.msra.mxu0 %v2438
          %2478 = vmatpush.msra.mxu0 %v2434
          %2479 = vmatpush.msra.mxu0 %v2430
          %2480 = vmatpush.msra.mxu0 %v2426
          %2481 = vmatpush.msra.mxu0 %v2422
          %2482 = vmatpush.msra.mxu0 %v2418
          %2483 = vmatpush.msra.mxu0 %v2414
          %2484 = vmatpush.msra.mxu0 %v2410
          %2485 = vmatpush.msra.mxu0 %v2406
          %2486 = vmatmul.f32.gmra.mxu0 %v2080
          %v2487 = vpop.f32.mrf.mxu0
          %v2488 = vadd.f32 0.0, %v2487
          %2489 = vdwg.mxu0
          %2490 = vmatpush.msra.mxu0 %v2467
          %2491 = vmatpush.msra.mxu0 %v2463
          %2492 = vmatpush.msra.mxu0 %v2459
          %2493 = vmatpush.msra.mxu0 %v2455
          %2494 = vmatpush.msra.mxu0 %v2451
          %2495 = vmatpush.msra.mxu0 %v2447
          %2496 = vmatpush.msra.mxu0 %v2443
          %2497 = vmatpush.msra.mxu0 %v2439
          %2498 = vmatpush.msra.mxu0 %v2435
          %2499 = vmatpush.msra.mxu0 %v2431
          %2500 = vmatpush.msra.mxu0 %v2427
          %2501 = vmatpush.msra.mxu0 %v2423
          %2502 = vmatpush.msra.mxu0 %v2419
          %2503 = vmatpush.msra.mxu0 %v2415
          %2504 = vmatpush.msra.mxu0 %v2411
          %2505 = vmatpush.msra.mxu0 %v2407
          %2506 = vmatmul.f32.gmra.mxu0 %v2080
          %v2507 = vpop.f32.mrf.mxu0
          %v2508 = vadd.f32 0.0, %v2507
          %2509 = vdwg.mxu0
          %2510 = vmatpush.msra.mxu0 %v2468
          %2511 = vmatpush.msra.mxu0 %v2464
          %2512 = vmatpush.msra.mxu0 %v2460
          %2513 = vmatpush.msra.mxu0 %v2456
          %2514 = vmatpush.msra.mxu0 %v2452
          %2515 = vmatpush.msra.mxu0 %v2448
          %2516 = vmatpush.msra.mxu0 %v2444
          %2517 = vmatpush.msra.mxu0 %v2440
          %2518 = vmatpush.msra.mxu0 %v2436
          %2519 = vmatpush.msra.mxu0 %v2432
          %2520 = vmatpush.msra.mxu0 %v2428
          %2521 = vmatpush.msra.mxu0 %v2424
          %2522 = vmatpush.msra.mxu0 %v2420
          %2523 = vmatpush.msra.mxu0 %v2416
          %2524 = vmatpush.msra.mxu0 %v2412
          %2525 = vmatpush.msra.mxu0 %v2408
          %2526 = vmatmul.f32.gmra.mxu0 %v2080
          %v2527 = vpop.f32.mrf.mxu0
          %v2528 = vadd.f32 0.0, %v2527
          %2529 = vdwg.mxu0
          %2530 = vmatpush.msra.mxu0 %v2469
          %2531 = vmatpush.msra.mxu0 %v2465
          %2532 = vmatpush.msra.mxu0 %v2461
          %2533 = vmatpush.msra.mxu0 %v2457
          %2534 = vmatpush.msra.mxu0 %v2453
          %2535 = vmatpush.msra.mxu0 %v2449
          %2536 = vmatpush.msra.mxu0 %v2445
          %2537 = vmatpush.msra.mxu0 %v2441
          %2538 = vmatpush.msra.mxu0 %v2437
          %2539 = vmatpush.msra.mxu0 %v2433
          %2540 = vmatpush.msra.mxu0 %v2429
          %2541 = vmatpush.msra.mxu0 %v2425
          %2542 = vmatpush.msra.mxu0 %v2421
          %2543 = vmatpush.msra.mxu0 %v2417
          %2544 = vmatpush.msra.mxu0 %v2413
          %2545 = vmatpush.msra.mxu0 %v2409
          %2546 = vmatmul.f32.gmra.mxu0 %v2080
          %v2547 = vpop.f32.mrf.mxu0
          %v2548 = vadd.f32 0.0, %v2547
          %2549 = vdwg.mxu0
          %v2550 = vadd.f32 %v2115, %v2488
          %v2551 = vadd.f32 %v2135, %v2508
          %v2552 = vadd.f32 %v2155, %v2528
          %v2553 = vadd.f32 %v2175, %v2548
          %v2554 = vxor.u32 %v2550, 2147483648
          %v2555 = vmul.f32 %v2554, 1.442695
          %v2556 = vpow.pop %v2555
          %v2557 = vadd.f32 %v2556, 1.0
          %v2558 = vrcp.pop %v2557
          %v2559 = vmul.f32 %v2557, %v2558
          %v2560 = vsub.f32 1.0, %v2559
          %v2561 = vmul.f32 %v2558, %v2560
          %v2562 = vadd.f32 %v2558, %v2561
          %vm2563 = vweird.f32 %v2557
          %vm2564 = vweird.f32 %v2558
          %vm2565 = vmor %vm2563, %vm2564
          %v2566 = vsel %vm2565, %v2558, %v2562
          %v2567 = vand.u32 2147483647, %v2557
          %vm2568 = vcmp.eq.f32.partialorder %v2567, 8.507059e+37
          %v2569 = vand.u32 %v2557, 2147483648
          %v2570 = vor.u32 1.1754944e-38, %v2569
          %v2571 = vsel %vm2568, %v2570, %v2566
          %v2572 = vmul.f32 1.0, %v2571
          %v2573 = vxor.u32 %v2551, 2147483648
          %v2574 = vmul.f32 %v2573, 1.442695
          %v2575 = vpow.pop %v2574
          %v2576 = vadd.f32 %v2575, 1.0
          %v2577 = vrcp.pop %v2576
          %v2578 = vmul.f32 %v2576, %v2577
          %v2579 = vsub.f32 1.0, %v2578
          %v2580 = vmul.f32 %v2577, %v2579
          %v2581 = vadd.f32 %v2577, %v2580
          %vm2582 = vweird.f32 %v2576
          %vm2583 = vweird.f32 %v2577
          %vm2584 = vmor %vm2582, %vm2583
          %v2585 = vsel %vm2584, %v2577, %v2581
          %v2586 = vand.u32 2147483647, %v2576
          %vm2587 = vcmp.eq.f32.partialorder %v2586, 8.507059e+37
          %v2588 = vand.u32 %v2576, 2147483648
          %v2589 = vor.u32 1.1754944e-38, %v2588
          %v2590 = vsel %vm2587, %v2589, %v2585
          %v2591 = vmul.f32 1.0, %v2590
          %v2592 = vtanh.pop %v2552
          %v2593 = vxor.u32 %v2553, 2147483648
          %v2594 = vmul.f32 %v2593, 1.442695
          %v2595 = vpow.pop %v2594
          %v2596 = vadd.f32 %v2595, 1.0
          %v2597 = vrcp.pop %v2596
          %v2598 = vmul.f32 %v2596, %v2597
          %v2599 = vsub.f32 1.0, %v2598
          %v2600 = vmul.f32 %v2597, %v2599
          %v2601 = vadd.f32 %v2597, %v2600
          %vm2602 = vweird.f32 %v2596
          %vm2603 = vweird.f32 %v2597
          %vm2604 = vmor %vm2602, %vm2603
          %v2605 = vsel %vm2604, %v2597, %v2601
          %v2606 = vand.u32 2147483647, %v2596
          %vm2607 = vcmp.eq.f32.partialorder %v2606, 8.507059e+37
          %v2608 = vand.u32 %v2596, 2147483648
          %v2609 = vor.u32 1.1754944e-38, %v2608
          %v2610 = vsel %vm2607, %v2609, %v2605
          %v2611 = vmul.f32 1.0, %v2610
          %v2612 = vmul.f32 %v2591, %v2081
          %v2613 = vmul.f32 %v2572, %v2592
          %v2614 = vadd.f32 %v2612, %v2613
          %v2615 = vtanh.pop %v2614
          %v2616 = vmul.f32 %v2611, %v2615
          %v2617 = vld [vmem:[#allocation14] sm:$0xff]
          %v2618 = vld [vmem:[#allocation14 + $0x8] sm:$0xff]
          %v2619 = vld [vmem:[#allocation14 + $0x10] sm:$0xff]
          %v2620 = vld [vmem:[#allocation14 + $0x18] sm:$0xff]
          %v2621 = vld [vmem:[#allocation14 + $0x20] sm:$0xff]
          %v2622 = vld [vmem:[#allocation14 + $0x28] sm:$0xff]
          %v2623 = vld [vmem:[#allocation14 + $0x30] sm:$0xff]
          %v2624 = vld [vmem:[#allocation14 + $0x38] sm:$0xff]
          %v2625 = vld [vmem:[#allocation14 + $0x40] sm:$0xff]
          %v2626 = vld [vmem:[#allocation14 + $0x48] sm:$0xff]
          %v2627 = vld [vmem:[#allocation14 + $0x50] sm:$0xff]
          %v2628 = vld [vmem:[#allocation14 + $0x58] sm:$0xff]
          %v2629 = vld [vmem:[#allocation14 + $0x60] sm:$0xff]
          %v2630 = vld [vmem:[#allocation14 + $0x68] sm:$0xff]
          %v2631 = vld [vmem:[#allocation14 + $0x70] sm:$0xff]
          %v2632 = vld [vmem:[#allocation14 + $0x78] sm:$0xff]
          %v2633 = vld [vmem:[#allocation14 + $0x80] sm:$0xff]
          %v2634 = vld [vmem:[#allocation14 + $0x88] sm:$0xff]
          %v2635 = vld [vmem:[#allocation14 + $0x90] sm:$0xff]
          %v2636 = vld [vmem:[#allocation14 + $0x98] sm:$0xff]
          %v2637 = vld [vmem:[#allocation14 + $0xa0] sm:$0xff]
          %v2638 = vld [vmem:[#allocation14 + $0xa8] sm:$0xff]
          %v2639 = vld [vmem:[#allocation14 + $0xb0] sm:$0xff]
          %v2640 = vld [vmem:[#allocation14 + $0xb8] sm:$0xff]
          %v2641 = vld [vmem:[#allocation14 + $0xc0] sm:$0xff]
          %v2642 = vld [vmem:[#allocation14 + $0xc8] sm:$0xff]
          %v2643 = vld [vmem:[#allocation14 + $0xd0] sm:$0xff]
          %v2644 = vld [vmem:[#allocation14 + $0xd8] sm:$0xff]
          %v2645 = vld [vmem:[#allocation14 + $0xe0] sm:$0xff]
          %v2646 = vld [vmem:[#allocation14 + $0xe8] sm:$0xff]
          %v2647 = vld [vmem:[#allocation14 + $0xf0] sm:$0xff]
          %v2648 = vld [vmem:[#allocation14 + $0xf8] sm:$0xff]
          %v2649 = vld [vmem:[#allocation14 + $0x100] sm:$0xff]
          %v2650 = vld [vmem:[#allocation14 + $0x108] sm:$0xff]
          %v2651 = vld [vmem:[#allocation14 + $0x110] sm:$0xff]
          %v2652 = vld [vmem:[#allocation14 + $0x118] sm:$0xff]
          %v2653 = vld [vmem:[#allocation14 + $0x120] sm:$0xff]
          %v2654 = vld [vmem:[#allocation14 + $0x128] sm:$0xff]
          %v2655 = vld [vmem:[#allocation14 + $0x130] sm:$0xff]
          %v2656 = vld [vmem:[#allocation14 + $0x138] sm:$0xff]
          %v2657 = vld [vmem:[#allocation14 + $0x140] sm:$0xff]
          %v2658 = vld [vmem:[#allocation14 + $0x148] sm:$0xff]
          %v2659 = vld [vmem:[#allocation14 + $0x150] sm:$0xff]
          %v2660 = vld [vmem:[#allocation14 + $0x158] sm:$0xff]
          %v2661 = vld [vmem:[#allocation14 + $0x160] sm:$0xff]
          %v2662 = vld [vmem:[#allocation14 + $0x168] sm:$0xff]
          %v2663 = vld [vmem:[#allocation14 + $0x170] sm:$0xff]
          %v2664 = vld [vmem:[#allocation14 + $0x178] sm:$0xff]
          %v2665 = vld [vmem:[#allocation14 + $0x180] sm:$0xff]
          %v2666 = vld [vmem:[#allocation14 + $0x188] sm:$0xff]
          %v2667 = vld [vmem:[#allocation14 + $0x190] sm:$0xff]
          %v2668 = vld [vmem:[#allocation14 + $0x198] sm:$0xff]
          %v2669 = vld [vmem:[#allocation14 + $0x1a0] sm:$0xff]
          %v2670 = vld [vmem:[#allocation14 + $0x1a8] sm:$0xff]
          %v2671 = vld [vmem:[#allocation14 + $0x1b0] sm:$0xff]
          %v2672 = vld [vmem:[#allocation14 + $0x1b8] sm:$0xff]
          %v2673 = vld [vmem:[#allocation14 + $0x1c0] sm:$0xff]
          %v2674 = vld [vmem:[#allocation14 + $0x1c8] sm:$0xff]
          %v2675 = vld [vmem:[#allocation14 + $0x1d0] sm:$0xff]
          %v2676 = vld [vmem:[#allocation14 + $0x1d8] sm:$0xff]
          %v2677 = vld [vmem:[#allocation14 + $0x1e0] sm:$0xff]
          %v2678 = vld [vmem:[#allocation14 + $0x1e8] sm:$0xff]
          %v2679 = vld [vmem:[#allocation14 + $0x1f0] sm:$0xff]
          %v2680 = vld [vmem:[#allocation14 + $0x1f8] sm:$0xff]
          %2681 = vmatpush.msra.mxu0 %v2677
          %2682 = vmatpush.msra.mxu0 %v2673
          %2683 = vmatpush.msra.mxu0 %v2669
          %2684 = vmatpush.msra.mxu0 %v2665
          %2685 = vmatpush.msra.mxu0 %v2661
          %2686 = vmatpush.msra.mxu0 %v2657
          %2687 = vmatpush.msra.mxu0 %v2653
          %2688 = vmatpush.msra.mxu0 %v2649
          %2689 = vmatpush.msra.mxu0 %v2645
          %2690 = vmatpush.msra.mxu0 %v2641
          %2691 = vmatpush.msra.mxu0 %v2637
          %2692 = vmatpush.msra.mxu0 %v2633
          %2693 = vmatpush.msra.mxu0 %v2629
          %2694 = vmatpush.msra.mxu0 %v2625
          %2695 = vmatpush.msra.mxu0 %v2621
          %2696 = vmatpush.msra.mxu0 %v2617
          %2697 = vmatmul.f32.gmra.mxu0 %v2616
          %v2698 = vpop.f32.mrf.mxu0
          %v2699 = vadd.f32 0.0, %v2698
          %2700 = vdwg.mxu0
          %2701 = vmatpush.msra.mxu0 %v2678
          %2702 = vmatpush.msra.mxu0 %v2674
          %2703 = vmatpush.msra.mxu0 %v2670
          %2704 = vmatpush.msra.mxu0 %v2666
          %2705 = vmatpush.msra.mxu0 %v2662
          %2706 = vmatpush.msra.mxu0 %v2658
          %2707 = vmatpush.msra.mxu0 %v2654
          %2708 = vmatpush.msra.mxu0 %v2650
          %2709 = vmatpush.msra.mxu0 %v2646
          %2710 = vmatpush.msra.mxu0 %v2642
          %2711 = vmatpush.msra.mxu0 %v2638
          %2712 = vmatpush.msra.mxu0 %v2634
          %2713 = vmatpush.msra.mxu0 %v2630
          %2714 = vmatpush.msra.mxu0 %v2626
          %2715 = vmatpush.msra.mxu0 %v2622
          %2716 = vmatpush.msra.mxu0 %v2618
          %2717 = vmatmul.f32.gmra.mxu0 %v2616
          %v2718 = vpop.f32.mrf.mxu0
          %v2719 = vadd.f32 0.0, %v2718
          %2720 = vdwg.mxu0
          %2721 = vmatpush.msra.mxu0 %v2679
          %2722 = vmatpush.msra.mxu0 %v2675
          %2723 = vmatpush.msra.mxu0 %v2671
          %2724 = vmatpush.msra.mxu0 %v2667
          %2725 = vmatpush.msra.mxu0 %v2663
          %2726 = vmatpush.msra.mxu0 %v2659
          %2727 = vmatpush.msra.mxu0 %v2655
          %2728 = vmatpush.msra.mxu0 %v2651
          %2729 = vmatpush.msra.mxu0 %v2647
          %2730 = vmatpush.msra.mxu0 %v2643
          %2731 = vmatpush.msra.mxu0 %v2639
          %2732 = vmatpush.msra.mxu0 %v2635
          %2733 = vmatpush.msra.mxu0 %v2631
          %2734 = vmatpush.msra.mxu0 %v2627
          %2735 = vmatpush.msra.mxu0 %v2623
          %2736 = vmatpush.msra.mxu0 %v2619
          %2737 = vmatmul.f32.gmra.mxu0 %v2616
          %v2738 = vpop.f32.mrf.mxu0
          %v2739 = vadd.f32 0.0, %v2738
          %2740 = vdwg.mxu0
          %2741 = vmatpush.msra.mxu0 %v2680
          %2742 = vmatpush.msra.mxu0 %v2676
          %2743 = vmatpush.msra.mxu0 %v2672
          %2744 = vmatpush.msra.mxu0 %v2668
          %2745 = vmatpush.msra.mxu0 %v2664
          %2746 = vmatpush.msra.mxu0 %v2660
          %2747 = vmatpush.msra.mxu0 %v2656
          %2748 = vmatpush.msra.mxu0 %v2652
          %2749 = vmatpush.msra.mxu0 %v2648
          %2750 = vmatpush.msra.mxu0 %v2644
          %2751 = vmatpush.msra.mxu0 %v2640
          %2752 = vmatpush.msra.mxu0 %v2636
          %2753 = vmatpush.msra.mxu0 %v2632
          %2754 = vmatpush.msra.mxu0 %v2628
          %2755 = vmatpush.msra.mxu0 %v2624
          %2756 = vmatpush.msra.mxu0 %v2620
          %2757 = vmatmul.f32.gmra.mxu0 %v2616
          %v2758 = vpop.f32.mrf.mxu0
          %v2759 = vadd.f32 0.0, %v2758
          %2760 = vdwg.mxu0
          %v2761 = vadd.f32 %v2344, %v2699
          %v2762 = vadd.f32 %v2364, %v2719
          %v2763 = vadd.f32 %v2384, %v2739
          %v2764 = vadd.f32 %v2404, %v2759
          %v2765 = vxor.u32 %v2761, 2147483648
          %v2766 = vmul.f32 %v2765, 1.442695
          %v2767 = vpow.pop %v2766
          %v2768 = vadd.f32 %v2767, 1.0
          %v2769 = vrcp.pop %v2768
          %v2770 = vmul.f32 %v2768, %v2769
          %v2771 = vsub.f32 1.0, %v2770
          %v2772 = vmul.f32 %v2769, %v2771
          %v2773 = vadd.f32 %v2769, %v2772
          %vm2774 = vweird.f32 %v2768
          %vm2775 = vweird.f32 %v2769
          %vm2776 = vmor %vm2774, %vm2775
          %v2777 = vsel %vm2776, %v2769, %v2773
          %v2778 = vand.u32 2147483647, %v2768
          %vm2779 = vcmp.eq.f32.partialorder %v2778, 8.507059e+37
          %v2780 = vand.u32 %v2768, 2147483648
          %v2781 = vor.u32 1.1754944e-38, %v2780
          %v2782 = vsel %vm2779, %v2781, %v2777
          %v2783 = vmul.f32 1.0, %v2782
          %v2784 = vxor.u32 %v2762, 2147483648
          %v2785 = vmul.f32 %v2784, 1.442695
          %v2786 = vpow.pop %v2785
          %v2787 = vadd.f32 %v2786, 1.0
          %v2788 = vrcp.pop %v2787
          %v2789 = vmul.f32 %v2787, %v2788
          %v2790 = vsub.f32 1.0, %v2789
          %v2791 = vmul.f32 %v2788, %v2790
          %v2792 = vadd.f32 %v2788, %v2791
          %vm2793 = vweird.f32 %v2787
          %vm2794 = vweird.f32 %v2788
          %vm2795 = vmor %vm2793, %vm2794
          %v2796 = vsel %vm2795, %v2788, %v2792
          %v2797 = vand.u32 2147483647, %v2787
          %vm2798 = vcmp.eq.f32.partialorder %v2797, 8.507059e+37
          %v2799 = vand.u32 %v2787, 2147483648
          %v2800 = vor.u32 1.1754944e-38, %v2799
          %v2801 = vsel %vm2798, %v2800, %v2796
          %v2802 = vmul.f32 1.0, %v2801
          %v2803 = vtanh.pop %v2763
          %v2804 = vxor.u32 %v2764, 2147483648
          %v2805 = vmul.f32 %v2804, 1.442695
          %v2806 = vpow.pop %v2805
          %v2807 = vadd.f32 %v2806, 1.0
          %v2808 = vrcp.pop %v2807
          %v2809 = vmul.f32 %v2807, %v2808
          %v2810 = vsub.f32 1.0, %v2809
          %v2811 = vmul.f32 %v2808, %v2810
          %v2812 = vadd.f32 %v2808, %v2811
          %vm2813 = vweird.f32 %v2807
          %vm2814 = vweird.f32 %v2808
          %vm2815 = vmor %vm2813, %vm2814
          %v2816 = vsel %vm2815, %v2808, %v2812
          %v2817 = vand.u32 2147483647, %v2807
          %vm2818 = vcmp.eq.f32.partialorder %v2817, 8.507059e+37
          %v2819 = vand.u32 %v2807, 2147483648
          %v2820 = vor.u32 1.1754944e-38, %v2819
          %v2821 = vsel %vm2818, %v2820, %v2816
          %v2822 = vmul.f32 1.0, %v2821
          %v2823 = vmul.f32 %v2802, %v2083
          %v2824 = vmul.f32 %v2783, %v2803
          %v2825 = vadd.f32 %v2823, %v2824
          %v2826 = vtanh.pop %v2825
          %v2827 = vmul.f32 %v2822, %v2826
          %2828 = vmatpush.msra.mxu0 %v2322
          %2829 = vmatpush.msra.mxu0 %v2318
          %2830 = vmatpush.msra.mxu0 %v2314
          %2831 = vmatpush.msra.mxu0 %v2310
          %2832 = vmatpush.msra.mxu0 %v2306
          %2833 = vmatpush.msra.mxu0 %v2302
          %2834 = vmatpush.msra.mxu0 %v2298
          %2835 = vmatpush.msra.mxu0 %v2294
          %2836 = vmatpush.msra.mxu0 %v2290
          %2837 = vmatpush.msra.mxu0 %v2286
          %2838 = vmatpush.msra.mxu0 %v2282
          %2839 = vmatpush.msra.mxu0 %v2278
          %2840 = vmatpush.msra.mxu0 %v2274
          %2841 = vmatpush.msra.mxu0 %v2270
          %2842 = vmatpush.msra.mxu0 %v2266
          %2843 = vmatpush.msra.mxu0 %v2262
          %2844 = vmatmul.f32.gmra.mxu0 %v2827
          %v2845 = vpop.f32.mrf.mxu0
          %v2846 = vadd.f32 %v479, %v2845
          %2847 = vdwg.mxu0
          %2848 = vmatpush.msra.mxu0 %v2323
          %2849 = vmatpush.msra.mxu0 %v2319
          %2850 = vmatpush.msra.mxu0 %v2315
          %2851 = vmatpush.msra.mxu0 %v2311
          %2852 = vmatpush.msra.mxu0 %v2307
          %2853 = vmatpush.msra.mxu0 %v2303
          %2854 = vmatpush.msra.mxu0 %v2299
          %2855 = vmatpush.msra.mxu0 %v2295
          %2856 = vmatpush.msra.mxu0 %v2291
          %2857 = vmatpush.msra.mxu0 %v2287
          %2858 = vmatpush.msra.mxu0 %v2283
          %2859 = vmatpush.msra.mxu0 %v2279
          %2860 = vmatpush.msra.mxu0 %v2275
          %2861 = vmatpush.msra.mxu0 %v2271
          %2862 = vmatpush.msra.mxu0 %v2267
          %2863 = vmatpush.msra.mxu0 %v2263
          %2864 = vmatmul.f32.gmra.mxu0 %v2827
          %v2865 = vpop.f32.mrf.mxu0
          %v2866 = vadd.f32 %v480, %v2865
          %2867 = vdwg.mxu0
          %2868 = vmatpush.msra.mxu0 %v2324
          %2869 = vmatpush.msra.mxu0 %v2320
          %2870 = vmatpush.msra.mxu0 %v2316
          %2871 = vmatpush.msra.mxu0 %v2312
          %2872 = vmatpush.msra.mxu0 %v2308
          %2873 = vmatpush.msra.mxu0 %v2304
          %2874 = vmatpush.msra.mxu0 %v2300
          %2875 = vmatpush.msra.mxu0 %v2296
          %2876 = vmatpush.msra.mxu0 %v2292
          %2877 = vmatpush.msra.mxu0 %v2288
          %2878 = vmatpush.msra.mxu0 %v2284
          %2879 = vmatpush.msra.mxu0 %v2280
          %2880 = vmatpush.msra.mxu0 %v2276
          %2881 = vmatpush.msra.mxu0 %v2272
          %2882 = vmatpush.msra.mxu0 %v2268
          %2883 = vmatpush.msra.mxu0 %v2264
          %2884 = vmatmul.f32.gmra.mxu0 %v2827
          %v2885 = vpop.f32.mrf.mxu0
          %v2886 = vadd.f32 %v481, %v2885
          %2887 = vdwg.mxu0
          %2888 = vmatpush.msra.mxu0 %v2325
          %2889 = vmatpush.msra.mxu0 %v2321
          %2890 = vmatpush.msra.mxu0 %v2317
          %2891 = vmatpush.msra.mxu0 %v2313
          %2892 = vmatpush.msra.mxu0 %v2309
          %2893 = vmatpush.msra.mxu0 %v2305
          %2894 = vmatpush.msra.mxu0 %v2301
          %2895 = vmatpush.msra.mxu0 %v2297
          %2896 = vmatpush.msra.mxu0 %v2293
          %2897 = vmatpush.msra.mxu0 %v2289
          %2898 = vmatpush.msra.mxu0 %v2285
          %2899 = vmatpush.msra.mxu0 %v2281
          %2900 = vmatpush.msra.mxu0 %v2277
          %2901 = vmatpush.msra.mxu0 %v2273
          %2902 = vmatpush.msra.mxu0 %v2269
          %2903 = vmatpush.msra.mxu0 %v2265
          %2904 = vmatmul.f32.gmra.mxu0 %v2827
          %v2905 = vpop.f32.mrf.mxu0
          %v2906 = vadd.f32 %v482, %v2905
          %2907 = vdwg.mxu0
          %2908 = vmatpush.msra.mxu0 %v2466
          %2909 = vmatpush.msra.mxu0 %v2462
          %2910 = vmatpush.msra.mxu0 %v2458
          %2911 = vmatpush.msra.mxu0 %v2454
          %2912 = vmatpush.msra.mxu0 %v2450
          %2913 = vmatpush.msra.mxu0 %v2446
          %2914 = vmatpush.msra.mxu0 %v2442
          %2915 = vmatpush.msra.mxu0 %v2438
          %2916 = vmatpush.msra.mxu0 %v2434
          %2917 = vmatpush.msra.mxu0 %v2430
          %2918 = vmatpush.msra.mxu0 %v2426
          %2919 = vmatpush.msra.mxu0 %v2422
          %2920 = vmatpush.msra.mxu0 %v2418
          %2921 = vmatpush.msra.mxu0 %v2414
          %2922 = vmatpush.msra.mxu0 %v2410
          %2923 = vmatpush.msra.mxu0 %v2406
          %2924 = vmatmul.f32.gmra.mxu0 %v2616
          %v2925 = vpop.f32.mrf.mxu0
          %v2926 = vadd.f32 0.0, %v2925
          %2927 = vdwg.mxu0
          %2928 = vmatpush.msra.mxu0 %v2467
          %2929 = vmatpush.msra.mxu0 %v2463
          %2930 = vmatpush.msra.mxu0 %v2459
          %2931 = vmatpush.msra.mxu0 %v2455
          %2932 = vmatpush.msra.mxu0 %v2451
          %2933 = vmatpush.msra.mxu0 %v2447
          %2934 = vmatpush.msra.mxu0 %v2443
          %2935 = vmatpush.msra.mxu0 %v2439
          %2936 = vmatpush.msra.mxu0 %v2435
          %2937 = vmatpush.msra.mxu0 %v2431
          %2938 = vmatpush.msra.mxu0 %v2427
          %2939 = vmatpush.msra.mxu0 %v2423
          %2940 = vmatpush.msra.mxu0 %v2419
          %2941 = vmatpush.msra.mxu0 %v2415
          %2942 = vmatpush.msra.mxu0 %v2411
          %2943 = vmatpush.msra.mxu0 %v2407
          %2944 = vmatmul.f32.gmra.mxu0 %v2616
          %v2945 = vpop.f32.mrf.mxu0
          %v2946 = vadd.f32 0.0, %v2945
          %2947 = vdwg.mxu0
          %2948 = vmatpush.msra.mxu0 %v2468
          %2949 = vmatpush.msra.mxu0 %v2464
          %2950 = vmatpush.msra.mxu0 %v2460
          %2951 = vmatpush.msra.mxu0 %v2456
          %2952 = vmatpush.msra.mxu0 %v2452
          %2953 = vmatpush.msra.mxu0 %v2448
          %2954 = vmatpush.msra.mxu0 %v2444
          %2955 = vmatpush.msra.mxu0 %v2440
          %2956 = vmatpush.msra.mxu0 %v2436
          %2957 = vmatpush.msra.mxu0 %v2432
          %2958 = vmatpush.msra.mxu0 %v2428
          %2959 = vmatpush.msra.mxu0 %v2424
          %2960 = vmatpush.msra.mxu0 %v2420
          %2961 = vmatpush.msra.mxu0 %v2416
          %2962 = vmatpush.msra.mxu0 %v2412
          %2963 = vmatpush.msra.mxu0 %v2408
          %2964 = vmatmul.f32.gmra.mxu0 %v2616
          %v2965 = vpop.f32.mrf.mxu0
          %v2966 = vadd.f32 0.0, %v2965
          %2967 = vdwg.mxu0
          %2968 = vmatpush.msra.mxu0 %v2469
          %2969 = vmatpush.msra.mxu0 %v2465
          %2970 = vmatpush.msra.mxu0 %v2461
          %2971 = vmatpush.msra.mxu0 %v2457
          %2972 = vmatpush.msra.mxu0 %v2453
          %2973 = vmatpush.msra.mxu0 %v2449
          %2974 = vmatpush.msra.mxu0 %v2445
          %2975 = vmatpush.msra.mxu0 %v2441
          %2976 = vmatpush.msra.mxu0 %v2437
          %2977 = vmatpush.msra.mxu0 %v2433
          %2978 = vmatpush.msra.mxu0 %v2429
          %2979 = vmatpush.msra.mxu0 %v2425
          %2980 = vmatpush.msra.mxu0 %v2421
          %2981 = vmatpush.msra.mxu0 %v2417
          %2982 = vmatpush.msra.mxu0 %v2413
          %2983 = vmatpush.msra.mxu0 %v2409
          %2984 = vmatmul.f32.gmra.mxu0 %v2616
          %v2985 = vpop.f32.mrf.mxu0
          %v2986 = vadd.f32 0.0, %v2985
          %2987 = vdwg.mxu0
          %v2988 = vadd.f32 %v2200, %v2926
          %v2989 = vadd.f32 %v2220, %v2946
          %v2990 = vadd.f32 %v2240, %v2966
          %v2991 = vadd.f32 %v2260, %v2986
          %v2992 = vxor.u32 %v2988, 2147483648
          %v2993 = vmul.f32 %v2992, 1.442695
          %v2994 = vpow.pop %v2993
          %v2995 = vadd.f32 %v2994, 1.0
          %v2996 = vrcp.pop %v2995
          %v2997 = vmul.f32 %v2995, %v2996
          %v2998 = vsub.f32 1.0, %v2997
          %v2999 = vmul.f32 %v2996, %v2998
          %v3000 = vadd.f32 %v2996, %v2999
          %vm3001 = vweird.f32 %v2995
          %vm3002 = vweird.f32 %v2996
          %vm3003 = vmor %vm3001, %vm3002
          %v3004 = vsel %vm3003, %v2996, %v3000
          %v3005 = vand.u32 2147483647, %v2995
          %vm3006 = vcmp.eq.f32.partialorder %v3005, 8.507059e+37
          %v3007 = vand.u32 %v2995, 2147483648
          %v3008 = vor.u32 1.1754944e-38, %v3007
          %v3009 = vsel %vm3006, %v3008, %v3004
          %v3010 = vmul.f32 1.0, %v3009
          %v3011 = vxor.u32 %v2989, 2147483648
          %v3012 = vmul.f32 %v3011, 1.442695
          %v3013 = vpow.pop %v3012
          %v3014 = vadd.f32 %v3013, 1.0
          %v3015 = vrcp.pop %v3014
          %v3016 = vmul.f32 %v3014, %v3015
          %v3017 = vsub.f32 1.0, %v3016
          %v3018 = vmul.f32 %v3015, %v3017
          %v3019 = vadd.f32 %v3015, %v3018
          %vm3020 = vweird.f32 %v3014
          %vm3021 = vweird.f32 %v3015
          %vm3022 = vmor %vm3020, %vm3021
          %v3023 = vsel %vm3022, %v3015, %v3019
          %v3024 = vand.u32 2147483647, %v3014
          %vm3025 = vcmp.eq.f32.partialorder %v3024, 8.507059e+37
          %v3026 = vand.u32 %v3014, 2147483648
          %v3027 = vor.u32 1.1754944e-38, %v3026
          %v3028 = vsel %vm3025, %v3027, %v3023
          %v3029 = vmul.f32 1.0, %v3028
          %v3030 = vtanh.pop %v2990
          %v3031 = vxor.u32 %v2991, 2147483648
          %v3032 = vmul.f32 %v3031, 1.442695
          %v3033 = vpow.pop %v3032
          %v3034 = vadd.f32 %v3033, 1.0
          %v3035 = vrcp.pop %v3034
          %v3036 = vmul.f32 %v3034, %v3035
          %v3037 = vsub.f32 1.0, %v3036
          %v3038 = vmul.f32 %v3035, %v3037
          %v3039 = vadd.f32 %v3035, %v3038
          %vm3040 = vweird.f32 %v3034
          %vm3041 = vweird.f32 %v3035
          %vm3042 = vmor %vm3040, %vm3041
          %v3043 = vsel %vm3042, %v3035, %v3039
          %v3044 = vand.u32 2147483647, %v3034
          %vm3045 = vcmp.eq.f32.partialorder %v3044, 8.507059e+37
          %v3046 = vand.u32 %v3034, 2147483648
          %v3047 = vor.u32 1.1754944e-38, %v3046
          %v3048 = vsel %vm3045, %v3047, %v3043
          %v3049 = vmul.f32 1.0, %v3048
          %v3050 = vmul.f32 %v3029, %v2614
          %v3051 = vmul.f32 %v3010, %v3030
          %v3052 = vadd.f32 %v3050, %v3051
          %v3053 = vtanh.pop %v3052
          %v3054 = vmul.f32 %v3049, %v3053
          %3055 = vmatpush.msra.mxu0 %v2677
          %3056 = vmatpush.msra.mxu0 %v2673
          %3057 = vmatpush.msra.mxu0 %v2669
          %3058 = vmatpush.msra.mxu0 %v2665
          %3059 = vmatpush.msra.mxu0 %v2661
          %3060 = vmatpush.msra.mxu0 %v2657
          %3061 = vmatpush.msra.mxu0 %v2653
          %3062 = vmatpush.msra.mxu0 %v2649
          %3063 = vmatpush.msra.mxu0 %v2645
          %3064 = vmatpush.msra.mxu0 %v2641
          %3065 = vmatpush.msra.mxu0 %v2637
          %3066 = vmatpush.msra.mxu0 %v2633
          %3067 = vmatpush.msra.mxu0 %v2629
          %3068 = vmatpush.msra.mxu0 %v2625
          %3069 = vmatpush.msra.mxu0 %v2621
          %3070 = vmatpush.msra.mxu0 %v2617
          %3071 = vmatmul.f32.gmra.mxu0 %v3054
          %v3072 = vpop.f32.mrf.mxu0
          %v3073 = vadd.f32 0.0, %v3072
          %3074 = vdwg.mxu0
          %3075 = vmatpush.msra.mxu0 %v2678
          %3076 = vmatpush.msra.mxu0 %v2674
          %3077 = vmatpush.msra.mxu0 %v2670
          %3078 = vmatpush.msra.mxu0 %v2666
          %3079 = vmatpush.msra.mxu0 %v2662
          %3080 = vmatpush.msra.mxu0 %v2658
          %3081 = vmatpush.msra.mxu0 %v2654
          %3082 = vmatpush.msra.mxu0 %v2650
          %3083 = vmatpush.msra.mxu0 %v2646
          %3084 = vmatpush.msra.mxu0 %v2642
          %3085 = vmatpush.msra.mxu0 %v2638
          %3086 = vmatpush.msra.mxu0 %v2634
          %3087 = vmatpush.msra.mxu0 %v2630
          %3088 = vmatpush.msra.mxu0 %v2626
          %3089 = vmatpush.msra.mxu0 %v2622
          %3090 = vmatpush.msra.mxu0 %v2618
          %3091 = vmatmul.f32.gmra.mxu0 %v3054
          %v3092 = vpop.f32.mrf.mxu0
          %v3093 = vadd.f32 0.0, %v3092
          %3094 = vdwg.mxu0
          %3095 = vmatpush.msra.mxu0 %v2679
          %3096 = vmatpush.msra.mxu0 %v2675
          %3097 = vmatpush.msra.mxu0 %v2671
          %3098 = vmatpush.msra.mxu0 %v2667
          %3099 = vmatpush.msra.mxu0 %v2663
          %3100 = vmatpush.msra.mxu0 %v2659
          %3101 = vmatpush.msra.mxu0 %v2655
          %3102 = vmatpush.msra.mxu0 %v2651
          %3103 = vmatpush.msra.mxu0 %v2647
          %3104 = vmatpush.msra.mxu0 %v2643
          %3105 = vmatpush.msra.mxu0 %v2639
          %3106 = vmatpush.msra.mxu0 %v2635
          %3107 = vmatpush.msra.mxu0 %v2631
          %3108 = vmatpush.msra.mxu0 %v2627
          %3109 = vmatpush.msra.mxu0 %v2623
          %3110 = vmatpush.msra.mxu0 %v2619
          %3111 = vmatmul.f32.gmra.mxu0 %v3054
          %v3112 = vpop.f32.mrf.mxu0
          %v3113 = vadd.f32 0.0, %v3112
          %3114 = vdwg.mxu0
          %3115 = vmatpush.msra.mxu0 %v2680
          %3116 = vmatpush.msra.mxu0 %v2676
          %3117 = vmatpush.msra.mxu0 %v2672
          %3118 = vmatpush.msra.mxu0 %v2668
          %3119 = vmatpush.msra.mxu0 %v2664
          %3120 = vmatpush.msra.mxu0 %v2660
          %3121 = vmatpush.msra.mxu0 %v2656
          %3122 = vmatpush.msra.mxu0 %v2652
          %3123 = vmatpush.msra.mxu0 %v2648
          %3124 = vmatpush.msra.mxu0 %v2644
          %3125 = vmatpush.msra.mxu0 %v2640
          %3126 = vmatpush.msra.mxu0 %v2636
          %3127 = vmatpush.msra.mxu0 %v2632
          %3128 = vmatpush.msra.mxu0 %v2628
          %3129 = vmatpush.msra.mxu0 %v2624
          %3130 = vmatpush.msra.mxu0 %v2620
          %3131 = vmatmul.f32.gmra.mxu0 %v3054
          %v3132 = vpop.f32.mrf.mxu0
          %v3133 = vadd.f32 0.0, %v3132
          %3134 = vdwg.mxu0
          %v3135 = vadd.f32 %v2846, %v3073
          %v3136 = vadd.f32 %v2866, %v3093
          %v3137 = vadd.f32 %v2886, %v3113
          %v3138 = vadd.f32 %v2906, %v3133
          %v3139 = vxor.u32 %v3135, 2147483648
          %v3140 = vmul.f32 %v3139, 1.442695
          %v3141 = vpow.pop %v3140
          %v3142 = vadd.f32 %v3141, 1.0
          %v3143 = vrcp.pop %v3142
          %v3144 = vmul.f32 %v3142, %v3143
          %v3145 = vsub.f32 1.0, %v3144
          %v3146 = vmul.f32 %v3143, %v3145
          %v3147 = vadd.f32 %v3143, %v3146
          %vm3148 = vweird.f32 %v3142
          %vm3149 = vweird.f32 %v3143
          %vm3150 = vmor %vm3148, %vm3149
          %v3151 = vsel %vm3150, %v3143, %v3147
          %v3152 = vand.u32 2147483647, %v3142
          %vm3153 = vcmp.eq.f32.partialorder %v3152, 8.507059e+37
          %v3154 = vand.u32 %v3142, 2147483648
          %v3155 = vor.u32 1.1754944e-38, %v3154
          %v3156 = vsel %vm3153, %v3155, %v3151
          %v3157 = vmul.f32 1.0, %v3156
          %v3158 = vxor.u32 %v3136, 2147483648
          %v3159 = vmul.f32 %v3158, 1.442695
          %v3160 = vpow.pop %v3159
          %v3161 = vadd.f32 %v3160, 1.0
          %v3162 = vrcp.pop %v3161
          %v3163 = vmul.f32 %v3161, %v3162
          %v3164 = vsub.f32 1.0, %v3163
          %v3165 = vmul.f32 %v3162, %v3164
          %v3166 = vadd.f32 %v3162, %v3165
          %vm3167 = vweird.f32 %v3161
          %vm3168 = vweird.f32 %v3162
          %vm3169 = vmor %vm3167, %vm3168
          %v3170 = vsel %vm3169, %v3162, %v3166
          %v3171 = vand.u32 2147483647, %v3161
          %vm3172 = vcmp.eq.f32.partialorder %v3171, 8.507059e+37
          %v3173 = vand.u32 %v3161, 2147483648
          %v3174 = vor.u32 1.1754944e-38, %v3173
          %v3175 = vsel %vm3172, %v3174, %v3170
          %v3176 = vmul.f32 1.0, %v3175
          %v3177 = vtanh.pop %v3137
          %v3178 = vxor.u32 %v3138, 2147483648
          %v3179 = vmul.f32 %v3178, 1.442695
          %v3180 = vpow.pop %v3179
          %v3181 = vadd.f32 %v3180, 1.0
          %v3182 = vrcp.pop %v3181
          %v3183 = vmul.f32 %v3181, %v3182
          %v3184 = vsub.f32 1.0, %v3183
          %v3185 = vmul.f32 %v3182, %v3184
          %v3186 = vadd.f32 %v3182, %v3185
          %vm3187 = vweird.f32 %v3181
          %vm3188 = vweird.f32 %v3182
          %vm3189 = vmor %vm3187, %vm3188
          %v3190 = vsel %vm3189, %v3182, %v3186
          %v3191 = vand.u32 2147483647, %v3181
          %vm3192 = vcmp.eq.f32.partialorder %v3191, 8.507059e+37
          %v3193 = vand.u32 %v3181, 2147483648
          %v3194 = vor.u32 1.1754944e-38, %v3193
          %v3195 = vsel %vm3192, %v3194, %v3190
          %v3196 = vmul.f32 1.0, %v3195
          %v3197 = vmul.f32 %v3176, %v2825
          %v3198 = vmul.f32 %v3157, %v3177
          %v3199 = vadd.f32 %v3197, %v3198
          %v3200 = vtanh.pop %v3199
          %v3201 = vmul.f32 %v3196, %v3200
          %3202 = vst [vmem:[#allocation2] sm:$0xff] %v3054
          %3203 = vst [vmem:[#allocation3] sm:$0xff] %v3052
          %3204 = vst [vmem:[#allocation4] sm:$0xff] %v3201
          %3205 = vst [vmem:[#allocation5] sm:$0xff] %v3199
          %v3206 = vld [vmem:[#allocation4] sm:$0xff]
          %v3207 = vld [vmem:[#allocation17] sm:$0xff]
          %v3208 = vld [vmem:[#allocation17 + $0x8] sm:$0xff]
          %v3209 = vld [vmem:[#allocation17 + $0x10] sm:$0xff]
          %v3210 = vld [vmem:[#allocation17 + $0x18] sm:$0xff]
          %v3211 = vld [vmem:[#allocation17 + $0x20] sm:$0xff]
          %v3212 = vld [vmem:[#allocation17 + $0x28] sm:$0xff]
          %v3213 = vld [vmem:[#allocation17 + $0x30] sm:$0xff]
          %v3214 = vld [vmem:[#allocation17 + $0x38] sm:$0xff]
          %v3215 = vld [vmem:[#allocation17 + $0x40] sm:$0xff]
          %v3216 = vld [vmem:[#allocation17 + $0x48] sm:$0xff]
          %v3217 = vld [vmem:[#allocation17 + $0x50] sm:$0xff]
          %v3218 = vld [vmem:[#allocation17 + $0x58] sm:$0xff]
          %v3219 = vld [vmem:[#allocation17 + $0x60] sm:$0xff]
          %v3220 = vld [vmem:[#allocation17 + $0x68] sm:$0xff]
          %v3221 = vld [vmem:[#allocation17 + $0x70] sm:$0xff]
          %v3222 = vld [vmem:[#allocation17 + $0x78] sm:$0xff]
          %v3223 = vld [vmem:[%s8] sm:$0x1]
          %v3225 = vperm.slane %v3223, 0
          %3227 = vmatpush.msra.mxu0 %v3222
          %3228 = vmatpush.msra.mxu0 %v3221
          %3229 = vmatpush.msra.mxu0 %v3220
          %3230 = vmatpush.msra.mxu0 %v3219
          %3231 = vmatpush.msra.mxu0 %v3218
          %3232 = vmatpush.msra.mxu0 %v3217
          %3233 = vmatpush.msra.mxu0 %v3216
          %3234 = vmatpush.msra.mxu0 %v3215
          %3235 = vmatpush.msra.mxu0 %v3214
          %3236 = vmatpush.msra.mxu0 %v3213
          %3237 = vmatpush.msra.mxu0 %v3212
          %3238 = vmatpush.msra.mxu0 %v3211
          %3239 = vmatpush.msra.mxu0 %v3210
          %3240 = vmatpush.msra.mxu0 %v3209
          %3241 = vmatpush.msra.mxu0 %v3208
          %3242 = vmatpush.msra.mxu0 %v3207
          %3243 = vmatmul.f32.gmra.mxu0 %v3206
          %v3244 = vpop.f32.mrf.mxu0
          %v3245 = vadd.f32 %v3225, %v3244
          %3246 = vdwg.mxu0
          %3247 = vst [vmem:[#allocation18] sm:$0xff] %v3245
        $region96: #{tpu_custom_call.1} parent=55 // pred_fallthru
          _
        // Predicated region
        $region97: #{tpu_custom_call.1} parent=55 // pred_check
          %p3248 = pneg %p253
        $region98: #{tpu_custom_call.1} parent=55 // pred_check_branch
          %3250 = sbr.rel (%p3248) target = $region100
        $region99: #{tpu_custom_call.1} parent=55 // pred_region
          %3252 = vsyncadd [#allocation8], 0
          %s3253 = smul.addr %s31, 8
          %s3254 = scalar_lea.hbm %s9, %s3253
          %s3256 = sshll.u32 [#allocation18], 4
          %s3257 = int_to_ptr.vmem [resolvable:$true] %s3256
          %s3258 = sshll.u32 %s3254, 4
          %s3259 = int_to_ptr.hbm [resolvable:$true] %s3258
          %3261 = dma.vmem_to_hbm [thread:$0]  %s3257, 128, %s3259, [#allocation8]
        $region100: #{tpu_custom_call.1} parent=55 // pred_fallthru
          _
        // Predicated region
        $region101: #{tpu_custom_call.1} parent=55 // pred_check
          %p3262 = pneg %p253
        $region102: #{tpu_custom_call.1} parent=55 // pred_check_branch
          %3264 = sbr.rel (%p3262) target = $region104
        $region103: #{tpu_custom_call.1} parent=55 // pred_region
          %3266 = dma.done [#allocation8], 128
        $region104: #{tpu_custom_call.1} parent=55 // pred_fallthru
          _
      $region56: #{tpu_custom_call.1} parent=5 // pred_fallthru
        _
      %p3267 = scmp.le.s32.totalorder 2, %s22
      // Predicated region
      $region105: #{tpu_custom_call.1} parent=5 // pred_check
        %p3268 = pneg %p3267
      $region106: #{tpu_custom_call.1} parent=5 // pred_check_branch
        %3270 = sbr.rel (%p3268) target = $region108
      $region107: #{tpu_custom_call.1} parent=5 // pred_region
        %s3271 = ssub.s32 %s22, 2
      $region108: #{tpu_custom_call.1} parent=5 // pred_fallthru
        _
    $region6: #{tpu_custom_call.1} parent=1 // loop_footer
      %s26 = sadd.s32 1, %s22
    $region7: #{tpu_custom_call.1} parent=1 // loop_footer_branch
      %21 = sbr.rel target = $region3
    $region8: #{tpu_custom_call.1} parent=1 // loop_exit
      _
    %3272 = vsyncpa [#allocation7], 1
    %s3273 = scalar_lea.sflag [#allocation7], 1
    %3274 = vsyncpa %s3273, 1
    %3275 = vsyncpa [#allocation10], 1
    %3276 = vsyncpa [#allocation13], 1
    %3277 = vsyncpa [#allocation16], 1
    %3278 = vsyncpa [#allocation8], 1
    %s3279 = scalar_lea.sflag [#allocation8], 1
    %3280 = vsyncpa %s3279, 1

</llo_original>
